<compile_context>
chip_gen: v5e
topology: v5e:2x2
jax: 0.10.0
libtpu: 0.0.40
codegen_flags: <defaults>
</compile_context>

<pallas_src>
import math
from functools import partial

import jax
import jax.numpy as jnp
from jax import lax
from jax.experimental import pallas as pl
from jax.experimental.pallas import tpu as pltpu

D_MODEL = 128
N_HEADS = 4
HEAD_DIM = D_MODEL // N_HEADS
D_FF = 2048
N_CLASSES = 5
PAD_CLASSES = 128          # lane-dense padded logit width (real classes = 5)
LN_EPS = 1e-5


# ---------------------------------------------------------------------------
# Kernel helpers (traced inside the kernel body)
# ---------------------------------------------------------------------------
def _layer_norm(x, gamma, beta):
    mu = jnp.mean(x, axis=-1, keepdims=True)
    var = jnp.mean((x - mu) ** 2, axis=-1, keepdims=True)
    return (x - mu) * lax.rsqrt(var + LN_EPS) * gamma + beta


def _attention(q, k, v, B, S):
    """Multi-head self-attention on flattened tokens.

    q, k, v: (B*S, D) f32.  All (batch, head) pairs are batched into a single
    pair of 3-D einsums (one batched MXU dot for scores, one for P@V) instead
    of a Python loop of tiny per-head matmuls.
    """
    scale = 1.0 / math.sqrt(HEAD_DIM)

    def gather_heads(t):
        return jnp.stack(
            [t[b * S:(b + 1) * S, h * HEAD_DIM:(h + 1) * HEAD_DIM]
             for b in range(B) for h in range(N_HEADS)],
            axis=0)                                                 # (B*H, S, hd)

    qh, kh, vh = gather_heads(q), gather_heads(k), gather_heads(v)

    s = jnp.einsum('bqd,bkd->bqk', qh, kh,
                   preferred_element_type=jnp.float32) * scale      # (B*H, S, S)
    s = s - jnp.max(s, axis=-1, keepdims=True)
    p = jnp.exp(s)
    p = p * pl.reciprocal(jnp.sum(p, axis=-1, keepdims=True), approx=True)
    o = jnp.einsum('bqk,bkd->bqd', p, vh,
                   preferred_element_type=jnp.float32)              # (B*H, S, hd)

    rows = [jnp.concatenate([o[b * N_HEADS + h] for h in range(N_HEADS)], axis=-1)
            for b in range(B)]                                      # each (S, D)
    return jnp.concatenate(rows, axis=0)                            # (B*S, D)


# ---------------------------------------------------------------------------
# Fused kernel: 2 encoder layers + classification head, single invocation
# ---------------------------------------------------------------------------
def fused_encoder_kernel(x_ref,
                         wqkv_ref, bqkv_ref, wo_ref, bo_ref,
                         w1_ref, b1_ref, w2_ref, b2_ref,
                         g1_ref, be1_ref, g2_ref, be2_ref,
                         lw_ref, lb_ref,
                         out_ref, *, B, S):
    h = x_ref[...].astype(jnp.float32)                              # (B*S, D)

    for l in range(2):                                              # static layer loop
        # --- multi-head self attention (bf16 MXU operands, f32 accumulate) --
        qkv = jnp.dot(h.astype(jnp.bfloat16), wqkv_ref[l],
                      preferred_element_type=jnp.float32) + bqkv_ref[l]
        q = qkv[:, 0 * D_MODEL:1 * D_MODEL]
        k = qkv[:, 1 * D_MODEL:2 * D_MODEL]
        v = qkv[:, 2 * D_MODEL:3 * D_MODEL]

        attn = _attention(q, k, v, B, S)
        attn = jnp.dot(attn.astype(jnp.bfloat16), wo_ref[l],
                       preferred_element_type=jnp.float32) + bo_ref[l]

        # --- add & norm 1 (f32 VPU math) ------------------------------------
        x1 = _layer_norm(h + attn, g1_ref[l], be1_ref[l])

        # --- feed-forward (relu) --------------------------------------------
        h1 = jnp.dot(x1.astype(jnp.bfloat16), w1_ref[l],
                     preferred_element_type=jnp.float32) + b1_ref[l]
        h1 = jnp.maximum(h1, 0.0)
        h2 = jnp.dot(h1.astype(jnp.bfloat16), w2_ref[l],
                     preferred_element_type=jnp.float32) + b2_ref[l]

        # --- add & norm 2 -----------------------------------------------------
        h = _layer_norm(x1 + h2, g2_ref[l], be2_ref[l])

    # --- classification head: max over seq -> linear -> softmax --------------
    hmax = jnp.concatenate(
        [jnp.max(h[b * S:(b + 1) * S, :], axis=0, keepdims=True) for b in range(B)],
        axis=0)                                                      # (B, D)
    logits = jnp.dot(hmax.astype(jnp.bfloat16), lw_ref[...],
                     preferred_element_type=jnp.float32) + lb_ref[...]  # (B, 128)
    # only the first N_CLASSES lanes are real classes; mask the padding out
    class_mask = lax.broadcasted_iota(jnp.int32, logits.shape, 1) < N_CLASSES
    logits = jnp.where(class_mask, logits, -1e30)
    logits = logits - jnp.max(logits, axis=-1, keepdims=True)
    p = jnp.exp(logits)
    out_ref[...] = p / jnp.sum(p, axis=-1, keepdims=True)


# ---------------------------------------------------------------------------
# Wrapper
# ---------------------------------------------------------------------------
@jax.jit
def encoder_forward(X, params):
    B, S = X.shape
    # Embedding lookup stays in XLA (single gather).  The reference module's
    # positional encoding is computed but never used, so it is dropped here.
    x = jnp.take(params["embedding"], X, axis=0).reshape(B * S, D_MODEL)

    weight_args = [params[name] for name in (
        "wqkv", "bqkv", "wo", "bo", "w1", "b1", "w2", "b2",
        "g1", "be1", "g2", "be2", "lin_w", "lin_b")]

    out_padded = pl.pallas_call(
        partial(fused_encoder_kernel, B=B, S=S),
        out_shape=jax.ShapeDtypeStruct((B, PAD_CLASSES), jnp.float32),
        compiler_params=pltpu.CompilerParams(vmem_limit_bytes=16 * 1024 * 1024),
    )(x, *weight_args)
    return out_padded[:, :N_CLASSES]


# ---------------------------------------------------------------------------
# Parameter construction (matches torch shapes; linear weights pre-transposed
# to (in, out); MXU weights stored in bf16, per-layer arrays stacked on a
# leading axis of size 2 so both layers' weights feed one pallas_call).
# ---------------------------------------------------------------------------
def init_params(vocab_len, key):
    keys = jax.random.split(key, 3)
    initrange = 0.1
    params = {
        "embedding": jax.random.uniform(keys[0], (vocab_len, D_MODEL),
                                        jnp.float32, -initrange, initrange),
    }
    # Linear(128, 5): weight uniform(-0.1, 0.1), bias zero; stored transposed
    # and lane-padded to 128 output columns (only the first 5 are real).
    lin_w = jax.random.uniform(keys[1], (N_CLASSES, D_MODEL), jnp.float32,
                               -initrange, initrange)
    params["lin_w"] = (jnp.zeros((D_MODEL, PAD_CLASSES), jnp.float32)
                       .at[:, :N_CLASSES].set(lin_w.T)).astype(jnp.bfloat16)
    params["lin_b"] = jnp.zeros((1, PAD_CLASSES), jnp.float32)

    def make_layer(k):
        kq = jax.random.split(k, 6)
        s_attn = 1.0 / math.sqrt(D_MODEL)
        s_ff1 = 1.0 / math.sqrt(D_MODEL)
        s_ff2 = 1.0 / math.sqrt(D_FF)
        return {
            # torch in_proj weight is (3D, D); store transposed (D, 3D)
            "wqkv": jax.random.uniform(kq[0], (3 * D_MODEL, D_MODEL),
                                       jnp.float32, -s_attn, s_attn).T,
            "bqkv": jnp.zeros((1, 3 * D_MODEL), jnp.float32),
            "wo": jax.random.uniform(kq[1], (D_MODEL, D_MODEL),
                                     jnp.float32, -s_attn, s_attn).T,
            "bo": jnp.zeros((1, D_MODEL), jnp.float32),
            "w1": jax.random.uniform(kq[2], (D_FF, D_MODEL),
                                     jnp.float32, -s_ff1, s_ff1).T,         # (D, D_FF)
            "b1": jax.random.uniform(kq[3], (1, D_FF), jnp.float32, -s_ff1, s_ff1),
            "w2": jax.random.uniform(kq[4], (D_MODEL, D_FF),
                                     jnp.float32, -s_ff2, s_ff2).T,         # (D_FF, D)
            "b2": jax.random.uniform(kq[5], (1, D_MODEL), jnp.float32, -s_ff2, s_ff2),
            "g1": jnp.ones((1, D_MODEL), jnp.float32),
            "be1": jnp.zeros((1, D_MODEL), jnp.float32),
            "g2": jnp.ones((1, D_MODEL), jnp.float32),
            "be2": jnp.zeros((1, D_MODEL), jnp.float32),
        }

    layers = [make_layer(k) for k in jax.random.split(keys[2], 2)]
    mxu_bf16 = {"wqkv", "wo", "w1", "w2"}
    for name in layers[0]:
        stacked = jnp.stack([lp[name] for lp in layers], axis=0)
        if name in mxu_bf16:
            stacked = stacked.astype(jnp.bfloat16)
        params[name] = stacked
    return params


# ---------------------------------------------------------------------------
if __name__ == "__main__":
    vocab_len = 50
    B, S = 2, 8
    key = jax.random.PRNGKey(0)
    k_tok, k_par = jax.random.split(key)
    X = jax.random.randint(k_tok, (B, S), 0, vocab_len, dtype=jnp.int32)
    params = init_params(vocab_len, k_par)

    out = encoder_forward(X, params)
    out = jax.block_until_ready(out)

    assert out.shape == (B, N_CLASSES)
    assert bool(jnp.all(jnp.isfinite(out)))
    # softmax rows must sum to 1
    assert bool(jnp.allclose(jnp.sum(out, axis=1), 1.0, atol=1e-4))
    print("KERNEL_OK")
</pallas_src>

<mosaic_0001>
module attributes {stable_mosaic.version = 11 : i64} {
  func.func @fused_encoder_kernel(%arg0: memref<16x128xf32, #tpu.memory_space<vmem>>, %arg1: memref<2x128x384xbf16, #tpu.memory_space<vmem>>, %arg2: memref<2x1x384xf32, #tpu.memory_space<vmem>>, %arg3: memref<2x128x128xbf16, #tpu.memory_space<vmem>>, %arg4: memref<2x1x128xf32, #tpu.memory_space<vmem>>, %arg5: memref<2x128x2048xbf16, #tpu.memory_space<vmem>>, %arg6: memref<2x1x2048xf32, #tpu.memory_space<vmem>>, %arg7: memref<2x2048x128xbf16, #tpu.memory_space<vmem>>, %arg8: memref<2x1x128xf32, #tpu.memory_space<vmem>>, %arg9: memref<2x1x128xf32, #tpu.memory_space<vmem>>, %arg10: memref<2x1x128xf32, #tpu.memory_space<vmem>>, %arg11: memref<2x1x128xf32, #tpu.memory_space<vmem>>, %arg12: memref<2x1x128xf32, #tpu.memory_space<vmem>>, %arg13: memref<128x128xbf16, #tpu.memory_space<vmem>>, %arg14: memref<1x128xf32, #tpu.memory_space<vmem>>, %arg15: memref<2x128xf32, #tpu.memory_space<vmem>>) attributes {dimension_semantics = [], scalar_prefetch = 0 : i64, scratch_operands = 0 : i64, tpu.core_type = #tpu.core_type<tc>} {
    %c0 = arith.constant 0 : index
    %c0_0 = arith.constant 0 : index
    %0 = vector.load %arg0[%c0, %c0_0] : memref<16x128xf32, #tpu.memory_space<vmem>>, vector<16x128xf32>
    %1 = arith.truncf %0 : vector<16x128xf32> to vector<16x128xbf16>
    %c0_1 = arith.constant 0 : index
    %c0_2 = arith.constant 0 : index
    %c0_3 = arith.constant 0 : index
    %2 = vector.load %arg1[%c0_1, %c0_2, %c0_3] : memref<2x128x384xbf16, #tpu.memory_space<vmem>>, vector<1x128x384xbf16>
    %3 = vector.shape_cast %2 : vector<1x128x384xbf16> to vector<128x384xbf16>
    %cst = arith.constant dense<0.000000e+00> : vector<16x384xf32>
    %4 = tpu.matmul %1, %3, %cst {dimension_numbers = #tpu.dot_dimension_numbers<[1], [0], [0], [1], [0, 0, 1, 1], [], []>} : vector<16x128xbf16>, vector<128x384xbf16>, vector<16x384xf32> -> vector<16x384xf32>
    %c0_4 = arith.constant 0 : index
    %c0_5 = arith.constant 0 : index
    %c0_6 = arith.constant 0 : index
    %5 = vector.load %arg2[%c0_4, %c0_5, %c0_6] : memref<2x1x384xf32, #tpu.memory_space<vmem>>, vector<1x1x384xf32>
    %6 = vector.shape_cast %5 : vector<1x1x384xf32> to vector<1x384xf32>
    %7 = vector.broadcast %6 : vector<1x384xf32> to vector<16x384xf32>
    %8 = arith.addf %4, %7 : vector<16x384xf32>
    %9 = vector.extract_strided_slice %8 {offsets = [0, 0], sizes = [16, 128], strides = [1, 1]} : vector<16x384xf32> to vector<16x128xf32>
    %10 = vector.extract_strided_slice %8 {offsets = [0, 128], sizes = [16, 128], strides = [1, 1]} : vector<16x384xf32> to vector<16x128xf32>
    %11 = vector.extract_strided_slice %8 {offsets = [0, 256], sizes = [16, 128], strides = [1, 1]} : vector<16x384xf32> to vector<16x128xf32>
    %12 = vector.extract_strided_slice %9 {offsets = [0, 0], sizes = [8, 32], strides = [1, 1]} : vector<16x128xf32> to vector<8x32xf32>
    %13 = vector.extract_strided_slice %9 {offsets = [0, 32], sizes = [8, 32], strides = [1, 1]} : vector<16x128xf32> to vector<8x32xf32>
    %14 = vector.extract_strided_slice %9 {offsets = [0, 64], sizes = [8, 32], strides = [1, 1]} : vector<16x128xf32> to vector<8x32xf32>
    %15 = vector.extract_strided_slice %9 {offsets = [0, 96], sizes = [8, 32], strides = [1, 1]} : vector<16x128xf32> to vector<8x32xf32>
    %16 = vector.extract_strided_slice %9 {offsets = [8, 0], sizes = [8, 32], strides = [1, 1]} : vector<16x128xf32> to vector<8x32xf32>
    %17 = vector.extract_strided_slice %9 {offsets = [8, 32], sizes = [8, 32], strides = [1, 1]} : vector<16x128xf32> to vector<8x32xf32>
    %18 = vector.extract_strided_slice %9 {offsets = [8, 64], sizes = [8, 32], strides = [1, 1]} : vector<16x128xf32> to vector<8x32xf32>
    %19 = vector.extract_strided_slice %9 {offsets = [8, 96], sizes = [8, 32], strides = [1, 1]} : vector<16x128xf32> to vector<8x32xf32>
    %20 = vector.shape_cast %12 : vector<8x32xf32> to vector<1x8x32xf32>
    %21 = vector.shape_cast %13 : vector<8x32xf32> to vector<1x8x32xf32>
    %22 = vector.shape_cast %14 : vector<8x32xf32> to vector<1x8x32xf32>
    %23 = vector.shape_cast %15 : vector<8x32xf32> to vector<1x8x32xf32>
    %24 = vector.shape_cast %16 : vector<8x32xf32> to vector<1x8x32xf32>
    %25 = vector.shape_cast %17 : vector<8x32xf32> to vector<1x8x32xf32>
    %26 = vector.shape_cast %18 : vector<8x32xf32> to vector<1x8x32xf32>
    %27 = vector.shape_cast %19 : vector<8x32xf32> to vector<1x8x32xf32>
    %28 = tpu.concatenate %20, %21, %22, %23, %24, %25, %26, %27 in 0 : vector<1x8x32xf32>, vector<1x8x32xf32>, vector<1x8x32xf32>, vector<1x8x32xf32>, vector<1x8x32xf32>, vector<1x8x32xf32>, vector<1x8x32xf32>, vector<1x8x32xf32> -> vector<8x8x32xf32>
    %29 = vector.extract_strided_slice %10 {offsets = [0, 0], sizes = [8, 32], strides = [1, 1]} : vector<16x128xf32> to vector<8x32xf32>
    %30 = vector.extract_strided_slice %10 {offsets = [0, 32], sizes = [8, 32], strides = [1, 1]} : vector<16x128xf32> to vector<8x32xf32>
    %31 = vector.extract_strided_slice %10 {offsets = [0, 64], sizes = [8, 32], strides = [1, 1]} : vector<16x128xf32> to vector<8x32xf32>
    %32 = vector.extract_strided_slice %10 {offsets = [0, 96], sizes = [8, 32], strides = [1, 1]} : vector<16x128xf32> to vector<8x32xf32>
    %33 = vector.extract_strided_slice %10 {offsets = [8, 0], sizes = [8, 32], strides = [1, 1]} : vector<16x128xf32> to vector<8x32xf32>
    %34 = vector.extract_strided_slice %10 {offsets = [8, 32], sizes = [8, 32], strides = [1, 1]} : vector<16x128xf32> to vector<8x32xf32>
    %35 = vector.extract_strided_slice %10 {offsets = [8, 64], sizes = [8, 32], strides = [1, 1]} : vector<16x128xf32> to vector<8x32xf32>
    %36 = vector.extract_strided_slice %10 {offsets = [8, 96], sizes = [8, 32], strides = [1, 1]} : vector<16x128xf32> to vector<8x32xf32>
    %37 = vector.shape_cast %29 : vector<8x32xf32> to vector<1x8x32xf32>
    %38 = vector.shape_cast %30 : vector<8x32xf32> to vector<1x8x32xf32>
    %39 = vector.shape_cast %31 : vector<8x32xf32> to vector<1x8x32xf32>
    %40 = vector.shape_cast %32 : vector<8x32xf32> to vector<1x8x32xf32>
    %41 = vector.shape_cast %33 : vector<8x32xf32> to vector<1x8x32xf32>
    %42 = vector.shape_cast %34 : vector<8x32xf32> to vector<1x8x32xf32>
    %43 = vector.shape_cast %35 : vector<8x32xf32> to vector<1x8x32xf32>
    %44 = vector.shape_cast %36 : vector<8x32xf32> to vector<1x8x32xf32>
    %45 = tpu.concatenate %37, %38, %39, %40, %41, %42, %43, %44 in 0 : vector<1x8x32xf32>, vector<1x8x32xf32>, vector<1x8x32xf32>, vector<1x8x32xf32>, vector<1x8x32xf32>, vector<1x8x32xf32>, vector<1x8x32xf32>, vector<1x8x32xf32> -> vector<8x8x32xf32>
    %46 = vector.extract_strided_slice %11 {offsets = [0, 0], sizes = [8, 32], strides = [1, 1]} : vector<16x128xf32> to vector<8x32xf32>
    %47 = vector.extract_strided_slice %11 {offsets = [0, 32], sizes = [8, 32], strides = [1, 1]} : vector<16x128xf32> to vector<8x32xf32>
    %48 = vector.extract_strided_slice %11 {offsets = [0, 64], sizes = [8, 32], strides = [1, 1]} : vector<16x128xf32> to vector<8x32xf32>
    %49 = vector.extract_strided_slice %11 {offsets = [0, 96], sizes = [8, 32], strides = [1, 1]} : vector<16x128xf32> to vector<8x32xf32>
    %50 = vector.extract_strided_slice %11 {offsets = [8, 0], sizes = [8, 32], strides = [1, 1]} : vector<16x128xf32> to vector<8x32xf32>
    %51 = vector.extract_strided_slice %11 {offsets = [8, 32], sizes = [8, 32], strides = [1, 1]} : vector<16x128xf32> to vector<8x32xf32>
    %52 = vector.extract_strided_slice %11 {offsets = [8, 64], sizes = [8, 32], strides = [1, 1]} : vector<16x128xf32> to vector<8x32xf32>
    %53 = vector.extract_strided_slice %11 {offsets = [8, 96], sizes = [8, 32], strides = [1, 1]} : vector<16x128xf32> to vector<8x32xf32>
    %54 = vector.shape_cast %46 : vector<8x32xf32> to vector<1x8x32xf32>
    %55 = vector.shape_cast %47 : vector<8x32xf32> to vector<1x8x32xf32>
    %56 = vector.shape_cast %48 : vector<8x32xf32> to vector<1x8x32xf32>
    %57 = vector.shape_cast %49 : vector<8x32xf32> to vector<1x8x32xf32>
    %58 = vector.shape_cast %50 : vector<8x32xf32> to vector<1x8x32xf32>
    %59 = vector.shape_cast %51 : vector<8x32xf32> to vector<1x8x32xf32>
    %60 = vector.shape_cast %52 : vector<8x32xf32> to vector<1x8x32xf32>
    %61 = vector.shape_cast %53 : vector<8x32xf32> to vector<1x8x32xf32>
    %62 = tpu.concatenate %54, %55, %56, %57, %58, %59, %60, %61 in 0 : vector<1x8x32xf32>, vector<1x8x32xf32>, vector<1x8x32xf32>, vector<1x8x32xf32>, vector<1x8x32xf32>, vector<1x8x32xf32>, vector<1x8x32xf32>, vector<1x8x32xf32> -> vector<8x8x32xf32>
    "tpu.trace_start"() <{level = 10 : i32, message = "bqd,bkd->bqk"}> : () -> ()
    %cst_7 = arith.constant dense<0.000000e+00> : vector<8x8x8xf32>
    %63 = tpu.matmul %28, %45, %cst_7 {dimension_numbers = #tpu.dot_dimension_numbers<[2], [2], [1], [1], [0, 0, 0, 1, 1, 1], [0], [0]>} : vector<8x8x32xf32>, vector<8x8x32xf32>, vector<8x8x8xf32> -> vector<8x8x8xf32>
    "tpu.trace_stop"() : () -> ()
    %cst_8 = arith.constant 0.176776692 : f32
    %64 = vector.broadcast %cst_8 : f32 to vector<8x8x8xf32>
    %65 = arith.mulf %63, %64 : vector<8x8x8xf32>
    %cst_9 = arith.constant dense<0xFF800000> : vector<8x8xf32>
    %66 = vector.multi_reduction <maximumf>, %65, %cst_9 [2] : vector<8x8x8xf32> to vector<8x8xf32>
    %67 = vector.shape_cast %66 : vector<8x8xf32> to vector<8x8x1xf32>
    %68 = vector.broadcast %67 : vector<8x8x1xf32> to vector<8x8x8xf32>
    %69 = arith.subf %65, %68 : vector<8x8x8xf32>
    %70 = math.exp %69 : vector<8x8x8xf32>
    %cst_10 = arith.constant dense<0.000000e+00> : vector<8x8xf32>
    %71 = vector.multi_reduction <add>, %70, %cst_10 [2] : vector<8x8x8xf32> to vector<8x8xf32>
    %72 = vector.shape_cast %71 : vector<8x8xf32> to vector<8x8x1xf32>
    %73 = tpu.reciprocal %72 {approx = true} : vector<8x8x1xf32> -> vector<8x8x1xf32>
    %74 = vector.broadcast %73 : vector<8x8x1xf32> to vector<8x8x8xf32>
    %75 = arith.mulf %70, %74 : vector<8x8x8xf32>
    "tpu.trace_start"() <{level = 10 : i32, message = "bqk,bkd->bqd"}> : () -> ()
    %cst_11 = arith.constant dense<0.000000e+00> : vector<8x8x32xf32>
    %76 = tpu.matmul %75, %62, %cst_11 {dimension_numbers = #tpu.dot_dimension_numbers<[2], [1], [1], [2], [0, 0, 0, 1, 1, 2], [0], [0]>} : vector<8x8x8xf32>, vector<8x8x32xf32>, vector<8x8x32xf32> -> vector<8x8x32xf32>
    "tpu.trace_stop"() : () -> ()
    %77 = vector.extract_strided_slice %76 {offsets = [0, 0, 0], sizes = [1, 8, 32], strides = [1, 1, 1]} : vector<8x8x32xf32> to vector<1x8x32xf32>
    %78 = vector.shape_cast %77 : vector<1x8x32xf32> to vector<8x32xf32>
    %79 = vector.extract_strided_slice %76 {offsets = [1, 0, 0], sizes = [1, 8, 32], strides = [1, 1, 1]} : vector<8x8x32xf32> to vector<1x8x32xf32>
    %80 = vector.shape_cast %79 : vector<1x8x32xf32> to vector<8x32xf32>
    %81 = vector.extract_strided_slice %76 {offsets = [2, 0, 0], sizes = [1, 8, 32], strides = [1, 1, 1]} : vector<8x8x32xf32> to vector<1x8x32xf32>
    %82 = vector.shape_cast %81 : vector<1x8x32xf32> to vector<8x32xf32>
    %83 = vector.extract_strided_slice %76 {offsets = [3, 0, 0], sizes = [1, 8, 32], strides = [1, 1, 1]} : vector<8x8x32xf32> to vector<1x8x32xf32>
    %84 = vector.shape_cast %83 : vector<1x8x32xf32> to vector<8x32xf32>
    %85 = tpu.concatenate %78, %80, %82, %84 in 1 : vector<8x32xf32>, vector<8x32xf32>, vector<8x32xf32>, vector<8x32xf32> -> vector<8x128xf32>
    %86 = vector.extract_strided_slice %76 {offsets = [4, 0, 0], sizes = [1, 8, 32], strides = [1, 1, 1]} : vector<8x8x32xf32> to vector<1x8x32xf32>
    %87 = vector.shape_cast %86 : vector<1x8x32xf32> to vector<8x32xf32>
    %88 = vector.extract_strided_slice %76 {offsets = [5, 0, 0], sizes = [1, 8, 32], strides = [1, 1, 1]} : vector<8x8x32xf32> to vector<1x8x32xf32>
    %89 = vector.shape_cast %88 : vector<1x8x32xf32> to vector<8x32xf32>
    %90 = vector.extract_strided_slice %76 {offsets = [6, 0, 0], sizes = [1, 8, 32], strides = [1, 1, 1]} : vector<8x8x32xf32> to vector<1x8x32xf32>
    %91 = vector.shape_cast %90 : vector<1x8x32xf32> to vector<8x32xf32>
    %92 = vector.extract_strided_slice %76 {offsets = [7, 0, 0], sizes = [1, 8, 32], strides = [1, 1, 1]} : vector<8x8x32xf32> to vector<1x8x32xf32>
    %93 = vector.shape_cast %92 : vector<1x8x32xf32> to vector<8x32xf32>
    %94 = tpu.concatenate %87, %89, %91, %93 in 1 : vector<8x32xf32>, vector<8x32xf32>, vector<8x32xf32>, vector<8x32xf32> -> vector<8x128xf32>
    %95 = tpu.concatenate %85, %94 in 0 : vector<8x128xf32>, vector<8x128xf32> -> vector<16x128xf32>
    %96 = arith.truncf %95 : vector<16x128xf32> to vector<16x128xbf16>
    %c0_12 = arith.constant 0 : index
    %c0_13 = arith.constant 0 : index
    %c0_14 = arith.constant 0 : index
    %97 = vector.load %arg3[%c0_12, %c0_13, %c0_14] : memref<2x128x128xbf16, #tpu.memory_space<vmem>>, vector<1x128x128xbf16>
    %98 = vector.shape_cast %97 : vector<1x128x128xbf16> to vector<128x128xbf16>
    %cst_15 = arith.constant dense<0.000000e+00> : vector<16x128xf32>
    %99 = tpu.matmul %96, %98, %cst_15 {dimension_numbers = #tpu.dot_dimension_numbers<[1], [0], [0], [1], [0, 0, 1, 1], [], []>} : vector<16x128xbf16>, vector<128x128xbf16>, vector<16x128xf32> -> vector<16x128xf32>
    %c0_16 = arith.constant 0 : index
    %c0_17 = arith.constant 0 : index
    %c0_18 = arith.constant 0 : index
    %100 = vector.load %arg4[%c0_16, %c0_17, %c0_18] : memref<2x1x128xf32, #tpu.memory_space<vmem>>, vector<1x1x128xf32>
    %101 = vector.shape_cast %100 : vector<1x1x128xf32> to vector<1x128xf32>
    %102 = vector.broadcast %101 : vector<1x128xf32> to vector<16x128xf32>
    %103 = arith.addf %99, %102 : vector<16x128xf32>
    %104 = arith.addf %0, %103 : vector<16x128xf32>
    %c0_19 = arith.constant 0 : index
    %c0_20 = arith.constant 0 : index
    %c0_21 = arith.constant 0 : index
    %105 = vector.load %arg9[%c0_19, %c0_20, %c0_21] : memref<2x1x128xf32, #tpu.memory_space<vmem>>, vector<1x1x128xf32>
    %106 = vector.shape_cast %105 : vector<1x1x128xf32> to vector<1x128xf32>
    %c0_22 = arith.constant 0 : index
    %c0_23 = arith.constant 0 : index
    %c0_24 = arith.constant 0 : index
    %107 = vector.load %arg10[%c0_22, %c0_23, %c0_24] : memref<2x1x128xf32, #tpu.memory_space<vmem>>, vector<1x1x128xf32>
    %108 = vector.shape_cast %107 : vector<1x1x128xf32> to vector<1x128xf32>
    %cst_25 = arith.constant dense<0.000000e+00> : vector<16xf32>
    %109 = vector.multi_reduction <add>, %104, %cst_25 [1] : vector<16x128xf32> to vector<16xf32>
    %110 = vector.shape_cast %109 : vector<16xf32> to vector<16x1xf32>
    %cst_26 = arith.constant 1.280000e+02 : f32
    %111 = vector.broadcast %cst_26 : f32 to vector<16x1xf32>
    %112 = arith.divf %110, %111 : vector<16x1xf32>
    %113 = vector.broadcast %112 : vector<16x1xf32> to vector<16x128xf32>
    %114 = arith.subf %104, %113 : vector<16x128xf32>
    %115 = arith.mulf %114, %114 : vector<16x128xf32>
    %cst_27 = arith.constant dense<0.000000e+00> : vector<16xf32>
    %116 = vector.multi_reduction <add>, %115, %cst_27 [1] : vector<16x128xf32> to vector<16xf32>
    %117 = vector.shape_cast %116 : vector<16xf32> to vector<16x1xf32>
    %cst_28 = arith.constant 1.280000e+02 : f32
    %118 = vector.broadcast %cst_28 : f32 to vector<16x1xf32>
    %119 = arith.divf %117, %118 : vector<16x1xf32>
    %120 = vector.broadcast %112 : vector<16x1xf32> to vector<16x128xf32>
    %121 = arith.subf %104, %120 : vector<16x128xf32>
    %cst_29 = arith.constant 9.99999974E-6 : f32
    %122 = vector.broadcast %cst_29 : f32 to vector<16x1xf32>
    %123 = arith.addf %119, %122 : vector<16x1xf32>
    %124 = math.rsqrt %123 : vector<16x1xf32>
    %125 = vector.broadcast %124 : vector<16x1xf32> to vector<16x128xf32>
    %126 = arith.mulf %121, %125 : vector<16x128xf32>
    %127 = vector.broadcast %106 : vector<1x128xf32> to vector<16x128xf32>
    %128 = arith.mulf %126, %127 : vector<16x128xf32>
    %129 = vector.broadcast %108 : vector<1x128xf32> to vector<16x128xf32>
    %130 = arith.addf %128, %129 : vector<16x128xf32>
    %131 = arith.truncf %130 : vector<16x128xf32> to vector<16x128xbf16>
    %c0_30 = arith.constant 0 : index
    %c0_31 = arith.constant 0 : index
    %c0_32 = arith.constant 0 : index
    %132 = vector.load %arg5[%c0_30, %c0_31, %c0_32] : memref<2x128x2048xbf16, #tpu.memory_space<vmem>>, vector<1x128x2048xbf16>
    %133 = vector.shape_cast %132 : vector<1x128x2048xbf16> to vector<128x2048xbf16>
    %cst_33 = arith.constant dense<0.000000e+00> : vector<16x2048xf32>
    %134 = tpu.matmul %131, %133, %cst_33 {dimension_numbers = #tpu.dot_dimension_numbers<[1], [0], [0], [1], [0, 0, 1, 1], [], []>} : vector<16x128xbf16>, vector<128x2048xbf16>, vector<16x2048xf32> -> vector<16x2048xf32>
    %c0_34 = arith.constant 0 : index
    %c0_35 = arith.constant 0 : index
    %c0_36 = arith.constant 0 : index
    %135 = vector.load %arg6[%c0_34, %c0_35, %c0_36] : memref<2x1x2048xf32, #tpu.memory_space<vmem>>, vector<1x1x2048xf32>
    %136 = vector.shape_cast %135 : vector<1x1x2048xf32> to vector<1x2048xf32>
    %137 = vector.broadcast %136 : vector<1x2048xf32> to vector<16x2048xf32>
    %138 = arith.addf %134, %137 : vector<16x2048xf32>
    %cst_37 = arith.constant 0.000000e+00 : f32
    %139 = vector.broadcast %cst_37 : f32 to vector<16x2048xf32>
    %140 = arith.maximumf %138, %139 : vector<16x2048xf32>
    %141 = arith.truncf %140 : vector<16x2048xf32> to vector<16x2048xbf16>
    %c0_38 = arith.constant 0 : index
    %c0_39 = arith.constant 0 : index
    %c0_40 = arith.constant 0 : index
    %142 = vector.load %arg7[%c0_38, %c0_39, %c0_40] : memref<2x2048x128xbf16, #tpu.memory_space<vmem>>, vector<1x2048x128xbf16>
    %143 = vector.shape_cast %142 : vector<1x2048x128xbf16> to vector<2048x128xbf16>
    %cst_41 = arith.constant dense<0.000000e+00> : vector<16x128xf32>
    %144 = tpu.matmul %141, %143, %cst_41 {dimension_numbers = #tpu.dot_dimension_numbers<[1], [0], [0], [1], [0, 0, 1, 1], [], []>} : vector<16x2048xbf16>, vector<2048x128xbf16>, vector<16x128xf32> -> vector<16x128xf32>
    %c0_42 = arith.constant 0 : index
    %c0_43 = arith.constant 0 : index
    %c0_44 = arith.constant 0 : index
    %145 = vector.load %arg8[%c0_42, %c0_43, %c0_44] : memref<2x1x128xf32, #tpu.memory_space<vmem>>, vector<1x1x128xf32>
    %146 = vector.shape_cast %145 : vector<1x1x128xf32> to vector<1x128xf32>
    %147 = vector.broadcast %146 : vector<1x128xf32> to vector<16x128xf32>
    %148 = arith.addf %144, %147 : vector<16x128xf32>
    %149 = arith.addf %130, %148 : vector<16x128xf32>
    %c0_45 = arith.constant 0 : index
    %c0_46 = arith.constant 0 : index
    %c0_47 = arith.constant 0 : index
    %150 = vector.load %arg11[%c0_45, %c0_46, %c0_47] : memref<2x1x128xf32, #tpu.memory_space<vmem>>, vector<1x1x128xf32>
    %151 = vector.shape_cast %150 : vector<1x1x128xf32> to vector<1x128xf32>
    %c0_48 = arith.constant 0 : index
    %c0_49 = arith.constant 0 : index
    %c0_50 = arith.constant 0 : index
    %152 = vector.load %arg12[%c0_48, %c0_49, %c0_50] : memref<2x1x128xf32, #tpu.memory_space<vmem>>, vector<1x1x128xf32>
    %153 = vector.shape_cast %152 : vector<1x1x128xf32> to vector<1x128xf32>
    %cst_51 = arith.constant dense<0.000000e+00> : vector<16xf32>
    %154 = vector.multi_reduction <add>, %149, %cst_51 [1] : vector<16x128xf32> to vector<16xf32>
    %155 = vector.shape_cast %154 : vector<16xf32> to vector<16x1xf32>
    %cst_52 = arith.constant 1.280000e+02 : f32
    %156 = vector.broadcast %cst_52 : f32 to vector<16x1xf32>
    %157 = arith.divf %155, %156 : vector<16x1xf32>
    %158 = vector.broadcast %157 : vector<16x1xf32> to vector<16x128xf32>
    %159 = arith.subf %149, %158 : vector<16x128xf32>
    %160 = arith.mulf %159, %159 : vector<16x128xf32>
    %cst_53 = arith.constant dense<0.000000e+00> : vector<16xf32>
    %161 = vector.multi_reduction <add>, %160, %cst_53 [1] : vector<16x128xf32> to vector<16xf32>
    %162 = vector.shape_cast %161 : vector<16xf32> to vector<16x1xf32>
    %cst_54 = arith.constant 1.280000e+02 : f32
    %163 = vector.broadcast %cst_54 : f32 to vector<16x1xf32>
    %164 = arith.divf %162, %163 : vector<16x1xf32>
    %165 = vector.broadcast %157 : vector<16x1xf32> to vector<16x128xf32>
    %166 = arith.subf %149, %165 : vector<16x128xf32>
    %cst_55 = arith.constant 9.99999974E-6 : f32
    %167 = vector.broadcast %cst_55 : f32 to vector<16x1xf32>
    %168 = arith.addf %164, %167 : vector<16x1xf32>
    %169 = math.rsqrt %168 : vector<16x1xf32>
    %170 = vector.broadcast %169 : vector<16x1xf32> to vector<16x128xf32>
    %171 = arith.mulf %166, %170 : vector<16x128xf32>
    %172 = vector.broadcast %151 : vector<1x128xf32> to vector<16x128xf32>
    %173 = arith.mulf %171, %172 : vector<16x128xf32>
    %174 = vector.broadcast %153 : vector<1x128xf32> to vector<16x128xf32>
    %175 = arith.addf %173, %174 : vector<16x128xf32>
    %176 = arith.truncf %175 : vector<16x128xf32> to vector<16x128xbf16>
    %c1 = arith.constant 1 : index
    %c0_56 = arith.constant 0 : index
    %c0_57 = arith.constant 0 : index
    %177 = vector.load %arg1[%c1, %c0_56, %c0_57] : memref<2x128x384xbf16, #tpu.memory_space<vmem>>, vector<1x128x384xbf16>
    %178 = vector.shape_cast %177 : vector<1x128x384xbf16> to vector<128x384xbf16>
    %cst_58 = arith.constant dense<0.000000e+00> : vector<16x384xf32>
    %179 = tpu.matmul %176, %178, %cst_58 {dimension_numbers = #tpu.dot_dimension_numbers<[1], [0], [0], [1], [0, 0, 1, 1], [], []>} : vector<16x128xbf16>, vector<128x384xbf16>, vector<16x384xf32> -> vector<16x384xf32>
    %c1_59 = arith.constant 1 : index
    %c0_60 = arith.constant 0 : index
    %c0_61 = arith.constant 0 : index
    %180 = vector.load %arg2[%c1_59, %c0_60, %c0_61] : memref<2x1x384xf32, #tpu.memory_space<vmem>>, vector<1x1x384xf32>
    %181 = vector.shape_cast %180 : vector<1x1x384xf32> to vector<1x384xf32>
    %182 = vector.broadcast %181 : vector<1x384xf32> to vector<16x384xf32>
    %183 = arith.addf %179, %182 : vector<16x384xf32>
    %184 = vector.extract_strided_slice %183 {offsets = [0, 0], sizes = [16, 128], strides = [1, 1]} : vector<16x384xf32> to vector<16x128xf32>
    %185 = vector.extract_strided_slice %183 {offsets = [0, 128], sizes = [16, 128], strides = [1, 1]} : vector<16x384xf32> to vector<16x128xf32>
    %186 = vector.extract_strided_slice %183 {offsets = [0, 256], sizes = [16, 128], strides = [1, 1]} : vector<16x384xf32> to vector<16x128xf32>
    %187 = vector.extract_strided_slice %184 {offsets = [0, 0], sizes = [8, 32], strides = [1, 1]} : vector<16x128xf32> to vector<8x32xf32>
    %188 = vector.extract_strided_slice %184 {offsets = [0, 32], sizes = [8, 32], strides = [1, 1]} : vector<16x128xf32> to vector<8x32xf32>
    %189 = vector.extract_strided_slice %184 {offsets = [0, 64], sizes = [8, 32], strides = [1, 1]} : vector<16x128xf32> to vector<8x32xf32>
    %190 = vector.extract_strided_slice %184 {offsets = [0, 96], sizes = [8, 32], strides = [1, 1]} : vector<16x128xf32> to vector<8x32xf32>
    %191 = vector.extract_strided_slice %184 {offsets = [8, 0], sizes = [8, 32], strides = [1, 1]} : vector<16x128xf32> to vector<8x32xf32>
    %192 = vector.extract_strided_slice %184 {offsets = [8, 32], sizes = [8, 32], strides = [1, 1]} : vector<16x128xf32> to vector<8x32xf32>
    %193 = vector.extract_strided_slice %184 {offsets = [8, 64], sizes = [8, 32], strides = [1, 1]} : vector<16x128xf32> to vector<8x32xf32>
    %194 = vector.extract_strided_slice %184 {offsets = [8, 96], sizes = [8, 32], strides = [1, 1]} : vector<16x128xf32> to vector<8x32xf32>
    %195 = vector.shape_cast %187 : vector<8x32xf32> to vector<1x8x32xf32>
    %196 = vector.shape_cast %188 : vector<8x32xf32> to vector<1x8x32xf32>
    %197 = vector.shape_cast %189 : vector<8x32xf32> to vector<1x8x32xf32>
    %198 = vector.shape_cast %190 : vector<8x32xf32> to vector<1x8x32xf32>
    %199 = vector.shape_cast %191 : vector<8x32xf32> to vector<1x8x32xf32>
    %200 = vector.shape_cast %192 : vector<8x32xf32> to vector<1x8x32xf32>
    %201 = vector.shape_cast %193 : vector<8x32xf32> to vector<1x8x32xf32>
    %202 = vector.shape_cast %194 : vector<8x32xf32> to vector<1x8x32xf32>
    %203 = tpu.concatenate %195, %196, %197, %198, %199, %200, %201, %202 in 0 : vector<1x8x32xf32>, vector<1x8x32xf32>, vector<1x8x32xf32>, vector<1x8x32xf32>, vector<1x8x32xf32>, vector<1x8x32xf32>, vector<1x8x32xf32>, vector<1x8x32xf32> -> vector<8x8x32xf32>
    %204 = vector.extract_strided_slice %185 {offsets = [0, 0], sizes = [8, 32], strides = [1, 1]} : vector<16x128xf32> to vector<8x32xf32>
    %205 = vector.extract_strided_slice %185 {offsets = [0, 32], sizes = [8, 32], strides = [1, 1]} : vector<16x128xf32> to vector<8x32xf32>
    %206 = vector.extract_strided_slice %185 {offsets = [0, 64], sizes = [8, 32], strides = [1, 1]} : vector<16x128xf32> to vector<8x32xf32>
    %207 = vector.extract_strided_slice %185 {offsets = [0, 96], sizes = [8, 32], strides = [1, 1]} : vector<16x128xf32> to vector<8x32xf32>
    %208 = vector.extract_strided_slice %185 {offsets = [8, 0], sizes = [8, 32], strides = [1, 1]} : vector<16x128xf32> to vector<8x32xf32>
    %209 = vector.extract_strided_slice %185 {offsets = [8, 32], sizes = [8, 32], strides = [1, 1]} : vector<16x128xf32> to vector<8x32xf32>
    %210 = vector.extract_strided_slice %185 {offsets = [8, 64], sizes = [8, 32], strides = [1, 1]} : vector<16x128xf32> to vector<8x32xf32>
    %211 = vector.extract_strided_slice %185 {offsets = [8, 96], sizes = [8, 32], strides = [1, 1]} : vector<16x128xf32> to vector<8x32xf32>
    %212 = vector.shape_cast %204 : vector<8x32xf32> to vector<1x8x32xf32>
    %213 = vector.shape_cast %205 : vector<8x32xf32> to vector<1x8x32xf32>
    %214 = vector.shape_cast %206 : vector<8x32xf32> to vector<1x8x32xf32>
    %215 = vector.shape_cast %207 : vector<8x32xf32> to vector<1x8x32xf32>
    %216 = vector.shape_cast %208 : vector<8x32xf32> to vector<1x8x32xf32>
    %217 = vector.shape_cast %209 : vector<8x32xf32> to vector<1x8x32xf32>
    %218 = vector.shape_cast %210 : vector<8x32xf32> to vector<1x8x32xf32>
    %219 = vector.shape_cast %211 : vector<8x32xf32> to vector<1x8x32xf32>
    %220 = tpu.concatenate %212, %213, %214, %215, %216, %217, %218, %219 in 0 : vector<1x8x32xf32>, vector<1x8x32xf32>, vector<1x8x32xf32>, vector<1x8x32xf32>, vector<1x8x32xf32>, vector<1x8x32xf32>, vector<1x8x32xf32>, vector<1x8x32xf32> -> vector<8x8x32xf32>
    %221 = vector.extract_strided_slice %186 {offsets = [0, 0], sizes = [8, 32], strides = [1, 1]} : vector<16x128xf32> to vector<8x32xf32>
    %222 = vector.extract_strided_slice %186 {offsets = [0, 32], sizes = [8, 32], strides = [1, 1]} : vector<16x128xf32> to vector<8x32xf32>
    %223 = vector.extract_strided_slice %186 {offsets = [0, 64], sizes = [8, 32], strides = [1, 1]} : vector<16x128xf32> to vector<8x32xf32>
    %224 = vector.extract_strided_slice %186 {offsets = [0, 96], sizes = [8, 32], strides = [1, 1]} : vector<16x128xf32> to vector<8x32xf32>
    %225 = vector.extract_strided_slice %186 {offsets = [8, 0], sizes = [8, 32], strides = [1, 1]} : vector<16x128xf32> to vector<8x32xf32>
    %226 = vector.extract_strided_slice %186 {offsets = [8, 32], sizes = [8, 32], strides = [1, 1]} : vector<16x128xf32> to vector<8x32xf32>
    %227 = vector.extract_strided_slice %186 {offsets = [8, 64], sizes = [8, 32], strides = [1, 1]} : vector<16x128xf32> to vector<8x32xf32>
    %228 = vector.extract_strided_slice %186 {offsets = [8, 96], sizes = [8, 32], strides = [1, 1]} : vector<16x128xf32> to vector<8x32xf32>
    %229 = vector.shape_cast %221 : vector<8x32xf32> to vector<1x8x32xf32>
    %230 = vector.shape_cast %222 : vector<8x32xf32> to vector<1x8x32xf32>
    %231 = vector.shape_cast %223 : vector<8x32xf32> to vector<1x8x32xf32>
    %232 = vector.shape_cast %224 : vector<8x32xf32> to vector<1x8x32xf32>
    %233 = vector.shape_cast %225 : vector<8x32xf32> to vector<1x8x32xf32>
    %234 = vector.shape_cast %226 : vector<8x32xf32> to vector<1x8x32xf32>
    %235 = vector.shape_cast %227 : vector<8x32xf32> to vector<1x8x32xf32>
    %236 = vector.shape_cast %228 : vector<8x32xf32> to vector<1x8x32xf32>
    %237 = tpu.concatenate %229, %230, %231, %232, %233, %234, %235, %236 in 0 : vector<1x8x32xf32>, vector<1x8x32xf32>, vector<1x8x32xf32>, vector<1x8x32xf32>, vector<1x8x32xf32>, vector<1x8x32xf32>, vector<1x8x32xf32>, vector<1x8x32xf32> -> vector<8x8x32xf32>
    "tpu.trace_start"() <{level = 10 : i32, message = "bqd,bkd->bqk"}> : () -> ()
    %cst_62 = arith.constant dense<0.000000e+00> : vector<8x8x8xf32>
    %238 = tpu.matmul %203, %220, %cst_62 {dimension_numbers = #tpu.dot_dimension_numbers<[2], [2], [1], [1], [0, 0, 0, 1, 1, 1], [0], [0]>} : vector<8x8x32xf32>, vector<8x8x32xf32>, vector<8x8x8xf32> -> vector<8x8x8xf32>
    "tpu.trace_stop"() : () -> ()
    %cst_63 = arith.constant 0.176776692 : f32
    %239 = vector.broadcast %cst_63 : f32 to vector<8x8x8xf32>
    %240 = arith.mulf %238, %239 : vector<8x8x8xf32>
    %cst_64 = arith.constant dense<0xFF800000> : vector<8x8xf32>
    %241 = vector.multi_reduction <maximumf>, %240, %cst_64 [2] : vector<8x8x8xf32> to vector<8x8xf32>
    %242 = vector.shape_cast %241 : vector<8x8xf32> to vector<8x8x1xf32>
    %243 = vector.broadcast %242 : vector<8x8x1xf32> to vector<8x8x8xf32>
    %244 = arith.subf %240, %243 : vector<8x8x8xf32>
    %245 = math.exp %244 : vector<8x8x8xf32>
    %cst_65 = arith.constant dense<0.000000e+00> : vector<8x8xf32>
    %246 = vector.multi_reduction <add>, %245, %cst_65 [2] : vector<8x8x8xf32> to vector<8x8xf32>
    %247 = vector.shape_cast %246 : vector<8x8xf32> to vector<8x8x1xf32>
    %248 = tpu.reciprocal %247 {approx = true} : vector<8x8x1xf32> -> vector<8x8x1xf32>
    %249 = vector.broadcast %248 : vector<8x8x1xf32> to vector<8x8x8xf32>
    %250 = arith.mulf %245, %249 : vector<8x8x8xf32>
    "tpu.trace_start"() <{level = 10 : i32, message = "bqk,bkd->bqd"}> : () -> ()
    %cst_66 = arith.constant dense<0.000000e+00> : vector<8x8x32xf32>
    %251 = tpu.matmul %250, %237, %cst_66 {dimension_numbers = #tpu.dot_dimension_numbers<[2], [1], [1], [2], [0, 0, 0, 1, 1, 2], [0], [0]>} : vector<8x8x8xf32>, vector<8x8x32xf32>, vector<8x8x32xf32> -> vector<8x8x32xf32>
    "tpu.trace_stop"() : () -> ()
    %252 = vector.extract_strided_slice %251 {offsets = [0, 0, 0], sizes = [1, 8, 32], strides = [1, 1, 1]} : vector<8x8x32xf32> to vector<1x8x32xf32>
    %253 = vector.shape_cast %252 : vector<1x8x32xf32> to vector<8x32xf32>
    %254 = vector.extract_strided_slice %251 {offsets = [1, 0, 0], sizes = [1, 8, 32], strides = [1, 1, 1]} : vector<8x8x32xf32> to vector<1x8x32xf32>
    %255 = vector.shape_cast %254 : vector<1x8x32xf32> to vector<8x32xf32>
    %256 = vector.extract_strided_slice %251 {offsets = [2, 0, 0], sizes = [1, 8, 32], strides = [1, 1, 1]} : vector<8x8x32xf32> to vector<1x8x32xf32>
    %257 = vector.shape_cast %256 : vector<1x8x32xf32> to vector<8x32xf32>
    %258 = vector.extract_strided_slice %251 {offsets = [3, 0, 0], sizes = [1, 8, 32], strides = [1, 1, 1]} : vector<8x8x32xf32> to vector<1x8x32xf32>
    %259 = vector.shape_cast %258 : vector<1x8x32xf32> to vector<8x32xf32>
    %260 = tpu.concatenate %253, %255, %257, %259 in 1 : vector<8x32xf32>, vector<8x32xf32>, vector<8x32xf32>, vector<8x32xf32> -> vector<8x128xf32>
    %261 = vector.extract_strided_slice %251 {offsets = [4, 0, 0], sizes = [1, 8, 32], strides = [1, 1, 1]} : vector<8x8x32xf32> to vector<1x8x32xf32>
    %262 = vector.shape_cast %261 : vector<1x8x32xf32> to vector<8x32xf32>
    %263 = vector.extract_strided_slice %251 {offsets = [5, 0, 0], sizes = [1, 8, 32], strides = [1, 1, 1]} : vector<8x8x32xf32> to vector<1x8x32xf32>
    %264 = vector.shape_cast %263 : vector<1x8x32xf32> to vector<8x32xf32>
    %265 = vector.extract_strided_slice %251 {offsets = [6, 0, 0], sizes = [1, 8, 32], strides = [1, 1, 1]} : vector<8x8x32xf32> to vector<1x8x32xf32>
    %266 = vector.shape_cast %265 : vector<1x8x32xf32> to vector<8x32xf32>
    %267 = vector.extract_strided_slice %251 {offsets = [7, 0, 0], sizes = [1, 8, 32], strides = [1, 1, 1]} : vector<8x8x32xf32> to vector<1x8x32xf32>
    %268 = vector.shape_cast %267 : vector<1x8x32xf32> to vector<8x32xf32>
    %269 = tpu.concatenate %262, %264, %266, %268 in 1 : vector<8x32xf32>, vector<8x32xf32>, vector<8x32xf32>, vector<8x32xf32> -> vector<8x128xf32>
    %270 = tpu.concatenate %260, %269 in 0 : vector<8x128xf32>, vector<8x128xf32> -> vector<16x128xf32>
    %271 = arith.truncf %270 : vector<16x128xf32> to vector<16x128xbf16>
    %c1_67 = arith.constant 1 : index
    %c0_68 = arith.constant 0 : index
    %c0_69 = arith.constant 0 : index
    %272 = vector.load %arg3[%c1_67, %c0_68, %c0_69] : memref<2x128x128xbf16, #tpu.memory_space<vmem>>, vector<1x128x128xbf16>
    %273 = vector.shape_cast %272 : vector<1x128x128xbf16> to vector<128x128xbf16>
    %cst_70 = arith.constant dense<0.000000e+00> : vector<16x128xf32>
    %274 = tpu.matmul %271, %273, %cst_70 {dimension_numbers = #tpu.dot_dimension_numbers<[1], [0], [0], [1], [0, 0, 1, 1], [], []>} : vector<16x128xbf16>, vector<128x128xbf16>, vector<16x128xf32> -> vector<16x128xf32>
    %c1_71 = arith.constant 1 : index
    %c0_72 = arith.constant 0 : index
    %c0_73 = arith.constant 0 : index
    %275 = vector.load %arg4[%c1_71, %c0_72, %c0_73] : memref<2x1x128xf32, #tpu.memory_space<vmem>>, vector<1x1x128xf32>
    %276 = vector.shape_cast %275 : vector<1x1x128xf32> to vector<1x128xf32>
    %277 = vector.broadcast %276 : vector<1x128xf32> to vector<16x128xf32>
    %278 = arith.addf %274, %277 : vector<16x128xf32>
    %279 = arith.addf %175, %278 : vector<16x128xf32>
    %c1_74 = arith.constant 1 : index
    %c0_75 = arith.constant 0 : index
    %c0_76 = arith.constant 0 : index
    %280 = vector.load %arg9[%c1_74, %c0_75, %c0_76] : memref<2x1x128xf32, #tpu.memory_space<vmem>>, vector<1x1x128xf32>
    %281 = vector.shape_cast %280 : vector<1x1x128xf32> to vector<1x128xf32>
    %c1_77 = arith.constant 1 : index
    %c0_78 = arith.constant 0 : index
    %c0_79 = arith.constant 0 : index
    %282 = vector.load %arg10[%c1_77, %c0_78, %c0_79] : memref<2x1x128xf32, #tpu.memory_space<vmem>>, vector<1x1x128xf32>
    %283 = vector.shape_cast %282 : vector<1x1x128xf32> to vector<1x128xf32>
    %cst_80 = arith.constant dense<0.000000e+00> : vector<16xf32>
    %284 = vector.multi_reduction <add>, %279, %cst_80 [1] : vector<16x128xf32> to vector<16xf32>
    %285 = vector.shape_cast %284 : vector<16xf32> to vector<16x1xf32>
    %cst_81 = arith.constant 1.280000e+02 : f32
    %286 = vector.broadcast %cst_81 : f32 to vector<16x1xf32>
    %287 = arith.divf %285, %286 : vector<16x1xf32>
    %288 = vector.broadcast %287 : vector<16x1xf32> to vector<16x128xf32>
    %289 = arith.subf %279, %288 : vector<16x128xf32>
    %290 = arith.mulf %289, %289 : vector<16x128xf32>
    %cst_82 = arith.constant dense<0.000000e+00> : vector<16xf32>
    %291 = vector.multi_reduction <add>, %290, %cst_82 [1] : vector<16x128xf32> to vector<16xf32>
    %292 = vector.shape_cast %291 : vector<16xf32> to vector<16x1xf32>
    %cst_83 = arith.constant 1.280000e+02 : f32
    %293 = vector.broadcast %cst_83 : f32 to vector<16x1xf32>
    %294 = arith.divf %292, %293 : vector<16x1xf32>
    %295 = vector.broadcast %287 : vector<16x1xf32> to vector<16x128xf32>
    %296 = arith.subf %279, %295 : vector<16x128xf32>
    %cst_84 = arith.constant 9.99999974E-6 : f32
    %297 = vector.broadcast %cst_84 : f32 to vector<16x1xf32>
    %298 = arith.addf %294, %297 : vector<16x1xf32>
    %299 = math.rsqrt %298 : vector<16x1xf32>
    %300 = vector.broadcast %299 : vector<16x1xf32> to vector<16x128xf32>
    %301 = arith.mulf %296, %300 : vector<16x128xf32>
    %302 = vector.broadcast %281 : vector<1x128xf32> to vector<16x128xf32>
    %303 = arith.mulf %301, %302 : vector<16x128xf32>
    %304 = vector.broadcast %283 : vector<1x128xf32> to vector<16x128xf32>
    %305 = arith.addf %303, %304 : vector<16x128xf32>
    %306 = arith.truncf %305 : vector<16x128xf32> to vector<16x128xbf16>
    %c1_85 = arith.constant 1 : index
    %c0_86 = arith.constant 0 : index
    %c0_87 = arith.constant 0 : index
    %307 = vector.load %arg5[%c1_85, %c0_86, %c0_87] : memref<2x128x2048xbf16, #tpu.memory_space<vmem>>, vector<1x128x2048xbf16>
    %308 = vector.shape_cast %307 : vector<1x128x2048xbf16> to vector<128x2048xbf16>
    %cst_88 = arith.constant dense<0.000000e+00> : vector<16x2048xf32>
    %309 = tpu.matmul %306, %308, %cst_88 {dimension_numbers = #tpu.dot_dimension_numbers<[1], [0], [0], [1], [0, 0, 1, 1], [], []>} : vector<16x128xbf16>, vector<128x2048xbf16>, vector<16x2048xf32> -> vector<16x2048xf32>
    %c1_89 = arith.constant 1 : index
    %c0_90 = arith.constant 0 : index
    %c0_91 = arith.constant 0 : index
    %310 = vector.load %arg6[%c1_89, %c0_90, %c0_91] : memref<2x1x2048xf32, #tpu.memory_space<vmem>>, vector<1x1x2048xf32>
    %311 = vector.shape_cast %310 : vector<1x1x2048xf32> to vector<1x2048xf32>
    %312 = vector.broadcast %311 : vector<1x2048xf32> to vector<16x2048xf32>
    %313 = arith.addf %309, %312 : vector<16x2048xf32>
    %cst_92 = arith.constant 0.000000e+00 : f32
    %314 = vector.broadcast %cst_92 : f32 to vector<16x2048xf32>
    %315 = arith.maximumf %313, %314 : vector<16x2048xf32>
    %316 = arith.truncf %315 : vector<16x2048xf32> to vector<16x2048xbf16>
    %c1_93 = arith.constant 1 : index
    %c0_94 = arith.constant 0 : index
    %c0_95 = arith.constant 0 : index
    %317 = vector.load %arg7[%c1_93, %c0_94, %c0_95] : memref<2x2048x128xbf16, #tpu.memory_space<vmem>>, vector<1x2048x128xbf16>
    %318 = vector.shape_cast %317 : vector<1x2048x128xbf16> to vector<2048x128xbf16>
    %cst_96 = arith.constant dense<0.000000e+00> : vector<16x128xf32>
    %319 = tpu.matmul %316, %318, %cst_96 {dimension_numbers = #tpu.dot_dimension_numbers<[1], [0], [0], [1], [0, 0, 1, 1], [], []>} : vector<16x2048xbf16>, vector<2048x128xbf16>, vector<16x128xf32> -> vector<16x128xf32>
    %c1_97 = arith.constant 1 : index
    %c0_98 = arith.constant 0 : index
    %c0_99 = arith.constant 0 : index
    %320 = vector.load %arg8[%c1_97, %c0_98, %c0_99] : memref<2x1x128xf32, #tpu.memory_space<vmem>>, vector<1x1x128xf32>
    %321 = vector.shape_cast %320 : vector<1x1x128xf32> to vector<1x128xf32>
    %322 = vector.broadcast %321 : vector<1x128xf32> to vector<16x128xf32>
    %323 = arith.addf %319, %322 : vector<16x128xf32>
    %324 = arith.addf %305, %323 : vector<16x128xf32>
    %c1_100 = arith.constant 1 : index
    %c0_101 = arith.constant 0 : index
    %c0_102 = arith.constant 0 : index
    %325 = vector.load %arg11[%c1_100, %c0_101, %c0_102] : memref<2x1x128xf32, #tpu.memory_space<vmem>>, vector<1x1x128xf32>
    %326 = vector.shape_cast %325 : vector<1x1x128xf32> to vector<1x128xf32>
    %c1_103 = arith.constant 1 : index
    %c0_104 = arith.constant 0 : index
    %c0_105 = arith.constant 0 : index
    %327 = vector.load %arg12[%c1_103, %c0_104, %c0_105] : memref<2x1x128xf32, #tpu.memory_space<vmem>>, vector<1x1x128xf32>
    %328 = vector.shape_cast %327 : vector<1x1x128xf32> to vector<1x128xf32>
    %cst_106 = arith.constant dense<0.000000e+00> : vector<16xf32>
    %329 = vector.multi_reduction <add>, %324, %cst_106 [1] : vector<16x128xf32> to vector<16xf32>
    %330 = vector.shape_cast %329 : vector<16xf32> to vector<16x1xf32>
    %cst_107 = arith.constant 1.280000e+02 : f32
    %331 = vector.broadcast %cst_107 : f32 to vector<16x1xf32>
    %332 = arith.divf %330, %331 : vector<16x1xf32>
    %333 = vector.broadcast %332 : vector<16x1xf32> to vector<16x128xf32>
    %334 = arith.subf %324, %333 : vector<16x128xf32>
    %335 = arith.mulf %334, %334 : vector<16x128xf32>
    %cst_108 = arith.constant dense<0.000000e+00> : vector<16xf32>
    %336 = vector.multi_reduction <add>, %335, %cst_108 [1] : vector<16x128xf32> to vector<16xf32>
    %337 = vector.shape_cast %336 : vector<16xf32> to vector<16x1xf32>
    %cst_109 = arith.constant 1.280000e+02 : f32
    %338 = vector.broadcast %cst_109 : f32 to vector<16x1xf32>
    %339 = arith.divf %337, %338 : vector<16x1xf32>
    %340 = vector.broadcast %332 : vector<16x1xf32> to vector<16x128xf32>
    %341 = arith.subf %324, %340 : vector<16x128xf32>
    %cst_110 = arith.constant 9.99999974E-6 : f32
    %342 = vector.broadcast %cst_110 : f32 to vector<16x1xf32>
    %343 = arith.addf %339, %342 : vector<16x1xf32>
    %344 = math.rsqrt %343 : vector<16x1xf32>
    %345 = vector.broadcast %344 : vector<16x1xf32> to vector<16x128xf32>
    %346 = arith.mulf %341, %345 : vector<16x128xf32>
    %347 = vector.broadcast %326 : vector<1x128xf32> to vector<16x128xf32>
    %348 = arith.mulf %346, %347 : vector<16x128xf32>
    %349 = vector.broadcast %328 : vector<1x128xf32> to vector<16x128xf32>
    %350 = arith.addf %348, %349 : vector<16x128xf32>
    %351 = vector.extract_strided_slice %350 {offsets = [0, 0], sizes = [8, 128], strides = [1, 1]} : vector<16x128xf32> to vector<8x128xf32>
    %cst_111 = arith.constant dense<0xFF800000> : vector<128xf32>
    %352 = vector.multi_reduction <maximumf>, %351, %cst_111 [0] : vector<8x128xf32> to vector<128xf32>
    %353 = vector.shape_cast %352 : vector<128xf32> to vector<1x128xf32>
    %354 = vector.extract_strided_slice %350 {offsets = [8, 0], sizes = [8, 128], strides = [1, 1]} : vector<16x128xf32> to vector<8x128xf32>
    %cst_112 = arith.constant dense<0xFF800000> : vector<128xf32>
    %355 = vector.multi_reduction <maximumf>, %354, %cst_112 [0] : vector<8x128xf32> to vector<128xf32>
    %356 = vector.shape_cast %355 : vector<128xf32> to vector<1x128xf32>
    %357 = tpu.concatenate %353, %356 in 0 : vector<1x128xf32>, vector<1x128xf32> -> vector<2x128xf32>
    %358 = arith.truncf %357 : vector<2x128xf32> to vector<2x128xbf16>
    %c0_113 = arith.constant 0 : index
    %c0_114 = arith.constant 0 : index
    %359 = vector.load %arg13[%c0_113, %c0_114] : memref<128x128xbf16, #tpu.memory_space<vmem>>, vector<128x128xbf16>
    %cst_115 = arith.constant dense<0.000000e+00> : vector<2x128xf32>
    %360 = tpu.matmul %358, %359, %cst_115 {dimension_numbers = #tpu.dot_dimension_numbers<[1], [0], [0], [1], [0, 0, 1, 1], [], []>} : vector<2x128xbf16>, vector<128x128xbf16>, vector<2x128xf32> -> vector<2x128xf32>
    %c0_116 = arith.constant 0 : index
    %c0_117 = arith.constant 0 : index
    %361 = vector.load %arg14[%c0_116, %c0_117] : memref<1x128xf32, #tpu.memory_space<vmem>>, vector<1x128xf32>
    %362 = vector.broadcast %361 : vector<1x128xf32> to vector<2x128xf32>
    %363 = arith.addf %360, %362 : vector<2x128xf32>
    %364 = tpu.iota {dimensions = array<i32: 1>} : vector<2x128xi32>
    %c5_i32 = arith.constant 5 : i32
    %365 = vector.broadcast %c5_i32 : i32 to vector<2x128xi32>
    %366 = arith.cmpi slt, %364, %365 : vector<2x128xi32>
    %cst_118 = arith.constant -1.000000e+30 : f32
    %367 = vector.broadcast %cst_118 : f32 to vector<2x128xf32>
    %368 = arith.select %366, %363, %367 : vector<2x128xi1>, vector<2x128xf32>
    %cst_119 = arith.constant dense<0xFF800000> : vector<2xf32>
    %369 = vector.multi_reduction <maximumf>, %368, %cst_119 [1] : vector<2x128xf32> to vector<2xf32>
    %370 = vector.shape_cast %369 : vector<2xf32> to vector<2x1xf32>
    %371 = vector.broadcast %370 : vector<2x1xf32> to vector<2x128xf32>
    %372 = arith.subf %368, %371 : vector<2x128xf32>
    %373 = math.exp %372 : vector<2x128xf32>
    %cst_120 = arith.constant dense<0.000000e+00> : vector<2xf32>
    %374 = vector.multi_reduction <add>, %373, %cst_120 [1] : vector<2x128xf32> to vector<2xf32>
    %375 = vector.shape_cast %374 : vector<2xf32> to vector<2x1xf32>
    %376 = vector.broadcast %375 : vector<2x1xf32> to vector<2x128xf32>
    %377 = arith.divf %373, %376 : vector<2x128xf32>
    %c0_121 = arith.constant 0 : index
    %c0_122 = arith.constant 0 : index
    %378 = vector.load %arg15[%c0_121, %c0_122] : memref<2x128xf32, #tpu.memory_space<vmem>>, vector<2x128xf32>
    tpu.vector_store %arg15[%c0_121, %c0_122], %377 {strides = array<i32>} : memref<2x128xf32, #tpu.memory_space<vmem>>, vector<2x128xf32>,
    return
  }
}

</mosaic_0001>

<llo_original>
// kernel: encoder_forward.1
$region0: #{encoder_forward.1}
  #allocation0 [shape = 'u32[]', space=smem, size = 0x4, offset = 0x4, fixed_abs, tag = 'smem constant byte address 0x4 - core index']
  #allocation1 [shape = 'u32[72,128]{1,0:T(1,128)}', space=vmem, size = 0x9000, scoped, tag = 'internal scratch']
  %s0 = inlined_call_operand.vmem [shape: f32[16,128], index: 0, kind: input, shape index: {}]
  %s1 = inlined_call_operand.hbm [shape: bf16[2,128,384], index: 1, kind: input, shape index: {}]
  %s2 = inlined_call_operand.vmem [shape: f32[2,1,384], index: 2, kind: input, shape index: {}]
  %s3 = inlined_call_operand.vmem [shape: bf16[2,128,128], index: 3, kind: input, shape index: {}]
  %s4 = inlined_call_operand.vmem [shape: f32[2,1,128], index: 4, kind: input, shape index: {}]
  %s5 = inlined_call_operand.hbm [shape: bf16[2,128,2048], index: 5, kind: input, shape index: {}]
  %s6 = inlined_call_operand.hbm [shape: f32[2,1,2048], index: 6, kind: input, shape index: {}]
  %s7 = inlined_call_operand.hbm [shape: bf16[2,2048,128], index: 7, kind: input, shape index: {}]
  %s8 = inlined_call_operand.vmem [shape: f32[2,1,128], index: 8, kind: input, shape index: {}]
  %s9 = inlined_call_operand.hbm [shape: f32[2,1,128], index: 9, kind: input, shape index: {}]
  %s10 = inlined_call_operand.vmem [shape: f32[2,1,128], index: 10, kind: input, shape index: {}]
  %s11 = inlined_call_operand.hbm [shape: f32[2,1,128], index: 11, kind: input, shape index: {}]
  %s12 = inlined_call_operand.vmem [shape: f32[2,1,128], index: 12, kind: input, shape index: {}]
  %s13 = inlined_call_operand.vmem [shape: bf16[128,128], index: 13, kind: input, shape index: {}]
  %s14 = inlined_call_operand.hbm [shape: f32[1,128], index: 14, kind: input, shape index: {}]
  %s15 = inlined_call_operand.hbm [shape: f32[2,128], index: 15, kind: output, shape index: {}]
  %s16 = sld [smem:[#allocation0]]
  $region98: #{encoder_forward.1} parent=0
    _
  %s18 = ssub.s32 1, %s16
  %s19 = scalar_select 0, %s18, %s16
  $region1: #{encoder_forward.1} parent=0
    #allocation2 [shape = 'u8[196608]{0}', space=vmem, size = 0x30000, scoped, tag = 'input window, operand 1, single buffered']
    #allocation3 [shape = 's32[1]{0}', space=sflag, size = 0x4, scoped, tag = 'scoped memory for encoder_forward.1']
    #allocation4 [shape = 's32[1]{0}', space=sflag, size = 0x4, scoped, tag = 'scoped memory for encoder_forward.1']
    #allocation5 [shape = 'u8[1048576]{0}', space=vmem, size = 0x100000, scoped, tag = 'input window, operand 5, single buffered']
    #allocation6 [shape = 's32[1]{0}', space=sflag, size = 0x4, scoped, tag = 'scoped memory for encoder_forward.1']
    #allocation7 [shape = 'u8[16384]{0}', space=vmem, size = 0x4000, scoped, tag = 'input window, operand 6, single buffered']
    #allocation8 [shape = 'u8[1048576]{0}', space=vmem, size = 0x100000, scoped, tag = 'input window, operand 7, single buffered']
    #allocation9 [shape = 's32[1]{0}', space=sflag, size = 0x4, scoped, tag = 'scoped memory for encoder_forward.1']
    #allocation10 [shape = 'u8[1024]{0}', space=vmem, size = 0x400, scoped, tag = 'input window, operand 9, single buffered']
    #allocation11 [shape = 'u8[1024]{0}', space=vmem, size = 0x400, scoped, tag = 'input window, operand 11, single buffered']
    #allocation12 [shape = 's32[1]{0}', space=sflag, size = 0x4, scoped, tag = 'scoped memory for encoder_forward.1']
    #allocation13 [shape = 'u8[512]{0}', space=vmem, size = 0x400, scoped, tag = 'input window, operand 14, single buffered']
    #allocation14 [shape = 'u8[1024]{0}', space=vmem, size = 0x400, scoped, tag = 'output window, operand 0, single buffered']
    %20 = vsyncpa [#allocation3], 0
    %21 = vsyncpa [#allocation6], 0
    %22 = vsyncpa [#allocation9], 0
    %23 = vsyncpa [#allocation12], 0
    %24 = vsyncpa [#allocation4], 0
    // Predicated region
    $region2: #{encoder_forward.1} parent=1 // pred_check
      _
    $region3: #{encoder_forward.1} parent=1 // pred_check_branch
      %26 = sbr.rel (0) target = $region5
    $region4: #{encoder_forward.1} parent=1 // pred_region
      _
    $region5: #{encoder_forward.1} parent=1 // pred_fallthru
      _
    // Predicated region
    $region6: #{encoder_forward.1} parent=1 // pred_check
      _
    $region7: #{encoder_forward.1} parent=1 // pred_check_branch
      %28 = sbr.rel (0) target = $region9
    $region8: #{encoder_forward.1} parent=1 // pred_region
      %30 = vsyncadd [#allocation3], 0
      %s31 = sshll.u32 %s1, 4
      %s32 = int_to_ptr.hbm [resolvable:$true] %s31
      %s33 = sshll.u32 [#allocation2], 4
      %s34 = int_to_ptr.vmem [resolvable:$true] %s33
      %39 = dma.hbm_to_vmem [thread:$0]  %s32, 6144, %s34, [#allocation3], 192, 192, 12
    $region9: #{encoder_forward.1} parent=1 // pred_fallthru
      _
    // Predicated region
    $region10: #{encoder_forward.1} parent=1 // pred_check
      _
    $region11: #{encoder_forward.1} parent=1 // pred_check_branch
      %41 = sbr.rel (0) target = $region13
    $region12: #{encoder_forward.1} parent=1 // pred_region
      _
    $region13: #{encoder_forward.1} parent=1 // pred_fallthru
      _
    // Predicated region
    $region14: #{encoder_forward.1} parent=1 // pred_check
      _
    $region15: #{encoder_forward.1} parent=1 // pred_check_branch
      %43 = sbr.rel (0) target = $region17
    $region16: #{encoder_forward.1} parent=1 // pred_region
      _
    $region17: #{encoder_forward.1} parent=1 // pred_fallthru
      _
    // Predicated region
    $region18: #{encoder_forward.1} parent=1 // pred_check
      _
    $region19: #{encoder_forward.1} parent=1 // pred_check_branch
      %45 = sbr.rel (0) target = $region21
    $region20: #{encoder_forward.1} parent=1 // pred_region
      _
    $region21: #{encoder_forward.1} parent=1 // pred_fallthru
      _
    // Predicated region
    $region22: #{encoder_forward.1} parent=1 // pred_check
      _
    $region23: #{encoder_forward.1} parent=1 // pred_check_branch
      %47 = sbr.rel (0) target = $region25
    $region24: #{encoder_forward.1} parent=1 // pred_region
      %49 = vsyncadd [#allocation6], 0
      %s50 = sshll.u32 %s5, 4
      %s51 = int_to_ptr.hbm [resolvable:$true] %s50
      %s52 = sshll.u32 [#allocation5], 4
      %s53 = int_to_ptr.vmem [resolvable:$true] %s52
      %58 = dma.hbm_to_vmem [thread:$0]  %s51, 32768, %s53, [#allocation6], 1024, 1024, 64
    $region25: #{encoder_forward.1} parent=1 // pred_fallthru
      _
    // Predicated region
    $region26: #{encoder_forward.1} parent=1 // pred_check
      _
    $region27: #{encoder_forward.1} parent=1 // pred_check_branch
      %60 = sbr.rel (0) target = $region29
    $region28: #{encoder_forward.1} parent=1 // pred_region
      %62 = vsyncadd [#allocation6], 0
      %s63 = sshll.u32 %s6, 4
      %s64 = int_to_ptr.hbm [resolvable:$true] %s63
      %s65 = sshll.u32 [#allocation7], 4
      %s66 = int_to_ptr.vmem [resolvable:$true] %s65
      %71 = dma.hbm_to_vmem [thread:$0]  %s64, 512, %s66, [#allocation6], 256, 256, 16
    $region29: #{encoder_forward.1} parent=1 // pred_fallthru
      _
    // Predicated region
    $region30: #{encoder_forward.1} parent=1 // pred_check
      _
    $region31: #{encoder_forward.1} parent=1 // pred_check_branch
      %73 = sbr.rel (0) target = $region33
    $region32: #{encoder_forward.1} parent=1 // pred_region
      %75 = vsyncadd [#allocation9], 0
      %s76 = sshll.u32 %s7, 4
      %s77 = int_to_ptr.hbm [resolvable:$true] %s76
      %s78 = sshll.u32 [#allocation8], 4
      %s79 = int_to_ptr.vmem [resolvable:$true] %s78
      %84 = dma.hbm_to_vmem [thread:$0]  %s77, 32768, %s79, [#allocation9], 64, 64, 4
    $region33: #{encoder_forward.1} parent=1 // pred_fallthru
      _
    // Predicated region
    $region34: #{encoder_forward.1} parent=1 // pred_check
      _
    $region35: #{encoder_forward.1} parent=1 // pred_check_branch
      %86 = sbr.rel (0) target = $region37
    $region36: #{encoder_forward.1} parent=1 // pred_region
      _
    $region37: #{encoder_forward.1} parent=1 // pred_fallthru
      _
    // Predicated region
    $region38: #{encoder_forward.1} parent=1 // pred_check
      _
    $region39: #{encoder_forward.1} parent=1 // pred_check_branch
      %88 = sbr.rel (0) target = $region41
    $region40: #{encoder_forward.1} parent=1 // pred_region
      %90 = vsyncadd [#allocation9], 0
      %s91 = sshll.u32 %s9, 4
      %s92 = int_to_ptr.hbm [resolvable:$true] %s91
      %s93 = sshll.u32 [#allocation10], 4
      %s94 = int_to_ptr.vmem [resolvable:$true] %s93
      %99 = dma.hbm_to_vmem [thread:$0]  %s92, 32, %s94, [#allocation9], 16, 16, 1
    $region41: #{encoder_forward.1} parent=1 // pred_fallthru
      _
    // Predicated region
    $region42: #{encoder_forward.1} parent=1 // pred_check
      _
    $region43: #{encoder_forward.1} parent=1 // pred_check_branch
      %101 = sbr.rel (0) target = $region45
    $region44: #{encoder_forward.1} parent=1 // pred_region
      _
    $region45: #{encoder_forward.1} parent=1 // pred_fallthru
      _
    // Predicated region
    $region46: #{encoder_forward.1} parent=1 // pred_check
      _
    $region47: #{encoder_forward.1} parent=1 // pred_check_branch
      %103 = sbr.rel (0) target = $region49
    $region48: #{encoder_forward.1} parent=1 // pred_region
      %105 = vsyncadd [#allocation12], 0
      %s106 = sshll.u32 %s11, 4
      %s107 = int_to_ptr.hbm [resolvable:$true] %s106
      %s108 = sshll.u32 [#allocation11], 4
      %s109 = int_to_ptr.vmem [resolvable:$true] %s108
      %114 = dma.hbm_to_vmem [thread:$0]  %s107, 32, %s109, [#allocation12], 16, 16, 1
    $region49: #{encoder_forward.1} parent=1 // pred_fallthru
      _
    // Predicated region
    $region50: #{encoder_forward.1} parent=1 // pred_check
      _
    $region51: #{encoder_forward.1} parent=1 // pred_check_branch
      %116 = sbr.rel (0) target = $region53
    $region52: #{encoder_forward.1} parent=1 // pred_region
      _
    $region53: #{encoder_forward.1} parent=1 // pred_fallthru
      _
    // Predicated region
    $region54: #{encoder_forward.1} parent=1 // pred_check
      _
    $region55: #{encoder_forward.1} parent=1 // pred_check_branch
      %118 = sbr.rel (0) target = $region57
    $region56: #{encoder_forward.1} parent=1 // pred_region
      _
    $region57: #{encoder_forward.1} parent=1 // pred_fallthru
      _
    // Predicated region
    $region58: #{encoder_forward.1} parent=1 // pred_check
      _
    $region59: #{encoder_forward.1} parent=1 // pred_check_branch
      %120 = sbr.rel (0) target = $region61
    $region60: #{encoder_forward.1} parent=1 // pred_region
      %122 = vsyncadd [#allocation12], 0
      %s124 = sshll.u32 %s14, 4
      %s125 = int_to_ptr.hbm [resolvable:$true] %s124
      %s126 = sshll.u32 [#allocation13], 4
      %s127 = int_to_ptr.vmem [resolvable:$true] %s126
      %129 = dma.hbm_to_vmem [thread:$0]  %s125, 16, %s127, [#allocation12]
    $region61: #{encoder_forward.1} parent=1 // pred_fallthru
      _
    // Predicated region
    $region62: #{encoder_forward.1} parent=1 // pred_check
      _
    $region63: #{encoder_forward.1} parent=1 // pred_check_branch
      %131 = sbr.rel (0) target = $region65
    $region64: #{encoder_forward.1} parent=1 // pred_region
      %133 = dma.done [#allocation3], 6144
    $region65: #{encoder_forward.1} parent=1 // pred_fallthru
      _
    // Predicated region
    $region66: #{encoder_forward.1} parent=1 // pred_check
      _
    $region67: #{encoder_forward.1} parent=1 // pred_check_branch
      %135 = sbr.rel (0) target = $region69
    $region68: #{encoder_forward.1} parent=1 // pred_region
      %137 = dma.done [#allocation6], 32768
    $region69: #{encoder_forward.1} parent=1 // pred_fallthru
      _
    // Predicated region
    $region70: #{encoder_forward.1} parent=1 // pred_check
      _
    $region71: #{encoder_forward.1} parent=1 // pred_check_branch
      %139 = sbr.rel (0) target = $region73
    $region72: #{encoder_forward.1} parent=1 // pred_region
      %141 = dma.done [#allocation6], 512
    $region73: #{encoder_forward.1} parent=1 // pred_fallthru
      _
    // Predicated region
    $region74: #{encoder_forward.1} parent=1 // pred_check
      _
    $region75: #{encoder_forward.1} parent=1 // pred_check_branch
      %143 = sbr.rel (0) target = $region77
    $region76: #{encoder_forward.1} parent=1 // pred_region
      %145 = dma.done [#allocation9], 32768
    $region77: #{encoder_forward.1} parent=1 // pred_fallthru
      _
    // Predicated region
    $region78: #{encoder_forward.1} parent=1 // pred_check
      _
    $region79: #{encoder_forward.1} parent=1 // pred_check_branch
      %147 = sbr.rel (0) target = $region81
    $region80: #{encoder_forward.1} parent=1 // pred_region
      %149 = dma.done [#allocation9], 32
    $region81: #{encoder_forward.1} parent=1 // pred_fallthru
      _
    // Predicated region
    $region82: #{encoder_forward.1} parent=1 // pred_check
      _
    $region83: #{encoder_forward.1} parent=1 // pred_check_branch
      %151 = sbr.rel (0) target = $region85
    $region84: #{encoder_forward.1} parent=1 // pred_region
      %153 = dma.done [#allocation12], 32
    $region85: #{encoder_forward.1} parent=1 // pred_fallthru
      _
    // Predicated region
    $region86: #{encoder_forward.1} parent=1 // pred_check
      _
    $region87: #{encoder_forward.1} parent=1 // pred_check_branch
      %155 = sbr.rel (0) target = $region89
    $region88: #{encoder_forward.1} parent=1 // pred_region
      %157 = dma.done [#allocation12], 16
    $region89: #{encoder_forward.1} parent=1 // pred_fallthru
      _
    %v158 = vld [vmem:[%s0] sm:$0xff]
    %v159 = vld [vmem:[%s0 + $0x8] sm:$0xff]
    %v160 = vpack.c.bf16 %v159, %v158
    %v161 = vld [vmem:[#allocation2] sm:$0xff]
    %v162 = vld [vmem:[#allocation2 + $0x8] sm:$0xf]
    %v163 = vld [vmem:[#allocation2 + $0xc] sm:$0xff]
    %v164 = vld [vmem:[#allocation2 + $0x14] sm:$0xf]
    %v165 = vld [vmem:[#allocation2 + $0x18] sm:$0xff]
    %v166 = vld [vmem:[#allocation2 + $0x20] sm:$0xf]
    %v167 = vld [vmem:[#allocation2 + $0x24] sm:$0xff]
    %v168 = vld [vmem:[#allocation2 + $0x2c] sm:$0xf]
    %v169 = vld [vmem:[#allocation2 + $0x30] sm:$0xff]
    %v170 = vld [vmem:[#allocation2 + $0x38] sm:$0xf]
    %v171 = vld [vmem:[#allocation2 + $0x3c] sm:$0xff]
    %v172 = vld [vmem:[#allocation2 + $0x44] sm:$0xf]
    %v173 = vld [vmem:[#allocation2 + $0x48] sm:$0xff]
    %v174 = vld [vmem:[#allocation2 + $0x50] sm:$0xf]
    %v175 = vld [vmem:[#allocation2 + $0x54] sm:$0xff]
    %v176 = vld [vmem:[#allocation2 + $0x5c] sm:$0xf]
    %v177 = vld [vmem:[#allocation2 + $0x60] sm:$0xff]
    %v178 = vld [vmem:[#allocation2 + $0x68] sm:$0xf]
    %v179 = vld [vmem:[#allocation2 + $0x6c] sm:$0xff]
    %v180 = vld [vmem:[#allocation2 + $0x74] sm:$0xf]
    %v181 = vld [vmem:[#allocation2 + $0x78] sm:$0xff]
    %v182 = vld [vmem:[#allocation2 + $0x80] sm:$0xf]
    %v183 = vld [vmem:[#allocation2 + $0x84] sm:$0xff]
    %v184 = vld [vmem:[#allocation2 + $0x8c] sm:$0xf]
    %v185 = vld [vmem:[#allocation2 + $0x90] sm:$0xff]
    %v186 = vld [vmem:[#allocation2 + $0x98] sm:$0xf]
    %v187 = vld [vmem:[#allocation2 + $0x9c] sm:$0xff]
    %v188 = vld [vmem:[#allocation2 + $0xa4] sm:$0xf]
    %v189 = vld [vmem:[#allocation2 + $0xa8] sm:$0xff]
    %v190 = vld [vmem:[#allocation2 + $0xb0] sm:$0xf]
    %v191 = vld [vmem:[#allocation2 + $0xb4] sm:$0xff]
    %v192 = vld [vmem:[#allocation2 + $0xbc] sm:$0xf]
    %v193 = vld [vmem:[%s2] sm:$0x7]
    %v195 = vperm.slane %v193, 0
    %v196 = vperm.slane %v193, 1
    %v197 = vperm.slane %v193, 2
    %v233 = vunpack.c.l.b16 %v161
    %v234 = vunpack.c.h.b16 %v161
    %v235 = vunpack.c.l.b16 %v162
    %v236 = vunpack.c.l.b16 %v163
    %v237 = vunpack.c.h.b16 %v163
    %v238 = vunpack.c.l.b16 %v164
    %v239 = vunpack.c.l.b16 %v165
    %v240 = vunpack.c.h.b16 %v165
    %v241 = vunpack.c.l.b16 %v166
    %v242 = vunpack.c.l.b16 %v167
    %v243 = vunpack.c.h.b16 %v167
    %v244 = vunpack.c.l.b16 %v168
    %v245 = vunpack.c.l.b16 %v169
    %v246 = vunpack.c.h.b16 %v169
    %v247 = vunpack.c.l.b16 %v170
    %v248 = vunpack.c.l.b16 %v171
    %v249 = vunpack.c.h.b16 %v171
    %v250 = vunpack.c.l.b16 %v172
    %v251 = vunpack.c.l.b16 %v173
    %v252 = vunpack.c.h.b16 %v173
    %v253 = vunpack.c.l.b16 %v174
    %v254 = vunpack.c.l.b16 %v175
    %v255 = vunpack.c.h.b16 %v175
    %v256 = vunpack.c.l.b16 %v176
    %v257 = vunpack.c.l.b16 %v177
    %v258 = vunpack.c.h.b16 %v177
    %v259 = vunpack.c.l.b16 %v178
    %v260 = vunpack.c.l.b16 %v179
    %v261 = vunpack.c.h.b16 %v179
    %v262 = vunpack.c.l.b16 %v180
    %v263 = vunpack.c.l.b16 %v181
    %v264 = vunpack.c.h.b16 %v181
    %v265 = vunpack.c.l.b16 %v182
    %v266 = vunpack.c.l.b16 %v183
    %v267 = vunpack.c.h.b16 %v183
    %v268 = vunpack.c.l.b16 %v184
    %v269 = vunpack.c.l.b16 %v185
    %v270 = vunpack.c.h.b16 %v185
    %v271 = vunpack.c.l.b16 %v186
    %v272 = vunpack.c.l.b16 %v187
    %v273 = vunpack.c.h.b16 %v187
    %v274 = vunpack.c.l.b16 %v188
    %v275 = vunpack.c.l.b16 %v189
    %v276 = vunpack.c.h.b16 %v189
    %v277 = vunpack.c.l.b16 %v190
    %v278 = vunpack.c.l.b16 %v191
    %v279 = vunpack.c.h.b16 %v191
    %v280 = vunpack.c.l.b16 %v192
    %v281 = vpack.c.b16 %v236, %v233
    %v282 = vpack.c.b16 %v237, %v234
    %v283 = vpack.c.b16 %v238, %v235
    %v284 = vpack.c.b16 %v242, %v239
    %v285 = vpack.c.b16 %v243, %v240
    %v286 = vpack.c.b16 %v244, %v241
    %v287 = vpack.c.b16 %v248, %v245
    %v288 = vpack.c.b16 %v249, %v246
    %v289 = vpack.c.b16 %v250, %v247
    %v290 = vpack.c.b16 %v254, %v251
    %v291 = vpack.c.b16 %v255, %v252
    %v292 = vpack.c.b16 %v256, %v253
    %v293 = vpack.c.b16 %v260, %v257
    %v294 = vpack.c.b16 %v261, %v258
    %v295 = vpack.c.b16 %v262, %v259
    %v296 = vpack.c.b16 %v266, %v263
    %v297 = vpack.c.b16 %v267, %v264
    %v298 = vpack.c.b16 %v268, %v265
    %v299 = vpack.c.b16 %v272, %v269
    %v300 = vpack.c.b16 %v273, %v270
    %v301 = vpack.c.b16 %v274, %v271
    %v302 = vpack.c.b16 %v278, %v275
    %v303 = vpack.c.b16 %v279, %v276
    %v304 = vpack.c.b16 %v280, %v277
    %329 = vmatpush.bf16.msra.mxu0 %v302
    %330 = vmatpush.bf16.msra.mxu0 %v299
    %331 = vmatpush.bf16.msra.mxu0 %v296
    %332 = vmatpush.bf16.msra.mxu0 %v293
    %333 = vmatpush.bf16.msra.mxu0 %v290
    %334 = vmatpush.bf16.msra.mxu0 %v287
    %335 = vmatpush.bf16.msra.mxu0 %v284
    %336 = vmatpush.bf16.msra.mxu0 %v281
    %337 = vmatmul.bf16.gmra.mxu0 %v160
    %v338 = vpop.f32.mrf.mxu0
    %v339 = vadd.f32 %v195, %v338
    %v340 = vpop.f32.mrf.mxu0
    %v341 = vadd.f32 %v195, %v340
    %342 = vdwg.mxu0
    %343 = vmatpush.bf16.msra.mxu0 %v303
    %344 = vmatpush.bf16.msra.mxu0 %v300
    %345 = vmatpush.bf16.msra.mxu0 %v297
    %346 = vmatpush.bf16.msra.mxu0 %v294
    %347 = vmatpush.bf16.msra.mxu0 %v291
    %348 = vmatpush.bf16.msra.mxu0 %v288
    %349 = vmatpush.bf16.msra.mxu0 %v285
    %350 = vmatpush.bf16.msra.mxu0 %v282
    %351 = vmatmul.bf16.gmra.mxu0 %v160
    %v352 = vpop.f32.mrf.mxu0
    %v353 = vadd.f32 %v196, %v352
    %v354 = vpop.f32.mrf.mxu0
    %v355 = vadd.f32 %v196, %v354
    %356 = vdwg.mxu0
    %357 = vmatpush.bf16.msra.mxu0 %v304
    %358 = vmatpush.bf16.msra.mxu0 %v301
    %359 = vmatpush.bf16.msra.mxu0 %v298
    %360 = vmatpush.bf16.msra.mxu0 %v295
    %361 = vmatpush.bf16.msra.mxu0 %v292
    %362 = vmatpush.bf16.msra.mxu0 %v289
    %363 = vmatpush.bf16.msra.mxu0 %v286
    %364 = vmatpush.bf16.msra.mxu0 %v283
    %365 = vmatmul.bf16.gmra.mxu0 %v160
    %v366 = vpop.f32.mrf.mxu0
    %v367 = vadd.f32 %v197, %v366
    %v368 = vpop.f32.mrf.mxu0
    %v369 = vadd.f32 %v197, %v368
    %370 = vdwg.mxu0
    %372 = vrot.lane.b32.xlu0 %v339, 96
    %v373 = vpop.permute.xlu0 %372
    %374 = vrot.lane.b32.xlu0 %v339, 64
    %v375 = vpop.permute.xlu0 %374
    %376 = vrot.lane.b32.xlu0 %v339, 32
    %v377 = vpop.permute.xlu0 %376
    %379 = vrot.lane.b32.xlu0 %v341, 96
    %v380 = vpop.permute.xlu0 %379
    %381 = vrot.lane.b32.xlu0 %v341, 64
    %v382 = vpop.permute.xlu0 %381
    %383 = vrot.lane.b32.xlu0 %v341, 32
    %v384 = vpop.permute.xlu0 %383
    %386 = vrot.lane.b32.xlu0 %v353, 96
    %v387 = vpop.permute.xlu0 %386
    %388 = vrot.lane.b32.xlu0 %v353, 64
    %v389 = vpop.permute.xlu0 %388
    %390 = vrot.lane.b32.xlu0 %v353, 32
    %v391 = vpop.permute.xlu0 %390
    %393 = vrot.lane.b32.xlu0 %v355, 96
    %v394 = vpop.permute.xlu0 %393
    %395 = vrot.lane.b32.xlu0 %v355, 64
    %v396 = vpop.permute.xlu0 %395
    %397 = vrot.lane.b32.xlu0 %v355, 32
    %v398 = vpop.permute.xlu0 %397
    %400 = vrot.lane.b32.xlu0 %v367, 96
    %v401 = vpop.permute.xlu0 %400
    %403 = vrot.lane.b32.xlu0 %v367, 64
    %v404 = vpop.permute.xlu0 %403
    %406 = vrot.lane.b32.xlu0 %v367, 32
    %v407 = vpop.permute.xlu0 %406
    %410 = vrot.lane.b32.xlu0 %v369, 96
    %v411 = vpop.permute.xlu0 %410
    %413 = vrot.lane.b32.xlu0 %v369, 64
    %v414 = vpop.permute.xlu0 %413
    %416 = vrot.lane.b32.xlu0 %v369, 32
    %v417 = vpop.permute.xlu0 %416
    %vm419 = vcmask 261120
    %v420 = vsel %vm419, %v339, 0
    %v422 = vsel %vm419, %v353, 0
    %424 = vmatpush.xpose.msra.mxu0 0.0
    %425 = vmatpush.xpose.msra.mxu0 0.0
    %426 = vmatpush.xpose.msra.mxu0 0.0
    %427 = vmatpush.xpose.msra.mxu0 0.0
    %428 = vmatpush.xpose.msra.mxu0 0.0
    %429 = vmatpush.xpose.msra.mxu0 0.0
    %430 = vmatpush.xpose.msra.mxu0 0.0
    %431 = vmatpush.xpose.msra.mxu0 0.0
    %432 = vmatpush.xpose.msra.mxu0 0.0
    %433 = vmatpush.xpose.msra.mxu0 0.0
    %434 = vmatpush.xpose.msra.mxu0 0.0
    %435 = vmatpush.xpose.msra.mxu0 0.0
    %436 = vmatpush.xpose.msra.mxu0 0.0
    %437 = vmatpush.xpose.msra.mxu0 0.0
    %438 = vmatpush.xpose.msra.mxu0 0.0
    %439 = vmatpush.xpose.msra.mxu0 %v422
    %440 = vmatmul.f32.gmra.mxu0 %v420
    %v441 = vpop.f32.mrf.mxu0
    %v442 = vadd.f32 0.0, %v441
    %443 = vdwg.mxu0
    %v444 = vsel %vm419, %v373, 0
    %v446 = vsel %vm419, %v387, 0
    %448 = vmatpush.xpose.msra.mxu0 0.0
    %449 = vmatpush.xpose.msra.mxu0 0.0
    %450 = vmatpush.xpose.msra.mxu0 0.0
    %451 = vmatpush.xpose.msra.mxu0 0.0
    %452 = vmatpush.xpose.msra.mxu0 0.0
    %453 = vmatpush.xpose.msra.mxu0 0.0
    %454 = vmatpush.xpose.msra.mxu0 0.0
    %455 = vmatpush.xpose.msra.mxu0 0.0
    %456 = vmatpush.xpose.msra.mxu0 0.0
    %457 = vmatpush.xpose.msra.mxu0 0.0
    %458 = vmatpush.xpose.msra.mxu0 0.0
    %459 = vmatpush.xpose.msra.mxu0 0.0
    %460 = vmatpush.xpose.msra.mxu0 0.0
    %461 = vmatpush.xpose.msra.mxu0 0.0
    %462 = vmatpush.xpose.msra.mxu0 0.0
    %463 = vmatpush.xpose.msra.mxu0 %v446
    %464 = vmatmul.f32.gmra.mxu0 %v444
    %v465 = vpop.f32.mrf.mxu0
    %v466 = vadd.f32 0.0, %v465
    %467 = vdwg.mxu0
    %v468 = vsel %vm419, %v375, 0
    %v470 = vsel %vm419, %v389, 0
    %472 = vmatpush.xpose.msra.mxu0 0.0
    %473 = vmatpush.xpose.msra.mxu0 0.0
    %474 = vmatpush.xpose.msra.mxu0 0.0
    %475 = vmatpush.xpose.msra.mxu0 0.0
    %476 = vmatpush.xpose.msra.mxu0 0.0
    %477 = vmatpush.xpose.msra.mxu0 0.0
    %478 = vmatpush.xpose.msra.mxu0 0.0
    %479 = vmatpush.xpose.msra.mxu0 0.0
    %480 = vmatpush.xpose.msra.mxu0 0.0
    %481 = vmatpush.xpose.msra.mxu0 0.0
    %482 = vmatpush.xpose.msra.mxu0 0.0
    %483 = vmatpush.xpose.msra.mxu0 0.0
    %484 = vmatpush.xpose.msra.mxu0 0.0
    %485 = vmatpush.xpose.msra.mxu0 0.0
    %486 = vmatpush.xpose.msra.mxu0 0.0
    %487 = vmatpush.xpose.msra.mxu0 %v470
    %488 = vmatmul.f32.gmra.mxu0 %v468
    %v489 = vpop.f32.mrf.mxu0
    %v490 = vadd.f32 0.0, %v489
    %491 = vdwg.mxu0
    %v492 = vsel %vm419, %v377, 0
    %v494 = vsel %vm419, %v391, 0
    %496 = vmatpush.xpose.msra.mxu0 0.0
    %497 = vmatpush.xpose.msra.mxu0 0.0
    %498 = vmatpush.xpose.msra.mxu0 0.0
    %499 = vmatpush.xpose.msra.mxu0 0.0
    %500 = vmatpush.xpose.msra.mxu0 0.0
    %501 = vmatpush.xpose.msra.mxu0 0.0
    %502 = vmatpush.xpose.msra.mxu0 0.0
    %503 = vmatpush.xpose.msra.mxu0 0.0
    %504 = vmatpush.xpose.msra.mxu0 0.0
    %505 = vmatpush.xpose.msra.mxu0 0.0
    %506 = vmatpush.xpose.msra.mxu0 0.0
    %507 = vmatpush.xpose.msra.mxu0 0.0
    %508 = vmatpush.xpose.msra.mxu0 0.0
    %509 = vmatpush.xpose.msra.mxu0 0.0
    %510 = vmatpush.xpose.msra.mxu0 0.0
    %511 = vmatpush.xpose.msra.mxu0 %v494
    %512 = vmatmul.f32.gmra.mxu0 %v492
    %v513 = vpop.f32.mrf.mxu0
    %v514 = vadd.f32 0.0, %v513
    %515 = vdwg.mxu0
    %v516 = vsel %vm419, %v341, 0
    %v518 = vsel %vm419, %v355, 0
    %520 = vmatpush.xpose.msra.mxu0 0.0
    %521 = vmatpush.xpose.msra.mxu0 0.0
    %522 = vmatpush.xpose.msra.mxu0 0.0
    %523 = vmatpush.xpose.msra.mxu0 0.0
    %524 = vmatpush.xpose.msra.mxu0 0.0
    %525 = vmatpush.xpose.msra.mxu0 0.0
    %526 = vmatpush.xpose.msra.mxu0 0.0
    %527 = vmatpush.xpose.msra.mxu0 0.0
    %528 = vmatpush.xpose.msra.mxu0 0.0
    %529 = vmatpush.xpose.msra.mxu0 0.0
    %530 = vmatpush.xpose.msra.mxu0 0.0
    %531 = vmatpush.xpose.msra.mxu0 0.0
    %532 = vmatpush.xpose.msra.mxu0 0.0
    %533 = vmatpush.xpose.msra.mxu0 0.0
    %534 = vmatpush.xpose.msra.mxu0 0.0
    %535 = vmatpush.xpose.msra.mxu0 %v518
    %536 = vmatmul.f32.gmra.mxu0 %v516
    %v537 = vpop.f32.mrf.mxu0
    %v538 = vadd.f32 0.0, %v537
    %539 = vdwg.mxu0
    %v540 = vsel %vm419, %v380, 0
    %v542 = vsel %vm419, %v394, 0
    %544 = vmatpush.xpose.msra.mxu0 0.0
    %545 = vmatpush.xpose.msra.mxu0 0.0
    %546 = vmatpush.xpose.msra.mxu0 0.0
    %547 = vmatpush.xpose.msra.mxu0 0.0
    %548 = vmatpush.xpose.msra.mxu0 0.0
    %549 = vmatpush.xpose.msra.mxu0 0.0
    %550 = vmatpush.xpose.msra.mxu0 0.0
    %551 = vmatpush.xpose.msra.mxu0 0.0
    %552 = vmatpush.xpose.msra.mxu0 0.0
    %553 = vmatpush.xpose.msra.mxu0 0.0
    %554 = vmatpush.xpose.msra.mxu0 0.0
    %555 = vmatpush.xpose.msra.mxu0 0.0
    %556 = vmatpush.xpose.msra.mxu0 0.0
    %557 = vmatpush.xpose.msra.mxu0 0.0
    %558 = vmatpush.xpose.msra.mxu0 0.0
    %559 = vmatpush.xpose.msra.mxu0 %v542
    %560 = vmatmul.f32.gmra.mxu0 %v540
    %v561 = vpop.f32.mrf.mxu0
    %v562 = vadd.f32 0.0, %v561
    %563 = vdwg.mxu0
    %v564 = vsel %vm419, %v382, 0
    %v566 = vsel %vm419, %v396, 0
    %568 = vmatpush.xpose.msra.mxu0 0.0
    %569 = vmatpush.xpose.msra.mxu0 0.0
    %570 = vmatpush.xpose.msra.mxu0 0.0
    %571 = vmatpush.xpose.msra.mxu0 0.0
    %572 = vmatpush.xpose.msra.mxu0 0.0
    %573 = vmatpush.xpose.msra.mxu0 0.0
    %574 = vmatpush.xpose.msra.mxu0 0.0
    %575 = vmatpush.xpose.msra.mxu0 0.0
    %576 = vmatpush.xpose.msra.mxu0 0.0
    %577 = vmatpush.xpose.msra.mxu0 0.0
    %578 = vmatpush.xpose.msra.mxu0 0.0
    %579 = vmatpush.xpose.msra.mxu0 0.0
    %580 = vmatpush.xpose.msra.mxu0 0.0
    %581 = vmatpush.xpose.msra.mxu0 0.0
    %582 = vmatpush.xpose.msra.mxu0 0.0
    %583 = vmatpush.xpose.msra.mxu0 %v566
    %584 = vmatmul.f32.gmra.mxu0 %v564
    %v585 = vpop.f32.mrf.mxu0
    %v586 = vadd.f32 0.0, %v585
    %587 = vdwg.mxu0
    %v588 = vsel %vm419, %v384, 0
    %v590 = vsel %vm419, %v398, 0
    %592 = vmatpush.xpose.msra.mxu0 0.0
    %593 = vmatpush.xpose.msra.mxu0 0.0
    %594 = vmatpush.xpose.msra.mxu0 0.0
    %595 = vmatpush.xpose.msra.mxu0 0.0
    %596 = vmatpush.xpose.msra.mxu0 0.0
    %597 = vmatpush.xpose.msra.mxu0 0.0
    %598 = vmatpush.xpose.msra.mxu0 0.0
    %599 = vmatpush.xpose.msra.mxu0 0.0
    %600 = vmatpush.xpose.msra.mxu0 0.0
    %601 = vmatpush.xpose.msra.mxu0 0.0
    %602 = vmatpush.xpose.msra.mxu0 0.0
    %603 = vmatpush.xpose.msra.mxu0 0.0
    %604 = vmatpush.xpose.msra.mxu0 0.0
    %605 = vmatpush.xpose.msra.mxu0 0.0
    %606 = vmatpush.xpose.msra.mxu0 0.0
    %607 = vmatpush.xpose.msra.mxu0 %v590
    %608 = vmatmul.f32.gmra.mxu0 %v588
    %v609 = vpop.f32.mrf.mxu0
    %v610 = vadd.f32 0.0, %v609
    %611 = vdwg.mxu0
    %v612 = vmul.f32 %v442, 0.17677669
    %v613 = vmul.f32 %v466, 0.17677669
    %v614 = vmul.f32 %v490, 0.17677669
    %v615 = vmul.f32 %v514, 0.17677669
    %v616 = vmul.f32 %v538, 0.17677669
    %v617 = vmul.f32 %v562, 0.17677669
    %v618 = vmul.f32 %v586, 0.17677669
    %v619 = vmul.f32 %v610, 0.17677669
    %vm620 = vcmask 64512
    %v621 = vsel %vm620, %v612, -inf
    %622 = vmax.xlane.f32.xlu0 %v621
    %v623 = vpop.xlane.xlu0 %622
    %v624 = vsel %vm620, %v613, -inf
    %625 = vmax.xlane.f32.xlu0 %v624
    %v626 = vpop.xlane.xlu0 %625
    %v627 = vsel %vm620, %v614, -inf
    %628 = vmax.xlane.f32.xlu0 %v627
    %v629 = vpop.xlane.xlu0 %628
    %v630 = vsel %vm620, %v615, -inf
    %631 = vmax.xlane.f32.xlu0 %v630
    %v632 = vpop.xlane.xlu0 %631
    %v633 = vsel %vm620, %v616, -inf
    %634 = vmax.xlane.f32.xlu0 %v633
    %v635 = vpop.xlane.xlu0 %634
    %v636 = vsel %vm620, %v617, -inf
    %637 = vmax.xlane.f32.xlu0 %v636
    %v638 = vpop.xlane.xlu0 %637
    %v639 = vsel %vm620, %v618, -inf
    %640 = vmax.xlane.f32.xlu0 %v639
    %v641 = vpop.xlane.xlu0 %640
    %v642 = vsel %vm620, %v619, -inf
    %643 = vmax.xlane.f32.xlu0 %v642
    %v644 = vpop.xlane.xlu0 %643
    %v645 = vsub.f32 %v612, %v623
    %v646 = vsub.f32 %v613, %v626
    %v647 = vsub.f32 %v614, %v629
    %v648 = vsub.f32 %v615, %v632
    %v649 = vsub.f32 %v616, %v635
    %v650 = vsub.f32 %v617, %v638
    %v651 = vsub.f32 %v618, %v641
    %v652 = vsub.f32 %v619, %v644
    %v653 = vmul.f32 %v645, 1.442695
    %v654 = vpow.pop %v653
    %v655 = vmul.f32 %v646, 1.442695
    %v656 = vpow.pop %v655
    %v657 = vmul.f32 %v647, 1.442695
    %v658 = vpow.pop %v657
    %v659 = vmul.f32 %v648, 1.442695
    %v660 = vpow.pop %v659
    %v661 = vmul.f32 %v649, 1.442695
    %v662 = vpow.pop %v661
    %v663 = vmul.f32 %v650, 1.442695
    %v664 = vpow.pop %v663
    %v665 = vmul.f32 %v651, 1.442695
    %v666 = vpow.pop %v665
    %v667 = vmul.f32 %v652, 1.442695
    %v668 = vpow.pop %v667
    %v669 = vsel %vm620, %v654, 0.0
    %670 = vadd.xlane.f32.xlu0 %v669
    %v671 = vpop.xlane.xlu0 %670
    %v672 = vsel %vm620, %v656, 0.0
    %673 = vadd.xlane.f32.xlu0 %v672
    %v674 = vpop.xlane.xlu0 %673
    %v675 = vsel %vm620, %v658, 0.0
    %676 = vadd.xlane.f32.xlu0 %v675
    %v677 = vpop.xlane.xlu0 %676
    %v678 = vsel %vm620, %v660, 0.0
    %679 = vadd.xlane.f32.xlu0 %v678
    %v680 = vpop.xlane.xlu0 %679
    %v681 = vsel %vm620, %v662, 0.0
    %682 = vadd.xlane.f32.xlu0 %v681
    %v683 = vpop.xlane.xlu0 %682
    %v684 = vsel %vm620, %v664, 0.0
    %685 = vadd.xlane.f32.xlu0 %v684
    %v686 = vpop.xlane.xlu0 %685
    %v687 = vsel %vm620, %v666, 0.0
    %688 = vadd.xlane.f32.xlu0 %v687
    %v689 = vpop.xlane.xlu0 %688
    %v690 = vsel %vm620, %v668, 0.0
    %691 = vadd.xlane.f32.xlu0 %v690
    %v692 = vpop.xlane.xlu0 %691
    %v693 = vrcp.pop %v671
    %v694 = vrcp.pop %v674
    %v695 = vrcp.pop %v677
    %v696 = vrcp.pop %v680
    %v697 = vrcp.pop %v683
    %v698 = vrcp.pop %v686
    %v699 = vrcp.pop %v689
    %v700 = vrcp.pop %v692
    %v701 = vmul.f32 %v654, %v693
    %v702 = vmul.f32 %v656, %v694
    %v703 = vmul.f32 %v658, %v695
    %v704 = vmul.f32 %v660, %v696
    %v705 = vmul.f32 %v662, %v697
    %v706 = vmul.f32 %v664, %v698
    %v707 = vmul.f32 %v666, %v699
    %v708 = vmul.f32 %v668, %v700
    %v710 = vsel %vm620, %v701, 0
    %712 = vmatpush.msra.mxu0 0.0
    %713 = vmatpush.msra.mxu0 0.0
    %714 = vmatpush.msra.mxu0 0.0
    %715 = vmatpush.msra.mxu0 0.0
    %716 = vmatpush.msra.mxu0 0.0
    %717 = vmatpush.msra.mxu0 0.0
    %718 = vmatpush.msra.mxu0 0.0
    %719 = vmatpush.msra.mxu0 0.0
    %720 = vmatpush.msra.mxu0 0.0
    %721 = vmatpush.msra.mxu0 0.0
    %722 = vmatpush.msra.mxu0 0.0
    %723 = vmatpush.msra.mxu0 0.0
    %724 = vmatpush.msra.mxu0 0.0
    %725 = vmatpush.msra.mxu0 0.0
    %726 = vmatpush.msra.mxu0 0.0
    %727 = vmatpush.msra.mxu0 %v367
    %728 = vmatmul.f32.gmra.mxu0 %v710
    %v729 = vpop.f32.mrf.mxu0
    %v730 = vadd.f32 0.0, %v729
    %731 = vdwg.mxu0
    %v733 = vsel %vm620, %v702, 0
    %735 = vmatpush.msra.mxu0 0.0
    %736 = vmatpush.msra.mxu0 0.0
    %737 = vmatpush.msra.mxu0 0.0
    %738 = vmatpush.msra.mxu0 0.0
    %739 = vmatpush.msra.mxu0 0.0
    %740 = vmatpush.msra.mxu0 0.0
    %741 = vmatpush.msra.mxu0 0.0
    %742 = vmatpush.msra.mxu0 0.0
    %743 = vmatpush.msra.mxu0 0.0
    %744 = vmatpush.msra.mxu0 0.0
    %745 = vmatpush.msra.mxu0 0.0
    %746 = vmatpush.msra.mxu0 0.0
    %747 = vmatpush.msra.mxu0 0.0
    %748 = vmatpush.msra.mxu0 0.0
    %749 = vmatpush.msra.mxu0 0.0
    %750 = vmatpush.msra.mxu0 %v401
    %751 = vmatmul.f32.gmra.mxu0 %v733
    %v752 = vpop.f32.mrf.mxu0
    %v753 = vadd.f32 0.0, %v752
    %754 = vdwg.mxu0
    %v756 = vsel %vm620, %v703, 0
    %758 = vmatpush.msra.mxu0 0.0
    %759 = vmatpush.msra.mxu0 0.0
    %760 = vmatpush.msra.mxu0 0.0
    %761 = vmatpush.msra.mxu0 0.0
    %762 = vmatpush.msra.mxu0 0.0
    %763 = vmatpush.msra.mxu0 0.0
    %764 = vmatpush.msra.mxu0 0.0
    %765 = vmatpush.msra.mxu0 0.0
    %766 = vmatpush.msra.mxu0 0.0
    %767 = vmatpush.msra.mxu0 0.0
    %768 = vmatpush.msra.mxu0 0.0
    %769 = vmatpush.msra.mxu0 0.0
    %770 = vmatpush.msra.mxu0 0.0
    %771 = vmatpush.msra.mxu0 0.0
    %772 = vmatpush.msra.mxu0 0.0
    %773 = vmatpush.msra.mxu0 %v404
    %774 = vmatmul.f32.gmra.mxu0 %v756
    %v775 = vpop.f32.mrf.mxu0
    %v776 = vadd.f32 0.0, %v775
    %777 = vdwg.mxu0
    %v779 = vsel %vm620, %v704, 0
    %781 = vmatpush.msra.mxu0 0.0
    %782 = vmatpush.msra.mxu0 0.0
    %783 = vmatpush.msra.mxu0 0.0
    %784 = vmatpush.msra.mxu0 0.0
    %785 = vmatpush.msra.mxu0 0.0
    %786 = vmatpush.msra.mxu0 0.0
    %787 = vmatpush.msra.mxu0 0.0
    %788 = vmatpush.msra.mxu0 0.0
    %789 = vmatpush.msra.mxu0 0.0
    %790 = vmatpush.msra.mxu0 0.0
    %791 = vmatpush.msra.mxu0 0.0
    %792 = vmatpush.msra.mxu0 0.0
    %793 = vmatpush.msra.mxu0 0.0
    %794 = vmatpush.msra.mxu0 0.0
    %795 = vmatpush.msra.mxu0 0.0
    %796 = vmatpush.msra.mxu0 %v407
    %797 = vmatmul.f32.gmra.mxu0 %v779
    %v798 = vpop.f32.mrf.mxu0
    %v799 = vadd.f32 0.0, %v798
    %800 = vdwg.mxu0
    %v802 = vsel %vm620, %v705, 0
    %804 = vmatpush.msra.mxu0 0.0
    %805 = vmatpush.msra.mxu0 0.0
    %806 = vmatpush.msra.mxu0 0.0
    %807 = vmatpush.msra.mxu0 0.0
    %808 = vmatpush.msra.mxu0 0.0
    %809 = vmatpush.msra.mxu0 0.0
    %810 = vmatpush.msra.mxu0 0.0
    %811 = vmatpush.msra.mxu0 0.0
    %812 = vmatpush.msra.mxu0 0.0
    %813 = vmatpush.msra.mxu0 0.0
    %814 = vmatpush.msra.mxu0 0.0
    %815 = vmatpush.msra.mxu0 0.0
    %816 = vmatpush.msra.mxu0 0.0
    %817 = vmatpush.msra.mxu0 0.0
    %818 = vmatpush.msra.mxu0 0.0
    %819 = vmatpush.msra.mxu0 %v369
    %820 = vmatmul.f32.gmra.mxu0 %v802
    %v821 = vpop.f32.mrf.mxu0
    %v822 = vadd.f32 0.0, %v821
    %823 = vdwg.mxu0
    %v825 = vsel %vm620, %v706, 0
    %827 = vmatpush.msra.mxu0 0.0
    %828 = vmatpush.msra.mxu0 0.0
    %829 = vmatpush.msra.mxu0 0.0
    %830 = vmatpush.msra.mxu0 0.0
    %831 = vmatpush.msra.mxu0 0.0
    %832 = vmatpush.msra.mxu0 0.0
    %833 = vmatpush.msra.mxu0 0.0
    %834 = vmatpush.msra.mxu0 0.0
    %835 = vmatpush.msra.mxu0 0.0
    %836 = vmatpush.msra.mxu0 0.0
    %837 = vmatpush.msra.mxu0 0.0
    %838 = vmatpush.msra.mxu0 0.0
    %839 = vmatpush.msra.mxu0 0.0
    %840 = vmatpush.msra.mxu0 0.0
    %841 = vmatpush.msra.mxu0 0.0
    %842 = vmatpush.msra.mxu0 %v411
    %843 = vmatmul.f32.gmra.mxu0 %v825
    %v844 = vpop.f32.mrf.mxu0
    %v845 = vadd.f32 0.0, %v844
    %846 = vdwg.mxu0
    %v848 = vsel %vm620, %v707, 0
    %850 = vmatpush.msra.mxu0 0.0
    %851 = vmatpush.msra.mxu0 0.0
    %852 = vmatpush.msra.mxu0 0.0
    %853 = vmatpush.msra.mxu0 0.0
    %854 = vmatpush.msra.mxu0 0.0
    %855 = vmatpush.msra.mxu0 0.0
    %856 = vmatpush.msra.mxu0 0.0
    %857 = vmatpush.msra.mxu0 0.0
    %858 = vmatpush.msra.mxu0 0.0
    %859 = vmatpush.msra.mxu0 0.0
    %860 = vmatpush.msra.mxu0 0.0
    %861 = vmatpush.msra.mxu0 0.0
    %862 = vmatpush.msra.mxu0 0.0
    %863 = vmatpush.msra.mxu0 0.0
    %864 = vmatpush.msra.mxu0 0.0
    %865 = vmatpush.msra.mxu0 %v414
    %866 = vmatmul.f32.gmra.mxu0 %v848
    %v867 = vpop.f32.mrf.mxu0
    %v868 = vadd.f32 0.0, %v867
    %869 = vdwg.mxu0
    %v871 = vsel %vm620, %v708, 0
    %873 = vmatpush.msra.mxu0 0.0
    %874 = vmatpush.msra.mxu0 0.0
    %875 = vmatpush.msra.mxu0 0.0
    %876 = vmatpush.msra.mxu0 0.0
    %877 = vmatpush.msra.mxu0 0.0
    %878 = vmatpush.msra.mxu0 0.0
    %879 = vmatpush.msra.mxu0 0.0
    %880 = vmatpush.msra.mxu0 0.0
    %881 = vmatpush.msra.mxu0 0.0
    %882 = vmatpush.msra.mxu0 0.0
    %883 = vmatpush.msra.mxu0 0.0
    %884 = vmatpush.msra.mxu0 0.0
    %885 = vmatpush.msra.mxu0 0.0
    %886 = vmatpush.msra.mxu0 0.0
    %887 = vmatpush.msra.mxu0 0.0
    %888 = vmatpush.msra.mxu0 %v417
    %889 = vmatmul.f32.gmra.mxu0 %v871
    %v890 = vpop.f32.mrf.mxu0
    %v891 = vadd.f32 0.0, %v890
    %892 = vdwg.mxu0
    %894 = vrot.lane.b32.xlu0 %v753, 32
    %v895 = vpop.permute.xlu0 %894
    %898 = vrot.lane.b32.xlu0 %v776, 64
    %v899 = vpop.permute.xlu0 %898
    %902 = vrot.lane.b32.xlu0 %v799, 96
    %v903 = vpop.permute.xlu0 %902
    %v905 = vsel %vm419, %v730, %v895
    %vm906 = vcmask 523264
    %v907 = vsel %vm906, %v905, %v899
    %vm908 = vcmask 785408
    %v909 = vsel %vm908, %v907, %v903
    %911 = vrot.lane.b32.xlu0 %v845, 32
    %v912 = vpop.permute.xlu0 %911
    %915 = vrot.lane.b32.xlu0 %v868, 64
    %v916 = vpop.permute.xlu0 %915
    %919 = vrot.lane.b32.xlu0 %v891, 96
    %v920 = vpop.permute.xlu0 %919
    %v922 = vsel %vm419, %v822, %v912
    %v923 = vsel %vm906, %v922, %v916
    %v924 = vsel %vm908, %v923, %v920
    %v925 = vpack.c.bf16 %v924, %v909
    %v926 = vld [vmem:[%s3] sm:$0xf]
    %v927 = vld [vmem:[%s3 + $0x4] sm:$0xf]
    %v928 = vld [vmem:[%s3 + $0x8] sm:$0xf]
    %v929 = vld [vmem:[%s3 + $0xc] sm:$0xf]
    %v930 = vld [vmem:[%s3 + $0x10] sm:$0xf]
    %v931 = vld [vmem:[%s3 + $0x14] sm:$0xf]
    %v932 = vld [vmem:[%s3 + $0x18] sm:$0xf]
    %v933 = vld [vmem:[%s3 + $0x1c] sm:$0xf]
    %v934 = vld [vmem:[%s3 + $0x20] sm:$0xf]
    %v935 = vld [vmem:[%s3 + $0x24] sm:$0xf]
    %v936 = vld [vmem:[%s3 + $0x28] sm:$0xf]
    %v937 = vld [vmem:[%s3 + $0x2c] sm:$0xf]
    %v938 = vld [vmem:[%s3 + $0x30] sm:$0xf]
    %v939 = vld [vmem:[%s3 + $0x34] sm:$0xf]
    %v940 = vld [vmem:[%s3 + $0x38] sm:$0xf]
    %v941 = vld [vmem:[%s3 + $0x3c] sm:$0xf]
    %v942 = vld [vmem:[%s4] sm:$0x1]
    %v944 = vperm.slane %v942, 0
    %v962 = vunpack.c.l.b16 %v926
    %v963 = vunpack.c.l.b16 %v927
    %v964 = vunpack.c.l.b16 %v928
    %v965 = vunpack.c.l.b16 %v929
    %v966 = vunpack.c.l.b16 %v930
    %v967 = vunpack.c.l.b16 %v931
    %v968 = vunpack.c.l.b16 %v932
    %v969 = vunpack.c.l.b16 %v933
    %v970 = vunpack.c.l.b16 %v934
    %v971 = vunpack.c.l.b16 %v935
    %v972 = vunpack.c.l.b16 %v936
    %v973 = vunpack.c.l.b16 %v937
    %v974 = vunpack.c.l.b16 %v938
    %v975 = vunpack.c.l.b16 %v939
    %v976 = vunpack.c.l.b16 %v940
    %v977 = vunpack.c.l.b16 %v941
    %v978 = vpack.c.b16 %v963, %v962
    %v979 = vpack.c.b16 %v965, %v964
    %v980 = vpack.c.b16 %v967, %v966
    %v981 = vpack.c.b16 %v969, %v968
    %v982 = vpack.c.b16 %v971, %v970
    %v983 = vpack.c.b16 %v973, %v972
    %v984 = vpack.c.b16 %v975, %v974
    %v985 = vpack.c.b16 %v977, %v976
    %994 = vmatpush.bf16.msra.mxu0 %v985
    %995 = vmatpush.bf16.msra.mxu0 %v984
    %996 = vmatpush.bf16.msra.mxu0 %v983
    %997 = vmatpush.bf16.msra.mxu0 %v982
    %998 = vmatpush.bf16.msra.mxu0 %v981
    %999 = vmatpush.bf16.msra.mxu0 %v980
    %1000 = vmatpush.bf16.msra.mxu0 %v979
    %1001 = vmatpush.bf16.msra.mxu0 %v978
    %1002 = vmatmul.bf16.gmra.mxu0 %v925
    %v1003 = vpop.f32.mrf.mxu0
    %v1004 = vadd.f32 %v944, %v1003
    %v1005 = vpop.f32.mrf.mxu0
    %v1006 = vadd.f32 %v944, %v1005
    %1007 = vdwg.mxu0
    %v1008 = vadd.f32 %v158, %v1004
    %v1009 = vadd.f32 %v159, %v1006
    %v1010 = vld [vmem:[#allocation10] sm:$0x1]
    %v1011 = vld [vmem:[%s10] sm:$0x1]
    %1012 = vadd.xlane.f32.xlu0 %v1008
    %v1013 = vpop.xlane.xlu0 %1012
    %1014 = vadd.xlane.f32.xlu0 %v1009
    %v1015 = vpop.xlane.xlu0 %1014
    %v1016 = vrcp.pop 128.0
    %v1017 = vmul.f32 128.0, %v1016
    %v1018 = vsub.f32 1.0, %v1017
    %v1019 = vmul.f32 %v1016, %v1018
    %v1020 = vadd.f32 %v1016, %v1019
    %vm1021 = vweird.f32 %v1016
    %v1022 = vsel %vm1021, %v1016, %v1020
    %v1023 = vmul.f32 %v1013, %v1022
    %v1024 = vmul.f32 %v1015, %v1022
    %v1025 = vsub.f32 %v1008, %v1023
    %v1026 = vsub.f32 %v1009, %v1024
    %v1027 = vmul.f32 %v1025, %v1025
    %v1028 = vmul.f32 %v1026, %v1026
    %1029 = vadd.xlane.f32.xlu0 %v1027
    %v1030 = vpop.xlane.xlu0 %1029
    %1031 = vadd.xlane.f32.xlu0 %v1028
    %v1032 = vpop.xlane.xlu0 %1031
    %v1033 = vmul.f32 %v1030, %v1022
    %v1034 = vmul.f32 %v1032, %v1022
    %v1035 = vadd.f32 %v1033, 1e-05
    %v1036 = vadd.f32 %v1034, 1e-05
    %v1037 = vrsqrt.pop %v1035
    %v1038 = vmul.f32 %v1037, %v1035
    %v1039 = vmul.f32 %v1038, %v1037
    %v1040 = vmul.f32 0.5, %v1039
    %v1041 = vsub.f32 1.5, %v1040
    %v1042 = vmul.f32 %v1037, %v1041
    %vm1043 = vweird.f32 %v1035
    %vm1044 = vweird.f32 %v1037
    %vm1045 = vmor %vm1043, %vm1044
    %v1046 = vsel %vm1045, %v1037, %v1042
    %v1047 = vrsqrt.pop %v1036
    %v1048 = vmul.f32 %v1047, %v1036
    %v1049 = vmul.f32 %v1048, %v1047
    %v1050 = vmul.f32 0.5, %v1049
    %v1051 = vsub.f32 1.5, %v1050
    %v1052 = vmul.f32 %v1047, %v1051
    %vm1053 = vweird.f32 %v1036
    %vm1054 = vweird.f32 %v1047
    %vm1055 = vmor %vm1053, %vm1054
    %v1056 = vsel %vm1055, %v1047, %v1052
    %v1057 = vmul.f32 %v1025, %v1046
    %v1058 = vmul.f32 %v1026, %v1056
    %v1060 = vperm.slane %v1010, 0
    %v1062 = vmul.f32 %v1057, %v1060
    %v1063 = vmul.f32 %v1058, %v1060
    %v1065 = vperm.slane %v1011, 0
    %v1067 = vadd.f32 %v1062, %v1065
    %v1068 = vadd.f32 %v1063, %v1065
    %v1069 = vpack.c.bf16 %v1068, %v1067
    %v1070 = vld [vmem:[#allocation5] sm:$0xff]
    %v1071 = vld [vmem:[#allocation5 + $0x8] sm:$0xff]
    %v1072 = vld [vmem:[#allocation5 + $0x10] sm:$0xff]
    %v1073 = vld [vmem:[#allocation5 + $0x18] sm:$0xff]
    %v1074 = vld [vmem:[#allocation5 + $0x20] sm:$0xff]
    %v1075 = vld [vmem:[#allocation5 + $0x28] sm:$0xff]
    %v1076 = vld [vmem:[#allocation5 + $0x30] sm:$0xff]
    %v1077 = vld [vmem:[#allocation5 + $0x38] sm:$0xff]
    %v1078 = vld [vmem:[#allocation5 + $0x40] sm:$0xff]
    %v1079 = vld [vmem:[#allocation5 + $0x48] sm:$0xff]
    %v1080 = vld [vmem:[#allocation5 + $0x50] sm:$0xff]
    %v1081 = vld [vmem:[#allocation5 + $0x58] sm:$0xff]
    %v1082 = vld [vmem:[#allocation5 + $0x60] sm:$0xff]
    %v1083 = vld [vmem:[#allocation5 + $0x68] sm:$0xff]
    %v1084 = vld [vmem:[#allocation5 + $0x70] sm:$0xff]
    %v1085 = vld [vmem:[#allocation5 + $0x78] sm:$0xff]
    %v1086 = vld [vmem:[#allocation5 + $0x80] sm:$0xff]
    %v1087 = vld [vmem:[#allocation5 + $0x88] sm:$0xff]
    %v1088 = vld [vmem:[#allocation5 + $0x90] sm:$0xff]
    %v1089 = vld [vmem:[#allocation5 + $0x98] sm:$0xff]
    %v1090 = vld [vmem:[#allocation5 + $0xa0] sm:$0xff]
    %v1091 = vld [vmem:[#allocation5 + $0xa8] sm:$0xff]
    %v1092 = vld [vmem:[#allocation5 + $0xb0] sm:$0xff]
    %v1093 = vld [vmem:[#allocation5 + $0xb8] sm:$0xff]
    %v1094 = vld [vmem:[#allocation5 + $0xc0] sm:$0xff]
    %v1095 = vld [vmem:[#allocation5 + $0xc8] sm:$0xff]
    %v1096 = vld [vmem:[#allocation5 + $0xd0] sm:$0xff]
    %v1097 = vld [vmem:[#allocation5 + $0xd8] sm:$0xff]
    %v1098 = vld [vmem:[#allocation5 + $0xe0] sm:$0xff]
    %v1099 = vld [vmem:[#allocation5 + $0xe8] sm:$0xff]
    %v1100 = vld [vmem:[#allocation5 + $0xf0] sm:$0xff]
    %v1101 = vld [vmem:[#allocation5 + $0xf8] sm:$0xff]
    %v1102 = vld [vmem:[#allocation5 + $0x100] sm:$0xff]
    %v1103 = vld [vmem:[#allocation5 + $0x108] sm:$0xff]
    %v1104 = vld [vmem:[#allocation5 + $0x110] sm:$0xff]
    %v1105 = vld [vmem:[#allocation5 + $0x118] sm:$0xff]
    %v1106 = vld [vmem:[#allocation5 + $0x120] sm:$0xff]
    %v1107 = vld [vmem:[#allocation5 + $0x128] sm:$0xff]
    %v1108 = vld [vmem:[#allocation5 + $0x130] sm:$0xff]
    %v1109 = vld [vmem:[#allocation5 + $0x138] sm:$0xff]
    %v1110 = vld [vmem:[#allocation5 + $0x140] sm:$0xff]
    %v1111 = vld [vmem:[#allocation5 + $0x148] sm:$0xff]
    %v1112 = vld [vmem:[#allocation5 + $0x150] sm:$0xff]
    %v1113 = vld [vmem:[#allocation5 + $0x158] sm:$0xff]
    %v1114 = vld [vmem:[#allocation5 + $0x160] sm:$0xff]
    %v1115 = vld [vmem:[#allocation5 + $0x168] sm:$0xff]
    %v1116 = vld [vmem:[#allocation5 + $0x170] sm:$0xff]
    %v1117 = vld [vmem:[#allocation5 + $0x178] sm:$0xff]
    %v1118 = vld [vmem:[#allocation5 + $0x180] sm:$0xff]
    %v1119 = vld [vmem:[#allocation5 + $0x188] sm:$0xff]
    %v1120 = vld [vmem:[#allocation5 + $0x190] sm:$0xff]
    %v1121 = vld [vmem:[#allocation5 + $0x198] sm:$0xff]
    %v1122 = vld [vmem:[#allocation5 + $0x1a0] sm:$0xff]
    %v1123 = vld [vmem:[#allocation5 + $0x1a8] sm:$0xff]
    %v1124 = vld [vmem:[#allocation5 + $0x1b0] sm:$0xff]
    %v1125 = vld [vmem:[#allocation5 + $0x1b8] sm:$0xff]
    %v1126 = vld [vmem:[#allocation5 + $0x1c0] sm:$0xff]
    %v1127 = vld [vmem:[#allocation5 + $0x1c8] sm:$0xff]
    %v1128 = vld [vmem:[#allocation5 + $0x1d0] sm:$0xff]
    %v1129 = vld [vmem:[#allocation5 + $0x1d8] sm:$0xff]
    %v1130 = vld [vmem:[#allocation5 + $0x1e0] sm:$0xff]
    %v1131 = vld [vmem:[#allocation5 + $0x1e8] sm:$0xff]
    %v1132 = vld [vmem:[#allocation5 + $0x1f0] sm:$0xff]
    %v1133 = vld [vmem:[#allocation5 + $0x1f8] sm:$0xff]
    %v1134 = vld [vmem:[#allocation5 + $0x200] sm:$0xff]
    %v1135 = vld [vmem:[#allocation5 + $0x208] sm:$0xff]
    %v1136 = vld [vmem:[#allocation5 + $0x210] sm:$0xff]
    %v1137 = vld [vmem:[#allocation5 + $0x218] sm:$0xff]
    %v1138 = vld [vmem:[#allocation5 + $0x220] sm:$0xff]
    %v1139 = vld [vmem:[#allocation5 + $0x228] sm:$0xff]
    %v1140 = vld [vmem:[#allocation5 + $0x230] sm:$0xff]
    %v1141 = vld [vmem:[#allocation5 + $0x238] sm:$0xff]
    %v1142 = vld [vmem:[#allocation5 + $0x240] sm:$0xff]
    %v1143 = vld [vmem:[#allocation5 + $0x248] sm:$0xff]
    %v1144 = vld [vmem:[#allocation5 + $0x250] sm:$0xff]
    %v1145 = vld [vmem:[#allocation5 + $0x258] sm:$0xff]
    %v1146 = vld [vmem:[#allocation5 + $0x260] sm:$0xff]
    %v1147 = vld [vmem:[#allocation5 + $0x268] sm:$0xff]
    %v1148 = vld [vmem:[#allocation5 + $0x270] sm:$0xff]
    %v1149 = vld [vmem:[#allocation5 + $0x278] sm:$0xff]
    %v1150 = vld [vmem:[#allocation5 + $0x280] sm:$0xff]
    %v1151 = vld [vmem:[#allocation5 + $0x288] sm:$0xff]
    %v1152 = vld [vmem:[#allocation5 + $0x290] sm:$0xff]
    %v1153 = vld [vmem:[#allocation5 + $0x298] sm:$0xff]
    %v1154 = vld [vmem:[#allocation5 + $0x2a0] sm:$0xff]
    %v1155 = vld [vmem:[#allocation5 + $0x2a8] sm:$0xff]
    %v1156 = vld [vmem:[#allocation5 + $0x2b0] sm:$0xff]
    %v1157 = vld [vmem:[#allocation5 + $0x2b8] sm:$0xff]
    %v1158 = vld [vmem:[#allocation5 + $0x2c0] sm:$0xff]
    %v1159 = vld [vmem:[#allocation5 + $0x2c8] sm:$0xff]
    %v1160 = vld [vmem:[#allocation5 + $0x2d0] sm:$0xff]
    %v1161 = vld [vmem:[#allocation5 + $0x2d8] sm:$0xff]
    %v1162 = vld [vmem:[#allocation5 + $0x2e0] sm:$0xff]
    %v1163 = vld [vmem:[#allocation5 + $0x2e8] sm:$0xff]
    %v1164 = vld [vmem:[#allocation5 + $0x2f0] sm:$0xff]
    %v1165 = vld [vmem:[#allocation5 + $0x2f8] sm:$0xff]
    %v1166 = vld [vmem:[#allocation5 + $0x300] sm:$0xff]
    %v1167 = vld [vmem:[#allocation5 + $0x308] sm:$0xff]
    %v1168 = vld [vmem:[#allocation5 + $0x310] sm:$0xff]
    %v1169 = vld [vmem:[#allocation5 + $0x318] sm:$0xff]
    %v1170 = vld [vmem:[#allocation5 + $0x320] sm:$0xff]
    %v1171 = vld [vmem:[#allocation5 + $0x328] sm:$0xff]
    %v1172 = vld [vmem:[#allocation5 + $0x330] sm:$0xff]
    %v1173 = vld [vmem:[#allocation5 + $0x338] sm:$0xff]
    %v1174 = vld [vmem:[#allocation5 + $0x340] sm:$0xff]
    %v1175 = vld [vmem:[#allocation5 + $0x348] sm:$0xff]
    %v1176 = vld [vmem:[#allocation5 + $0x350] sm:$0xff]
    %v1177 = vld [vmem:[#allocation5 + $0x358] sm:$0xff]
    %v1178 = vld [vmem:[#allocation5 + $0x360] sm:$0xff]
    %v1179 = vld [vmem:[#allocation5 + $0x368] sm:$0xff]
    %v1180 = vld [vmem:[#allocation5 + $0x370] sm:$0xff]
    %v1181 = vld [vmem:[#allocation5 + $0x378] sm:$0xff]
    %v1182 = vld [vmem:[#allocation5 + $0x380] sm:$0xff]
    %v1183 = vld [vmem:[#allocation5 + $0x388] sm:$0xff]
    %v1184 = vld [vmem:[#allocation5 + $0x390] sm:$0xff]
    %v1185 = vld [vmem:[#allocation5 + $0x398] sm:$0xff]
    %v1186 = vld [vmem:[#allocation5 + $0x3a0] sm:$0xff]
    %v1187 = vld [vmem:[#allocation5 + $0x3a8] sm:$0xff]
    %v1188 = vld [vmem:[#allocation5 + $0x3b0] sm:$0xff]
    %v1189 = vld [vmem:[#allocation5 + $0x3b8] sm:$0xff]
    %v1190 = vld [vmem:[#allocation5 + $0x3c0] sm:$0xff]
    %v1191 = vld [vmem:[#allocation5 + $0x3c8] sm:$0xff]
    %v1192 = vld [vmem:[#allocation5 + $0x3d0] sm:$0xff]
    %v1193 = vld [vmem:[#allocation5 + $0x3d8] sm:$0xff]
    %v1194 = vld [vmem:[#allocation5 + $0x3e0] sm:$0xff]
    %v1195 = vld [vmem:[#allocation5 + $0x3e8] sm:$0xff]
    %v1196 = vld [vmem:[#allocation5 + $0x3f0] sm:$0xff]
    %v1197 = vld [vmem:[#allocation5 + $0x3f8] sm:$0xff]
    %v1198 = vld [vmem:[#allocation7] sm:$0xff]
    %v1199 = vld [vmem:[#allocation7 + $0x8] sm:$0xff]
    %v1202 = vperm.slane %v1198, 0
    %v1203 = vperm.slane %v1198, 1
    %v1204 = vperm.slane %v1198, 2
    %v1205 = vperm.slane %v1198, 3
    %v1206 = vperm.slane %v1198, 4
    %v1207 = vperm.slane %v1198, 5
    %v1208 = vperm.slane %v1198, 6
    %v1209 = vperm.slane %v1198, 7
    %v1210 = vperm.slane %v1199, 0
    %v1211 = vperm.slane %v1199, 1
    %v1212 = vperm.slane %v1199, 2
    %v1213 = vperm.slane %v1199, 3
    %v1214 = vperm.slane %v1199, 4
    %v1215 = vperm.slane %v1199, 5
    %v1216 = vperm.slane %v1199, 6
    %v1217 = vperm.slane %v1199, 7
    %v1362 = vunpack.c.l.b16 %v1070
    %v1363 = vunpack.c.h.b16 %v1070
    %v1364 = vunpack.c.l.b16 %v1071
    %v1365 = vunpack.c.h.b16 %v1071
    %v1366 = vunpack.c.l.b16 %v1072
    %v1367 = vunpack.c.h.b16 %v1072
    %v1368 = vunpack.c.l.b16 %v1073
    %v1369 = vunpack.c.h.b16 %v1073
    %v1370 = vunpack.c.l.b16 %v1074
    %v1371 = vunpack.c.h.b16 %v1074
    %v1372 = vunpack.c.l.b16 %v1075
    %v1373 = vunpack.c.h.b16 %v1075
    %v1374 = vunpack.c.l.b16 %v1076
    %v1375 = vunpack.c.h.b16 %v1076
    %v1376 = vunpack.c.l.b16 %v1077
    %v1377 = vunpack.c.h.b16 %v1077
    %v1378 = vunpack.c.l.b16 %v1078
    %v1379 = vunpack.c.h.b16 %v1078
    %v1380 = vunpack.c.l.b16 %v1079
    %v1381 = vunpack.c.h.b16 %v1079
    %v1382 = vunpack.c.l.b16 %v1080
    %v1383 = vunpack.c.h.b16 %v1080
    %v1384 = vunpack.c.l.b16 %v1081
    %v1385 = vunpack.c.h.b16 %v1081
    %v1386 = vunpack.c.l.b16 %v1082
    %v1387 = vunpack.c.h.b16 %v1082
    %v1388 = vunpack.c.l.b16 %v1083
    %v1389 = vunpack.c.h.b16 %v1083
    %v1390 = vunpack.c.l.b16 %v1084
    %v1391 = vunpack.c.h.b16 %v1084
    %v1392 = vunpack.c.l.b16 %v1085
    %v1393 = vunpack.c.h.b16 %v1085
    %v1394 = vunpack.c.l.b16 %v1086
    %v1395 = vunpack.c.h.b16 %v1086
    %v1396 = vunpack.c.l.b16 %v1087
    %v1397 = vunpack.c.h.b16 %v1087
    %v1398 = vunpack.c.l.b16 %v1088
    %v1399 = vunpack.c.h.b16 %v1088
    %v1400 = vunpack.c.l.b16 %v1089
    %v1401 = vunpack.c.h.b16 %v1089
    %v1402 = vunpack.c.l.b16 %v1090
    %v1403 = vunpack.c.h.b16 %v1090
    %v1404 = vunpack.c.l.b16 %v1091
    %v1405 = vunpack.c.h.b16 %v1091
    %v1406 = vunpack.c.l.b16 %v1092
    %v1407 = vunpack.c.h.b16 %v1092
    %v1408 = vunpack.c.l.b16 %v1093
    %v1409 = vunpack.c.h.b16 %v1093
    %v1410 = vunpack.c.l.b16 %v1094
    %v1411 = vunpack.c.h.b16 %v1094
    %v1412 = vunpack.c.l.b16 %v1095
    %v1413 = vunpack.c.h.b16 %v1095
    %v1414 = vunpack.c.l.b16 %v1096
    %v1415 = vunpack.c.h.b16 %v1096
    %v1416 = vunpack.c.l.b16 %v1097
    %v1417 = vunpack.c.h.b16 %v1097
    %v1418 = vunpack.c.l.b16 %v1098
    %v1419 = vunpack.c.h.b16 %v1098
    %v1420 = vunpack.c.l.b16 %v1099
    %v1421 = vunpack.c.h.b16 %v1099
    %v1422 = vunpack.c.l.b16 %v1100
    %v1423 = vunpack.c.h.b16 %v1100
    %v1424 = vunpack.c.l.b16 %v1101
    %v1425 = vunpack.c.h.b16 %v1101
    %v1426 = vunpack.c.l.b16 %v1102
    %v1427 = vunpack.c.h.b16 %v1102
    %v1428 = vunpack.c.l.b16 %v1103
    %v1429 = vunpack.c.h.b16 %v1103
    %v1430 = vunpack.c.l.b16 %v1104
    %v1431 = vunpack.c.h.b16 %v1104
    %v1432 = vunpack.c.l.b16 %v1105
    %v1433 = vunpack.c.h.b16 %v1105
    %v1434 = vunpack.c.l.b16 %v1106
    %v1435 = vunpack.c.h.b16 %v1106
    %v1436 = vunpack.c.l.b16 %v1107
    %v1437 = vunpack.c.h.b16 %v1107
    %v1438 = vunpack.c.l.b16 %v1108
    %v1439 = vunpack.c.h.b16 %v1108
    %v1440 = vunpack.c.l.b16 %v1109
    %v1441 = vunpack.c.h.b16 %v1109
    %v1442 = vunpack.c.l.b16 %v1110
    %v1443 = vunpack.c.h.b16 %v1110
    %v1444 = vunpack.c.l.b16 %v1111
    %v1445 = vunpack.c.h.b16 %v1111
    %v1446 = vunpack.c.l.b16 %v1112
    %v1447 = vunpack.c.h.b16 %v1112
    %v1448 = vunpack.c.l.b16 %v1113
    %v1449 = vunpack.c.h.b16 %v1113
    %v1450 = vunpack.c.l.b16 %v1114
    %v1451 = vunpack.c.h.b16 %v1114
    %v1452 = vunpack.c.l.b16 %v1115
    %v1453 = vunpack.c.h.b16 %v1115
    %v1454 = vunpack.c.l.b16 %v1116
    %v1455 = vunpack.c.h.b16 %v1116
    %v1456 = vunpack.c.l.b16 %v1117
    %v1457 = vunpack.c.h.b16 %v1117
    %v1458 = vunpack.c.l.b16 %v1118
    %v1459 = vunpack.c.h.b16 %v1118
    %v1460 = vunpack.c.l.b16 %v1119
    %v1461 = vunpack.c.h.b16 %v1119
    %v1462 = vunpack.c.l.b16 %v1120
    %v1463 = vunpack.c.h.b16 %v1120
    %v1464 = vunpack.c.l.b16 %v1121
    %v1465 = vunpack.c.h.b16 %v1121
    %v1466 = vunpack.c.l.b16 %v1122
    %v1467 = vunpack.c.h.b16 %v1122
    %v1468 = vunpack.c.l.b16 %v1123
    %v1469 = vunpack.c.h.b16 %v1123
    %v1470 = vunpack.c.l.b16 %v1124
    %v1471 = vunpack.c.h.b16 %v1124
    %v1472 = vunpack.c.l.b16 %v1125
    %v1473 = vunpack.c.h.b16 %v1125
    %v1474 = vunpack.c.l.b16 %v1126
    %v1475 = vunpack.c.h.b16 %v1126
    %v1476 = vunpack.c.l.b16 %v1127
    %v1477 = vunpack.c.h.b16 %v1127
    %v1478 = vunpack.c.l.b16 %v1128
    %v1479 = vunpack.c.h.b16 %v1128
    %v1480 = vunpack.c.l.b16 %v1129
    %v1481 = vunpack.c.h.b16 %v1129
    %v1482 = vunpack.c.l.b16 %v1130
    %v1483 = vunpack.c.h.b16 %v1130
    %v1484 = vunpack.c.l.b16 %v1131
    %v1485 = vunpack.c.h.b16 %v1131
    %v1486 = vunpack.c.l.b16 %v1132
    %v1487 = vunpack.c.h.b16 %v1132
    %v1488 = vunpack.c.l.b16 %v1133
    %v1489 = vunpack.c.h.b16 %v1133
    %v1490 = vunpack.c.l.b16 %v1134
    %v1491 = vunpack.c.h.b16 %v1134
    %v1492 = vunpack.c.l.b16 %v1135
    %v1493 = vunpack.c.h.b16 %v1135
    %v1494 = vunpack.c.l.b16 %v1136
    %v1495 = vunpack.c.h.b16 %v1136
    %v1496 = vunpack.c.l.b16 %v1137
    %v1497 = vunpack.c.h.b16 %v1137
    %v1498 = vunpack.c.l.b16 %v1138
    %v1499 = vunpack.c.h.b16 %v1138
    %v1500 = vunpack.c.l.b16 %v1139
    %v1501 = vunpack.c.h.b16 %v1139
    %v1502 = vunpack.c.l.b16 %v1140
    %v1503 = vunpack.c.h.b16 %v1140
    %v1504 = vunpack.c.l.b16 %v1141
    %v1505 = vunpack.c.h.b16 %v1141
    %v1506 = vunpack.c.l.b16 %v1142
    %v1507 = vunpack.c.h.b16 %v1142
    %v1508 = vunpack.c.l.b16 %v1143
    %v1509 = vunpack.c.h.b16 %v1143
    %v1510 = vunpack.c.l.b16 %v1144
    %v1511 = vunpack.c.h.b16 %v1144
    %v1512 = vunpack.c.l.b16 %v1145
    %v1513 = vunpack.c.h.b16 %v1145
    %v1514 = vunpack.c.l.b16 %v1146
    %v1515 = vunpack.c.h.b16 %v1146
    %v1516 = vunpack.c.l.b16 %v1147
    %v1517 = vunpack.c.h.b16 %v1147
    %v1518 = vunpack.c.l.b16 %v1148
    %v1519 = vunpack.c.h.b16 %v1148
    %v1520 = vunpack.c.l.b16 %v1149
    %v1521 = vunpack.c.h.b16 %v1149
    %v1522 = vunpack.c.l.b16 %v1150
    %v1523 = vunpack.c.h.b16 %v1150
    %v1524 = vunpack.c.l.b16 %v1151
    %v1525 = vunpack.c.h.b16 %v1151
    %v1526 = vunpack.c.l.b16 %v1152
    %v1527 = vunpack.c.h.b16 %v1152
    %v1528 = vunpack.c.l.b16 %v1153
    %v1529 = vunpack.c.h.b16 %v1153
    %v1530 = vunpack.c.l.b16 %v1154
    %v1531 = vunpack.c.h.b16 %v1154
    %v1532 = vunpack.c.l.b16 %v1155
    %v1533 = vunpack.c.h.b16 %v1155
    %v1534 = vunpack.c.l.b16 %v1156
    %v1535 = vunpack.c.h.b16 %v1156
    %v1536 = vunpack.c.l.b16 %v1157
    %v1537 = vunpack.c.h.b16 %v1157
    %v1538 = vunpack.c.l.b16 %v1158
    %v1539 = vunpack.c.h.b16 %v1158
    %v1540 = vunpack.c.l.b16 %v1159
    %v1541 = vunpack.c.h.b16 %v1159
    %v1542 = vunpack.c.l.b16 %v1160
    %v1543 = vunpack.c.h.b16 %v1160
    %v1544 = vunpack.c.l.b16 %v1161
    %v1545 = vunpack.c.h.b16 %v1161
    %v1546 = vunpack.c.l.b16 %v1162
    %v1547 = vunpack.c.h.b16 %v1162
    %v1548 = vunpack.c.l.b16 %v1163
    %v1549 = vunpack.c.h.b16 %v1163
    %v1550 = vunpack.c.l.b16 %v1164
    %v1551 = vunpack.c.h.b16 %v1164
    %v1552 = vunpack.c.l.b16 %v1165
    %v1553 = vunpack.c.h.b16 %v1165
    %v1554 = vunpack.c.l.b16 %v1166
    %v1555 = vunpack.c.h.b16 %v1166
    %v1556 = vunpack.c.l.b16 %v1167
    %v1557 = vunpack.c.h.b16 %v1167
    %v1558 = vunpack.c.l.b16 %v1168
    %v1559 = vunpack.c.h.b16 %v1168
    %v1560 = vunpack.c.l.b16 %v1169
    %v1561 = vunpack.c.h.b16 %v1169
    %v1562 = vunpack.c.l.b16 %v1170
    %v1563 = vunpack.c.h.b16 %v1170
    %v1564 = vunpack.c.l.b16 %v1171
    %v1565 = vunpack.c.h.b16 %v1171
    %v1566 = vunpack.c.l.b16 %v1172
    %v1567 = vunpack.c.h.b16 %v1172
    %v1568 = vunpack.c.l.b16 %v1173
    %v1569 = vunpack.c.h.b16 %v1173
    %v1570 = vunpack.c.l.b16 %v1174
    %v1571 = vunpack.c.h.b16 %v1174
    %v1572 = vunpack.c.l.b16 %v1175
    %v1573 = vunpack.c.h.b16 %v1175
    %v1574 = vunpack.c.l.b16 %v1176
    %v1575 = vunpack.c.h.b16 %v1176
    %v1576 = vunpack.c.l.b16 %v1177
    %v1577 = vunpack.c.h.b16 %v1177
    %v1578 = vunpack.c.l.b16 %v1178
    %v1579 = vunpack.c.h.b16 %v1178
    %v1580 = vunpack.c.l.b16 %v1179
    %v1581 = vunpack.c.h.b16 %v1179
    %v1582 = vunpack.c.l.b16 %v1180
    %v1583 = vunpack.c.h.b16 %v1180
    %v1584 = vunpack.c.l.b16 %v1181
    %v1585 = vunpack.c.h.b16 %v1181
    %v1586 = vunpack.c.l.b16 %v1182
    %v1587 = vunpack.c.h.b16 %v1182
    %v1588 = vunpack.c.l.b16 %v1183
    %v1589 = vunpack.c.h.b16 %v1183
    %v1590 = vunpack.c.l.b16 %v1184
    %v1591 = vunpack.c.h.b16 %v1184
    %v1592 = vunpack.c.l.b16 %v1185
    %v1593 = vunpack.c.h.b16 %v1185
    %v1594 = vunpack.c.l.b16 %v1186
    %v1595 = vunpack.c.h.b16 %v1186
    %v1596 = vunpack.c.l.b16 %v1187
    %v1597 = vunpack.c.h.b16 %v1187
    %v1598 = vunpack.c.l.b16 %v1188
    %v1599 = vunpack.c.h.b16 %v1188
    %v1600 = vunpack.c.l.b16 %v1189
    %v1601 = vunpack.c.h.b16 %v1189
    %v1602 = vunpack.c.l.b16 %v1190
    %v1603 = vunpack.c.h.b16 %v1190
    %v1604 = vunpack.c.l.b16 %v1191
    %v1605 = vunpack.c.h.b16 %v1191
    %v1606 = vunpack.c.l.b16 %v1192
    %v1607 = vunpack.c.h.b16 %v1192
    %v1608 = vunpack.c.l.b16 %v1193
    %v1609 = vunpack.c.h.b16 %v1193
    %v1610 = vunpack.c.l.b16 %v1194
    %v1611 = vunpack.c.h.b16 %v1194
    %v1612 = vunpack.c.l.b16 %v1195
    %v1613 = vunpack.c.h.b16 %v1195
    %v1614 = vunpack.c.l.b16 %v1196
    %v1615 = vunpack.c.h.b16 %v1196
    %v1616 = vunpack.c.l.b16 %v1197
    %v1617 = vunpack.c.h.b16 %v1197
    %v1618 = vpack.c.b16 %v1378, %v1362
    %v1619 = vpack.c.b16 %v1379, %v1363
    %v1620 = vpack.c.b16 %v1380, %v1364
    %v1621 = vpack.c.b16 %v1381, %v1365
    %v1622 = vpack.c.b16 %v1382, %v1366
    %v1623 = vpack.c.b16 %v1383, %v1367
    %v1624 = vpack.c.b16 %v1384, %v1368
    %v1625 = vpack.c.b16 %v1385, %v1369
    %v1626 = vpack.c.b16 %v1386, %v1370
    %v1627 = vpack.c.b16 %v1387, %v1371
    %v1628 = vpack.c.b16 %v1388, %v1372
    %v1629 = vpack.c.b16 %v1389, %v1373
    %v1630 = vpack.c.b16 %v1390, %v1374
    %v1631 = vpack.c.b16 %v1391, %v1375
    %v1632 = vpack.c.b16 %v1392, %v1376
    %v1633 = vpack.c.b16 %v1393, %v1377
    %v1634 = vpack.c.b16 %v1410, %v1394
    %v1635 = vpack.c.b16 %v1411, %v1395
    %v1636 = vpack.c.b16 %v1412, %v1396
    %v1637 = vpack.c.b16 %v1413, %v1397
    %v1638 = vpack.c.b16 %v1414, %v1398
    %v1639 = vpack.c.b16 %v1415, %v1399
    %v1640 = vpack.c.b16 %v1416, %v1400
    %v1641 = vpack.c.b16 %v1417, %v1401
    %v1642 = vpack.c.b16 %v1418, %v1402
    %v1643 = vpack.c.b16 %v1419, %v1403
    %v1644 = vpack.c.b16 %v1420, %v1404
    %v1645 = vpack.c.b16 %v1421, %v1405
    %v1646 = vpack.c.b16 %v1422, %v1406
    %v1647 = vpack.c.b16 %v1423, %v1407
    %v1648 = vpack.c.b16 %v1424, %v1408
    %v1649 = vpack.c.b16 %v1425, %v1409
    %v1650 = vpack.c.b16 %v1442, %v1426
    %v1651 = vpack.c.b16 %v1443, %v1427
    %v1652 = vpack.c.b16 %v1444, %v1428
    %v1653 = vpack.c.b16 %v1445, %v1429
    %v1654 = vpack.c.b16 %v1446, %v1430
    %v1655 = vpack.c.b16 %v1447, %v1431
    %v1656 = vpack.c.b16 %v1448, %v1432
    %v1657 = vpack.c.b16 %v1449, %v1433
    %v1658 = vpack.c.b16 %v1450, %v1434
    %v1659 = vpack.c.b16 %v1451, %v1435
    %v1660 = vpack.c.b16 %v1452, %v1436
    %v1661 = vpack.c.b16 %v1453, %v1437
    %v1662 = vpack.c.b16 %v1454, %v1438
    %v1663 = vpack.c.b16 %v1455, %v1439
    %v1664 = vpack.c.b16 %v1456, %v1440
    %v1665 = vpack.c.b16 %v1457, %v1441
    %v1666 = vpack.c.b16 %v1474, %v1458
    %v1667 = vpack.c.b16 %v1475, %v1459
    %v1668 = vpack.c.b16 %v1476, %v1460
    %v1669 = vpack.c.b16 %v1477, %v1461
    %v1670 = vpack.c.b16 %v1478, %v1462
    %v1671 = vpack.c.b16 %v1479, %v1463
    %v1672 = vpack.c.b16 %v1480, %v1464
    %v1673 = vpack.c.b16 %v1481, %v1465
    %v1674 = vpack.c.b16 %v1482, %v1466
    %v1675 = vpack.c.b16 %v1483, %v1467
    %v1676 = vpack.c.b16 %v1484, %v1468
    %v1677 = vpack.c.b16 %v1485, %v1469
    %v1678 = vpack.c.b16 %v1486, %v1470
    %v1679 = vpack.c.b16 %v1487, %v1471
    %v1680 = vpack.c.b16 %v1488, %v1472
    %v1681 = vpack.c.b16 %v1489, %v1473
    %v1682 = vpack.c.b16 %v1506, %v1490
    %v1683 = vpack.c.b16 %v1507, %v1491
    %v1684 = vpack.c.b16 %v1508, %v1492
    %v1685 = vpack.c.b16 %v1509, %v1493
    %v1686 = vpack.c.b16 %v1510, %v1494
    %v1687 = vpack.c.b16 %v1511, %v1495
    %v1688 = vpack.c.b16 %v1512, %v1496
    %v1689 = vpack.c.b16 %v1513, %v1497
    %v1690 = vpack.c.b16 %v1514, %v1498
    %v1691 = vpack.c.b16 %v1515, %v1499
    %v1692 = vpack.c.b16 %v1516, %v1500
    %v1693 = vpack.c.b16 %v1517, %v1501
    %v1694 = vpack.c.b16 %v1518, %v1502
    %v1695 = vpack.c.b16 %v1519, %v1503
    %v1696 = vpack.c.b16 %v1520, %v1504
    %v1697 = vpack.c.b16 %v1521, %v1505
    %v1698 = vpack.c.b16 %v1538, %v1522
    %v1699 = vpack.c.b16 %v1539, %v1523
    %v1700 = vpack.c.b16 %v1540, %v1524
    %v1701 = vpack.c.b16 %v1541, %v1525
    %v1702 = vpack.c.b16 %v1542, %v1526
    %v1703 = vpack.c.b16 %v1543, %v1527
    %v1704 = vpack.c.b16 %v1544, %v1528
    %v1705 = vpack.c.b16 %v1545, %v1529
    %v1706 = vpack.c.b16 %v1546, %v1530
    %v1707 = vpack.c.b16 %v1547, %v1531
    %v1708 = vpack.c.b16 %v1548, %v1532
    %v1709 = vpack.c.b16 %v1549, %v1533
    %v1710 = vpack.c.b16 %v1550, %v1534
    %v1711 = vpack.c.b16 %v1551, %v1535
    %v1712 = vpack.c.b16 %v1552, %v1536
    %v1713 = vpack.c.b16 %v1553, %v1537
    %v1714 = vpack.c.b16 %v1570, %v1554
    %v1715 = vpack.c.b16 %v1571, %v1555
    %v1716 = vpack.c.b16 %v1572, %v1556
    %v1717 = vpack.c.b16 %v1573, %v1557
    %v1718 = vpack.c.b16 %v1574, %v1558
    %v1719 = vpack.c.b16 %v1575, %v1559
    %v1720 = vpack.c.b16 %v1576, %v1560
    %v1721 = vpack.c.b16 %v1577, %v1561
    %v1722 = vpack.c.b16 %v1578, %v1562
    %v1723 = vpack.c.b16 %v1579, %v1563
    %v1724 = vpack.c.b16 %v1580, %v1564
    %v1725 = vpack.c.b16 %v1581, %v1565
    %v1726 = vpack.c.b16 %v1582, %v1566
    %v1727 = vpack.c.b16 %v1583, %v1567
    %v1728 = vpack.c.b16 %v1584, %v1568
    %v1729 = vpack.c.b16 %v1585, %v1569
    %v1730 = vpack.c.b16 %v1602, %v1586
    %v1731 = vpack.c.b16 %v1603, %v1587
    %v1732 = vpack.c.b16 %v1604, %v1588
    %v1733 = vpack.c.b16 %v1605, %v1589
    %v1734 = vpack.c.b16 %v1606, %v1590
    %v1735 = vpack.c.b16 %v1607, %v1591
    %v1736 = vpack.c.b16 %v1608, %v1592
    %v1737 = vpack.c.b16 %v1609, %v1593
    %v1738 = vpack.c.b16 %v1610, %v1594
    %v1739 = vpack.c.b16 %v1611, %v1595
    %v1740 = vpack.c.b16 %v1612, %v1596
    %v1741 = vpack.c.b16 %v1613, %v1597
    %v1742 = vpack.c.b16 %v1614, %v1598
    %v1743 = vpack.c.b16 %v1615, %v1599
    %v1744 = vpack.c.b16 %v1616, %v1600
    %v1745 = vpack.c.b16 %v1617, %v1601
    %1874 = vmatpush.bf16.msra.mxu0 %v1730
    %1875 = vmatpush.bf16.msra.mxu0 %v1714
    %1876 = vmatpush.bf16.msra.mxu0 %v1698
    %1877 = vmatpush.bf16.msra.mxu0 %v1682
    %1878 = vmatpush.bf16.msra.mxu0 %v1666
    %1879 = vmatpush.bf16.msra.mxu0 %v1650
    %1880 = vmatpush.bf16.msra.mxu0 %v1634
    %1881 = vmatpush.bf16.msra.mxu0 %v1618
    %1882 = vmatmul.bf16.gmra.mxu0 %v1069
    %v1883 = vpop.f32.mrf.mxu0
    %v1884 = vadd.f32 %v1202, %v1883
    %v1885 = vpop.f32.mrf.mxu0
    %v1886 = vadd.f32 %v1202, %v1885
    %1887 = vdwg.mxu0
    %1888 = vmatpush.bf16.msra.mxu0 %v1731
    %1889 = vmatpush.bf16.msra.mxu0 %v1715
    %1890 = vmatpush.bf16.msra.mxu0 %v1699
    %1891 = vmatpush.bf16.msra.mxu0 %v1683
    %1892 = vmatpush.bf16.msra.mxu0 %v1667
    %1893 = vmatpush.bf16.msra.mxu0 %v1651
    %1894 = vmatpush.bf16.msra.mxu0 %v1635
    %1895 = vmatpush.bf16.msra.mxu0 %v1619
    %1896 = vmatmul.bf16.gmra.mxu0 %v1069
    %v1897 = vpop.f32.mrf.mxu0
    %v1898 = vadd.f32 %v1203, %v1897
    %v1899 = vpop.f32.mrf.mxu0
    %v1900 = vadd.f32 %v1203, %v1899
    %1901 = vdwg.mxu0
    %1902 = vmatpush.bf16.msra.mxu0 %v1732
    %1903 = vmatpush.bf16.msra.mxu0 %v1716
    %1904 = vmatpush.bf16.msra.mxu0 %v1700
    %1905 = vmatpush.bf16.msra.mxu0 %v1684
    %1906 = vmatpush.bf16.msra.mxu0 %v1668
    %1907 = vmatpush.bf16.msra.mxu0 %v1652
    %1908 = vmatpush.bf16.msra.mxu0 %v1636
    %1909 = vmatpush.bf16.msra.mxu0 %v1620
    %1910 = vmatmul.bf16.gmra.mxu0 %v1069
    %v1911 = vpop.f32.mrf.mxu0
    %v1912 = vadd.f32 %v1204, %v1911
    %v1913 = vpop.f32.mrf.mxu0
    %v1914 = vadd.f32 %v1204, %v1913
    %1915 = vdwg.mxu0
    %1916 = vmatpush.bf16.msra.mxu0 %v1733
    %1917 = vmatpush.bf16.msra.mxu0 %v1717
    %1918 = vmatpush.bf16.msra.mxu0 %v1701
    %1919 = vmatpush.bf16.msra.mxu0 %v1685
    %1920 = vmatpush.bf16.msra.mxu0 %v1669
    %1921 = vmatpush.bf16.msra.mxu0 %v1653
    %1922 = vmatpush.bf16.msra.mxu0 %v1637
    %1923 = vmatpush.bf16.msra.mxu0 %v1621
    %1924 = vmatmul.bf16.gmra.mxu0 %v1069
    %v1925 = vpop.f32.mrf.mxu0
    %v1926 = vadd.f32 %v1205, %v1925
    %v1927 = vpop.f32.mrf.mxu0
    %v1928 = vadd.f32 %v1205, %v1927
    %1929 = vdwg.mxu0
    %1930 = vmatpush.bf16.msra.mxu0 %v1734
    %1931 = vmatpush.bf16.msra.mxu0 %v1718
    %1932 = vmatpush.bf16.msra.mxu0 %v1702
    %1933 = vmatpush.bf16.msra.mxu0 %v1686
    %1934 = vmatpush.bf16.msra.mxu0 %v1670
    %1935 = vmatpush.bf16.msra.mxu0 %v1654
    %1936 = vmatpush.bf16.msra.mxu0 %v1638
    %1937 = vmatpush.bf16.msra.mxu0 %v1622
    %1938 = vmatmul.bf16.gmra.mxu0 %v1069
    %v1939 = vpop.f32.mrf.mxu0
    %v1940 = vadd.f32 %v1206, %v1939
    %v1941 = vpop.f32.mrf.mxu0
    %v1942 = vadd.f32 %v1206, %v1941
    %1943 = vdwg.mxu0
    %1944 = vmatpush.bf16.msra.mxu0 %v1735
    %1945 = vmatpush.bf16.msra.mxu0 %v1719
    %1946 = vmatpush.bf16.msra.mxu0 %v1703
    %1947 = vmatpush.bf16.msra.mxu0 %v1687
    %1948 = vmatpush.bf16.msra.mxu0 %v1671
    %1949 = vmatpush.bf16.msra.mxu0 %v1655
    %1950 = vmatpush.bf16.msra.mxu0 %v1639
    %1951 = vmatpush.bf16.msra.mxu0 %v1623
    %1952 = vmatmul.bf16.gmra.mxu0 %v1069
    %v1953 = vpop.f32.mrf.mxu0
    %v1954 = vadd.f32 %v1207, %v1953
    %v1955 = vpop.f32.mrf.mxu0
    %v1956 = vadd.f32 %v1207, %v1955
    %1957 = vdwg.mxu0
    %1958 = vmatpush.bf16.msra.mxu0 %v1736
    %1959 = vmatpush.bf16.msra.mxu0 %v1720
    %1960 = vmatpush.bf16.msra.mxu0 %v1704
    %1961 = vmatpush.bf16.msra.mxu0 %v1688
    %1962 = vmatpush.bf16.msra.mxu0 %v1672
    %1963 = vmatpush.bf16.msra.mxu0 %v1656
    %1964 = vmatpush.bf16.msra.mxu0 %v1640
    %1965 = vmatpush.bf16.msra.mxu0 %v1624
    %1966 = vmatmul.bf16.gmra.mxu0 %v1069
    %v1967 = vpop.f32.mrf.mxu0
    %v1968 = vadd.f32 %v1208, %v1967
    %v1969 = vpop.f32.mrf.mxu0
    %v1970 = vadd.f32 %v1208, %v1969
    %1971 = vdwg.mxu0
    %1972 = vmatpush.bf16.msra.mxu0 %v1737
    %1973 = vmatpush.bf16.msra.mxu0 %v1721
    %1974 = vmatpush.bf16.msra.mxu0 %v1705
    %1975 = vmatpush.bf16.msra.mxu0 %v1689
    %1976 = vmatpush.bf16.msra.mxu0 %v1673
    %1977 = vmatpush.bf16.msra.mxu0 %v1657
    %1978 = vmatpush.bf16.msra.mxu0 %v1641
    %1979 = vmatpush.bf16.msra.mxu0 %v1625
    %1980 = vmatmul.bf16.gmra.mxu0 %v1069
    %v1981 = vpop.f32.mrf.mxu0
    %v1982 = vadd.f32 %v1209, %v1981
    %v1983 = vpop.f32.mrf.mxu0
    %v1984 = vadd.f32 %v1209, %v1983
    %1985 = vdwg.mxu0
    %1986 = vmatpush.bf16.msra.mxu0 %v1738
    %1987 = vmatpush.bf16.msra.mxu0 %v1722
    %1988 = vmatpush.bf16.msra.mxu0 %v1706
    %1989 = vmatpush.bf16.msra.mxu0 %v1690
    %1990 = vmatpush.bf16.msra.mxu0 %v1674
    %1991 = vmatpush.bf16.msra.mxu0 %v1658
    %1992 = vmatpush.bf16.msra.mxu0 %v1642
    %1993 = vmatpush.bf16.msra.mxu0 %v1626
    %1994 = vmatmul.bf16.gmra.mxu0 %v1069
    %v1995 = vpop.f32.mrf.mxu0
    %v1996 = vadd.f32 %v1210, %v1995
    %v1997 = vpop.f32.mrf.mxu0
    %v1998 = vadd.f32 %v1210, %v1997
    %1999 = vdwg.mxu0
    %2000 = vmatpush.bf16.msra.mxu0 %v1739
    %2001 = vmatpush.bf16.msra.mxu0 %v1723
    %2002 = vmatpush.bf16.msra.mxu0 %v1707
    %2003 = vmatpush.bf16.msra.mxu0 %v1691
    %2004 = vmatpush.bf16.msra.mxu0 %v1675
    %2005 = vmatpush.bf16.msra.mxu0 %v1659
    %2006 = vmatpush.bf16.msra.mxu0 %v1643
    %2007 = vmatpush.bf16.msra.mxu0 %v1627
    %2008 = vmatmul.bf16.gmra.mxu0 %v1069
    %v2009 = vpop.f32.mrf.mxu0
    %v2010 = vadd.f32 %v1211, %v2009
    %v2011 = vpop.f32.mrf.mxu0
    %v2012 = vadd.f32 %v1211, %v2011
    %2013 = vdwg.mxu0
    %2014 = vmatpush.bf16.msra.mxu0 %v1740
    %2015 = vmatpush.bf16.msra.mxu0 %v1724
    %2016 = vmatpush.bf16.msra.mxu0 %v1708
    %2017 = vmatpush.bf16.msra.mxu0 %v1692
    %2018 = vmatpush.bf16.msra.mxu0 %v1676
    %2019 = vmatpush.bf16.msra.mxu0 %v1660
    %2020 = vmatpush.bf16.msra.mxu0 %v1644
    %2021 = vmatpush.bf16.msra.mxu0 %v1628
    %2022 = vmatmul.bf16.gmra.mxu0 %v1069
    %v2023 = vpop.f32.mrf.mxu0
    %v2024 = vadd.f32 %v1212, %v2023
    %v2025 = vpop.f32.mrf.mxu0
    %v2026 = vadd.f32 %v1212, %v2025
    %2027 = vdwg.mxu0
    %2028 = vmatpush.bf16.msra.mxu0 %v1741
    %2029 = vmatpush.bf16.msra.mxu0 %v1725
    %2030 = vmatpush.bf16.msra.mxu0 %v1709
    %2031 = vmatpush.bf16.msra.mxu0 %v1693
    %2032 = vmatpush.bf16.msra.mxu0 %v1677
    %2033 = vmatpush.bf16.msra.mxu0 %v1661
    %2034 = vmatpush.bf16.msra.mxu0 %v1645
    %2035 = vmatpush.bf16.msra.mxu0 %v1629
    %2036 = vmatmul.bf16.gmra.mxu0 %v1069
    %v2037 = vpop.f32.mrf.mxu0
    %v2038 = vadd.f32 %v1213, %v2037
    %v2039 = vpop.f32.mrf.mxu0
    %v2040 = vadd.f32 %v1213, %v2039
    %2041 = vdwg.mxu0
    %2042 = vmatpush.bf16.msra.mxu0 %v1742
    %2043 = vmatpush.bf16.msra.mxu0 %v1726
    %2044 = vmatpush.bf16.msra.mxu0 %v1710
    %2045 = vmatpush.bf16.msra.mxu0 %v1694
    %2046 = vmatpush.bf16.msra.mxu0 %v1678
    %2047 = vmatpush.bf16.msra.mxu0 %v1662
    %2048 = vmatpush.bf16.msra.mxu0 %v1646
    %2049 = vmatpush.bf16.msra.mxu0 %v1630
    %2050 = vmatmul.bf16.gmra.mxu0 %v1069
    %v2051 = vpop.f32.mrf.mxu0
    %v2052 = vadd.f32 %v1214, %v2051
    %v2053 = vpop.f32.mrf.mxu0
    %v2054 = vadd.f32 %v1214, %v2053
    %2055 = vdwg.mxu0
    %2056 = vmatpush.bf16.msra.mxu0 %v1743
    %2057 = vmatpush.bf16.msra.mxu0 %v1727
    %2058 = vmatpush.bf16.msra.mxu0 %v1711
    %2059 = vmatpush.bf16.msra.mxu0 %v1695
    %2060 = vmatpush.bf16.msra.mxu0 %v1679
    %2061 = vmatpush.bf16.msra.mxu0 %v1663
    %2062 = vmatpush.bf16.msra.mxu0 %v1647
    %2063 = vmatpush.bf16.msra.mxu0 %v1631
    %2064 = vmatmul.bf16.gmra.mxu0 %v1069
    %v2065 = vpop.f32.mrf.mxu0
    %v2066 = vadd.f32 %v1215, %v2065
    %v2067 = vpop.f32.mrf.mxu0
    %v2068 = vadd.f32 %v1215, %v2067
    %2069 = vdwg.mxu0
    %2070 = vmatpush.bf16.msra.mxu0 %v1744
    %2071 = vmatpush.bf16.msra.mxu0 %v1728
    %2072 = vmatpush.bf16.msra.mxu0 %v1712
    %2073 = vmatpush.bf16.msra.mxu0 %v1696
    %2074 = vmatpush.bf16.msra.mxu0 %v1680
    %2075 = vmatpush.bf16.msra.mxu0 %v1664
    %2076 = vmatpush.bf16.msra.mxu0 %v1648
    %2077 = vmatpush.bf16.msra.mxu0 %v1632
    %2078 = vmatmul.bf16.gmra.mxu0 %v1069
    %v2079 = vpop.f32.mrf.mxu0
    %v2080 = vadd.f32 %v1216, %v2079
    %v2081 = vpop.f32.mrf.mxu0
    %v2082 = vadd.f32 %v1216, %v2081
    %2083 = vdwg.mxu0
    %2084 = vmatpush.bf16.msra.mxu0 %v1745
    %2085 = vmatpush.bf16.msra.mxu0 %v1729
    %2086 = vmatpush.bf16.msra.mxu0 %v1713
    %2087 = vmatpush.bf16.msra.mxu0 %v1697
    %2088 = vmatpush.bf16.msra.mxu0 %v1681
    %2089 = vmatpush.bf16.msra.mxu0 %v1665
    %2090 = vmatpush.bf16.msra.mxu0 %v1649
    %2091 = vmatpush.bf16.msra.mxu0 %v1633
    %2092 = vmatmul.bf16.gmra.mxu0 %v1069
    %v2093 = vpop.f32.mrf.mxu0
    %v2094 = vadd.f32 %v1217, %v2093
    %v2095 = vpop.f32.mrf.mxu0
    %v2096 = vadd.f32 %v1217, %v2095
    %2097 = vdwg.mxu0
    %v2098 = vmax.f32 %v1884, 0.0
    %v2099 = vmax.f32 %v1898, 0.0
    %v2100 = vmax.f32 %v1912, 0.0
    %v2101 = vmax.f32 %v1926, 0.0
    %v2102 = vmax.f32 %v1940, 0.0
    %v2103 = vmax.f32 %v1954, 0.0
    %v2104 = vmax.f32 %v1968, 0.0
    %v2105 = vmax.f32 %v1982, 0.0
    %v2106 = vmax.f32 %v1996, 0.0
    %v2107 = vmax.f32 %v2010, 0.0
    %v2108 = vmax.f32 %v2024, 0.0
    %v2109 = vmax.f32 %v2038, 0.0
    %v2110 = vmax.f32 %v2052, 0.0
    %v2111 = vmax.f32 %v2066, 0.0
    %v2112 = vmax.f32 %v2080, 0.0
    %v2113 = vmax.f32 %v2094, 0.0
    %v2114 = vmax.f32 %v1886, 0.0
    %v2115 = vmax.f32 %v1900, 0.0
    %v2116 = vmax.f32 %v1914, 0.0
    %v2117 = vmax.f32 %v1928, 0.0
    %v2118 = vmax.f32 %v1942, 0.0
    %v2119 = vmax.f32 %v1956, 0.0
    %v2120 = vmax.f32 %v1970, 0.0
    %v2121 = vmax.f32 %v1984, 0.0
    %v2122 = vmax.f32 %v1998, 0.0
    %v2123 = vmax.f32 %v2012, 0.0
    %v2124 = vmax.f32 %v2026, 0.0
    %v2125 = vmax.f32 %v2040, 0.0
    %v2126 = vmax.f32 %v2054, 0.0
    %v2127 = vmax.f32 %v2068, 0.0
    %v2128 = vmax.f32 %v2082, 0.0
    %v2129 = vmax.f32 %v2096, 0.0
    %v2130 = vpack.c.bf16 %v2114, %v2098
    %v2131 = vpack.c.bf16 %v2115, %v2099
    %v2132 = vpack.c.bf16 %v2116, %v2100
    %v2133 = vpack.c.bf16 %v2117, %v2101
    %v2134 = vpack.c.bf16 %v2118, %v2102
    %v2135 = vpack.c.bf16 %v2119, %v2103
    %v2136 = vpack.c.bf16 %v2120, %v2104
    %v2137 = vpack.c.bf16 %v2121, %v2105
    %v2138 = vpack.c.bf16 %v2122, %v2106
    %v2139 = vpack.c.bf16 %v2123, %v2107
    %v2140 = vpack.c.bf16 %v2124, %v2108
    %v2141 = vpack.c.bf16 %v2125, %v2109
    %v2142 = vpack.c.bf16 %v2126, %v2110
    %v2143 = vpack.c.bf16 %v2127, %v2111
    %v2144 = vpack.c.bf16 %v2128, %v2112
    %v2145 = vpack.c.bf16 %v2129, %v2113
    %v2146 = vld [vmem:[#allocation8] sm:$0xf]
    %v2147 = vld [vmem:[#allocation8 + $0x4] sm:$0xf]
    %v2148 = vld [vmem:[#allocation8 + $0x8] sm:$0xf]
    %v2149 = vld [vmem:[#allocation8 + $0xc] sm:$0xf]
    %v2150 = vld [vmem:[#allocation8 + $0x10] sm:$0xf]
    %v2151 = vld [vmem:[#allocation8 + $0x14] sm:$0xf]
    %v2152 = vld [vmem:[#allocation8 + $0x18] sm:$0xf]
    %v2153 = vld [vmem:[#allocation8 + $0x1c] sm:$0xf]
    %v2154 = vld [vmem:[#allocation8 + $0x20] sm:$0xf]
    %v2155 = vld [vmem:[#allocation8 + $0x24] sm:$0xf]
    %v2156 = vld [vmem:[#allocation8 + $0x28] sm:$0xf]
    %v2157 = vld [vmem:[#allocation8 + $0x2c] sm:$0xf]
    %v2158 = vld [vmem:[#allocation8 + $0x30] sm:$0xf]
    %v2159 = vld [vmem:[#allocation8 + $0x34] sm:$0xf]
    %v2160 = vld [vmem:[#allocation8 + $0x38] sm:$0xf]
    %v2161 = vld [vmem:[#allocation8 + $0x3c] sm:$0xf]
    %v2162 = vld [vmem:[#allocation8 + $0x40] sm:$0xf]
    %v2163 = vld [vmem:[#allocation8 + $0x44] sm:$0xf]
    %v2164 = vld [vmem:[#allocation8 + $0x48] sm:$0xf]
    %v2165 = vld [vmem:[#allocation8 + $0x4c] sm:$0xf]
    %v2166 = vld [vmem:[#allocation8 + $0x50] sm:$0xf]
    %v2167 = vld [vmem:[#allocation8 + $0x54] sm:$0xf]
    %v2168 = vld [vmem:[#allocation8 + $0x58] sm:$0xf]
    %v2169 = vld [vmem:[#allocation8 + $0x5c] sm:$0xf]
    %v2170 = vld [vmem:[#allocation8 + $0x60] sm:$0xf]
    %v2171 = vld [vmem:[#allocation8 + $0x64] sm:$0xf]
    %v2172 = vld [vmem:[#allocation8 + $0x68] sm:$0xf]
    %v2173 = vld [vmem:[#allocation8 + $0x6c] sm:$0xf]
    %v2174 = vld [vmem:[#allocation8 + $0x70] sm:$0xf]
    %v2175 = vld [vmem:[#allocation8 + $0x74] sm:$0xf]
    %v2176 = vld [vmem:[#allocation8 + $0x78] sm:$0xf]
    %v2177 = vld [vmem:[#allocation8 + $0x7c] sm:$0xf]
    %v2178 = vld [vmem:[#allocation8 + $0x80] sm:$0xf]
    %v2179 = vld [vmem:[#allocation8 + $0x84] sm:$0xf]
    %v2180 = vld [vmem:[#allocation8 + $0x88] sm:$0xf]
    %v2181 = vld [vmem:[#allocation8 + $0x8c] sm:$0xf]
    %v2182 = vld [vmem:[#allocation8 + $0x90] sm:$0xf]
    %v2183 = vld [vmem:[#allocation8 + $0x94] sm:$0xf]
    %v2184 = vld [vmem:[#allocation8 + $0x98] sm:$0xf]
    %v2185 = vld [vmem:[#allocation8 + $0x9c] sm:$0xf]
    %v2186 = vld [vmem:[#allocation8 + $0xa0] sm:$0xf]
    %v2187 = vld [vmem:[#allocation8 + $0xa4] sm:$0xf]
    %v2188 = vld [vmem:[#allocation8 + $0xa8] sm:$0xf]
    %v2189 = vld [vmem:[#allocation8 + $0xac] sm:$0xf]
    %v2190 = vld [vmem:[#allocation8 + $0xb0] sm:$0xf]
    %v2191 = vld [vmem:[#allocation8 + $0xb4] sm:$0xf]
    %v2192 = vld [vmem:[#allocation8 + $0xb8] sm:$0xf]
    %v2193 = vld [vmem:[#allocation8 + $0xbc] sm:$0xf]
    %v2194 = vld [vmem:[#allocation8 + $0xc0] sm:$0xf]
    %v2195 = vld [vmem:[#allocation8 + $0xc4] sm:$0xf]
    %v2196 = vld [vmem:[#allocation8 + $0xc8] sm:$0xf]
    %v2197 = vld [vmem:[#allocation8 + $0xcc] sm:$0xf]
    %v2198 = vld [vmem:[#allocation8 + $0xd0] sm:$0xf]
    %v2199 = vld [vmem:[#allocation8 + $0xd4] sm:$0xf]
    %v2200 = vld [vmem:[#allocation8 + $0xd8] sm:$0xf]
    %v2201 = vld [vmem:[#allocation8 + $0xdc] sm:$0xf]
    %v2202 = vld [vmem:[#allocation8 + $0xe0] sm:$0xf]
    %v2203 = vld [vmem:[#allocation8 + $0xe4] sm:$0xf]
    %v2204 = vld [vmem:[#allocation8 + $0xe8] sm:$0xf]
    %v2205 = vld [vmem:[#allocation8 + $0xec] sm:$0xf]
    %v2206 = vld [vmem:[#allocation8 + $0xf0] sm:$0xf]
    %v2207 = vld [vmem:[#allocation8 + $0xf4] sm:$0xf]
    %v2208 = vld [vmem:[#allocation8 + $0xf8] sm:$0xf]
    %v2209 = vld [vmem:[#allocation8 + $0xfc] sm:$0xf]
    %v2210 = vld [vmem:[#allocation8 + $0x100] sm:$0xf]
    %v2211 = vld [vmem:[#allocation8 + $0x104] sm:$0xf]
    %v2212 = vld [vmem:[#allocation8 + $0x108] sm:$0xf]
    %v2213 = vld [vmem:[#allocation8 + $0x10c] sm:$0xf]
    %v2214 = vld [vmem:[#allocation8 + $0x110] sm:$0xf]
    %v2215 = vld [vmem:[#allocation8 + $0x114] sm:$0xf]
    %v2216 = vld [vmem:[#allocation8 + $0x118] sm:$0xf]
    %v2217 = vld [vmem:[#allocation8 + $0x11c] sm:$0xf]
    %v2218 = vld [vmem:[#allocation8 + $0x120] sm:$0xf]
    %v2219 = vld [vmem:[#allocation8 + $0x124] sm:$0xf]
    %v2220 = vld [vmem:[#allocation8 + $0x128] sm:$0xf]
    %v2221 = vld [vmem:[#allocation8 + $0x12c] sm:$0xf]
    %v2222 = vld [vmem:[#allocation8 + $0x130] sm:$0xf]
    %v2223 = vld [vmem:[#allocation8 + $0x134] sm:$0xf]
    %v2224 = vld [vmem:[#allocation8 + $0x138] sm:$0xf]
    %v2225 = vld [vmem:[#allocation8 + $0x13c] sm:$0xf]
    %v2226 = vld [vmem:[#allocation8 + $0x140] sm:$0xf]
    %v2227 = vld [vmem:[#allocation8 + $0x144] sm:$0xf]
    %v2228 = vld [vmem:[#allocation8 + $0x148] sm:$0xf]
    %v2229 = vld [vmem:[#allocation8 + $0x14c] sm:$0xf]
    %v2230 = vld [vmem:[#allocation8 + $0x150] sm:$0xf]
    %v2231 = vld [vmem:[#allocation8 + $0x154] sm:$0xf]
    %v2232 = vld [vmem:[#allocation8 + $0x158] sm:$0xf]
    %v2233 = vld [vmem:[#allocation8 + $0x15c] sm:$0xf]
    %v2234 = vld [vmem:[#allocation8 + $0x160] sm:$0xf]
    %v2235 = vld [vmem:[#allocation8 + $0x164] sm:$0xf]
    %v2236 = vld [vmem:[#allocation8 + $0x168] sm:$0xf]
    %v2237 = vld [vmem:[#allocation8 + $0x16c] sm:$0xf]
    %v2238 = vld [vmem:[#allocation8 + $0x170] sm:$0xf]
    %v2239 = vld [vmem:[#allocation8 + $0x174] sm:$0xf]
    %v2240 = vld [vmem:[#allocation8 + $0x178] sm:$0xf]
    %v2241 = vld [vmem:[#allocation8 + $0x17c] sm:$0xf]
    %v2242 = vld [vmem:[#allocation8 + $0x180] sm:$0xf]
    %v2243 = vld [vmem:[#allocation8 + $0x184] sm:$0xf]
    %v2244 = vld [vmem:[#allocation8 + $0x188] sm:$0xf]
    %v2245 = vld [vmem:[#allocation8 + $0x18c] sm:$0xf]
    %v2246 = vld [vmem:[#allocation8 + $0x190] sm:$0xf]
    %v2247 = vld [vmem:[#allocation8 + $0x194] sm:$0xf]
    %v2248 = vld [vmem:[#allocation8 + $0x198] sm:$0xf]
    %v2249 = vld [vmem:[#allocation8 + $0x19c] sm:$0xf]
    %v2250 = vld [vmem:[#allocation8 + $0x1a0] sm:$0xf]
    %v2251 = vld [vmem:[#allocation8 + $0x1a4] sm:$0xf]
    %v2252 = vld [vmem:[#allocation8 + $0x1a8] sm:$0xf]
    %v2253 = vld [vmem:[#allocation8 + $0x1ac] sm:$0xf]
    %v2254 = vld [vmem:[#allocation8 + $0x1b0] sm:$0xf]
    %v2255 = vld [vmem:[#allocation8 + $0x1b4] sm:$0xf]
    %v2256 = vld [vmem:[#allocation8 + $0x1b8] sm:$0xf]
    %v2257 = vld [vmem:[#allocation8 + $0x1bc] sm:$0xf]
    %v2258 = vld [vmem:[#allocation8 + $0x1c0] sm:$0xf]
    %v2259 = vld [vmem:[#allocation8 + $0x1c4] sm:$0xf]
    %v2260 = vld [vmem:[#allocation8 + $0x1c8] sm:$0xf]
    %v2261 = vld [vmem:[#allocation8 + $0x1cc] sm:$0xf]
    %v2262 = vld [vmem:[#allocation8 + $0x1d0] sm:$0xf]
    %v2263 = vld [vmem:[#allocation8 + $0x1d4] sm:$0xf]
    %v2264 = vld [vmem:[#allocation8 + $0x1d8] sm:$0xf]
    %v2265 = vld [vmem:[#allocation8 + $0x1dc] sm:$0xf]
    %v2266 = vld [vmem:[#allocation8 + $0x1e0] sm:$0xf]
    %v2267 = vld [vmem:[#allocation8 + $0x1e4] sm:$0xf]
    %v2268 = vld [vmem:[#allocation8 + $0x1e8] sm:$0xf]
    %v2269 = vld [vmem:[#allocation8 + $0x1ec] sm:$0xf]
    %v2270 = vld [vmem:[#allocation8 + $0x1f0] sm:$0xf]
    %v2271 = vld [vmem:[#allocation8 + $0x1f4] sm:$0xf]
    %v2272 = vld [vmem:[#allocation8 + $0x1f8] sm:$0xf]
    %v2273 = vld [vmem:[#allocation8 + $0x1fc] sm:$0xf]
    %v2274 = vld [vmem:[#allocation8 + $0x200] sm:$0xf]
    %v2275 = vld [vmem:[#allocation8 + $0x204] sm:$0xf]
    %v2276 = vld [vmem:[#allocation8 + $0x208] sm:$0xf]
    %v2277 = vld [vmem:[#allocation8 + $0x20c] sm:$0xf]
    %v2278 = vld [vmem:[#allocation8 + $0x210] sm:$0xf]
    %v2279 = vld [vmem:[#allocation8 + $0x214] sm:$0xf]
    %v2280 = vld [vmem:[#allocation8 + $0x218] sm:$0xf]
    %v2281 = vld [vmem:[#allocation8 + $0x21c] sm:$0xf]
    %v2282 = vld [vmem:[#allocation8 + $0x220] sm:$0xf]
    %v2283 = vld [vmem:[#allocation8 + $0x224] sm:$0xf]
    %v2284 = vld [vmem:[#allocation8 + $0x228] sm:$0xf]
    %v2285 = vld [vmem:[#allocation8 + $0x22c] sm:$0xf]
    %v2286 = vld [vmem:[#allocation8 + $0x230] sm:$0xf]
    %v2287 = vld [vmem:[#allocation8 + $0x234] sm:$0xf]
    %v2288 = vld [vmem:[#allocation8 + $0x238] sm:$0xf]
    %v2289 = vld [vmem:[#allocation8 + $0x23c] sm:$0xf]
    %v2290 = vld [vmem:[#allocation8 + $0x240] sm:$0xf]
    %v2291 = vld [vmem:[#allocation8 + $0x244] sm:$0xf]
    %v2292 = vld [vmem:[#allocation8 + $0x248] sm:$0xf]
    %v2293 = vld [vmem:[#allocation8 + $0x24c] sm:$0xf]
    %v2294 = vld [vmem:[#allocation8 + $0x250] sm:$0xf]
    %v2295 = vld [vmem:[#allocation8 + $0x254] sm:$0xf]
    %v2296 = vld [vmem:[#allocation8 + $0x258] sm:$0xf]
    %v2297 = vld [vmem:[#allocation8 + $0x25c] sm:$0xf]
    %v2298 = vld [vmem:[#allocation8 + $0x260] sm:$0xf]
    %v2299 = vld [vmem:[#allocation8 + $0x264] sm:$0xf]
    %v2300 = vld [vmem:[#allocation8 + $0x268] sm:$0xf]
    %v2301 = vld [vmem:[#allocation8 + $0x26c] sm:$0xf]
    %v2302 = vld [vmem:[#allocation8 + $0x270] sm:$0xf]
    %v2303 = vld [vmem:[#allocation8 + $0x274] sm:$0xf]
    %v2304 = vld [vmem:[#allocation8 + $0x278] sm:$0xf]
    %v2305 = vld [vmem:[#allocation8 + $0x27c] sm:$0xf]
    %v2306 = vld [vmem:[#allocation8 + $0x280] sm:$0xf]
    %v2307 = vld [vmem:[#allocation8 + $0x284] sm:$0xf]
    %v2308 = vld [vmem:[#allocation8 + $0x288] sm:$0xf]
    %v2309 = vld [vmem:[#allocation8 + $0x28c] sm:$0xf]
    %v2310 = vld [vmem:[#allocation8 + $0x290] sm:$0xf]
    %v2311 = vld [vmem:[#allocation8 + $0x294] sm:$0xf]
    %v2312 = vld [vmem:[#allocation8 + $0x298] sm:$0xf]
    %v2313 = vld [vmem:[#allocation8 + $0x29c] sm:$0xf]
    %v2314 = vld [vmem:[#allocation8 + $0x2a0] sm:$0xf]
    %v2315 = vld [vmem:[#allocation8 + $0x2a4] sm:$0xf]
    %v2316 = vld [vmem:[#allocation8 + $0x2a8] sm:$0xf]
    %v2317 = vld [vmem:[#allocation8 + $0x2ac] sm:$0xf]
    %v2318 = vld [vmem:[#allocation8 + $0x2b0] sm:$0xf]
    %v2319 = vld [vmem:[#allocation8 + $0x2b4] sm:$0xf]
    %v2320 = vld [vmem:[#allocation8 + $0x2b8] sm:$0xf]
    %v2321 = vld [vmem:[#allocation8 + $0x2bc] sm:$0xf]
    %v2322 = vld [vmem:[#allocation8 + $0x2c0] sm:$0xf]
    %v2323 = vld [vmem:[#allocation8 + $0x2c4] sm:$0xf]
    %v2324 = vld [vmem:[#allocation8 + $0x2c8] sm:$0xf]
    %v2325 = vld [vmem:[#allocation8 + $0x2cc] sm:$0xf]
    %v2326 = vld [vmem:[#allocation8 + $0x2d0] sm:$0xf]
    %v2327 = vld [vmem:[#allocation8 + $0x2d4] sm:$0xf]
    %v2328 = vld [vmem:[#allocation8 + $0x2d8] sm:$0xf]
    %v2329 = vld [vmem:[#allocation8 + $0x2dc] sm:$0xf]
    %v2330 = vld [vmem:[#allocation8 + $0x2e0] sm:$0xf]
    %v2331 = vld [vmem:[#allocation8 + $0x2e4] sm:$0xf]
    %v2332 = vld [vmem:[#allocation8 + $0x2e8] sm:$0xf]
    %v2333 = vld [vmem:[#allocation8 + $0x2ec] sm:$0xf]
    %v2334 = vld [vmem:[#allocation8 + $0x2f0] sm:$0xf]
    %v2335 = vld [vmem:[#allocation8 + $0x2f4] sm:$0xf]
    %v2336 = vld [vmem:[#allocation8 + $0x2f8] sm:$0xf]
    %v2337 = vld [vmem:[#allocation8 + $0x2fc] sm:$0xf]
    %v2338 = vld [vmem:[#allocation8 + $0x300] sm:$0xf]
    %v2339 = vld [vmem:[#allocation8 + $0x304] sm:$0xf]
    %v2340 = vld [vmem:[#allocation8 + $0x308] sm:$0xf]
    %v2341 = vld [vmem:[#allocation8 + $0x30c] sm:$0xf]
    %v2342 = vld [vmem:[#allocation8 + $0x310] sm:$0xf]
    %v2343 = vld [vmem:[#allocation8 + $0x314] sm:$0xf]
    %v2344 = vld [vmem:[#allocation8 + $0x318] sm:$0xf]
    %v2345 = vld [vmem:[#allocation8 + $0x31c] sm:$0xf]
    %v2346 = vld [vmem:[#allocation8 + $0x320] sm:$0xf]
    %v2347 = vld [vmem:[#allocation8 + $0x324] sm:$0xf]
    %v2348 = vld [vmem:[#allocation8 + $0x328] sm:$0xf]
    %v2349 = vld [vmem:[#allocation8 + $0x32c] sm:$0xf]
    %v2350 = vld [vmem:[#allocation8 + $0x330] sm:$0xf]
    %v2351 = vld [vmem:[#allocation8 + $0x334] sm:$0xf]
    %v2352 = vld [vmem:[#allocation8 + $0x338] sm:$0xf]
    %v2353 = vld [vmem:[#allocation8 + $0x33c] sm:$0xf]
    %v2354 = vld [vmem:[#allocation8 + $0x340] sm:$0xf]
    %v2355 = vld [vmem:[#allocation8 + $0x344] sm:$0xf]
    %v2356 = vld [vmem:[#allocation8 + $0x348] sm:$0xf]
    %v2357 = vld [vmem:[#allocation8 + $0x34c] sm:$0xf]
    %v2358 = vld [vmem:[#allocation8 + $0x350] sm:$0xf]
    %v2359 = vld [vmem:[#allocation8 + $0x354] sm:$0xf]
    %v2360 = vld [vmem:[#allocation8 + $0x358] sm:$0xf]
    %v2361 = vld [vmem:[#allocation8 + $0x35c] sm:$0xf]
    %v2362 = vld [vmem:[#allocation8 + $0x360] sm:$0xf]
    %v2363 = vld [vmem:[#allocation8 + $0x364] sm:$0xf]
    %v2364 = vld [vmem:[#allocation8 + $0x368] sm:$0xf]
    %v2365 = vld [vmem:[#allocation8 + $0x36c] sm:$0xf]
    %v2366 = vld [vmem:[#allocation8 + $0x370] sm:$0xf]
    %v2367 = vld [vmem:[#allocation8 + $0x374] sm:$0xf]
    %v2368 = vld [vmem:[#allocation8 + $0x378] sm:$0xf]
    %v2369 = vld [vmem:[#allocation8 + $0x37c] sm:$0xf]
    %v2370 = vld [vmem:[#allocation8 + $0x380] sm:$0xf]
    %v2371 = vld [vmem:[#allocation8 + $0x384] sm:$0xf]
    %v2372 = vld [vmem:[#allocation8 + $0x388] sm:$0xf]
    %v2373 = vld [vmem:[#allocation8 + $0x38c] sm:$0xf]
    %v2374 = vld [vmem:[#allocation8 + $0x390] sm:$0xf]
    %v2375 = vld [vmem:[#allocation8 + $0x394] sm:$0xf]
    %v2376 = vld [vmem:[#allocation8 + $0x398] sm:$0xf]
    %v2377 = vld [vmem:[#allocation8 + $0x39c] sm:$0xf]
    %v2378 = vld [vmem:[#allocation8 + $0x3a0] sm:$0xf]
    %v2379 = vld [vmem:[#allocation8 + $0x3a4] sm:$0xf]
    %v2380 = vld [vmem:[#allocation8 + $0x3a8] sm:$0xf]
    %v2381 = vld [vmem:[#allocation8 + $0x3ac] sm:$0xf]
    %v2382 = vld [vmem:[#allocation8 + $0x3b0] sm:$0xf]
    %v2383 = vld [vmem:[#allocation8 + $0x3b4] sm:$0xf]
    %v2384 = vld [vmem:[#allocation8 + $0x3b8] sm:$0xf]
    %v2385 = vld [vmem:[#allocation8 + $0x3bc] sm:$0xf]
    %v2386 = vld [vmem:[#allocation8 + $0x3c0] sm:$0xf]
    %v2387 = vld [vmem:[#allocation8 + $0x3c4] sm:$0xf]
    %v2388 = vld [vmem:[#allocation8 + $0x3c8] sm:$0xf]
    %v2389 = vld [vmem:[#allocation8 + $0x3cc] sm:$0xf]
    %v2390 = vld [vmem:[#allocation8 + $0x3d0] sm:$0xf]
    %v2391 = vld [vmem:[#allocation8 + $0x3d4] sm:$0xf]
    %v2392 = vld [vmem:[#allocation8 + $0x3d8] sm:$0xf]
    %v2393 = vld [vmem:[#allocation8 + $0x3dc] sm:$0xf]
    %v2394 = vld [vmem:[#allocation8 + $0x3e0] sm:$0xf]
    %v2395 = vld [vmem:[#allocation8 + $0x3e4] sm:$0xf]
    %v2396 = vld [vmem:[#allocation8 + $0x3e8] sm:$0xf]
    %v2397 = vld [vmem:[#allocation8 + $0x3ec] sm:$0xf]
    %v2398 = vld [vmem:[#allocation8 + $0x3f0] sm:$0xf]
    %v2399 = vld [vmem:[#allocation8 + $0x3f4] sm:$0xf]
    %v2400 = vld [vmem:[#allocation8 + $0x3f8] sm:$0xf]
    %v2401 = vld [vmem:[#allocation8 + $0x3fc] sm:$0xf]
    %v2402 = vld [vmem:[%s8] sm:$0x1]
    %v2404 = vperm.slane %v2402, 0
    %v2662 = vunpack.c.l.b16 %v2146
    %v2663 = vunpack.c.l.b16 %v2147
    %v2664 = vunpack.c.l.b16 %v2148
    %v2665 = vunpack.c.l.b16 %v2149
    %v2666 = vunpack.c.l.b16 %v2150
    %v2667 = vunpack.c.l.b16 %v2151
    %v2668 = vunpack.c.l.b16 %v2152
    %v2669 = vunpack.c.l.b16 %v2153
    %v2670 = vunpack.c.l.b16 %v2154
    %v2671 = vunpack.c.l.b16 %v2155
    %v2672 = vunpack.c.l.b16 %v2156
    %v2673 = vunpack.c.l.b16 %v2157
    %v2674 = vunpack.c.l.b16 %v2158
    %v2675 = vunpack.c.l.b16 %v2159
    %v2676 = vunpack.c.l.b16 %v2160
    %v2677 = vunpack.c.l.b16 %v2161
    %v2678 = vunpack.c.l.b16 %v2162
    %v2679 = vunpack.c.l.b16 %v2163
    %v2680 = vunpack.c.l.b16 %v2164
    %v2681 = vunpack.c.l.b16 %v2165
    %v2682 = vunpack.c.l.b16 %v2166
    %v2683 = vunpack.c.l.b16 %v2167
    %v2684 = vunpack.c.l.b16 %v2168
    %v2685 = vunpack.c.l.b16 %v2169
    %v2686 = vunpack.c.l.b16 %v2170
    %v2687 = vunpack.c.l.b16 %v2171
    %v2688 = vunpack.c.l.b16 %v2172
    %v2689 = vunpack.c.l.b16 %v2173
    %v2690 = vunpack.c.l.b16 %v2174
    %v2691 = vunpack.c.l.b16 %v2175
    %v2692 = vunpack.c.l.b16 %v2176
    %v2693 = vunpack.c.l.b16 %v2177
    %v2694 = vunpack.c.l.b16 %v2178
    %v2695 = vunpack.c.l.b16 %v2179
    %v2696 = vunpack.c.l.b16 %v2180
    %v2697 = vunpack.c.l.b16 %v2181
    %v2698 = vunpack.c.l.b16 %v2182
    %v2699 = vunpack.c.l.b16 %v2183
    %v2700 = vunpack.c.l.b16 %v2184
    %v2701 = vunpack.c.l.b16 %v2185
    %v2702 = vunpack.c.l.b16 %v2186
    %v2703 = vunpack.c.l.b16 %v2187
    %v2704 = vunpack.c.l.b16 %v2188
    %v2705 = vunpack.c.l.b16 %v2189
    %v2706 = vunpack.c.l.b16 %v2190
    %v2707 = vunpack.c.l.b16 %v2191
    %v2708 = vunpack.c.l.b16 %v2192
    %v2709 = vunpack.c.l.b16 %v2193
    %v2710 = vunpack.c.l.b16 %v2194
    %v2711 = vunpack.c.l.b16 %v2195
    %v2712 = vunpack.c.l.b16 %v2196
    %v2713 = vunpack.c.l.b16 %v2197
    %v2714 = vunpack.c.l.b16 %v2198
    %v2715 = vunpack.c.l.b16 %v2199
    %v2716 = vunpack.c.l.b16 %v2200
    %v2717 = vunpack.c.l.b16 %v2201
    %v2718 = vunpack.c.l.b16 %v2202
    %v2719 = vunpack.c.l.b16 %v2203
    %v2720 = vunpack.c.l.b16 %v2204
    %v2721 = vunpack.c.l.b16 %v2205
    %v2722 = vunpack.c.l.b16 %v2206
    %v2723 = vunpack.c.l.b16 %v2207
    %v2724 = vunpack.c.l.b16 %v2208
    %v2725 = vunpack.c.l.b16 %v2209
    %v2726 = vunpack.c.l.b16 %v2210
    %v2727 = vunpack.c.l.b16 %v2211
    %v2728 = vunpack.c.l.b16 %v2212
    %v2729 = vunpack.c.l.b16 %v2213
    %v2730 = vunpack.c.l.b16 %v2214
    %v2731 = vunpack.c.l.b16 %v2215
    %v2732 = vunpack.c.l.b16 %v2216
    %v2733 = vunpack.c.l.b16 %v2217
    %v2734 = vunpack.c.l.b16 %v2218
    %v2735 = vunpack.c.l.b16 %v2219
    %v2736 = vunpack.c.l.b16 %v2220
    %v2737 = vunpack.c.l.b16 %v2221
    %v2738 = vunpack.c.l.b16 %v2222
    %v2739 = vunpack.c.l.b16 %v2223
    %v2740 = vunpack.c.l.b16 %v2224
    %v2741 = vunpack.c.l.b16 %v2225
    %v2742 = vunpack.c.l.b16 %v2226
    %v2743 = vunpack.c.l.b16 %v2227
    %v2744 = vunpack.c.l.b16 %v2228
    %v2745 = vunpack.c.l.b16 %v2229
    %v2746 = vunpack.c.l.b16 %v2230
    %v2747 = vunpack.c.l.b16 %v2231
    %v2748 = vunpack.c.l.b16 %v2232
    %v2749 = vunpack.c.l.b16 %v2233
    %v2750 = vunpack.c.l.b16 %v2234
    %v2751 = vunpack.c.l.b16 %v2235
    %v2752 = vunpack.c.l.b16 %v2236
    %v2753 = vunpack.c.l.b16 %v2237
    %v2754 = vunpack.c.l.b16 %v2238
    %v2755 = vunpack.c.l.b16 %v2239
    %v2756 = vunpack.c.l.b16 %v2240
    %v2757 = vunpack.c.l.b16 %v2241
    %v2758 = vunpack.c.l.b16 %v2242
    %v2759 = vunpack.c.l.b16 %v2243
    %v2760 = vunpack.c.l.b16 %v2244
    %v2761 = vunpack.c.l.b16 %v2245
    %v2762 = vunpack.c.l.b16 %v2246
    %v2763 = vunpack.c.l.b16 %v2247
    %v2764 = vunpack.c.l.b16 %v2248
    %v2765 = vunpack.c.l.b16 %v2249
    %v2766 = vunpack.c.l.b16 %v2250
    %v2767 = vunpack.c.l.b16 %v2251
    %v2768 = vunpack.c.l.b16 %v2252
    %v2769 = vunpack.c.l.b16 %v2253
    %v2770 = vunpack.c.l.b16 %v2254
    %v2771 = vunpack.c.l.b16 %v2255
    %v2772 = vunpack.c.l.b16 %v2256
    %v2773 = vunpack.c.l.b16 %v2257
    %v2774 = vunpack.c.l.b16 %v2258
    %v2775 = vunpack.c.l.b16 %v2259
    %v2776 = vunpack.c.l.b16 %v2260
    %v2777 = vunpack.c.l.b16 %v2261
    %v2778 = vunpack.c.l.b16 %v2262
    %v2779 = vunpack.c.l.b16 %v2263
    %v2780 = vunpack.c.l.b16 %v2264
    %v2781 = vunpack.c.l.b16 %v2265
    %v2782 = vunpack.c.l.b16 %v2266
    %v2783 = vunpack.c.l.b16 %v2267
    %v2784 = vunpack.c.l.b16 %v2268
    %v2785 = vunpack.c.l.b16 %v2269
    %v2786 = vunpack.c.l.b16 %v2270
    %v2787 = vunpack.c.l.b16 %v2271
    %v2788 = vunpack.c.l.b16 %v2272
    %v2789 = vunpack.c.l.b16 %v2273
    %v2790 = vunpack.c.l.b16 %v2274
    %v2791 = vunpack.c.l.b16 %v2275
    %v2792 = vunpack.c.l.b16 %v2276
    %v2793 = vunpack.c.l.b16 %v2277
    %v2794 = vunpack.c.l.b16 %v2278
    %v2795 = vunpack.c.l.b16 %v2279
    %v2796 = vunpack.c.l.b16 %v2280
    %v2797 = vunpack.c.l.b16 %v2281
    %v2798 = vunpack.c.l.b16 %v2282
    %v2799 = vunpack.c.l.b16 %v2283
    %v2800 = vunpack.c.l.b16 %v2284
    %v2801 = vunpack.c.l.b16 %v2285
    %v2802 = vunpack.c.l.b16 %v2286
    %v2803 = vunpack.c.l.b16 %v2287
    %v2804 = vunpack.c.l.b16 %v2288
    %v2805 = vunpack.c.l.b16 %v2289
    %v2806 = vunpack.c.l.b16 %v2290
    %v2807 = vunpack.c.l.b16 %v2291
    %v2808 = vunpack.c.l.b16 %v2292
    %v2809 = vunpack.c.l.b16 %v2293
    %v2810 = vunpack.c.l.b16 %v2294
    %v2811 = vunpack.c.l.b16 %v2295
    %v2812 = vunpack.c.l.b16 %v2296
    %v2813 = vunpack.c.l.b16 %v2297
    %v2814 = vunpack.c.l.b16 %v2298
    %v2815 = vunpack.c.l.b16 %v2299
    %v2816 = vunpack.c.l.b16 %v2300
    %v2817 = vunpack.c.l.b16 %v2301
    %v2818 = vunpack.c.l.b16 %v2302
    %v2819 = vunpack.c.l.b16 %v2303
    %v2820 = vunpack.c.l.b16 %v2304
    %v2821 = vunpack.c.l.b16 %v2305
    %v2822 = vunpack.c.l.b16 %v2306
    %v2823 = vunpack.c.l.b16 %v2307
    %v2824 = vunpack.c.l.b16 %v2308
    %v2825 = vunpack.c.l.b16 %v2309
    %v2826 = vunpack.c.l.b16 %v2310
    %v2827 = vunpack.c.l.b16 %v2311
    %v2828 = vunpack.c.l.b16 %v2312
    %v2829 = vunpack.c.l.b16 %v2313
    %v2830 = vunpack.c.l.b16 %v2314
    %v2831 = vunpack.c.l.b16 %v2315
    %v2832 = vunpack.c.l.b16 %v2316
    %v2833 = vunpack.c.l.b16 %v2317
    %v2834 = vunpack.c.l.b16 %v2318
    %v2835 = vunpack.c.l.b16 %v2319
    %v2836 = vunpack.c.l.b16 %v2320
    %v2837 = vunpack.c.l.b16 %v2321
    %v2838 = vunpack.c.l.b16 %v2322
    %v2839 = vunpack.c.l.b16 %v2323
    %v2840 = vunpack.c.l.b16 %v2324
    %v2841 = vunpack.c.l.b16 %v2325
    %v2842 = vunpack.c.l.b16 %v2326
    %v2843 = vunpack.c.l.b16 %v2327
    %v2844 = vunpack.c.l.b16 %v2328
    %v2845 = vunpack.c.l.b16 %v2329
    %v2846 = vunpack.c.l.b16 %v2330
    %v2847 = vunpack.c.l.b16 %v2331
    %v2848 = vunpack.c.l.b16 %v2332
    %v2849 = vunpack.c.l.b16 %v2333
    %v2850 = vunpack.c.l.b16 %v2334
    %v2851 = vunpack.c.l.b16 %v2335
    %v2852 = vunpack.c.l.b16 %v2336
    %v2853 = vunpack.c.l.b16 %v2337
    %v2854 = vunpack.c.l.b16 %v2338
    %v2855 = vunpack.c.l.b16 %v2339
    %v2856 = vunpack.c.l.b16 %v2340
    %v2857 = vunpack.c.l.b16 %v2341
    %v2858 = vunpack.c.l.b16 %v2342
    %v2859 = vunpack.c.l.b16 %v2343
    %v2860 = vunpack.c.l.b16 %v2344
    %v2861 = vunpack.c.l.b16 %v2345
    %v2862 = vunpack.c.l.b16 %v2346
    %v2863 = vunpack.c.l.b16 %v2347
    %v2864 = vunpack.c.l.b16 %v2348
    %v2865 = vunpack.c.l.b16 %v2349
    %v2866 = vunpack.c.l.b16 %v2350
    %v2867 = vunpack.c.l.b16 %v2351
    %v2868 = vunpack.c.l.b16 %v2352
    %v2869 = vunpack.c.l.b16 %v2353
    %v2870 = vunpack.c.l.b16 %v2354
    %v2871 = vunpack.c.l.b16 %v2355
    %v2872 = vunpack.c.l.b16 %v2356
    %v2873 = vunpack.c.l.b16 %v2357
    %v2874 = vunpack.c.l.b16 %v2358
    %v2875 = vunpack.c.l.b16 %v2359
    %v2876 = vunpack.c.l.b16 %v2360
    %v2877 = vunpack.c.l.b16 %v2361
    %v2878 = vunpack.c.l.b16 %v2362
    %v2879 = vunpack.c.l.b16 %v2363
    %v2880 = vunpack.c.l.b16 %v2364
    %v2881 = vunpack.c.l.b16 %v2365
    %v2882 = vunpack.c.l.b16 %v2366
    %v2883 = vunpack.c.l.b16 %v2367
    %v2884 = vunpack.c.l.b16 %v2368
    %v2885 = vunpack.c.l.b16 %v2369
    %v2886 = vunpack.c.l.b16 %v2370
    %v2887 = vunpack.c.l.b16 %v2371
    %v2888 = vunpack.c.l.b16 %v2372
    %v2889 = vunpack.c.l.b16 %v2373
    %v2890 = vunpack.c.l.b16 %v2374
    %v2891 = vunpack.c.l.b16 %v2375
    %v2892 = vunpack.c.l.b16 %v2376
    %v2893 = vunpack.c.l.b16 %v2377
    %v2894 = vunpack.c.l.b16 %v2378
    %v2895 = vunpack.c.l.b16 %v2379
    %v2896 = vunpack.c.l.b16 %v2380
    %v2897 = vunpack.c.l.b16 %v2381
    %v2898 = vunpack.c.l.b16 %v2382
    %v2899 = vunpack.c.l.b16 %v2383
    %v2900 = vunpack.c.l.b16 %v2384
    %v2901 = vunpack.c.l.b16 %v2385
    %v2902 = vunpack.c.l.b16 %v2386
    %v2903 = vunpack.c.l.b16 %v2387
    %v2904 = vunpack.c.l.b16 %v2388
    %v2905 = vunpack.c.l.b16 %v2389
    %v2906 = vunpack.c.l.b16 %v2390
    %v2907 = vunpack.c.l.b16 %v2391
    %v2908 = vunpack.c.l.b16 %v2392
    %v2909 = vunpack.c.l.b16 %v2393
    %v2910 = vunpack.c.l.b16 %v2394
    %v2911 = vunpack.c.l.b16 %v2395
    %v2912 = vunpack.c.l.b16 %v2396
    %v2913 = vunpack.c.l.b16 %v2397
    %v2914 = vunpack.c.l.b16 %v2398
    %v2915 = vunpack.c.l.b16 %v2399
    %v2916 = vunpack.c.l.b16 %v2400
    %v2917 = vunpack.c.l.b16 %v2401
    %v2918 = vpack.c.b16 %v2663, %v2662
    %v2919 = vpack.c.b16 %v2665, %v2664
    %v2920 = vpack.c.b16 %v2667, %v2666
    %v2921 = vpack.c.b16 %v2669, %v2668
    %v2922 = vpack.c.b16 %v2671, %v2670
    %v2923 = vpack.c.b16 %v2673, %v2672
    %v2924 = vpack.c.b16 %v2675, %v2674
    %v2925 = vpack.c.b16 %v2677, %v2676
    %v2926 = vpack.c.b16 %v2679, %v2678
    %v2927 = vpack.c.b16 %v2681, %v2680
    %v2928 = vpack.c.b16 %v2683, %v2682
    %v2929 = vpack.c.b16 %v2685, %v2684
    %v2930 = vpack.c.b16 %v2687, %v2686
    %v2931 = vpack.c.b16 %v2689, %v2688
    %v2932 = vpack.c.b16 %v2691, %v2690
    %v2933 = vpack.c.b16 %v2693, %v2692
    %v2934 = vpack.c.b16 %v2695, %v2694
    %v2935 = vpack.c.b16 %v2697, %v2696
    %v2936 = vpack.c.b16 %v2699, %v2698
    %v2937 = vpack.c.b16 %v2701, %v2700
    %v2938 = vpack.c.b16 %v2703, %v2702
    %v2939 = vpack.c.b16 %v2705, %v2704
    %v2940 = vpack.c.b16 %v2707, %v2706
    %v2941 = vpack.c.b16 %v2709, %v2708
    %v2942 = vpack.c.b16 %v2711, %v2710
    %v2943 = vpack.c.b16 %v2713, %v2712
    %v2944 = vpack.c.b16 %v2715, %v2714
    %v2945 = vpack.c.b16 %v2717, %v2716
    %v2946 = vpack.c.b16 %v2719, %v2718
    %v2947 = vpack.c.b16 %v2721, %v2720
    %v2948 = vpack.c.b16 %v2723, %v2722
    %v2949 = vpack.c.b16 %v2725, %v2724
    %v2950 = vpack.c.b16 %v2727, %v2726
    %v2951 = vpack.c.b16 %v2729, %v2728
    %v2952 = vpack.c.b16 %v2731, %v2730
    %v2953 = vpack.c.b16 %v2733, %v2732
    %v2954 = vpack.c.b16 %v2735, %v2734
    %v2955 = vpack.c.b16 %v2737, %v2736
    %v2956 = vpack.c.b16 %v2739, %v2738
    %v2957 = vpack.c.b16 %v2741, %v2740
    %v2958 = vpack.c.b16 %v2743, %v2742
    %v2959 = vpack.c.b16 %v2745, %v2744
    %v2960 = vpack.c.b16 %v2747, %v2746
    %v2961 = vpack.c.b16 %v2749, %v2748
    %v2962 = vpack.c.b16 %v2751, %v2750
    %v2963 = vpack.c.b16 %v2753, %v2752
    %v2964 = vpack.c.b16 %v2755, %v2754
    %v2965 = vpack.c.b16 %v2757, %v2756
    %v2966 = vpack.c.b16 %v2759, %v2758
    %v2967 = vpack.c.b16 %v2761, %v2760
    %v2968 = vpack.c.b16 %v2763, %v2762
    %v2969 = vpack.c.b16 %v2765, %v2764
    %v2970 = vpack.c.b16 %v2767, %v2766
    %v2971 = vpack.c.b16 %v2769, %v2768
    %v2972 = vpack.c.b16 %v2771, %v2770
    %v2973 = vpack.c.b16 %v2773, %v2772
    %v2974 = vpack.c.b16 %v2775, %v2774
    %v2975 = vpack.c.b16 %v2777, %v2776
    %v2976 = vpack.c.b16 %v2779, %v2778
    %v2977 = vpack.c.b16 %v2781, %v2780
    %v2978 = vpack.c.b16 %v2783, %v2782
    %v2979 = vpack.c.b16 %v2785, %v2784
    %v2980 = vpack.c.b16 %v2787, %v2786
    %v2981 = vpack.c.b16 %v2789, %v2788
    %v2982 = vpack.c.b16 %v2791, %v2790
    %v2983 = vpack.c.b16 %v2793, %v2792
    %v2984 = vpack.c.b16 %v2795, %v2794
    %v2985 = vpack.c.b16 %v2797, %v2796
    %v2986 = vpack.c.b16 %v2799, %v2798
    %v2987 = vpack.c.b16 %v2801, %v2800
    %v2988 = vpack.c.b16 %v2803, %v2802
    %v2989 = vpack.c.b16 %v2805, %v2804
    %v2990 = vpack.c.b16 %v2807, %v2806
    %v2991 = vpack.c.b16 %v2809, %v2808
    %v2992 = vpack.c.b16 %v2811, %v2810
    %v2993 = vpack.c.b16 %v2813, %v2812
    %v2994 = vpack.c.b16 %v2815, %v2814
    %v2995 = vpack.c.b16 %v2817, %v2816
    %v2996 = vpack.c.b16 %v2819, %v2818
    %v2997 = vpack.c.b16 %v2821, %v2820
    %v2998 = vpack.c.b16 %v2823, %v2822
    %v2999 = vpack.c.b16 %v2825, %v2824
    %v3000 = vpack.c.b16 %v2827, %v2826
    %v3001 = vpack.c.b16 %v2829, %v2828
    %v3002 = vpack.c.b16 %v2831, %v2830
    %v3003 = vpack.c.b16 %v2833, %v2832
    %v3004 = vpack.c.b16 %v2835, %v2834
    %v3005 = vpack.c.b16 %v2837, %v2836
    %v3006 = vpack.c.b16 %v2839, %v2838
    %v3007 = vpack.c.b16 %v2841, %v2840
    %v3008 = vpack.c.b16 %v2843, %v2842
    %v3009 = vpack.c.b16 %v2845, %v2844
    %v3010 = vpack.c.b16 %v2847, %v2846
    %v3011 = vpack.c.b16 %v2849, %v2848
    %v3012 = vpack.c.b16 %v2851, %v2850
    %v3013 = vpack.c.b16 %v2853, %v2852
    %v3014 = vpack.c.b16 %v2855, %v2854
    %v3015 = vpack.c.b16 %v2857, %v2856
    %v3016 = vpack.c.b16 %v2859, %v2858
    %v3017 = vpack.c.b16 %v2861, %v2860
    %v3018 = vpack.c.b16 %v2863, %v2862
    %v3019 = vpack.c.b16 %v2865, %v2864
    %v3020 = vpack.c.b16 %v2867, %v2866
    %v3021 = vpack.c.b16 %v2869, %v2868
    %v3022 = vpack.c.b16 %v2871, %v2870
    %v3023 = vpack.c.b16 %v2873, %v2872
    %v3024 = vpack.c.b16 %v2875, %v2874
    %v3025 = vpack.c.b16 %v2877, %v2876
    %v3026 = vpack.c.b16 %v2879, %v2878
    %v3027 = vpack.c.b16 %v2881, %v2880
    %v3028 = vpack.c.b16 %v2883, %v2882
    %v3029 = vpack.c.b16 %v2885, %v2884
    %v3030 = vpack.c.b16 %v2887, %v2886
    %v3031 = vpack.c.b16 %v2889, %v2888
    %v3032 = vpack.c.b16 %v2891, %v2890
    %v3033 = vpack.c.b16 %v2893, %v2892
    %v3034 = vpack.c.b16 %v2895, %v2894
    %v3035 = vpack.c.b16 %v2897, %v2896
    %v3036 = vpack.c.b16 %v2899, %v2898
    %v3037 = vpack.c.b16 %v2901, %v2900
    %v3038 = vpack.c.b16 %v2903, %v2902
    %v3039 = vpack.c.b16 %v2905, %v2904
    %v3040 = vpack.c.b16 %v2907, %v2906
    %v3041 = vpack.c.b16 %v2909, %v2908
    %v3042 = vpack.c.b16 %v2911, %v2910
    %v3043 = vpack.c.b16 %v2913, %v2912
    %v3044 = vpack.c.b16 %v2915, %v2914
    %v3045 = vpack.c.b16 %v2917, %v2916
    %3174 = vmatpush.bf16.msra.mxu0 %v2925
    %3175 = vmatpush.bf16.msra.mxu0 %v2924
    %3176 = vmatpush.bf16.msra.mxu0 %v2923
    %3177 = vmatpush.bf16.msra.mxu0 %v2922
    %3178 = vmatpush.bf16.msra.mxu0 %v2921
    %3179 = vmatpush.bf16.msra.mxu0 %v2920
    %3180 = vmatpush.bf16.msra.mxu0 %v2919
    %3181 = vmatpush.bf16.msra.mxu0 %v2918
    %3182 = vmatmul.bf16.gmra.mxu0 %v2130
    %v3183 = vpop.f32.mrf.mxu0
    %v3184 = vadd.f32 %v2404, %v3183
    %v3185 = vpop.f32.mrf.mxu0
    %v3186 = vadd.f32 %v2404, %v3185
    %3187 = vdwg.mxu0
    %3188 = vmatpush.bf16.msra.mxu0 %v2933
    %3189 = vmatpush.bf16.msra.mxu0 %v2932
    %3190 = vmatpush.bf16.msra.mxu0 %v2931
    %3191 = vmatpush.bf16.msra.mxu0 %v2930
    %3192 = vmatpush.bf16.msra.mxu0 %v2929
    %3193 = vmatpush.bf16.msra.mxu0 %v2928
    %3194 = vmatpush.bf16.msra.mxu0 %v2927
    %3195 = vmatpush.bf16.msra.mxu0 %v2926
    %3196 = vmatmul.bf16.gmra.mxu0 %v2131
    %v3197 = vpop.f32.mrf.mxu0
    %v3198 = vadd.f32 %v3184, %v3197
    %v3199 = vpop.f32.mrf.mxu0
    %v3200 = vadd.f32 %v3186, %v3199
    %3201 = vdwg.mxu0
    %3202 = vmatpush.bf16.msra.mxu0 %v2941
    %3203 = vmatpush.bf16.msra.mxu0 %v2940
    %3204 = vmatpush.bf16.msra.mxu0 %v2939
    %3205 = vmatpush.bf16.msra.mxu0 %v2938
    %3206 = vmatpush.bf16.msra.mxu0 %v2937
    %3207 = vmatpush.bf16.msra.mxu0 %v2936
    %3208 = vmatpush.bf16.msra.mxu0 %v2935
    %3209 = vmatpush.bf16.msra.mxu0 %v2934
    %3210 = vmatmul.bf16.gmra.mxu0 %v2132
    %v3211 = vpop.f32.mrf.mxu0
    %v3212 = vadd.f32 %v3198, %v3211
    %v3213 = vpop.f32.mrf.mxu0
    %v3214 = vadd.f32 %v3200, %v3213
    %3215 = vdwg.mxu0
    %3216 = vmatpush.bf16.msra.mxu0 %v2949
    %3217 = vmatpush.bf16.msra.mxu0 %v2948
    %3218 = vmatpush.bf16.msra.mxu0 %v2947
    %3219 = vmatpush.bf16.msra.mxu0 %v2946
    %3220 = vmatpush.bf16.msra.mxu0 %v2945
    %3221 = vmatpush.bf16.msra.mxu0 %v2944
    %3222 = vmatpush.bf16.msra.mxu0 %v2943
    %3223 = vmatpush.bf16.msra.mxu0 %v2942
    %3224 = vmatmul.bf16.gmra.mxu0 %v2133
    %v3225 = vpop.f32.mrf.mxu0
    %v3226 = vadd.f32 %v3212, %v3225
    %v3227 = vpop.f32.mrf.mxu0
    %v3228 = vadd.f32 %v3214, %v3227
    %3229 = vdwg.mxu0
    %3230 = vmatpush.bf16.msra.mxu0 %v2957
    %3231 = vmatpush.bf16.msra.mxu0 %v2956
    %3232 = vmatpush.bf16.msra.mxu0 %v2955
    %3233 = vmatpush.bf16.msra.mxu0 %v2954
    %3234 = vmatpush.bf16.msra.mxu0 %v2953
    %3235 = vmatpush.bf16.msra.mxu0 %v2952
    %3236 = vmatpush.bf16.msra.mxu0 %v2951
    %3237 = vmatpush.bf16.msra.mxu0 %v2950
    %3238 = vmatmul.bf16.gmra.mxu0 %v2134
    %v3239 = vpop.f32.mrf.mxu0
    %v3240 = vadd.f32 %v3226, %v3239
    %v3241 = vpop.f32.mrf.mxu0
    %v3242 = vadd.f32 %v3228, %v3241
    %3243 = vdwg.mxu0
    %3244 = vmatpush.bf16.msra.mxu0 %v2965
    %3245 = vmatpush.bf16.msra.mxu0 %v2964
    %3246 = vmatpush.bf16.msra.mxu0 %v2963
    %3247 = vmatpush.bf16.msra.mxu0 %v2962
    %3248 = vmatpush.bf16.msra.mxu0 %v2961
    %3249 = vmatpush.bf16.msra.mxu0 %v2960
    %3250 = vmatpush.bf16.msra.mxu0 %v2959
    %3251 = vmatpush.bf16.msra.mxu0 %v2958
    %3252 = vmatmul.bf16.gmra.mxu0 %v2135
    %v3253 = vpop.f32.mrf.mxu0
    %v3254 = vadd.f32 %v3240, %v3253
    %v3255 = vpop.f32.mrf.mxu0
    %v3256 = vadd.f32 %v3242, %v3255
    %3257 = vdwg.mxu0
    %3258 = vmatpush.bf16.msra.mxu0 %v2973
    %3259 = vmatpush.bf16.msra.mxu0 %v2972
    %3260 = vmatpush.bf16.msra.mxu0 %v2971
    %3261 = vmatpush.bf16.msra.mxu0 %v2970
    %3262 = vmatpush.bf16.msra.mxu0 %v2969
    %3263 = vmatpush.bf16.msra.mxu0 %v2968
    %3264 = vmatpush.bf16.msra.mxu0 %v2967
    %3265 = vmatpush.bf16.msra.mxu0 %v2966
    %3266 = vmatmul.bf16.gmra.mxu0 %v2136
    %v3267 = vpop.f32.mrf.mxu0
    %v3268 = vadd.f32 %v3254, %v3267
    %v3269 = vpop.f32.mrf.mxu0
    %v3270 = vadd.f32 %v3256, %v3269
    %3271 = vdwg.mxu0
    %3272 = vmatpush.bf16.msra.mxu0 %v2981
    %3273 = vmatpush.bf16.msra.mxu0 %v2980
    %3274 = vmatpush.bf16.msra.mxu0 %v2979
    %3275 = vmatpush.bf16.msra.mxu0 %v2978
    %3276 = vmatpush.bf16.msra.mxu0 %v2977
    %3277 = vmatpush.bf16.msra.mxu0 %v2976
    %3278 = vmatpush.bf16.msra.mxu0 %v2975
    %3279 = vmatpush.bf16.msra.mxu0 %v2974
    %3280 = vmatmul.bf16.gmra.mxu0 %v2137
    %v3281 = vpop.f32.mrf.mxu0
    %v3282 = vadd.f32 %v3268, %v3281
    %v3283 = vpop.f32.mrf.mxu0
    %v3284 = vadd.f32 %v3270, %v3283
    %3285 = vdwg.mxu0
    %3286 = vmatpush.bf16.msra.mxu0 %v2989
    %3287 = vmatpush.bf16.msra.mxu0 %v2988
    %3288 = vmatpush.bf16.msra.mxu0 %v2987
    %3289 = vmatpush.bf16.msra.mxu0 %v2986
    %3290 = vmatpush.bf16.msra.mxu0 %v2985
    %3291 = vmatpush.bf16.msra.mxu0 %v2984
    %3292 = vmatpush.bf16.msra.mxu0 %v2983
    %3293 = vmatpush.bf16.msra.mxu0 %v2982
    %3294 = vmatmul.bf16.gmra.mxu0 %v2138
    %v3295 = vpop.f32.mrf.mxu0
    %v3296 = vadd.f32 %v3282, %v3295
    %v3297 = vpop.f32.mrf.mxu0
    %v3298 = vadd.f32 %v3284, %v3297
    %3299 = vdwg.mxu0
    %3300 = vmatpush.bf16.msra.mxu0 %v2997
    %3301 = vmatpush.bf16.msra.mxu0 %v2996
    %3302 = vmatpush.bf16.msra.mxu0 %v2995
    %3303 = vmatpush.bf16.msra.mxu0 %v2994
    %3304 = vmatpush.bf16.msra.mxu0 %v2993
    %3305 = vmatpush.bf16.msra.mxu0 %v2992
    %3306 = vmatpush.bf16.msra.mxu0 %v2991
    %3307 = vmatpush.bf16.msra.mxu0 %v2990
    %3308 = vmatmul.bf16.gmra.mxu0 %v2139
    %v3309 = vpop.f32.mrf.mxu0
    %v3310 = vadd.f32 %v3296, %v3309
    %v3311 = vpop.f32.mrf.mxu0
    %v3312 = vadd.f32 %v3298, %v3311
    %3313 = vdwg.mxu0
    %3314 = vmatpush.bf16.msra.mxu0 %v3005
    %3315 = vmatpush.bf16.msra.mxu0 %v3004
    %3316 = vmatpush.bf16.msra.mxu0 %v3003
    %3317 = vmatpush.bf16.msra.mxu0 %v3002
    %3318 = vmatpush.bf16.msra.mxu0 %v3001
    %3319 = vmatpush.bf16.msra.mxu0 %v3000
    %3320 = vmatpush.bf16.msra.mxu0 %v2999
    %3321 = vmatpush.bf16.msra.mxu0 %v2998
    %3322 = vmatmul.bf16.gmra.mxu0 %v2140
    %v3323 = vpop.f32.mrf.mxu0
    %v3324 = vadd.f32 %v3310, %v3323
    %v3325 = vpop.f32.mrf.mxu0
    %v3326 = vadd.f32 %v3312, %v3325
    %3327 = vdwg.mxu0
    %3328 = vmatpush.bf16.msra.mxu0 %v3013
    %3329 = vmatpush.bf16.msra.mxu0 %v3012
    %3330 = vmatpush.bf16.msra.mxu0 %v3011
    %3331 = vmatpush.bf16.msra.mxu0 %v3010
    %3332 = vmatpush.bf16.msra.mxu0 %v3009
    %3333 = vmatpush.bf16.msra.mxu0 %v3008
    %3334 = vmatpush.bf16.msra.mxu0 %v3007
    %3335 = vmatpush.bf16.msra.mxu0 %v3006
    %3336 = vmatmul.bf16.gmra.mxu0 %v2141
    %v3337 = vpop.f32.mrf.mxu0
    %v3338 = vadd.f32 %v3324, %v3337
    %v3339 = vpop.f32.mrf.mxu0
    %v3340 = vadd.f32 %v3326, %v3339
    %3341 = vdwg.mxu0
    %3342 = vmatpush.bf16.msra.mxu0 %v3021
    %3343 = vmatpush.bf16.msra.mxu0 %v3020
    %3344 = vmatpush.bf16.msra.mxu0 %v3019
    %3345 = vmatpush.bf16.msra.mxu0 %v3018
    %3346 = vmatpush.bf16.msra.mxu0 %v3017
    %3347 = vmatpush.bf16.msra.mxu0 %v3016
    %3348 = vmatpush.bf16.msra.mxu0 %v3015
    %3349 = vmatpush.bf16.msra.mxu0 %v3014
    %3350 = vmatmul.bf16.gmra.mxu0 %v2142
    %v3351 = vpop.f32.mrf.mxu0
    %v3352 = vadd.f32 %v3338, %v3351
    %v3353 = vpop.f32.mrf.mxu0
    %v3354 = vadd.f32 %v3340, %v3353
    %3355 = vdwg.mxu0
    %3356 = vmatpush.bf16.msra.mxu0 %v3029
    %3357 = vmatpush.bf16.msra.mxu0 %v3028
    %3358 = vmatpush.bf16.msra.mxu0 %v3027
    %3359 = vmatpush.bf16.msra.mxu0 %v3026
    %3360 = vmatpush.bf16.msra.mxu0 %v3025
    %3361 = vmatpush.bf16.msra.mxu0 %v3024
    %3362 = vmatpush.bf16.msra.mxu0 %v3023
    %3363 = vmatpush.bf16.msra.mxu0 %v3022
    %3364 = vmatmul.bf16.gmra.mxu0 %v2143
    %v3365 = vpop.f32.mrf.mxu0
    %v3366 = vadd.f32 %v3352, %v3365
    %v3367 = vpop.f32.mrf.mxu0
    %v3368 = vadd.f32 %v3354, %v3367
    %3369 = vdwg.mxu0
    %3370 = vmatpush.bf16.msra.mxu0 %v3037
    %3371 = vmatpush.bf16.msra.mxu0 %v3036
    %3372 = vmatpush.bf16.msra.mxu0 %v3035
    %3373 = vmatpush.bf16.msra.mxu0 %v3034
    %3374 = vmatpush.bf16.msra.mxu0 %v3033
    %3375 = vmatpush.bf16.msra.mxu0 %v3032
    %3376 = vmatpush.bf16.msra.mxu0 %v3031
    %3377 = vmatpush.bf16.msra.mxu0 %v3030
    %3378 = vmatmul.bf16.gmra.mxu0 %v2144
    %v3379 = vpop.f32.mrf.mxu0
    %v3380 = vadd.f32 %v3366, %v3379
    %v3381 = vpop.f32.mrf.mxu0
    %v3382 = vadd.f32 %v3368, %v3381
    %3383 = vdwg.mxu0
    %3384 = vmatpush.bf16.msra.mxu0 %v3045
    %3385 = vmatpush.bf16.msra.mxu0 %v3044
    %3386 = vmatpush.bf16.msra.mxu0 %v3043
    %3387 = vmatpush.bf16.msra.mxu0 %v3042
    %3388 = vmatpush.bf16.msra.mxu0 %v3041
    %3389 = vmatpush.bf16.msra.mxu0 %v3040
    %3390 = vmatpush.bf16.msra.mxu0 %v3039
    %3391 = vmatpush.bf16.msra.mxu0 %v3038
    %3392 = vmatmul.bf16.gmra.mxu0 %v2145
    %v3393 = vpop.f32.mrf.mxu0
    %v3394 = vadd.f32 %v3380, %v3393
    %v3395 = vpop.f32.mrf.mxu0
    %v3396 = vadd.f32 %v3382, %v3395
    %3397 = vdwg.mxu0
    %v3398 = vadd.f32 %v1067, %v3394
    %v3399 = vadd.f32 %v1068, %v3396
    %v3400 = vld [vmem:[#allocation11] sm:$0x1]
    %v3401 = vld [vmem:[%s12] sm:$0x1]
    %3402 = vadd.xlane.f32.xlu0 %v3398
    %v3403 = vpop.xlane.xlu0 %3402
    %3404 = vadd.xlane.f32.xlu0 %v3399
    %v3405 = vpop.xlane.xlu0 %3404
    %v3406 = vmul.f32 %v3403, %v1022
    %v3407 = vmul.f32 %v3405, %v1022
    %v3408 = vsub.f32 %v3398, %v3406
    %v3409 = vsub.f32 %v3399, %v3407
    %v3410 = vmul.f32 %v3408, %v3408
    %v3411 = vmul.f32 %v3409, %v3409
    %3412 = vadd.xlane.f32.xlu0 %v3410
    %v3413 = vpop.xlane.xlu0 %3412
    %3414 = vadd.xlane.f32.xlu0 %v3411
    %v3415 = vpop.xlane.xlu0 %3414
    %v3416 = vmul.f32 %v3413, %v1022
    %v3417 = vmul.f32 %v3415, %v1022
    %v3418 = vadd.f32 %v3416, 1e-05
    %v3419 = vadd.f32 %v3417, 1e-05
    %v3420 = vrsqrt.pop %v3418
    %v3421 = vmul.f32 %v3420, %v3418
    %v3422 = vmul.f32 %v3421, %v3420
    %v3423 = vmul.f32 0.5, %v3422
    %v3424 = vsub.f32 1.5, %v3423
    %v3425 = vmul.f32 %v3420, %v3424
    %vm3426 = vweird.f32 %v3418
    %vm3427 = vweird.f32 %v3420
    %vm3428 = vmor %vm3426, %vm3427
    %v3429 = vsel %vm3428, %v3420, %v3425
    %v3430 = vrsqrt.pop %v3419
    %v3431 = vmul.f32 %v3430, %v3419
    %v3432 = vmul.f32 %v3431, %v3430
    %v3433 = vmul.f32 0.5, %v3432
    %v3434 = vsub.f32 1.5, %v3433
    %v3435 = vmul.f32 %v3430, %v3434
    %vm3436 = vweird.f32 %v3419
    %vm3437 = vweird.f32 %v3430
    %vm3438 = vmor %vm3436, %vm3437
    %v3439 = vsel %vm3438, %v3430, %v3435
    %v3440 = vmul.f32 %v3408, %v3429
    %v3441 = vmul.f32 %v3409, %v3439
    %v3443 = vperm.slane %v3400, 0
    %v3445 = vmul.f32 %v3440, %v3443
    %v3446 = vmul.f32 %v3441, %v3443
    %v3448 = vperm.slane %v3401, 0
    %v3450 = vadd.f32 %v3445, %v3448
    %v3451 = vadd.f32 %v3446, %v3448
    %v3452 = vpack.c.bf16 %v3451, %v3450
    %s3453 = scalar_lea.vmem [#allocation2], 192
    %v3454 = vld [vmem:[%s3453] sm:$0xff]
    %v3455 = vld [vmem:[%s3453 + $0x8] sm:$0xf]
    %v3456 = vld [vmem:[%s3453 + $0xc] sm:$0xff]
    %v3457 = vld [vmem:[%s3453 + $0x14] sm:$0xf]
    %v3458 = vld [vmem:[%s3453 + $0x18] sm:$0xff]
    %v3459 = vld [vmem:[%s3453 + $0x20] sm:$0xf]
    %v3460 = vld [vmem:[%s3453 + $0x24] sm:$0xff]
    %v3461 = vld [vmem:[%s3453 + $0x2c] sm:$0xf]
    %v3462 = vld [vmem:[%s3453 + $0x30] sm:$0xff]
    %v3463 = vld [vmem:[%s3453 + $0x38] sm:$0xf]
    %v3464 = vld [vmem:[%s3453 + $0x3c] sm:$0xff]
    %v3465 = vld [vmem:[%s3453 + $0x44] sm:$0xf]
    %v3466 = vld [vmem:[%s3453 + $0x48] sm:$0xff]
    %v3467 = vld [vmem:[%s3453 + $0x50] sm:$0xf]
    %v3468 = vld [vmem:[%s3453 + $0x54] sm:$0xff]
    %v3469 = vld [vmem:[%s3453 + $0x5c] sm:$0xf]
    %v3470 = vld [vmem:[%s3453 + $0x60] sm:$0xff]
    %v3471 = vld [vmem:[%s3453 + $0x68] sm:$0xf]
    %v3472 = vld [vmem:[%s3453 + $0x6c] sm:$0xff]
    %v3473 = vld [vmem:[%s3453 + $0x74] sm:$0xf]
    %v3474 = vld [vmem:[%s3453 + $0x78] sm:$0xff]
    %v3475 = vld [vmem:[%s3453 + $0x80] sm:$0xf]
    %v3476 = vld [vmem:[%s3453 + $0x84] sm:$0xff]
    %v3477 = vld [vmem:[%s3453 + $0x8c] sm:$0xf]
    %v3478 = vld [vmem:[%s3453 + $0x90] sm:$0xff]
    %v3479 = vld [vmem:[%s3453 + $0x98] sm:$0xf]
    %v3480 = vld [vmem:[%s3453 + $0x9c] sm:$0xff]
    %v3481 = vld [vmem:[%s3453 + $0xa4] sm:$0xf]
    %v3482 = vld [vmem:[%s3453 + $0xa8] sm:$0xff]
    %v3483 = vld [vmem:[%s3453 + $0xb0] sm:$0xf]
    %v3484 = vld [vmem:[%s3453 + $0xb4] sm:$0xff]
    %v3485 = vld [vmem:[%s3453 + $0xbc] sm:$0xf]
    %s3486 = scalar_lea.vmem %s2, 3
    %v3487 = vld [vmem:[%s3486] sm:$0x7]
    %v3489 = vperm.slane %v3487, 0
    %v3490 = vperm.slane %v3487, 1
    %v3491 = vperm.slane %v3487, 2
    %v3527 = vunpack.c.l.b16 %v3454
    %v3528 = vunpack.c.h.b16 %v3454
    %v3529 = vunpack.c.l.b16 %v3455
    %v3530 = vunpack.c.l.b16 %v3456
    %v3531 = vunpack.c.h.b16 %v3456
    %v3532 = vunpack.c.l.b16 %v3457
    %v3533 = vunpack.c.l.b16 %v3458
    %v3534 = vunpack.c.h.b16 %v3458
    %v3535 = vunpack.c.l.b16 %v3459
    %v3536 = vunpack.c.l.b16 %v3460
    %v3537 = vunpack.c.h.b16 %v3460
    %v3538 = vunpack.c.l.b16 %v3461
    %v3539 = vunpack.c.l.b16 %v3462
    %v3540 = vunpack.c.h.b16 %v3462
    %v3541 = vunpack.c.l.b16 %v3463
    %v3542 = vunpack.c.l.b16 %v3464
    %v3543 = vunpack.c.h.b16 %v3464
    %v3544 = vunpack.c.l.b16 %v3465
    %v3545 = vunpack.c.l.b16 %v3466
    %v3546 = vunpack.c.h.b16 %v3466
    %v3547 = vunpack.c.l.b16 %v3467
    %v3548 = vunpack.c.l.b16 %v3468
    %v3549 = vunpack.c.h.b16 %v3468
    %v3550 = vunpack.c.l.b16 %v3469
    %v3551 = vunpack.c.l.b16 %v3470
    %v3552 = vunpack.c.h.b16 %v3470
    %v3553 = vunpack.c.l.b16 %v3471
    %v3554 = vunpack.c.l.b16 %v3472
    %v3555 = vunpack.c.h.b16 %v3472
    %v3556 = vunpack.c.l.b16 %v3473
    %v3557 = vunpack.c.l.b16 %v3474
    %v3558 = vunpack.c.h.b16 %v3474
    %v3559 = vunpack.c.l.b16 %v3475
    %v3560 = vunpack.c.l.b16 %v3476
    %v3561 = vunpack.c.h.b16 %v3476
    %v3562 = vunpack.c.l.b16 %v3477
    %v3563 = vunpack.c.l.b16 %v3478
    %v3564 = vunpack.c.h.b16 %v3478
    %v3565 = vunpack.c.l.b16 %v3479
    %v3566 = vunpack.c.l.b16 %v3480
    %v3567 = vunpack.c.h.b16 %v3480
    %v3568 = vunpack.c.l.b16 %v3481
    %v3569 = vunpack.c.l.b16 %v3482
    %v3570 = vunpack.c.h.b16 %v3482
    %v3571 = vunpack.c.l.b16 %v3483
    %v3572 = vunpack.c.l.b16 %v3484
    %v3573 = vunpack.c.h.b16 %v3484
    %v3574 = vunpack.c.l.b16 %v3485
    %v3575 = vpack.c.b16 %v3530, %v3527
    %v3576 = vpack.c.b16 %v3531, %v3528
    %v3577 = vpack.c.b16 %v3532, %v3529
    %v3578 = vpack.c.b16 %v3536, %v3533
    %v3579 = vpack.c.b16 %v3537, %v3534
    %v3580 = vpack.c.b16 %v3538, %v3535
    %v3581 = vpack.c.b16 %v3542, %v3539
    %v3582 = vpack.c.b16 %v3543, %v3540
    %v3583 = vpack.c.b16 %v3544, %v3541
    %v3584 = vpack.c.b16 %v3548, %v3545
    %v3585 = vpack.c.b16 %v3549, %v3546
    %v3586 = vpack.c.b16 %v3550, %v3547
    %v3587 = vpack.c.b16 %v3554, %v3551
    %v3588 = vpack.c.b16 %v3555, %v3552
    %v3589 = vpack.c.b16 %v3556, %v3553
    %v3590 = vpack.c.b16 %v3560, %v3557
    %v3591 = vpack.c.b16 %v3561, %v3558
    %v3592 = vpack.c.b16 %v3562, %v3559
    %v3593 = vpack.c.b16 %v3566, %v3563
    %v3594 = vpack.c.b16 %v3567, %v3564
    %v3595 = vpack.c.b16 %v3568, %v3565
    %v3596 = vpack.c.b16 %v3572, %v3569
    %v3597 = vpack.c.b16 %v3573, %v3570
    %v3598 = vpack.c.b16 %v3574, %v3571
    %3623 = vmatpush.bf16.msra.mxu0 %v3596
    %3624 = vmatpush.bf16.msra.mxu0 %v3593
    %3625 = vmatpush.bf16.msra.mxu0 %v3590
    %3626 = vmatpush.bf16.msra.mxu0 %v3587
    %3627 = vmatpush.bf16.msra.mxu0 %v3584
    %3628 = vmatpush.bf16.msra.mxu0 %v3581
    %3629 = vmatpush.bf16.msra.mxu0 %v3578
    %3630 = vmatpush.bf16.msra.mxu0 %v3575
    %3631 = vmatmul.bf16.gmra.mxu0 %v3452
    %v3632 = vpop.f32.mrf.mxu0
    %v3633 = vadd.f32 %v3489, %v3632
    %v3634 = vpop.f32.mrf.mxu0
    %v3635 = vadd.f32 %v3489, %v3634
    %3636 = vdwg.mxu0
    %3637 = vmatpush.bf16.msra.mxu0 %v3597
    %3638 = vmatpush.bf16.msra.mxu0 %v3594
    %3639 = vmatpush.bf16.msra.mxu0 %v3591
    %3640 = vmatpush.bf16.msra.mxu0 %v3588
    %3641 = vmatpush.bf16.msra.mxu0 %v3585
    %3642 = vmatpush.bf16.msra.mxu0 %v3582
    %3643 = vmatpush.bf16.msra.mxu0 %v3579
    %3644 = vmatpush.bf16.msra.mxu0 %v3576
    %3645 = vmatmul.bf16.gmra.mxu0 %v3452
    %v3646 = vpop.f32.mrf.mxu0
    %v3647 = vadd.f32 %v3490, %v3646
    %v3648 = vpop.f32.mrf.mxu0
    %v3649 = vadd.f32 %v3490, %v3648
    %3650 = vdwg.mxu0
    %3651 = vmatpush.bf16.msra.mxu0 %v3598
    %3652 = vmatpush.bf16.msra.mxu0 %v3595
    %3653 = vmatpush.bf16.msra.mxu0 %v3592
    %3654 = vmatpush.bf16.msra.mxu0 %v3589
    %3655 = vmatpush.bf16.msra.mxu0 %v3586
    %3656 = vmatpush.bf16.msra.mxu0 %v3583
    %3657 = vmatpush.bf16.msra.mxu0 %v3580
    %3658 = vmatpush.bf16.msra.mxu0 %v3577
    %3659 = vmatmul.bf16.gmra.mxu0 %v3452
    %v3660 = vpop.f32.mrf.mxu0
    %v3661 = vadd.f32 %v3491, %v3660
    %v3662 = vpop.f32.mrf.mxu0
    %v3663 = vadd.f32 %v3491, %v3662
    %3664 = vdwg.mxu0
    %3666 = vrot.lane.b32.xlu0 %v3633, 96
    %v3667 = vpop.permute.xlu0 %3666
    %3668 = vrot.lane.b32.xlu0 %v3633, 64
    %v3669 = vpop.permute.xlu0 %3668
    %3670 = vrot.lane.b32.xlu0 %v3633, 32
    %v3671 = vpop.permute.xlu0 %3670
    %3673 = vrot.lane.b32.xlu0 %v3635, 96
    %v3674 = vpop.permute.xlu0 %3673
    %3675 = vrot.lane.b32.xlu0 %v3635, 64
    %v3676 = vpop.permute.xlu0 %3675
    %3677 = vrot.lane.b32.xlu0 %v3635, 32
    %v3678 = vpop.permute.xlu0 %3677
    %3680 = vrot.lane.b32.xlu0 %v3647, 96
    %v3681 = vpop.permute.xlu0 %3680
    %3682 = vrot.lane.b32.xlu0 %v3647, 64
    %v3683 = vpop.permute.xlu0 %3682
    %3684 = vrot.lane.b32.xlu0 %v3647, 32
    %v3685 = vpop.permute.xlu0 %3684
    %3687 = vrot.lane.b32.xlu0 %v3649, 96
    %v3688 = vpop.permute.xlu0 %3687
    %3689 = vrot.lane.b32.xlu0 %v3649, 64
    %v3690 = vpop.permute.xlu0 %3689
    %3691 = vrot.lane.b32.xlu0 %v3649, 32
    %v3692 = vpop.permute.xlu0 %3691
    %3694 = vrot.lane.b32.xlu0 %v3661, 96
    %v3695 = vpop.permute.xlu0 %3694
    %3697 = vrot.lane.b32.xlu0 %v3661, 64
    %v3698 = vpop.permute.xlu0 %3697
    %3700 = vrot.lane.b32.xlu0 %v3661, 32
    %v3701 = vpop.permute.xlu0 %3700
    %3704 = vrot.lane.b32.xlu0 %v3663, 96
    %v3705 = vpop.permute.xlu0 %3704
    %3707 = vrot.lane.b32.xlu0 %v3663, 64
    %v3708 = vpop.permute.xlu0 %3707
    %3710 = vrot.lane.b32.xlu0 %v3663, 32
    %v3711 = vpop.permute.xlu0 %3710
    %v3713 = vsel %vm419, %v3633, 0
    %v3715 = vsel %vm419, %v3647, 0
    %3717 = vmatpush.xpose.msra.mxu0 0.0
    %3718 = vmatpush.xpose.msra.mxu0 0.0
    %3719 = vmatpush.xpose.msra.mxu0 0.0
    %3720 = vmatpush.xpose.msra.mxu0 0.0
    %3721 = vmatpush.xpose.msra.mxu0 0.0
    %3722 = vmatpush.xpose.msra.mxu0 0.0
    %3723 = vmatpush.xpose.msra.mxu0 0.0
    %3724 = vmatpush.xpose.msra.mxu0 0.0
    %3725 = vmatpush.xpose.msra.mxu0 0.0
    %3726 = vmatpush.xpose.msra.mxu0 0.0
    %3727 = vmatpush.xpose.msra.mxu0 0.0
    %3728 = vmatpush.xpose.msra.mxu0 0.0
    %3729 = vmatpush.xpose.msra.mxu0 0.0
    %3730 = vmatpush.xpose.msra.mxu0 0.0
    %3731 = vmatpush.xpose.msra.mxu0 0.0
    %3732 = vmatpush.xpose.msra.mxu0 %v3715
    %3733 = vmatmul.f32.gmra.mxu0 %v3713
    %v3734 = vpop.f32.mrf.mxu0
    %v3735 = vadd.f32 0.0, %v3734
    %3736 = vdwg.mxu0
    %v3737 = vsel %vm419, %v3667, 0
    %v3739 = vsel %vm419, %v3681, 0
    %3741 = vmatpush.xpose.msra.mxu0 0.0
    %3742 = vmatpush.xpose.msra.mxu0 0.0
    %3743 = vmatpush.xpose.msra.mxu0 0.0
    %3744 = vmatpush.xpose.msra.mxu0 0.0
    %3745 = vmatpush.xpose.msra.mxu0 0.0
    %3746 = vmatpush.xpose.msra.mxu0 0.0
    %3747 = vmatpush.xpose.msra.mxu0 0.0
    %3748 = vmatpush.xpose.msra.mxu0 0.0
    %3749 = vmatpush.xpose.msra.mxu0 0.0
    %3750 = vmatpush.xpose.msra.mxu0 0.0
    %3751 = vmatpush.xpose.msra.mxu0 0.0
    %3752 = vmatpush.xpose.msra.mxu0 0.0
    %3753 = vmatpush.xpose.msra.mxu0 0.0
    %3754 = vmatpush.xpose.msra.mxu0 0.0
    %3755 = vmatpush.xpose.msra.mxu0 0.0
    %3756 = vmatpush.xpose.msra.mxu0 %v3739
    %3757 = vmatmul.f32.gmra.mxu0 %v3737
    %v3758 = vpop.f32.mrf.mxu0
    %v3759 = vadd.f32 0.0, %v3758
    %3760 = vdwg.mxu0
    %v3761 = vsel %vm419, %v3669, 0
    %v3763 = vsel %vm419, %v3683, 0
    %3765 = vmatpush.xpose.msra.mxu0 0.0
    %3766 = vmatpush.xpose.msra.mxu0 0.0
    %3767 = vmatpush.xpose.msra.mxu0 0.0
    %3768 = vmatpush.xpose.msra.mxu0 0.0
    %3769 = vmatpush.xpose.msra.mxu0 0.0
    %3770 = vmatpush.xpose.msra.mxu0 0.0
    %3771 = vmatpush.xpose.msra.mxu0 0.0
    %3772 = vmatpush.xpose.msra.mxu0 0.0
    %3773 = vmatpush.xpose.msra.mxu0 0.0
    %3774 = vmatpush.xpose.msra.mxu0 0.0
    %3775 = vmatpush.xpose.msra.mxu0 0.0
    %3776 = vmatpush.xpose.msra.mxu0 0.0
    %3777 = vmatpush.xpose.msra.mxu0 0.0
    %3778 = vmatpush.xpose.msra.mxu0 0.0
    %3779 = vmatpush.xpose.msra.mxu0 0.0
    %3780 = vmatpush.xpose.msra.mxu0 %v3763
    %3781 = vmatmul.f32.gmra.mxu0 %v3761
    %v3782 = vpop.f32.mrf.mxu0
    %v3783 = vadd.f32 0.0, %v3782
    %3784 = vdwg.mxu0
    %v3785 = vsel %vm419, %v3671, 0
    %v3787 = vsel %vm419, %v3685, 0
    %3789 = vmatpush.xpose.msra.mxu0 0.0
    %3790 = vmatpush.xpose.msra.mxu0 0.0
    %3791 = vmatpush.xpose.msra.mxu0 0.0
    %3792 = vmatpush.xpose.msra.mxu0 0.0
    %3793 = vmatpush.xpose.msra.mxu0 0.0
    %3794 = vmatpush.xpose.msra.mxu0 0.0
    %3795 = vmatpush.xpose.msra.mxu0 0.0
    %3796 = vmatpush.xpose.msra.mxu0 0.0
    %3797 = vmatpush.xpose.msra.mxu0 0.0
    %3798 = vmatpush.xpose.msra.mxu0 0.0
    %3799 = vmatpush.xpose.msra.mxu0 0.0
    %3800 = vmatpush.xpose.msra.mxu0 0.0
    %3801 = vmatpush.xpose.msra.mxu0 0.0
    %3802 = vmatpush.xpose.msra.mxu0 0.0
    %3803 = vmatpush.xpose.msra.mxu0 0.0
    %3804 = vmatpush.xpose.msra.mxu0 %v3787
    %3805 = vmatmul.f32.gmra.mxu0 %v3785
    %v3806 = vpop.f32.mrf.mxu0
    %v3807 = vadd.f32 0.0, %v3806
    %3808 = vdwg.mxu0
    %v3809 = vsel %vm419, %v3635, 0
    %v3811 = vsel %vm419, %v3649, 0
    %3813 = vmatpush.xpose.msra.mxu0 0.0
    %3814 = vmatpush.xpose.msra.mxu0 0.0
    %3815 = vmatpush.xpose.msra.mxu0 0.0
    %3816 = vmatpush.xpose.msra.mxu0 0.0
    %3817 = vmatpush.xpose.msra.mxu0 0.0
    %3818 = vmatpush.xpose.msra.mxu0 0.0
    %3819 = vmatpush.xpose.msra.mxu0 0.0
    %3820 = vmatpush.xpose.msra.mxu0 0.0
    %3821 = vmatpush.xpose.msra.mxu0 0.0
    %3822 = vmatpush.xpose.msra.mxu0 0.0
    %3823 = vmatpush.xpose.msra.mxu0 0.0
    %3824 = vmatpush.xpose.msra.mxu0 0.0
    %3825 = vmatpush.xpose.msra.mxu0 0.0
    %3826 = vmatpush.xpose.msra.mxu0 0.0
    %3827 = vmatpush.xpose.msra.mxu0 0.0
    %3828 = vmatpush.xpose.msra.mxu0 %v3811
    %3829 = vmatmul.f32.gmra.mxu0 %v3809
    %v3830 = vpop.f32.mrf.mxu0
    %v3831 = vadd.f32 0.0, %v3830
    %3832 = vdwg.mxu0
    %v3833 = vsel %vm419, %v3674, 0
    %v3835 = vsel %vm419, %v3688, 0
    %3837 = vmatpush.xpose.msra.mxu0 0.0
    %3838 = vmatpush.xpose.msra.mxu0 0.0
    %3839 = vmatpush.xpose.msra.mxu0 0.0
    %3840 = vmatpush.xpose.msra.mxu0 0.0
    %3841 = vmatpush.xpose.msra.mxu0 0.0
    %3842 = vmatpush.xpose.msra.mxu0 0.0
    %3843 = vmatpush.xpose.msra.mxu0 0.0
    %3844 = vmatpush.xpose.msra.mxu0 0.0
    %3845 = vmatpush.xpose.msra.mxu0 0.0
    %3846 = vmatpush.xpose.msra.mxu0 0.0
    %3847 = vmatpush.xpose.msra.mxu0 0.0
    %3848 = vmatpush.xpose.msra.mxu0 0.0
    %3849 = vmatpush.xpose.msra.mxu0 0.0
    %3850 = vmatpush.xpose.msra.mxu0 0.0
    %3851 = vmatpush.xpose.msra.mxu0 0.0
    %3852 = vmatpush.xpose.msra.mxu0 %v3835
    %3853 = vmatmul.f32.gmra.mxu0 %v3833
    %v3854 = vpop.f32.mrf.mxu0
    %v3855 = vadd.f32 0.0, %v3854
    %3856 = vdwg.mxu0
    %v3857 = vsel %vm419, %v3676, 0
    %v3859 = vsel %vm419, %v3690, 0
    %3861 = vmatpush.xpose.msra.mxu0 0.0
    %3862 = vmatpush.xpose.msra.mxu0 0.0
    %3863 = vmatpush.xpose.msra.mxu0 0.0
    %3864 = vmatpush.xpose.msra.mxu0 0.0
    %3865 = vmatpush.xpose.msra.mxu0 0.0
    %3866 = vmatpush.xpose.msra.mxu0 0.0
    %3867 = vmatpush.xpose.msra.mxu0 0.0
    %3868 = vmatpush.xpose.msra.mxu0 0.0
    %3869 = vmatpush.xpose.msra.mxu0 0.0
    %3870 = vmatpush.xpose.msra.mxu0 0.0
    %3871 = vmatpush.xpose.msra.mxu0 0.0
    %3872 = vmatpush.xpose.msra.mxu0 0.0
    %3873 = vmatpush.xpose.msra.mxu0 0.0
    %3874 = vmatpush.xpose.msra.mxu0 0.0
    %3875 = vmatpush.xpose.msra.mxu0 0.0
    %3876 = vmatpush.xpose.msra.mxu0 %v3859
    %3877 = vmatmul.f32.gmra.mxu0 %v3857
    %v3878 = vpop.f32.mrf.mxu0
    %v3879 = vadd.f32 0.0, %v3878
    %3880 = vdwg.mxu0
    %v3881 = vsel %vm419, %v3678, 0
    %v3883 = vsel %vm419, %v3692, 0
    %3885 = vmatpush.xpose.msra.mxu0 0.0
    %3886 = vmatpush.xpose.msra.mxu0 0.0
    %3887 = vmatpush.xpose.msra.mxu0 0.0
    %3888 = vmatpush.xpose.msra.mxu0 0.0
    %3889 = vmatpush.xpose.msra.mxu0 0.0
    %3890 = vmatpush.xpose.msra.mxu0 0.0
    %3891 = vmatpush.xpose.msra.mxu0 0.0
    %3892 = vmatpush.xpose.msra.mxu0 0.0
    %3893 = vmatpush.xpose.msra.mxu0 0.0
    %3894 = vmatpush.xpose.msra.mxu0 0.0
    %3895 = vmatpush.xpose.msra.mxu0 0.0
    %3896 = vmatpush.xpose.msra.mxu0 0.0
    %3897 = vmatpush.xpose.msra.mxu0 0.0
    %3898 = vmatpush.xpose.msra.mxu0 0.0
    %3899 = vmatpush.xpose.msra.mxu0 0.0
    %3900 = vmatpush.xpose.msra.mxu0 %v3883
    %3901 = vmatmul.f32.gmra.mxu0 %v3881
    %v3902 = vpop.f32.mrf.mxu0
    %v3903 = vadd.f32 0.0, %v3902
    %3904 = vdwg.mxu0
    %v3905 = vmul.f32 %v3735, 0.17677669
    %v3906 = vmul.f32 %v3759, 0.17677669
    %v3907 = vmul.f32 %v3783, 0.17677669
    %v3908 = vmul.f32 %v3807, 0.17677669
    %v3909 = vmul.f32 %v3831, 0.17677669
    %v3910 = vmul.f32 %v3855, 0.17677669
    %v3911 = vmul.f32 %v3879, 0.17677669
    %v3912 = vmul.f32 %v3903, 0.17677669
    %v3913 = vsel %vm620, %v3905, -inf
    %3914 = vmax.xlane.f32.xlu0 %v3913
    %v3915 = vpop.xlane.xlu0 %3914
    %v3916 = vsel %vm620, %v3906, -inf
    %3917 = vmax.xlane.f32.xlu0 %v3916
    %v3918 = vpop.xlane.xlu0 %3917
    %v3919 = vsel %vm620, %v3907, -inf
    %3920 = vmax.xlane.f32.xlu0 %v3919
    %v3921 = vpop.xlane.xlu0 %3920
    %v3922 = vsel %vm620, %v3908, -inf
    %3923 = vmax.xlane.f32.xlu0 %v3922
    %v3924 = vpop.xlane.xlu0 %3923
    %v3925 = vsel %vm620, %v3909, -inf
    %3926 = vmax.xlane.f32.xlu0 %v3925
    %v3927 = vpop.xlane.xlu0 %3926
    %v3928 = vsel %vm620, %v3910, -inf
    %3929 = vmax.xlane.f32.xlu0 %v3928
    %v3930 = vpop.xlane.xlu0 %3929
    %v3931 = vsel %vm620, %v3911, -inf
    %3932 = vmax.xlane.f32.xlu0 %v3931
    %v3933 = vpop.xlane.xlu0 %3932
    %v3934 = vsel %vm620, %v3912, -inf
    %3935 = vmax.xlane.f32.xlu0 %v3934
    %v3936 = vpop.xlane.xlu0 %3935
    %v3937 = vsub.f32 %v3905, %v3915
    %v3938 = vsub.f32 %v3906, %v3918
    %v3939 = vsub.f32 %v3907, %v3921
    %v3940 = vsub.f32 %v3908, %v3924
    %v3941 = vsub.f32 %v3909, %v3927
    %v3942 = vsub.f32 %v3910, %v3930
    %v3943 = vsub.f32 %v3911, %v3933
    %v3944 = vsub.f32 %v3912, %v3936
    %v3945 = vmul.f32 %v3937, 1.442695
    %v3946 = vpow.pop %v3945
    %v3947 = vmul.f32 %v3938, 1.442695
    %v3948 = vpow.pop %v3947
    %v3949 = vmul.f32 %v3939, 1.442695
    %v3950 = vpow.pop %v3949
    %v3951 = vmul.f32 %v3940, 1.442695
    %v3952 = vpow.pop %v3951
    %v3953 = vmul.f32 %v3941, 1.442695
    %v3954 = vpow.pop %v3953
    %v3955 = vmul.f32 %v3942, 1.442695
    %v3956 = vpow.pop %v3955
    %v3957 = vmul.f32 %v3943, 1.442695
    %v3958 = vpow.pop %v3957
    %v3959 = vmul.f32 %v3944, 1.442695
    %v3960 = vpow.pop %v3959
    %v3961 = vsel %vm620, %v3946, 0.0
    %3962 = vadd.xlane.f32.xlu0 %v3961
    %v3963 = vpop.xlane.xlu0 %3962
    %v3964 = vsel %vm620, %v3948, 0.0
    %3965 = vadd.xlane.f32.xlu0 %v3964
    %v3966 = vpop.xlane.xlu0 %3965
    %v3967 = vsel %vm620, %v3950, 0.0
    %3968 = vadd.xlane.f32.xlu0 %v3967
    %v3969 = vpop.xlane.xlu0 %3968
    %v3970 = vsel %vm620, %v3952, 0.0
    %3971 = vadd.xlane.f32.xlu0 %v3970
    %v3972 = vpop.xlane.xlu0 %3971
    %v3973 = vsel %vm620, %v3954, 0.0
    %3974 = vadd.xlane.f32.xlu0 %v3973
    %v3975 = vpop.xlane.xlu0 %3974
    %v3976 = vsel %vm620, %v3956, 0.0
    %3977 = vadd.xlane.f32.xlu0 %v3976
    %v3978 = vpop.xlane.xlu0 %3977
    %v3979 = vsel %vm620, %v3958, 0.0
    %3980 = vadd.xlane.f32.xlu0 %v3979
    %v3981 = vpop.xlane.xlu0 %3980
    %v3982 = vsel %vm620, %v3960, 0.0
    %3983 = vadd.xlane.f32.xlu0 %v3982
    %v3984 = vpop.xlane.xlu0 %3983
    %v3985 = vrcp.pop %v3963
    %v3986 = vrcp.pop %v3966
    %v3987 = vrcp.pop %v3969
    %v3988 = vrcp.pop %v3972
    %v3989 = vrcp.pop %v3975
    %v3990 = vrcp.pop %v3978
    %v3991 = vrcp.pop %v3981
    %v3992 = vrcp.pop %v3984
    %v3993 = vmul.f32 %v3946, %v3985
    %v3994 = vmul.f32 %v3948, %v3986
    %v3995 = vmul.f32 %v3950, %v3987
    %v3996 = vmul.f32 %v3952, %v3988
    %v3997 = vmul.f32 %v3954, %v3989
    %v3998 = vmul.f32 %v3956, %v3990
    %v3999 = vmul.f32 %v3958, %v3991
    %v4000 = vmul.f32 %v3960, %v3992
    %v4002 = vsel %vm620, %v3993, 0
    %4004 = vmatpush.msra.mxu0 0.0
    %4005 = vmatpush.msra.mxu0 0.0
    %4006 = vmatpush.msra.mxu0 0.0
    %4007 = vmatpush.msra.mxu0 0.0
    %4008 = vmatpush.msra.mxu0 0.0
    %4009 = vmatpush.msra.mxu0 0.0
    %4010 = vmatpush.msra.mxu0 0.0
    %4011 = vmatpush.msra.mxu0 0.0
    %4012 = vmatpush.msra.mxu0 0.0
    %4013 = vmatpush.msra.mxu0 0.0
    %4014 = vmatpush.msra.mxu0 0.0
    %4015 = vmatpush.msra.mxu0 0.0
    %4016 = vmatpush.msra.mxu0 0.0
    %4017 = vmatpush.msra.mxu0 0.0
    %4018 = vmatpush.msra.mxu0 0.0
    %4019 = vmatpush.msra.mxu0 %v3661
    %4020 = vmatmul.f32.gmra.mxu0 %v4002
    %v4021 = vpop.f32.mrf.mxu0
    %v4022 = vadd.f32 0.0, %v4021
    %4023 = vdwg.mxu0
    %v4025 = vsel %vm620, %v3994, 0
    %4027 = vmatpush.msra.mxu0 0.0
    %4028 = vmatpush.msra.mxu0 0.0
    %4029 = vmatpush.msra.mxu0 0.0
    %4030 = vmatpush.msra.mxu0 0.0
    %4031 = vmatpush.msra.mxu0 0.0
    %4032 = vmatpush.msra.mxu0 0.0
    %4033 = vmatpush.msra.mxu0 0.0
    %4034 = vmatpush.msra.mxu0 0.0
    %4035 = vmatpush.msra.mxu0 0.0
    %4036 = vmatpush.msra.mxu0 0.0
    %4037 = vmatpush.msra.mxu0 0.0
    %4038 = vmatpush.msra.mxu0 0.0
    %4039 = vmatpush.msra.mxu0 0.0
    %4040 = vmatpush.msra.mxu0 0.0
    %4041 = vmatpush.msra.mxu0 0.0
    %4042 = vmatpush.msra.mxu0 %v3695
    %4043 = vmatmul.f32.gmra.mxu0 %v4025
    %v4044 = vpop.f32.mrf.mxu0
    %v4045 = vadd.f32 0.0, %v4044
    %4046 = vdwg.mxu0
    %v4048 = vsel %vm620, %v3995, 0
    %4050 = vmatpush.msra.mxu0 0.0
    %4051 = vmatpush.msra.mxu0 0.0
    %4052 = vmatpush.msra.mxu0 0.0
    %4053 = vmatpush.msra.mxu0 0.0
    %4054 = vmatpush.msra.mxu0 0.0
    %4055 = vmatpush.msra.mxu0 0.0
    %4056 = vmatpush.msra.mxu0 0.0
    %4057 = vmatpush.msra.mxu0 0.0
    %4058 = vmatpush.msra.mxu0 0.0
    %4059 = vmatpush.msra.mxu0 0.0
    %4060 = vmatpush.msra.mxu0 0.0
    %4061 = vmatpush.msra.mxu0 0.0
    %4062 = vmatpush.msra.mxu0 0.0
    %4063 = vmatpush.msra.mxu0 0.0
    %4064 = vmatpush.msra.mxu0 0.0
    %4065 = vmatpush.msra.mxu0 %v3698
    %4066 = vmatmul.f32.gmra.mxu0 %v4048
    %v4067 = vpop.f32.mrf.mxu0
    %v4068 = vadd.f32 0.0, %v4067
    %4069 = vdwg.mxu0
    %v4071 = vsel %vm620, %v3996, 0
    %4073 = vmatpush.msra.mxu0 0.0
    %4074 = vmatpush.msra.mxu0 0.0
    %4075 = vmatpush.msra.mxu0 0.0
    %4076 = vmatpush.msra.mxu0 0.0
    %4077 = vmatpush.msra.mxu0 0.0
    %4078 = vmatpush.msra.mxu0 0.0
    %4079 = vmatpush.msra.mxu0 0.0
    %4080 = vmatpush.msra.mxu0 0.0
    %4081 = vmatpush.msra.mxu0 0.0
    %4082 = vmatpush.msra.mxu0 0.0
    %4083 = vmatpush.msra.mxu0 0.0
    %4084 = vmatpush.msra.mxu0 0.0
    %4085 = vmatpush.msra.mxu0 0.0
    %4086 = vmatpush.msra.mxu0 0.0
    %4087 = vmatpush.msra.mxu0 0.0
    %4088 = vmatpush.msra.mxu0 %v3701
    %4089 = vmatmul.f32.gmra.mxu0 %v4071
    %v4090 = vpop.f32.mrf.mxu0
    %v4091 = vadd.f32 0.0, %v4090
    %4092 = vdwg.mxu0
    %v4094 = vsel %vm620, %v3997, 0
    %4096 = vmatpush.msra.mxu0 0.0
    %4097 = vmatpush.msra.mxu0 0.0
    %4098 = vmatpush.msra.mxu0 0.0
    %4099 = vmatpush.msra.mxu0 0.0
    %4100 = vmatpush.msra.mxu0 0.0
    %4101 = vmatpush.msra.mxu0 0.0
    %4102 = vmatpush.msra.mxu0 0.0
    %4103 = vmatpush.msra.mxu0 0.0
    %4104 = vmatpush.msra.mxu0 0.0
    %4105 = vmatpush.msra.mxu0 0.0
    %4106 = vmatpush.msra.mxu0 0.0
    %4107 = vmatpush.msra.mxu0 0.0
    %4108 = vmatpush.msra.mxu0 0.0
    %4109 = vmatpush.msra.mxu0 0.0
    %4110 = vmatpush.msra.mxu0 0.0
    %4111 = vmatpush.msra.mxu0 %v3663
    %4112 = vmatmul.f32.gmra.mxu0 %v4094
    %v4113 = vpop.f32.mrf.mxu0
    %v4114 = vadd.f32 0.0, %v4113
    %4115 = vdwg.mxu0
    %v4117 = vsel %vm620, %v3998, 0
    %4119 = vmatpush.msra.mxu0 0.0
    %4120 = vmatpush.msra.mxu0 0.0
    %4121 = vmatpush.msra.mxu0 0.0
    %4122 = vmatpush.msra.mxu0 0.0
    %4123 = vmatpush.msra.mxu0 0.0
    %4124 = vmatpush.msra.mxu0 0.0
    %4125 = vmatpush.msra.mxu0 0.0
    %4126 = vmatpush.msra.mxu0 0.0
    %4127 = vmatpush.msra.mxu0 0.0
    %4128 = vmatpush.msra.mxu0 0.0
    %4129 = vmatpush.msra.mxu0 0.0
    %4130 = vmatpush.msra.mxu0 0.0
    %4131 = vmatpush.msra.mxu0 0.0
    %4132 = vmatpush.msra.mxu0 0.0
    %4133 = vmatpush.msra.mxu0 0.0
    %4134 = vmatpush.msra.mxu0 %v3705
    %4135 = vmatmul.f32.gmra.mxu0 %v4117
    %v4136 = vpop.f32.mrf.mxu0
    %v4137 = vadd.f32 0.0, %v4136
    %4138 = vdwg.mxu0
    %v4140 = vsel %vm620, %v3999, 0
    %4142 = vmatpush.msra.mxu0 0.0
    %4143 = vmatpush.msra.mxu0 0.0
    %4144 = vmatpush.msra.mxu0 0.0
    %4145 = vmatpush.msra.mxu0 0.0
    %4146 = vmatpush.msra.mxu0 0.0
    %4147 = vmatpush.msra.mxu0 0.0
    %4148 = vmatpush.msra.mxu0 0.0
    %4149 = vmatpush.msra.mxu0 0.0
    %4150 = vmatpush.msra.mxu0 0.0
    %4151 = vmatpush.msra.mxu0 0.0
    %4152 = vmatpush.msra.mxu0 0.0
    %4153 = vmatpush.msra.mxu0 0.0
    %4154 = vmatpush.msra.mxu0 0.0
    %4155 = vmatpush.msra.mxu0 0.0
    %4156 = vmatpush.msra.mxu0 0.0
    %4157 = vmatpush.msra.mxu0 %v3708
    %4158 = vmatmul.f32.gmra.mxu0 %v4140
    %v4159 = vpop.f32.mrf.mxu0
    %v4160 = vadd.f32 0.0, %v4159
    %4161 = vdwg.mxu0
    %v4163 = vsel %vm620, %v4000, 0
    %4165 = vmatpush.msra.mxu0 0.0
    %4166 = vmatpush.msra.mxu0 0.0
    %4167 = vmatpush.msra.mxu0 0.0
    %4168 = vmatpush.msra.mxu0 0.0
    %4169 = vmatpush.msra.mxu0 0.0
    %4170 = vmatpush.msra.mxu0 0.0
    %4171 = vmatpush.msra.mxu0 0.0
    %4172 = vmatpush.msra.mxu0 0.0
    %4173 = vmatpush.msra.mxu0 0.0
    %4174 = vmatpush.msra.mxu0 0.0
    %4175 = vmatpush.msra.mxu0 0.0
    %4176 = vmatpush.msra.mxu0 0.0
    %4177 = vmatpush.msra.mxu0 0.0
    %4178 = vmatpush.msra.mxu0 0.0
    %4179 = vmatpush.msra.mxu0 0.0
    %4180 = vmatpush.msra.mxu0 %v3711
    %4181 = vmatmul.f32.gmra.mxu0 %v4163
    %v4182 = vpop.f32.mrf.mxu0
    %v4183 = vadd.f32 0.0, %v4182
    %4184 = vdwg.mxu0
    %4186 = vrot.lane.b32.xlu0 %v4045, 32
    %v4187 = vpop.permute.xlu0 %4186
    %4190 = vrot.lane.b32.xlu0 %v4068, 64
    %v4191 = vpop.permute.xlu0 %4190
    %4194 = vrot.lane.b32.xlu0 %v4091, 96
    %v4195 = vpop.permute.xlu0 %4194
    %v4197 = vsel %vm419, %v4022, %v4187
    %v4198 = vsel %vm906, %v4197, %v4191
    %v4199 = vsel %vm908, %v4198, %v4195
    %4201 = vrot.lane.b32.xlu0 %v4137, 32
    %v4202 = vpop.permute.xlu0 %4201
    %4205 = vrot.lane.b32.xlu0 %v4160, 64
    %v4206 = vpop.permute.xlu0 %4205
    %4209 = vrot.lane.b32.xlu0 %v4183, 96
    %v4210 = vpop.permute.xlu0 %4209
    %v4212 = vsel %vm419, %v4114, %v4202
    %v4213 = vsel %vm906, %v4212, %v4206
    %v4214 = vsel %vm908, %v4213, %v4210
    %v4215 = vpack.c.bf16 %v4214, %v4199
    %s4216 = scalar_lea.vmem %s3, 64
    %v4217 = vld [vmem:[%s4216] sm:$0xf]
    %v4218 = vld [vmem:[%s4216 + $0x4] sm:$0xf]
    %v4219 = vld [vmem:[%s4216 + $0x8] sm:$0xf]
    %v4220 = vld [vmem:[%s4216 + $0xc] sm:$0xf]
    %v4221 = vld [vmem:[%s4216 + $0x10] sm:$0xf]
    %v4222 = vld [vmem:[%s4216 + $0x14] sm:$0xf]
    %v4223 = vld [vmem:[%s4216 + $0x18] sm:$0xf]
    %v4224 = vld [vmem:[%s4216 + $0x1c] sm:$0xf]
    %v4225 = vld [vmem:[%s4216 + $0x20] sm:$0xf]
    %v4226 = vld [vmem:[%s4216 + $0x24] sm:$0xf]
    %v4227 = vld [vmem:[%s4216 + $0x28] sm:$0xf]
    %v4228 = vld [vmem:[%s4216 + $0x2c] sm:$0xf]
    %v4229 = vld [vmem:[%s4216 + $0x30] sm:$0xf]
    %v4230 = vld [vmem:[%s4216 + $0x34] sm:$0xf]
    %v4231 = vld [vmem:[%s4216 + $0x38] sm:$0xf]
    %v4232 = vld [vmem:[%s4216 + $0x3c] sm:$0xf]
    %s4233 = scalar_lea.vmem %s4, 1
    %v4234 = vld [vmem:[%s4233] sm:$0x1]
    %v4236 = vperm.slane %v4234, 0
    %v4254 = vunpack.c.l.b16 %v4217
    %v4255 = vunpack.c.l.b16 %v4218
    %v4256 = vunpack.c.l.b16 %v4219
    %v4257 = vunpack.c.l.b16 %v4220
    %v4258 = vunpack.c.l.b16 %v4221
    %v4259 = vunpack.c.l.b16 %v4222
    %v4260 = vunpack.c.l.b16 %v4223
    %v4261 = vunpack.c.l.b16 %v4224
    %v4262 = vunpack.c.l.b16 %v4225
    %v4263 = vunpack.c.l.b16 %v4226
    %v4264 = vunpack.c.l.b16 %v4227
    %v4265 = vunpack.c.l.b16 %v4228
    %v4266 = vunpack.c.l.b16 %v4229
    %v4267 = vunpack.c.l.b16 %v4230
    %v4268 = vunpack.c.l.b16 %v4231
    %v4269 = vunpack.c.l.b16 %v4232
    %v4270 = vpack.c.b16 %v4255, %v4254
    %v4271 = vpack.c.b16 %v4257, %v4256
    %v4272 = vpack.c.b16 %v4259, %v4258
    %v4273 = vpack.c.b16 %v4261, %v4260
    %v4274 = vpack.c.b16 %v4263, %v4262
    %v4275 = vpack.c.b16 %v4265, %v4264
    %v4276 = vpack.c.b16 %v4267, %v4266
    %v4277 = vpack.c.b16 %v4269, %v4268
    %4286 = vmatpush.bf16.msra.mxu0 %v4277
    %4287 = vmatpush.bf16.msra.mxu0 %v4276
    %4288 = vmatpush.bf16.msra.mxu0 %v4275
    %4289 = vmatpush.bf16.msra.mxu0 %v4274
    %4290 = vmatpush.bf16.msra.mxu0 %v4273
    %4291 = vmatpush.bf16.msra.mxu0 %v4272
    %4292 = vmatpush.bf16.msra.mxu0 %v4271
    %4293 = vmatpush.bf16.msra.mxu0 %v4270
    %4294 = vmatmul.bf16.gmra.mxu0 %v4215
    %v4295 = vpop.f32.mrf.mxu0
    %v4296 = vadd.f32 %v4236, %v4295
    %v4297 = vpop.f32.mrf.mxu0
    %v4298 = vadd.f32 %v4236, %v4297
    %4299 = vdwg.mxu0
    %v4300 = vadd.f32 %v3450, %v4296
    %v4301 = vadd.f32 %v3451, %v4298
    %s4302 = scalar_lea.vmem [#allocation10], 1
    %v4303 = vld [vmem:[%s4302] sm:$0x1]
    %s4304 = scalar_lea.vmem %s10, 1
    %v4305 = vld [vmem:[%s4304] sm:$0x1]
    %4306 = vadd.xlane.f32.xlu0 %v4300
    %v4307 = vpop.xlane.xlu0 %4306
    %4308 = vadd.xlane.f32.xlu0 %v4301
    %v4309 = vpop.xlane.xlu0 %4308
    %v4310 = vmul.f32 %v4307, %v1022
    %v4311 = vmul.f32 %v4309, %v1022
    %v4312 = vsub.f32 %v4300, %v4310
    %v4313 = vsub.f32 %v4301, %v4311
    %v4314 = vmul.f32 %v4312, %v4312
    %v4315 = vmul.f32 %v4313, %v4313
    %4316 = vadd.xlane.f32.xlu0 %v4314
    %v4317 = vpop.xlane.xlu0 %4316
    %4318 = vadd.xlane.f32.xlu0 %v4315
    %v4319 = vpop.xlane.xlu0 %4318
    %v4320 = vmul.f32 %v4317, %v1022
    %v4321 = vmul.f32 %v4319, %v1022
    %v4322 = vadd.f32 %v4320, 1e-05
    %v4323 = vadd.f32 %v4321, 1e-05
    %v4324 = vrsqrt.pop %v4322
    %v4325 = vmul.f32 %v4324, %v4322
    %v4326 = vmul.f32 %v4325, %v4324
    %v4327 = vmul.f32 0.5, %v4326
    %v4328 = vsub.f32 1.5, %v4327
    %v4329 = vmul.f32 %v4324, %v4328
    %vm4330 = vweird.f32 %v4322
    %vm4331 = vweird.f32 %v4324
    %vm4332 = vmor %vm4330, %vm4331
    %v4333 = vsel %vm4332, %v4324, %v4329
    %v4334 = vrsqrt.pop %v4323
    %v4335 = vmul.f32 %v4334, %v4323
    %v4336 = vmul.f32 %v4335, %v4334
    %v4337 = vmul.f32 0.5, %v4336
    %v4338 = vsub.f32 1.5, %v4337
    %v4339 = vmul.f32 %v4334, %v4338
    %vm4340 = vweird.f32 %v4323
    %vm4341 = vweird.f32 %v4334
    %vm4342 = vmor %vm4340, %vm4341
    %v4343 = vsel %vm4342, %v4334, %v4339
    %v4344 = vmul.f32 %v4312, %v4333
    %v4345 = vmul.f32 %v4313, %v4343
    %v4347 = vperm.slane %v4303, 0
    %v4349 = vmul.f32 %v4344, %v4347
    %v4350 = vmul.f32 %v4345, %v4347
    %v4352 = vperm.slane %v4305, 0
    %v4354 = vadd.f32 %v4349, %v4352
    %v4355 = vadd.f32 %v4350, %v4352
    %v4356 = vpack.c.bf16 %v4355, %v4354
    %s4357 = scalar_lea.vmem [#allocation5], 1024
    %v4358 = vld [vmem:[%s4357] sm:$0xff]
    %v4359 = vld [vmem:[%s4357 + $0x8] sm:$0xff]
    %v4360 = vld [vmem:[%s4357 + $0x10] sm:$0xff]
    %v4361 = vld [vmem:[%s4357 + $0x18] sm:$0xff]
    %v4362 = vld [vmem:[%s4357 + $0x20] sm:$0xff]
    %v4363 = vld [vmem:[%s4357 + $0x28] sm:$0xff]
    %v4364 = vld [vmem:[%s4357 + $0x30] sm:$0xff]
    %v4365 = vld [vmem:[%s4357 + $0x38] sm:$0xff]
    %v4366 = vld [vmem:[%s4357 + $0x40] sm:$0xff]
    %v4367 = vld [vmem:[%s4357 + $0x48] sm:$0xff]
    %v4368 = vld [vmem:[%s4357 + $0x50] sm:$0xff]
    %v4369 = vld [vmem:[%s4357 + $0x58] sm:$0xff]
    %v4370 = vld [vmem:[%s4357 + $0x60] sm:$0xff]
    %v4371 = vld [vmem:[%s4357 + $0x68] sm:$0xff]
    %v4372 = vld [vmem:[%s4357 + $0x70] sm:$0xff]
    %v4373 = vld [vmem:[%s4357 + $0x78] sm:$0xff]
    %v4374 = vld [vmem:[%s4357 + $0x80] sm:$0xff]
    %v4375 = vld [vmem:[%s4357 + $0x88] sm:$0xff]
    %v4376 = vld [vmem:[%s4357 + $0x90] sm:$0xff]
    %v4377 = vld [vmem:[%s4357 + $0x98] sm:$0xff]
    %v4378 = vld [vmem:[%s4357 + $0xa0] sm:$0xff]
    %v4379 = vld [vmem:[%s4357 + $0xa8] sm:$0xff]
    %v4380 = vld [vmem:[%s4357 + $0xb0] sm:$0xff]
    %v4381 = vld [vmem:[%s4357 + $0xb8] sm:$0xff]
    %v4382 = vld [vmem:[%s4357 + $0xc0] sm:$0xff]
    %v4383 = vld [vmem:[%s4357 + $0xc8] sm:$0xff]
    %v4384 = vld [vmem:[%s4357 + $0xd0] sm:$0xff]
    %v4385 = vld [vmem:[%s4357 + $0xd8] sm:$0xff]
    %v4386 = vld [vmem:[%s4357 + $0xe0] sm:$0xff]
    %v4387 = vld [vmem:[%s4357 + $0xe8] sm:$0xff]
    %v4388 = vld [vmem:[%s4357 + $0xf0] sm:$0xff]
    %v4389 = vld [vmem:[%s4357 + $0xf8] sm:$0xff]
    %v4390 = vld [vmem:[%s4357 + $0x100] sm:$0xff]
    %v4391 = vld [vmem:[%s4357 + $0x108] sm:$0xff]
    %v4392 = vld [vmem:[%s4357 + $0x110] sm:$0xff]
    %v4393 = vld [vmem:[%s4357 + $0x118] sm:$0xff]
    %v4394 = vld [vmem:[%s4357 + $0x120] sm:$0xff]
    %v4395 = vld [vmem:[%s4357 + $0x128] sm:$0xff]
    %v4396 = vld [vmem:[%s4357 + $0x130] sm:$0xff]
    %v4397 = vld [vmem:[%s4357 + $0x138] sm:$0xff]
    %v4398 = vld [vmem:[%s4357 + $0x140] sm:$0xff]
    %v4399 = vld [vmem:[%s4357 + $0x148] sm:$0xff]
    %v4400 = vld [vmem:[%s4357 + $0x150] sm:$0xff]
    %v4401 = vld [vmem:[%s4357 + $0x158] sm:$0xff]
    %v4402 = vld [vmem:[%s4357 + $0x160] sm:$0xff]
    %v4403 = vld [vmem:[%s4357 + $0x168] sm:$0xff]
    %v4404 = vld [vmem:[%s4357 + $0x170] sm:$0xff]
    %v4405 = vld [vmem:[%s4357 + $0x178] sm:$0xff]
    %v4406 = vld [vmem:[%s4357 + $0x180] sm:$0xff]
    %v4407 = vld [vmem:[%s4357 + $0x188] sm:$0xff]
    %v4408 = vld [vmem:[%s4357 + $0x190] sm:$0xff]
    %v4409 = vld [vmem:[%s4357 + $0x198] sm:$0xff]
    %v4410 = vld [vmem:[%s4357 + $0x1a0] sm:$0xff]
    %v4411 = vld [vmem:[%s4357 + $0x1a8] sm:$0xff]
    %v4412 = vld [vmem:[%s4357 + $0x1b0] sm:$0xff]
    %v4413 = vld [vmem:[%s4357 + $0x1b8] sm:$0xff]
    %v4414 = vld [vmem:[%s4357 + $0x1c0] sm:$0xff]
    %v4415 = vld [vmem:[%s4357 + $0x1c8] sm:$0xff]
    %v4416 = vld [vmem:[%s4357 + $0x1d0] sm:$0xff]
    %v4417 = vld [vmem:[%s4357 + $0x1d8] sm:$0xff]
    %v4418 = vld [vmem:[%s4357 + $0x1e0] sm:$0xff]
    %v4419 = vld [vmem:[%s4357 + $0x1e8] sm:$0xff]
    %v4420 = vld [vmem:[%s4357 + $0x1f0] sm:$0xff]
    %v4421 = vld [vmem:[%s4357 + $0x1f8] sm:$0xff]
    %v4422 = vld [vmem:[%s4357 + $0x200] sm:$0xff]
    %v4423 = vld [vmem:[%s4357 + $0x208] sm:$0xff]
    %v4424 = vld [vmem:[%s4357 + $0x210] sm:$0xff]
    %v4425 = vld [vmem:[%s4357 + $0x218] sm:$0xff]
    %v4426 = vld [vmem:[%s4357 + $0x220] sm:$0xff]
    %v4427 = vld [vmem:[%s4357 + $0x228] sm:$0xff]
    %v4428 = vld [vmem:[%s4357 + $0x230] sm:$0xff]
    %v4429 = vld [vmem:[%s4357 + $0x238] sm:$0xff]
    %v4430 = vld [vmem:[%s4357 + $0x240] sm:$0xff]
    %v4431 = vld [vmem:[%s4357 + $0x248] sm:$0xff]
    %v4432 = vld [vmem:[%s4357 + $0x250] sm:$0xff]
    %v4433 = vld [vmem:[%s4357 + $0x258] sm:$0xff]
    %v4434 = vld [vmem:[%s4357 + $0x260] sm:$0xff]
    %v4435 = vld [vmem:[%s4357 + $0x268] sm:$0xff]
    %v4436 = vld [vmem:[%s4357 + $0x270] sm:$0xff]
    %v4437 = vld [vmem:[%s4357 + $0x278] sm:$0xff]
    %v4438 = vld [vmem:[%s4357 + $0x280] sm:$0xff]
    %v4439 = vld [vmem:[%s4357 + $0x288] sm:$0xff]
    %v4440 = vld [vmem:[%s4357 + $0x290] sm:$0xff]
    %v4441 = vld [vmem:[%s4357 + $0x298] sm:$0xff]
    %v4442 = vld [vmem:[%s4357 + $0x2a0] sm:$0xff]
    %v4443 = vld [vmem:[%s4357 + $0x2a8] sm:$0xff]
    %v4444 = vld [vmem:[%s4357 + $0x2b0] sm:$0xff]
    %v4445 = vld [vmem:[%s4357 + $0x2b8] sm:$0xff]
    %v4446 = vld [vmem:[%s4357 + $0x2c0] sm:$0xff]
    %v4447 = vld [vmem:[%s4357 + $0x2c8] sm:$0xff]
    %v4448 = vld [vmem:[%s4357 + $0x2d0] sm:$0xff]
    %v4449 = vld [vmem:[%s4357 + $0x2d8] sm:$0xff]
    %v4450 = vld [vmem:[%s4357 + $0x2e0] sm:$0xff]
    %v4451 = vld [vmem:[%s4357 + $0x2e8] sm:$0xff]
    %v4452 = vld [vmem:[%s4357 + $0x2f0] sm:$0xff]
    %v4453 = vld [vmem:[%s4357 + $0x2f8] sm:$0xff]
    %v4454 = vld [vmem:[%s4357 + $0x300] sm:$0xff]
    %v4455 = vld [vmem:[%s4357 + $0x308] sm:$0xff]
    %v4456 = vld [vmem:[%s4357 + $0x310] sm:$0xff]
    %v4457 = vld [vmem:[%s4357 + $0x318] sm:$0xff]
    %v4458 = vld [vmem:[%s4357 + $0x320] sm:$0xff]
    %v4459 = vld [vmem:[%s4357 + $0x328] sm:$0xff]
    %v4460 = vld [vmem:[%s4357 + $0x330] sm:$0xff]
    %v4461 = vld [vmem:[%s4357 + $0x338] sm:$0xff]
    %v4462 = vld [vmem:[%s4357 + $0x340] sm:$0xff]
    %v4463 = vld [vmem:[%s4357 + $0x348] sm:$0xff]
    %v4464 = vld [vmem:[%s4357 + $0x350] sm:$0xff]
    %v4465 = vld [vmem:[%s4357 + $0x358] sm:$0xff]
    %v4466 = vld [vmem:[%s4357 + $0x360] sm:$0xff]
    %v4467 = vld [vmem:[%s4357 + $0x368] sm:$0xff]
    %v4468 = vld [vmem:[%s4357 + $0x370] sm:$0xff]
    %v4469 = vld [vmem:[%s4357 + $0x378] sm:$0xff]
    %v4470 = vld [vmem:[%s4357 + $0x380] sm:$0xff]
    %v4471 = vld [vmem:[%s4357 + $0x388] sm:$0xff]
    %v4472 = vld [vmem:[%s4357 + $0x390] sm:$0xff]
    %v4473 = vld [vmem:[%s4357 + $0x398] sm:$0xff]
    %v4474 = vld [vmem:[%s4357 + $0x3a0] sm:$0xff]
    %v4475 = vld [vmem:[%s4357 + $0x3a8] sm:$0xff]
    %v4476 = vld [vmem:[%s4357 + $0x3b0] sm:$0xff]
    %v4477 = vld [vmem:[%s4357 + $0x3b8] sm:$0xff]
    %v4478 = vld [vmem:[%s4357 + $0x3c0] sm:$0xff]
    %v4479 = vld [vmem:[%s4357 + $0x3c8] sm:$0xff]
    %v4480 = vld [vmem:[%s4357 + $0x3d0] sm:$0xff]
    %v4481 = vld [vmem:[%s4357 + $0x3d8] sm:$0xff]
    %v4482 = vld [vmem:[%s4357 + $0x3e0] sm:$0xff]
    %v4483 = vld [vmem:[%s4357 + $0x3e8] sm:$0xff]
    %v4484 = vld [vmem:[%s4357 + $0x3f0] sm:$0xff]
    %v4485 = vld [vmem:[%s4357 + $0x3f8] sm:$0xff]
    %s4486 = scalar_lea.vmem [#allocation7], 16
    %v4487 = vld [vmem:[%s4486] sm:$0xff]
    %v4488 = vld [vmem:[%s4486 + $0x8] sm:$0xff]
    %v4491 = vperm.slane %v4487, 0
    %v4492 = vperm.slane %v4487, 1
    %v4493 = vperm.slane %v4487, 2
    %v4494 = vperm.slane %v4487, 3
    %v4495 = vperm.slane %v4487, 4
    %v4496 = vperm.slane %v4487, 5
    %v4497 = vperm.slane %v4487, 6
    %v4498 = vperm.slane %v4487, 7
    %v4499 = vperm.slane %v4488, 0
    %v4500 = vperm.slane %v4488, 1
    %v4501 = vperm.slane %v4488, 2
    %v4502 = vperm.slane %v4488, 3
    %v4503 = vperm.slane %v4488, 4
    %v4504 = vperm.slane %v4488, 5
    %v4505 = vperm.slane %v4488, 6
    %v4506 = vperm.slane %v4488, 7
    %v4651 = vunpack.c.l.b16 %v4358
    %v4652 = vunpack.c.h.b16 %v4358
    %v4653 = vunpack.c.l.b16 %v4359
    %v4654 = vunpack.c.h.b16 %v4359
    %v4655 = vunpack.c.l.b16 %v4360
    %v4656 = vunpack.c.h.b16 %v4360
    %v4657 = vunpack.c.l.b16 %v4361
    %v4658 = vunpack.c.h.b16 %v4361
    %v4659 = vunpack.c.l.b16 %v4362
    %v4660 = vunpack.c.h.b16 %v4362
    %v4661 = vunpack.c.l.b16 %v4363
    %v4662 = vunpack.c.h.b16 %v4363
    %v4663 = vunpack.c.l.b16 %v4364
    %v4664 = vunpack.c.h.b16 %v4364
    %v4665 = vunpack.c.l.b16 %v4365
    %v4666 = vunpack.c.h.b16 %v4365
    %v4667 = vunpack.c.l.b16 %v4366
    %v4668 = vunpack.c.h.b16 %v4366
    %v4669 = vunpack.c.l.b16 %v4367
    %v4670 = vunpack.c.h.b16 %v4367
    %v4671 = vunpack.c.l.b16 %v4368
    %v4672 = vunpack.c.h.b16 %v4368
    %v4673 = vunpack.c.l.b16 %v4369
    %v4674 = vunpack.c.h.b16 %v4369
    %v4675 = vunpack.c.l.b16 %v4370
    %v4676 = vunpack.c.h.b16 %v4370
    %v4677 = vunpack.c.l.b16 %v4371
    %v4678 = vunpack.c.h.b16 %v4371
    %v4679 = vunpack.c.l.b16 %v4372
    %v4680 = vunpack.c.h.b16 %v4372
    %v4681 = vunpack.c.l.b16 %v4373
    %v4682 = vunpack.c.h.b16 %v4373
    %v4683 = vunpack.c.l.b16 %v4374
    %v4684 = vunpack.c.h.b16 %v4374
    %v4685 = vunpack.c.l.b16 %v4375
    %v4686 = vunpack.c.h.b16 %v4375
    %v4687 = vunpack.c.l.b16 %v4376
    %v4688 = vunpack.c.h.b16 %v4376
    %v4689 = vunpack.c.l.b16 %v4377
    %v4690 = vunpack.c.h.b16 %v4377
    %v4691 = vunpack.c.l.b16 %v4378
    %v4692 = vunpack.c.h.b16 %v4378
    %v4693 = vunpack.c.l.b16 %v4379
    %v4694 = vunpack.c.h.b16 %v4379
    %v4695 = vunpack.c.l.b16 %v4380
    %v4696 = vunpack.c.h.b16 %v4380
    %v4697 = vunpack.c.l.b16 %v4381
    %v4698 = vunpack.c.h.b16 %v4381
    %v4699 = vunpack.c.l.b16 %v4382
    %v4700 = vunpack.c.h.b16 %v4382
    %v4701 = vunpack.c.l.b16 %v4383
    %v4702 = vunpack.c.h.b16 %v4383
    %v4703 = vunpack.c.l.b16 %v4384
    %v4704 = vunpack.c.h.b16 %v4384
    %v4705 = vunpack.c.l.b16 %v4385
    %v4706 = vunpack.c.h.b16 %v4385
    %v4707 = vunpack.c.l.b16 %v4386
    %v4708 = vunpack.c.h.b16 %v4386
    %v4709 = vunpack.c.l.b16 %v4387
    %v4710 = vunpack.c.h.b16 %v4387
    %v4711 = vunpack.c.l.b16 %v4388
    %v4712 = vunpack.c.h.b16 %v4388
    %v4713 = vunpack.c.l.b16 %v4389
    %v4714 = vunpack.c.h.b16 %v4389
    %v4715 = vunpack.c.l.b16 %v4390
    %v4716 = vunpack.c.h.b16 %v4390
    %v4717 = vunpack.c.l.b16 %v4391
    %v4718 = vunpack.c.h.b16 %v4391
    %v4719 = vunpack.c.l.b16 %v4392
    %v4720 = vunpack.c.h.b16 %v4392
    %v4721 = vunpack.c.l.b16 %v4393
    %v4722 = vunpack.c.h.b16 %v4393
    %v4723 = vunpack.c.l.b16 %v4394
    %v4724 = vunpack.c.h.b16 %v4394
    %v4725 = vunpack.c.l.b16 %v4395
    %v4726 = vunpack.c.h.b16 %v4395
    %v4727 = vunpack.c.l.b16 %v4396
    %v4728 = vunpack.c.h.b16 %v4396
    %v4729 = vunpack.c.l.b16 %v4397
    %v4730 = vunpack.c.h.b16 %v4397
    %v4731 = vunpack.c.l.b16 %v4398
    %v4732 = vunpack.c.h.b16 %v4398
    %v4733 = vunpack.c.l.b16 %v4399
    %v4734 = vunpack.c.h.b16 %v4399
    %v4735 = vunpack.c.l.b16 %v4400
    %v4736 = vunpack.c.h.b16 %v4400
    %v4737 = vunpack.c.l.b16 %v4401
    %v4738 = vunpack.c.h.b16 %v4401
    %v4739 = vunpack.c.l.b16 %v4402
    %v4740 = vunpack.c.h.b16 %v4402
    %v4741 = vunpack.c.l.b16 %v4403
    %v4742 = vunpack.c.h.b16 %v4403
    %v4743 = vunpack.c.l.b16 %v4404
    %v4744 = vunpack.c.h.b16 %v4404
    %v4745 = vunpack.c.l.b16 %v4405
    %v4746 = vunpack.c.h.b16 %v4405
    %v4747 = vunpack.c.l.b16 %v4406
    %v4748 = vunpack.c.h.b16 %v4406
    %v4749 = vunpack.c.l.b16 %v4407
    %v4750 = vunpack.c.h.b16 %v4407
    %v4751 = vunpack.c.l.b16 %v4408
    %v4752 = vunpack.c.h.b16 %v4408
    %v4753 = vunpack.c.l.b16 %v4409
    %v4754 = vunpack.c.h.b16 %v4409
    %v4755 = vunpack.c.l.b16 %v4410
    %v4756 = vunpack.c.h.b16 %v4410
    %v4757 = vunpack.c.l.b16 %v4411
    %v4758 = vunpack.c.h.b16 %v4411
    %v4759 = vunpack.c.l.b16 %v4412
    %v4760 = vunpack.c.h.b16 %v4412
    %v4761 = vunpack.c.l.b16 %v4413
    %v4762 = vunpack.c.h.b16 %v4413
    %v4763 = vunpack.c.l.b16 %v4414
    %v4764 = vunpack.c.h.b16 %v4414
    %v4765 = vunpack.c.l.b16 %v4415
    %v4766 = vunpack.c.h.b16 %v4415
    %v4767 = vunpack.c.l.b16 %v4416
    %v4768 = vunpack.c.h.b16 %v4416
    %v4769 = vunpack.c.l.b16 %v4417
    %v4770 = vunpack.c.h.b16 %v4417
    %v4771 = vunpack.c.l.b16 %v4418
    %v4772 = vunpack.c.h.b16 %v4418
    %v4773 = vunpack.c.l.b16 %v4419
    %v4774 = vunpack.c.h.b16 %v4419
    %v4775 = vunpack.c.l.b16 %v4420
    %v4776 = vunpack.c.h.b16 %v4420
    %v4777 = vunpack.c.l.b16 %v4421
    %v4778 = vunpack.c.h.b16 %v4421
    %v4779 = vunpack.c.l.b16 %v4422
    %v4780 = vunpack.c.h.b16 %v4422
    %v4781 = vunpack.c.l.b16 %v4423
    %v4782 = vunpack.c.h.b16 %v4423
    %v4783 = vunpack.c.l.b16 %v4424
    %v4784 = vunpack.c.h.b16 %v4424
    %v4785 = vunpack.c.l.b16 %v4425
    %v4786 = vunpack.c.h.b16 %v4425
    %v4787 = vunpack.c.l.b16 %v4426
    %v4788 = vunpack.c.h.b16 %v4426
    %v4789 = vunpack.c.l.b16 %v4427
    %v4790 = vunpack.c.h.b16 %v4427
    %v4791 = vunpack.c.l.b16 %v4428
    %v4792 = vunpack.c.h.b16 %v4428
    %v4793 = vunpack.c.l.b16 %v4429
    %v4794 = vunpack.c.h.b16 %v4429
    %v4795 = vunpack.c.l.b16 %v4430
    %v4796 = vunpack.c.h.b16 %v4430
    %v4797 = vunpack.c.l.b16 %v4431
    %v4798 = vunpack.c.h.b16 %v4431
    %v4799 = vunpack.c.l.b16 %v4432
    %v4800 = vunpack.c.h.b16 %v4432
    %v4801 = vunpack.c.l.b16 %v4433
    %v4802 = vunpack.c.h.b16 %v4433
    %v4803 = vunpack.c.l.b16 %v4434
    %v4804 = vunpack.c.h.b16 %v4434
    %v4805 = vunpack.c.l.b16 %v4435
    %v4806 = vunpack.c.h.b16 %v4435
    %v4807 = vunpack.c.l.b16 %v4436
    %v4808 = vunpack.c.h.b16 %v4436
    %v4809 = vunpack.c.l.b16 %v4437
    %v4810 = vunpack.c.h.b16 %v4437
    %v4811 = vunpack.c.l.b16 %v4438
    %v4812 = vunpack.c.h.b16 %v4438
    %v4813 = vunpack.c.l.b16 %v4439
    %v4814 = vunpack.c.h.b16 %v4439
    %v4815 = vunpack.c.l.b16 %v4440
    %v4816 = vunpack.c.h.b16 %v4440
    %v4817 = vunpack.c.l.b16 %v4441
    %v4818 = vunpack.c.h.b16 %v4441
    %v4819 = vunpack.c.l.b16 %v4442
    %v4820 = vunpack.c.h.b16 %v4442
    %v4821 = vunpack.c.l.b16 %v4443
    %v4822 = vunpack.c.h.b16 %v4443
    %v4823 = vunpack.c.l.b16 %v4444
    %v4824 = vunpack.c.h.b16 %v4444
    %v4825 = vunpack.c.l.b16 %v4445
    %v4826 = vunpack.c.h.b16 %v4445
    %v4827 = vunpack.c.l.b16 %v4446
    %v4828 = vunpack.c.h.b16 %v4446
    %v4829 = vunpack.c.l.b16 %v4447
    %v4830 = vunpack.c.h.b16 %v4447
    %v4831 = vunpack.c.l.b16 %v4448
    %v4832 = vunpack.c.h.b16 %v4448
    %v4833 = vunpack.c.l.b16 %v4449
    %v4834 = vunpack.c.h.b16 %v4449
    %v4835 = vunpack.c.l.b16 %v4450
    %v4836 = vunpack.c.h.b16 %v4450
    %v4837 = vunpack.c.l.b16 %v4451
    %v4838 = vunpack.c.h.b16 %v4451
    %v4839 = vunpack.c.l.b16 %v4452
    %v4840 = vunpack.c.h.b16 %v4452
    %v4841 = vunpack.c.l.b16 %v4453
    %v4842 = vunpack.c.h.b16 %v4453
    %v4843 = vunpack.c.l.b16 %v4454
    %v4844 = vunpack.c.h.b16 %v4454
    %v4845 = vunpack.c.l.b16 %v4455
    %v4846 = vunpack.c.h.b16 %v4455
    %v4847 = vunpack.c.l.b16 %v4456
    %v4848 = vunpack.c.h.b16 %v4456
    %v4849 = vunpack.c.l.b16 %v4457
    %v4850 = vunpack.c.h.b16 %v4457
    %v4851 = vunpack.c.l.b16 %v4458
    %v4852 = vunpack.c.h.b16 %v4458
    %v4853 = vunpack.c.l.b16 %v4459
    %v4854 = vunpack.c.h.b16 %v4459
    %v4855 = vunpack.c.l.b16 %v4460
    %v4856 = vunpack.c.h.b16 %v4460
    %v4857 = vunpack.c.l.b16 %v4461
    %v4858 = vunpack.c.h.b16 %v4461
    %v4859 = vunpack.c.l.b16 %v4462
    %v4860 = vunpack.c.h.b16 %v4462
    %v4861 = vunpack.c.l.b16 %v4463
    %v4862 = vunpack.c.h.b16 %v4463
    %v4863 = vunpack.c.l.b16 %v4464
    %v4864 = vunpack.c.h.b16 %v4464
    %v4865 = vunpack.c.l.b16 %v4465
    %v4866 = vunpack.c.h.b16 %v4465
    %v4867 = vunpack.c.l.b16 %v4466
    %v4868 = vunpack.c.h.b16 %v4466
    %v4869 = vunpack.c.l.b16 %v4467
    %v4870 = vunpack.c.h.b16 %v4467
    %v4871 = vunpack.c.l.b16 %v4468
    %v4872 = vunpack.c.h.b16 %v4468
    %v4873 = vunpack.c.l.b16 %v4469
    %v4874 = vunpack.c.h.b16 %v4469
    %v4875 = vunpack.c.l.b16 %v4470
    %v4876 = vunpack.c.h.b16 %v4470
    %v4877 = vunpack.c.l.b16 %v4471
    %v4878 = vunpack.c.h.b16 %v4471
    %v4879 = vunpack.c.l.b16 %v4472
    %v4880 = vunpack.c.h.b16 %v4472
    %v4881 = vunpack.c.l.b16 %v4473
    %v4882 = vunpack.c.h.b16 %v4473
    %v4883 = vunpack.c.l.b16 %v4474
    %v4884 = vunpack.c.h.b16 %v4474
    %v4885 = vunpack.c.l.b16 %v4475
    %v4886 = vunpack.c.h.b16 %v4475
    %v4887 = vunpack.c.l.b16 %v4476
    %v4888 = vunpack.c.h.b16 %v4476
    %v4889 = vunpack.c.l.b16 %v4477
    %v4890 = vunpack.c.h.b16 %v4477
    %v4891 = vunpack.c.l.b16 %v4478
    %v4892 = vunpack.c.h.b16 %v4478
    %v4893 = vunpack.c.l.b16 %v4479
    %v4894 = vunpack.c.h.b16 %v4479
    %v4895 = vunpack.c.l.b16 %v4480
    %v4896 = vunpack.c.h.b16 %v4480
    %v4897 = vunpack.c.l.b16 %v4481
    %v4898 = vunpack.c.h.b16 %v4481
    %v4899 = vunpack.c.l.b16 %v4482
    %v4900 = vunpack.c.h.b16 %v4482
    %v4901 = vunpack.c.l.b16 %v4483
    %v4902 = vunpack.c.h.b16 %v4483
    %v4903 = vunpack.c.l.b16 %v4484
    %v4904 = vunpack.c.h.b16 %v4484
    %v4905 = vunpack.c.l.b16 %v4485
    %v4906 = vunpack.c.h.b16 %v4485
    %v4907 = vpack.c.b16 %v4667, %v4651
    %v4908 = vpack.c.b16 %v4668, %v4652
    %v4909 = vpack.c.b16 %v4669, %v4653
    %v4910 = vpack.c.b16 %v4670, %v4654
    %v4911 = vpack.c.b16 %v4671, %v4655
    %v4912 = vpack.c.b16 %v4672, %v4656
    %v4913 = vpack.c.b16 %v4673, %v4657
    %v4914 = vpack.c.b16 %v4674, %v4658
    %v4915 = vpack.c.b16 %v4675, %v4659
    %v4916 = vpack.c.b16 %v4676, %v4660
    %v4917 = vpack.c.b16 %v4677, %v4661
    %v4918 = vpack.c.b16 %v4678, %v4662
    %v4919 = vpack.c.b16 %v4679, %v4663
    %v4920 = vpack.c.b16 %v4680, %v4664
    %v4921 = vpack.c.b16 %v4681, %v4665
    %v4922 = vpack.c.b16 %v4682, %v4666
    %v4923 = vpack.c.b16 %v4699, %v4683
    %v4924 = vpack.c.b16 %v4700, %v4684
    %v4925 = vpack.c.b16 %v4701, %v4685
    %v4926 = vpack.c.b16 %v4702, %v4686
    %v4927 = vpack.c.b16 %v4703, %v4687
    %v4928 = vpack.c.b16 %v4704, %v4688
    %v4929 = vpack.c.b16 %v4705, %v4689
    %v4930 = vpack.c.b16 %v4706, %v4690
    %v4931 = vpack.c.b16 %v4707, %v4691
    %v4932 = vpack.c.b16 %v4708, %v4692
    %v4933 = vpack.c.b16 %v4709, %v4693
    %v4934 = vpack.c.b16 %v4710, %v4694
    %v4935 = vpack.c.b16 %v4711, %v4695
    %v4936 = vpack.c.b16 %v4712, %v4696
    %v4937 = vpack.c.b16 %v4713, %v4697
    %v4938 = vpack.c.b16 %v4714, %v4698
    %v4939 = vpack.c.b16 %v4731, %v4715
    %v4940 = vpack.c.b16 %v4732, %v4716
    %v4941 = vpack.c.b16 %v4733, %v4717
    %v4942 = vpack.c.b16 %v4734, %v4718
    %v4943 = vpack.c.b16 %v4735, %v4719
    %v4944 = vpack.c.b16 %v4736, %v4720
    %v4945 = vpack.c.b16 %v4737, %v4721
    %v4946 = vpack.c.b16 %v4738, %v4722
    %v4947 = vpack.c.b16 %v4739, %v4723
    %v4948 = vpack.c.b16 %v4740, %v4724
    %v4949 = vpack.c.b16 %v4741, %v4725
    %v4950 = vpack.c.b16 %v4742, %v4726
    %v4951 = vpack.c.b16 %v4743, %v4727
    %v4952 = vpack.c.b16 %v4744, %v4728
    %v4953 = vpack.c.b16 %v4745, %v4729
    %v4954 = vpack.c.b16 %v4746, %v4730
    %v4955 = vpack.c.b16 %v4763, %v4747
    %v4956 = vpack.c.b16 %v4764, %v4748
    %v4957 = vpack.c.b16 %v4765, %v4749
    %v4958 = vpack.c.b16 %v4766, %v4750
    %v4959 = vpack.c.b16 %v4767, %v4751
    %v4960 = vpack.c.b16 %v4768, %v4752
    %v4961 = vpack.c.b16 %v4769, %v4753
    %v4962 = vpack.c.b16 %v4770, %v4754
    %v4963 = vpack.c.b16 %v4771, %v4755
    %v4964 = vpack.c.b16 %v4772, %v4756
    %v4965 = vpack.c.b16 %v4773, %v4757
    %v4966 = vpack.c.b16 %v4774, %v4758
    %v4967 = vpack.c.b16 %v4775, %v4759
    %v4968 = vpack.c.b16 %v4776, %v4760
    %v4969 = vpack.c.b16 %v4777, %v4761
    %v4970 = vpack.c.b16 %v4778, %v4762
    %v4971 = vpack.c.b16 %v4795, %v4779
    %v4972 = vpack.c.b16 %v4796, %v4780
    %v4973 = vpack.c.b16 %v4797, %v4781
    %v4974 = vpack.c.b16 %v4798, %v4782
    %v4975 = vpack.c.b16 %v4799, %v4783
    %v4976 = vpack.c.b16 %v4800, %v4784
    %v4977 = vpack.c.b16 %v4801, %v4785
    %v4978 = vpack.c.b16 %v4802, %v4786
    %v4979 = vpack.c.b16 %v4803, %v4787
    %v4980 = vpack.c.b16 %v4804, %v4788
    %v4981 = vpack.c.b16 %v4805, %v4789
    %v4982 = vpack.c.b16 %v4806, %v4790
    %v4983 = vpack.c.b16 %v4807, %v4791
    %v4984 = vpack.c.b16 %v4808, %v4792
    %v4985 = vpack.c.b16 %v4809, %v4793
    %v4986 = vpack.c.b16 %v4810, %v4794
    %v4987 = vpack.c.b16 %v4827, %v4811
    %v4988 = vpack.c.b16 %v4828, %v4812
    %v4989 = vpack.c.b16 %v4829, %v4813
    %v4990 = vpack.c.b16 %v4830, %v4814
    %v4991 = vpack.c.b16 %v4831, %v4815
    %v4992 = vpack.c.b16 %v4832, %v4816
    %v4993 = vpack.c.b16 %v4833, %v4817
    %v4994 = vpack.c.b16 %v4834, %v4818
    %v4995 = vpack.c.b16 %v4835, %v4819
    %v4996 = vpack.c.b16 %v4836, %v4820
    %v4997 = vpack.c.b16 %v4837, %v4821
    %v4998 = vpack.c.b16 %v4838, %v4822
    %v4999 = vpack.c.b16 %v4839, %v4823
    %v5000 = vpack.c.b16 %v4840, %v4824
    %v5001 = vpack.c.b16 %v4841, %v4825
    %v5002 = vpack.c.b16 %v4842, %v4826
    %v5003 = vpack.c.b16 %v4859, %v4843
    %v5004 = vpack.c.b16 %v4860, %v4844
    %v5005 = vpack.c.b16 %v4861, %v4845
    %v5006 = vpack.c.b16 %v4862, %v4846
    %v5007 = vpack.c.b16 %v4863, %v4847
    %v5008 = vpack.c.b16 %v4864, %v4848
    %v5009 = vpack.c.b16 %v4865, %v4849
    %v5010 = vpack.c.b16 %v4866, %v4850
    %v5011 = vpack.c.b16 %v4867, %v4851
    %v5012 = vpack.c.b16 %v4868, %v4852
    %v5013 = vpack.c.b16 %v4869, %v4853
    %v5014 = vpack.c.b16 %v4870, %v4854
    %v5015 = vpack.c.b16 %v4871, %v4855
    %v5016 = vpack.c.b16 %v4872, %v4856
    %v5017 = vpack.c.b16 %v4873, %v4857
    %v5018 = vpack.c.b16 %v4874, %v4858
    %v5019 = vpack.c.b16 %v4891, %v4875
    %v5020 = vpack.c.b16 %v4892, %v4876
    %v5021 = vpack.c.b16 %v4893, %v4877
    %v5022 = vpack.c.b16 %v4894, %v4878
    %v5023 = vpack.c.b16 %v4895, %v4879
    %v5024 = vpack.c.b16 %v4896, %v4880
    %v5025 = vpack.c.b16 %v4897, %v4881
    %v5026 = vpack.c.b16 %v4898, %v4882
    %v5027 = vpack.c.b16 %v4899, %v4883
    %v5028 = vpack.c.b16 %v4900, %v4884
    %v5029 = vpack.c.b16 %v4901, %v4885
    %v5030 = vpack.c.b16 %v4902, %v4886
    %v5031 = vpack.c.b16 %v4903, %v4887
    %v5032 = vpack.c.b16 %v4904, %v4888
    %v5033 = vpack.c.b16 %v4905, %v4889
    %v5034 = vpack.c.b16 %v4906, %v4890
    %5163 = vmatpush.bf16.msra.mxu0 %v5019
    %5164 = vmatpush.bf16.msra.mxu0 %v5003
    %5165 = vmatpush.bf16.msra.mxu0 %v4987
    %5166 = vmatpush.bf16.msra.mxu0 %v4971
    %5167 = vmatpush.bf16.msra.mxu0 %v4955
    %5168 = vmatpush.bf16.msra.mxu0 %v4939
    %5169 = vmatpush.bf16.msra.mxu0 %v4923
    %5170 = vmatpush.bf16.msra.mxu0 %v4907
    %5171 = vmatmul.bf16.gmra.mxu0 %v4356
    %v5172 = vpop.f32.mrf.mxu0
    %v5173 = vadd.f32 %v4491, %v5172
    %v5174 = vpop.f32.mrf.mxu0
    %v5175 = vadd.f32 %v4491, %v5174
    %5176 = vdwg.mxu0
    %5177 = vmatpush.bf16.msra.mxu0 %v5020
    %5178 = vmatpush.bf16.msra.mxu0 %v5004
    %5179 = vmatpush.bf16.msra.mxu0 %v4988
    %5180 = vmatpush.bf16.msra.mxu0 %v4972
    %5181 = vmatpush.bf16.msra.mxu0 %v4956
    %5182 = vmatpush.bf16.msra.mxu0 %v4940
    %5183 = vmatpush.bf16.msra.mxu0 %v4924
    %5184 = vmatpush.bf16.msra.mxu0 %v4908
    %5185 = vmatmul.bf16.gmra.mxu0 %v4356
    %v5186 = vpop.f32.mrf.mxu0
    %v5187 = vadd.f32 %v4492, %v5186
    %v5188 = vpop.f32.mrf.mxu0
    %v5189 = vadd.f32 %v4492, %v5188
    %5190 = vdwg.mxu0
    %5191 = vmatpush.bf16.msra.mxu0 %v5021
    %5192 = vmatpush.bf16.msra.mxu0 %v5005
    %5193 = vmatpush.bf16.msra.mxu0 %v4989
    %5194 = vmatpush.bf16.msra.mxu0 %v4973
    %5195 = vmatpush.bf16.msra.mxu0 %v4957
    %5196 = vmatpush.bf16.msra.mxu0 %v4941
    %5197 = vmatpush.bf16.msra.mxu0 %v4925
    %5198 = vmatpush.bf16.msra.mxu0 %v4909
    %5199 = vmatmul.bf16.gmra.mxu0 %v4356
    %v5200 = vpop.f32.mrf.mxu0
    %v5201 = vadd.f32 %v4493, %v5200
    %v5202 = vpop.f32.mrf.mxu0
    %v5203 = vadd.f32 %v4493, %v5202
    %5204 = vdwg.mxu0
    %5205 = vmatpush.bf16.msra.mxu0 %v5022
    %5206 = vmatpush.bf16.msra.mxu0 %v5006
    %5207 = vmatpush.bf16.msra.mxu0 %v4990
    %5208 = vmatpush.bf16.msra.mxu0 %v4974
    %5209 = vmatpush.bf16.msra.mxu0 %v4958
    %5210 = vmatpush.bf16.msra.mxu0 %v4942
    %5211 = vmatpush.bf16.msra.mxu0 %v4926
    %5212 = vmatpush.bf16.msra.mxu0 %v4910
    %5213 = vmatmul.bf16.gmra.mxu0 %v4356
    %v5214 = vpop.f32.mrf.mxu0
    %v5215 = vadd.f32 %v4494, %v5214
    %v5216 = vpop.f32.mrf.mxu0
    %v5217 = vadd.f32 %v4494, %v5216
    %5218 = vdwg.mxu0
    %5219 = vmatpush.bf16.msra.mxu0 %v5023
    %5220 = vmatpush.bf16.msra.mxu0 %v5007
    %5221 = vmatpush.bf16.msra.mxu0 %v4991
    %5222 = vmatpush.bf16.msra.mxu0 %v4975
    %5223 = vmatpush.bf16.msra.mxu0 %v4959
    %5224 = vmatpush.bf16.msra.mxu0 %v4943
    %5225 = vmatpush.bf16.msra.mxu0 %v4927
    %5226 = vmatpush.bf16.msra.mxu0 %v4911
    %5227 = vmatmul.bf16.gmra.mxu0 %v4356
    %v5228 = vpop.f32.mrf.mxu0
    %v5229 = vadd.f32 %v4495, %v5228
    %v5230 = vpop.f32.mrf.mxu0
    %v5231 = vadd.f32 %v4495, %v5230
    %5232 = vdwg.mxu0
    %5233 = vmatpush.bf16.msra.mxu0 %v5024
    %5234 = vmatpush.bf16.msra.mxu0 %v5008
    %5235 = vmatpush.bf16.msra.mxu0 %v4992
    %5236 = vmatpush.bf16.msra.mxu0 %v4976
    %5237 = vmatpush.bf16.msra.mxu0 %v4960
    %5238 = vmatpush.bf16.msra.mxu0 %v4944
    %5239 = vmatpush.bf16.msra.mxu0 %v4928
    %5240 = vmatpush.bf16.msra.mxu0 %v4912
    %5241 = vmatmul.bf16.gmra.mxu0 %v4356
    %v5242 = vpop.f32.mrf.mxu0
    %v5243 = vadd.f32 %v4496, %v5242
    %v5244 = vpop.f32.mrf.mxu0
    %v5245 = vadd.f32 %v4496, %v5244
    %5246 = vdwg.mxu0
    %5247 = vmatpush.bf16.msra.mxu0 %v5025
    %5248 = vmatpush.bf16.msra.mxu0 %v5009
    %5249 = vmatpush.bf16.msra.mxu0 %v4993
    %5250 = vmatpush.bf16.msra.mxu0 %v4977
    %5251 = vmatpush.bf16.msra.mxu0 %v4961
    %5252 = vmatpush.bf16.msra.mxu0 %v4945
    %5253 = vmatpush.bf16.msra.mxu0 %v4929
    %5254 = vmatpush.bf16.msra.mxu0 %v4913
    %5255 = vmatmul.bf16.gmra.mxu0 %v4356
    %v5256 = vpop.f32.mrf.mxu0
    %v5257 = vadd.f32 %v4497, %v5256
    %v5258 = vpop.f32.mrf.mxu0
    %v5259 = vadd.f32 %v4497, %v5258
    %5260 = vdwg.mxu0
    %5261 = vmatpush.bf16.msra.mxu0 %v5026
    %5262 = vmatpush.bf16.msra.mxu0 %v5010
    %5263 = vmatpush.bf16.msra.mxu0 %v4994
    %5264 = vmatpush.bf16.msra.mxu0 %v4978
    %5265 = vmatpush.bf16.msra.mxu0 %v4962
    %5266 = vmatpush.bf16.msra.mxu0 %v4946
    %5267 = vmatpush.bf16.msra.mxu0 %v4930
    %5268 = vmatpush.bf16.msra.mxu0 %v4914
    %5269 = vmatmul.bf16.gmra.mxu0 %v4356
    %v5270 = vpop.f32.mrf.mxu0
    %v5271 = vadd.f32 %v4498, %v5270
    %v5272 = vpop.f32.mrf.mxu0
    %v5273 = vadd.f32 %v4498, %v5272
    %5274 = vdwg.mxu0
    %5275 = vmatpush.bf16.msra.mxu0 %v5027
    %5276 = vmatpush.bf16.msra.mxu0 %v5011
    %5277 = vmatpush.bf16.msra.mxu0 %v4995
    %5278 = vmatpush.bf16.msra.mxu0 %v4979
    %5279 = vmatpush.bf16.msra.mxu0 %v4963
    %5280 = vmatpush.bf16.msra.mxu0 %v4947
    %5281 = vmatpush.bf16.msra.mxu0 %v4931
    %5282 = vmatpush.bf16.msra.mxu0 %v4915
    %5283 = vmatmul.bf16.gmra.mxu0 %v4356
    %v5284 = vpop.f32.mrf.mxu0
    %v5285 = vadd.f32 %v4499, %v5284
    %v5286 = vpop.f32.mrf.mxu0
    %v5287 = vadd.f32 %v4499, %v5286
    %5288 = vdwg.mxu0
    %5289 = vmatpush.bf16.msra.mxu0 %v5028
    %5290 = vmatpush.bf16.msra.mxu0 %v5012
    %5291 = vmatpush.bf16.msra.mxu0 %v4996
    %5292 = vmatpush.bf16.msra.mxu0 %v4980
    %5293 = vmatpush.bf16.msra.mxu0 %v4964
    %5294 = vmatpush.bf16.msra.mxu0 %v4948
    %5295 = vmatpush.bf16.msra.mxu0 %v4932
    %5296 = vmatpush.bf16.msra.mxu0 %v4916
    %5297 = vmatmul.bf16.gmra.mxu0 %v4356
    %v5298 = vpop.f32.mrf.mxu0
    %v5299 = vadd.f32 %v4500, %v5298
    %v5300 = vpop.f32.mrf.mxu0
    %v5301 = vadd.f32 %v4500, %v5300
    %5302 = vdwg.mxu0
    %5303 = vmatpush.bf16.msra.mxu0 %v5029
    %5304 = vmatpush.bf16.msra.mxu0 %v5013
    %5305 = vmatpush.bf16.msra.mxu0 %v4997
    %5306 = vmatpush.bf16.msra.mxu0 %v4981
    %5307 = vmatpush.bf16.msra.mxu0 %v4965
    %5308 = vmatpush.bf16.msra.mxu0 %v4949
    %5309 = vmatpush.bf16.msra.mxu0 %v4933
    %5310 = vmatpush.bf16.msra.mxu0 %v4917
    %5311 = vmatmul.bf16.gmra.mxu0 %v4356
    %v5312 = vpop.f32.mrf.mxu0
    %v5313 = vadd.f32 %v4501, %v5312
    %v5314 = vpop.f32.mrf.mxu0
    %v5315 = vadd.f32 %v4501, %v5314
    %5316 = vdwg.mxu0
    %5317 = vmatpush.bf16.msra.mxu0 %v5030
    %5318 = vmatpush.bf16.msra.mxu0 %v5014
    %5319 = vmatpush.bf16.msra.mxu0 %v4998
    %5320 = vmatpush.bf16.msra.mxu0 %v4982
    %5321 = vmatpush.bf16.msra.mxu0 %v4966
    %5322 = vmatpush.bf16.msra.mxu0 %v4950
    %5323 = vmatpush.bf16.msra.mxu0 %v4934
    %5324 = vmatpush.bf16.msra.mxu0 %v4918
    %5325 = vmatmul.bf16.gmra.mxu0 %v4356
    %v5326 = vpop.f32.mrf.mxu0
    %v5327 = vadd.f32 %v4502, %v5326
    %v5328 = vpop.f32.mrf.mxu0
    %v5329 = vadd.f32 %v4502, %v5328
    %5330 = vdwg.mxu0
    %5331 = vmatpush.bf16.msra.mxu0 %v5031
    %5332 = vmatpush.bf16.msra.mxu0 %v5015
    %5333 = vmatpush.bf16.msra.mxu0 %v4999
    %5334 = vmatpush.bf16.msra.mxu0 %v4983
    %5335 = vmatpush.bf16.msra.mxu0 %v4967
    %5336 = vmatpush.bf16.msra.mxu0 %v4951
    %5337 = vmatpush.bf16.msra.mxu0 %v4935
    %5338 = vmatpush.bf16.msra.mxu0 %v4919
    %5339 = vmatmul.bf16.gmra.mxu0 %v4356
    %v5340 = vpop.f32.mrf.mxu0
    %v5341 = vadd.f32 %v4503, %v5340
    %v5342 = vpop.f32.mrf.mxu0
    %v5343 = vadd.f32 %v4503, %v5342
    %5344 = vdwg.mxu0
    %5345 = vmatpush.bf16.msra.mxu0 %v5032
    %5346 = vmatpush.bf16.msra.mxu0 %v5016
    %5347 = vmatpush.bf16.msra.mxu0 %v5000
    %5348 = vmatpush.bf16.msra.mxu0 %v4984
    %5349 = vmatpush.bf16.msra.mxu0 %v4968
    %5350 = vmatpush.bf16.msra.mxu0 %v4952
    %5351 = vmatpush.bf16.msra.mxu0 %v4936
    %5352 = vmatpush.bf16.msra.mxu0 %v4920
    %5353 = vmatmul.bf16.gmra.mxu0 %v4356
    %v5354 = vpop.f32.mrf.mxu0
    %v5355 = vadd.f32 %v4504, %v5354
    %v5356 = vpop.f32.mrf.mxu0
    %v5357 = vadd.f32 %v4504, %v5356
    %5358 = vdwg.mxu0
    %5359 = vmatpush.bf16.msra.mxu0 %v5033
    %5360 = vmatpush.bf16.msra.mxu0 %v5017
    %5361 = vmatpush.bf16.msra.mxu0 %v5001
    %5362 = vmatpush.bf16.msra.mxu0 %v4985
    %5363 = vmatpush.bf16.msra.mxu0 %v4969
    %5364 = vmatpush.bf16.msra.mxu0 %v4953
    %5365 = vmatpush.bf16.msra.mxu0 %v4937
    %5366 = vmatpush.bf16.msra.mxu0 %v4921
    %5367 = vmatmul.bf16.gmra.mxu0 %v4356
    %v5368 = vpop.f32.mrf.mxu0
    %v5369 = vadd.f32 %v4505, %v5368
    %v5370 = vpop.f32.mrf.mxu0
    %v5371 = vadd.f32 %v4505, %v5370
    %5372 = vdwg.mxu0
    %5373 = vmatpush.bf16.msra.mxu0 %v5034
    %5374 = vmatpush.bf16.msra.mxu0 %v5018
    %5375 = vmatpush.bf16.msra.mxu0 %v5002
    %5376 = vmatpush.bf16.msra.mxu0 %v4986
    %5377 = vmatpush.bf16.msra.mxu0 %v4970
    %5378 = vmatpush.bf16.msra.mxu0 %v4954
    %5379 = vmatpush.bf16.msra.mxu0 %v4938
    %5380 = vmatpush.bf16.msra.mxu0 %v4922
    %5381 = vmatmul.bf16.gmra.mxu0 %v4356
    %v5382 = vpop.f32.mrf.mxu0
    %v5383 = vadd.f32 %v4506, %v5382
    %v5384 = vpop.f32.mrf.mxu0
    %v5385 = vadd.f32 %v4506, %v5384
    %5386 = vdwg.mxu0
    %v5387 = vmax.f32 %v5173, 0.0
    %v5388 = vmax.f32 %v5187, 0.0
    %v5389 = vmax.f32 %v5201, 0.0
    %v5390 = vmax.f32 %v5215, 0.0
    %v5391 = vmax.f32 %v5229, 0.0
    %v5392 = vmax.f32 %v5243, 0.0
    %v5393 = vmax.f32 %v5257, 0.0
    %v5394 = vmax.f32 %v5271, 0.0
    %v5395 = vmax.f32 %v5285, 0.0
    %v5396 = vmax.f32 %v5299, 0.0
    %v5397 = vmax.f32 %v5313, 0.0
    %v5398 = vmax.f32 %v5327, 0.0
    %v5399 = vmax.f32 %v5341, 0.0
    %v5400 = vmax.f32 %v5355, 0.0
    %v5401 = vmax.f32 %v5369, 0.0
    %v5402 = vmax.f32 %v5383, 0.0
    %v5403 = vmax.f32 %v5175, 0.0
    %v5404 = vmax.f32 %v5189, 0.0
    %v5405 = vmax.f32 %v5203, 0.0
    %v5406 = vmax.f32 %v5217, 0.0
    %v5407 = vmax.f32 %v5231, 0.0
    %v5408 = vmax.f32 %v5245, 0.0
    %v5409 = vmax.f32 %v5259, 0.0
    %v5410 = vmax.f32 %v5273, 0.0
    %v5411 = vmax.f32 %v5287, 0.0
    %v5412 = vmax.f32 %v5301, 0.0
    %v5413 = vmax.f32 %v5315, 0.0
    %v5414 = vmax.f32 %v5329, 0.0
    %v5415 = vmax.f32 %v5343, 0.0
    %v5416 = vmax.f32 %v5357, 0.0
    %v5417 = vmax.f32 %v5371, 0.0
    %v5418 = vmax.f32 %v5385, 0.0
    %v5419 = vpack.c.bf16 %v5403, %v5387
    %v5420 = vpack.c.bf16 %v5404, %v5388
    %v5421 = vpack.c.bf16 %v5405, %v5389
    %v5422 = vpack.c.bf16 %v5406, %v5390
    %v5423 = vpack.c.bf16 %v5407, %v5391
    %v5424 = vpack.c.bf16 %v5408, %v5392
    %v5425 = vpack.c.bf16 %v5409, %v5393
    %v5426 = vpack.c.bf16 %v5410, %v5394
    %v5427 = vpack.c.bf16 %v5411, %v5395
    %v5428 = vpack.c.bf16 %v5412, %v5396
    %v5429 = vpack.c.bf16 %v5413, %v5397
    %v5430 = vpack.c.bf16 %v5414, %v5398
    %v5431 = vpack.c.bf16 %v5415, %v5399
    %v5432 = vpack.c.bf16 %v5416, %v5400
    %v5433 = vpack.c.bf16 %v5417, %v5401
    %v5434 = vpack.c.bf16 %v5418, %v5402
    %s5435 = scalar_lea.vmem [#allocation8], 1024
    %v5436 = vld [vmem:[%s5435] sm:$0xf]
    %v5437 = vld [vmem:[%s5435 + $0x4] sm:$0xf]
    %v5438 = vld [vmem:[%s5435 + $0x8] sm:$0xf]
    %v5439 = vld [vmem:[%s5435 + $0xc] sm:$0xf]
    %v5440 = vld [vmem:[%s5435 + $0x10] sm:$0xf]
    %v5441 = vld [vmem:[%s5435 + $0x14] sm:$0xf]
    %v5442 = vld [vmem:[%s5435 + $0x18] sm:$0xf]
    %v5443 = vld [vmem:[%s5435 + $0x1c] sm:$0xf]
    %v5444 = vld [vmem:[%s5435 + $0x20] sm:$0xf]
    %v5445 = vld [vmem:[%s5435 + $0x24] sm:$0xf]
    %v5446 = vld [vmem:[%s5435 + $0x28] sm:$0xf]
    %v5447 = vld [vmem:[%s5435 + $0x2c] sm:$0xf]
    %v5448 = vld [vmem:[%s5435 + $0x30] sm:$0xf]
    %v5449 = vld [vmem:[%s5435 + $0x34] sm:$0xf]
    %v5450 = vld [vmem:[%s5435 + $0x38] sm:$0xf]
    %v5451 = vld [vmem:[%s5435 + $0x3c] sm:$0xf]
    %v5452 = vld [vmem:[%s5435 + $0x40] sm:$0xf]
    %v5453 = vld [vmem:[%s5435 + $0x44] sm:$0xf]
    %v5454 = vld [vmem:[%s5435 + $0x48] sm:$0xf]
    %v5455 = vld [vmem:[%s5435 + $0x4c] sm:$0xf]
    %v5456 = vld [vmem:[%s5435 + $0x50] sm:$0xf]
    %v5457 = vld [vmem:[%s5435 + $0x54] sm:$0xf]
    %v5458 = vld [vmem:[%s5435 + $0x58] sm:$0xf]
    %v5459 = vld [vmem:[%s5435 + $0x5c] sm:$0xf]
    %v5460 = vld [vmem:[%s5435 + $0x60] sm:$0xf]
    %v5461 = vld [vmem:[%s5435 + $0x64] sm:$0xf]
    %v5462 = vld [vmem:[%s5435 + $0x68] sm:$0xf]
    %v5463 = vld [vmem:[%s5435 + $0x6c] sm:$0xf]
    %v5464 = vld [vmem:[%s5435 + $0x70] sm:$0xf]
    %v5465 = vld [vmem:[%s5435 + $0x74] sm:$0xf]
    %v5466 = vld [vmem:[%s5435 + $0x78] sm:$0xf]
    %v5467 = vld [vmem:[%s5435 + $0x7c] sm:$0xf]
    %v5468 = vld [vmem:[%s5435 + $0x80] sm:$0xf]
    %v5469 = vld [vmem:[%s5435 + $0x84] sm:$0xf]
    %v5470 = vld [vmem:[%s5435 + $0x88] sm:$0xf]
    %v5471 = vld [vmem:[%s5435 + $0x8c] sm:$0xf]
    %v5472 = vld [vmem:[%s5435 + $0x90] sm:$0xf]
    %v5473 = vld [vmem:[%s5435 + $0x94] sm:$0xf]
    %v5474 = vld [vmem:[%s5435 + $0x98] sm:$0xf]
    %v5475 = vld [vmem:[%s5435 + $0x9c] sm:$0xf]
    %v5476 = vld [vmem:[%s5435 + $0xa0] sm:$0xf]
    %v5477 = vld [vmem:[%s5435 + $0xa4] sm:$0xf]
    %v5478 = vld [vmem:[%s5435 + $0xa8] sm:$0xf]
    %v5479 = vld [vmem:[%s5435 + $0xac] sm:$0xf]
    %v5480 = vld [vmem:[%s5435 + $0xb0] sm:$0xf]
    %v5481 = vld [vmem:[%s5435 + $0xb4] sm:$0xf]
    %v5482 = vld [vmem:[%s5435 + $0xb8] sm:$0xf]
    %v5483 = vld [vmem:[%s5435 + $0xbc] sm:$0xf]
    %v5484 = vld [vmem:[%s5435 + $0xc0] sm:$0xf]
    %v5485 = vld [vmem:[%s5435 + $0xc4] sm:$0xf]
    %v5486 = vld [vmem:[%s5435 + $0xc8] sm:$0xf]
    %v5487 = vld [vmem:[%s5435 + $0xcc] sm:$0xf]
    %v5488 = vld [vmem:[%s5435 + $0xd0] sm:$0xf]
    %v5489 = vld [vmem:[%s5435 + $0xd4] sm:$0xf]
    %v5490 = vld [vmem:[%s5435 + $0xd8] sm:$0xf]
    %v5491 = vld [vmem:[%s5435 + $0xdc] sm:$0xf]
    %v5492 = vld [vmem:[%s5435 + $0xe0] sm:$0xf]
    %v5493 = vld [vmem:[%s5435 + $0xe4] sm:$0xf]
    %v5494 = vld [vmem:[%s5435 + $0xe8] sm:$0xf]
    %v5495 = vld [vmem:[%s5435 + $0xec] sm:$0xf]
    %v5496 = vld [vmem:[%s5435 + $0xf0] sm:$0xf]
    %v5497 = vld [vmem:[%s5435 + $0xf4] sm:$0xf]
    %v5498 = vld [vmem:[%s5435 + $0xf8] sm:$0xf]
    %v5499 = vld [vmem:[%s5435 + $0xfc] sm:$0xf]
    %v5500 = vld [vmem:[%s5435 + $0x100] sm:$0xf]
    %v5501 = vld [vmem:[%s5435 + $0x104] sm:$0xf]
    %v5502 = vld [vmem:[%s5435 + $0x108] sm:$0xf]
    %v5503 = vld [vmem:[%s5435 + $0x10c] sm:$0xf]
    %v5504 = vld [vmem:[%s5435 + $0x110] sm:$0xf]
    %v5505 = vld [vmem:[%s5435 + $0x114] sm:$0xf]
    %v5506 = vld [vmem:[%s5435 + $0x118] sm:$0xf]
    %v5507 = vld [vmem:[%s5435 + $0x11c] sm:$0xf]
    %v5508 = vld [vmem:[%s5435 + $0x120] sm:$0xf]
    %v5509 = vld [vmem:[%s5435 + $0x124] sm:$0xf]
    %v5510 = vld [vmem:[%s5435 + $0x128] sm:$0xf]
    %v5511 = vld [vmem:[%s5435 + $0x12c] sm:$0xf]
    %v5512 = vld [vmem:[%s5435 + $0x130] sm:$0xf]
    %v5513 = vld [vmem:[%s5435 + $0x134] sm:$0xf]
    %v5514 = vld [vmem:[%s5435 + $0x138] sm:$0xf]
    %v5515 = vld [vmem:[%s5435 + $0x13c] sm:$0xf]
    %v5516 = vld [vmem:[%s5435 + $0x140] sm:$0xf]
    %v5517 = vld [vmem:[%s5435 + $0x144] sm:$0xf]
    %v5518 = vld [vmem:[%s5435 + $0x148] sm:$0xf]
    %v5519 = vld [vmem:[%s5435 + $0x14c] sm:$0xf]
    %v5520 = vld [vmem:[%s5435 + $0x150] sm:$0xf]
    %v5521 = vld [vmem:[%s5435 + $0x154] sm:$0xf]
    %v5522 = vld [vmem:[%s5435 + $0x158] sm:$0xf]
    %v5523 = vld [vmem:[%s5435 + $0x15c] sm:$0xf]
    %v5524 = vld [vmem:[%s5435 + $0x160] sm:$0xf]
    %v5525 = vld [vmem:[%s5435 + $0x164] sm:$0xf]
    %v5526 = vld [vmem:[%s5435 + $0x168] sm:$0xf]
    %v5527 = vld [vmem:[%s5435 + $0x16c] sm:$0xf]
    %v5528 = vld [vmem:[%s5435 + $0x170] sm:$0xf]
    %v5529 = vld [vmem:[%s5435 + $0x174] sm:$0xf]
    %v5530 = vld [vmem:[%s5435 + $0x178] sm:$0xf]
    %v5531 = vld [vmem:[%s5435 + $0x17c] sm:$0xf]
    %v5532 = vld [vmem:[%s5435 + $0x180] sm:$0xf]
    %v5533 = vld [vmem:[%s5435 + $0x184] sm:$0xf]
    %v5534 = vld [vmem:[%s5435 + $0x188] sm:$0xf]
    %v5535 = vld [vmem:[%s5435 + $0x18c] sm:$0xf]
    %v5536 = vld [vmem:[%s5435 + $0x190] sm:$0xf]
    %v5537 = vld [vmem:[%s5435 + $0x194] sm:$0xf]
    %v5538 = vld [vmem:[%s5435 + $0x198] sm:$0xf]
    %v5539 = vld [vmem:[%s5435 + $0x19c] sm:$0xf]
    %v5540 = vld [vmem:[%s5435 + $0x1a0] sm:$0xf]
    %v5541 = vld [vmem:[%s5435 + $0x1a4] sm:$0xf]
    %v5542 = vld [vmem:[%s5435 + $0x1a8] sm:$0xf]
    %v5543 = vld [vmem:[%s5435 + $0x1ac] sm:$0xf]
    %v5544 = vld [vmem:[%s5435 + $0x1b0] sm:$0xf]
    %v5545 = vld [vmem:[%s5435 + $0x1b4] sm:$0xf]
    %v5546 = vld [vmem:[%s5435 + $0x1b8] sm:$0xf]
    %v5547 = vld [vmem:[%s5435 + $0x1bc] sm:$0xf]
    %v5548 = vld [vmem:[%s5435 + $0x1c0] sm:$0xf]
    %v5549 = vld [vmem:[%s5435 + $0x1c4] sm:$0xf]
    %v5550 = vld [vmem:[%s5435 + $0x1c8] sm:$0xf]
    %v5551 = vld [vmem:[%s5435 + $0x1cc] sm:$0xf]
    %v5552 = vld [vmem:[%s5435 + $0x1d0] sm:$0xf]
    %v5553 = vld [vmem:[%s5435 + $0x1d4] sm:$0xf]
    %v5554 = vld [vmem:[%s5435 + $0x1d8] sm:$0xf]
    %v5555 = vld [vmem:[%s5435 + $0x1dc] sm:$0xf]
    %v5556 = vld [vmem:[%s5435 + $0x1e0] sm:$0xf]
    %v5557 = vld [vmem:[%s5435 + $0x1e4] sm:$0xf]
    %v5558 = vld [vmem:[%s5435 + $0x1e8] sm:$0xf]
    %v5559 = vld [vmem:[%s5435 + $0x1ec] sm:$0xf]
    %v5560 = vld [vmem:[%s5435 + $0x1f0] sm:$0xf]
    %v5561 = vld [vmem:[%s5435 + $0x1f4] sm:$0xf]
    %v5562 = vld [vmem:[%s5435 + $0x1f8] sm:$0xf]
    %v5563 = vld [vmem:[%s5435 + $0x1fc] sm:$0xf]
    %v5564 = vld [vmem:[%s5435 + $0x200] sm:$0xf]
    %v5565 = vld [vmem:[%s5435 + $0x204] sm:$0xf]
    %v5566 = vld [vmem:[%s5435 + $0x208] sm:$0xf]
    %v5567 = vld [vmem:[%s5435 + $0x20c] sm:$0xf]
    %v5568 = vld [vmem:[%s5435 + $0x210] sm:$0xf]
    %v5569 = vld [vmem:[%s5435 + $0x214] sm:$0xf]
    %v5570 = vld [vmem:[%s5435 + $0x218] sm:$0xf]
    %v5571 = vld [vmem:[%s5435 + $0x21c] sm:$0xf]
    %v5572 = vld [vmem:[%s5435 + $0x220] sm:$0xf]
    %v5573 = vld [vmem:[%s5435 + $0x224] sm:$0xf]
    %v5574 = vld [vmem:[%s5435 + $0x228] sm:$0xf]
    %v5575 = vld [vmem:[%s5435 + $0x22c] sm:$0xf]
    %v5576 = vld [vmem:[%s5435 + $0x230] sm:$0xf]
    %v5577 = vld [vmem:[%s5435 + $0x234] sm:$0xf]
    %v5578 = vld [vmem:[%s5435 + $0x238] sm:$0xf]
    %v5579 = vld [vmem:[%s5435 + $0x23c] sm:$0xf]
    %v5580 = vld [vmem:[%s5435 + $0x240] sm:$0xf]
    %v5581 = vld [vmem:[%s5435 + $0x244] sm:$0xf]
    %v5582 = vld [vmem:[%s5435 + $0x248] sm:$0xf]
    %v5583 = vld [vmem:[%s5435 + $0x24c] sm:$0xf]
    %v5584 = vld [vmem:[%s5435 + $0x250] sm:$0xf]
    %v5585 = vld [vmem:[%s5435 + $0x254] sm:$0xf]
    %v5586 = vld [vmem:[%s5435 + $0x258] sm:$0xf]
    %v5587 = vld [vmem:[%s5435 + $0x25c] sm:$0xf]
    %v5588 = vld [vmem:[%s5435 + $0x260] sm:$0xf]
    %v5589 = vld [vmem:[%s5435 + $0x264] sm:$0xf]
    %v5590 = vld [vmem:[%s5435 + $0x268] sm:$0xf]
    %v5591 = vld [vmem:[%s5435 + $0x26c] sm:$0xf]
    %v5592 = vld [vmem:[%s5435 + $0x270] sm:$0xf]
    %v5593 = vld [vmem:[%s5435 + $0x274] sm:$0xf]
    %v5594 = vld [vmem:[%s5435 + $0x278] sm:$0xf]
    %v5595 = vld [vmem:[%s5435 + $0x27c] sm:$0xf]
    %v5596 = vld [vmem:[%s5435 + $0x280] sm:$0xf]
    %v5597 = vld [vmem:[%s5435 + $0x284] sm:$0xf]
    %v5598 = vld [vmem:[%s5435 + $0x288] sm:$0xf]
    %v5599 = vld [vmem:[%s5435 + $0x28c] sm:$0xf]
    %v5600 = vld [vmem:[%s5435 + $0x290] sm:$0xf]
    %v5601 = vld [vmem:[%s5435 + $0x294] sm:$0xf]
    %v5602 = vld [vmem:[%s5435 + $0x298] sm:$0xf]
    %v5603 = vld [vmem:[%s5435 + $0x29c] sm:$0xf]
    %v5604 = vld [vmem:[%s5435 + $0x2a0] sm:$0xf]
    %v5605 = vld [vmem:[%s5435 + $0x2a4] sm:$0xf]
    %v5606 = vld [vmem:[%s5435 + $0x2a8] sm:$0xf]
    %v5607 = vld [vmem:[%s5435 + $0x2ac] sm:$0xf]
    %v5608 = vld [vmem:[%s5435 + $0x2b0] sm:$0xf]
    %v5609 = vld [vmem:[%s5435 + $0x2b4] sm:$0xf]
    %v5610 = vld [vmem:[%s5435 + $0x2b8] sm:$0xf]
    %v5611 = vld [vmem:[%s5435 + $0x2bc] sm:$0xf]
    %v5612 = vld [vmem:[%s5435 + $0x2c0] sm:$0xf]
    %v5613 = vld [vmem:[%s5435 + $0x2c4] sm:$0xf]
    %v5614 = vld [vmem:[%s5435 + $0x2c8] sm:$0xf]
    %v5615 = vld [vmem:[%s5435 + $0x2cc] sm:$0xf]
    %v5616 = vld [vmem:[%s5435 + $0x2d0] sm:$0xf]
    %v5617 = vld [vmem:[%s5435 + $0x2d4] sm:$0xf]
    %v5618 = vld [vmem:[%s5435 + $0x2d8] sm:$0xf]
    %v5619 = vld [vmem:[%s5435 + $0x2dc] sm:$0xf]
    %v5620 = vld [vmem:[%s5435 + $0x2e0] sm:$0xf]
    %v5621 = vld [vmem:[%s5435 + $0x2e4] sm:$0xf]
    %v5622 = vld [vmem:[%s5435 + $0x2e8] sm:$0xf]
    %v5623 = vld [vmem:[%s5435 + $0x2ec] sm:$0xf]
    %v5624 = vld [vmem:[%s5435 + $0x2f0] sm:$0xf]
    %v5625 = vld [vmem:[%s5435 + $0x2f4] sm:$0xf]
    %v5626 = vld [vmem:[%s5435 + $0x2f8] sm:$0xf]
    %v5627 = vld [vmem:[%s5435 + $0x2fc] sm:$0xf]
    %v5628 = vld [vmem:[%s5435 + $0x300] sm:$0xf]
    %v5629 = vld [vmem:[%s5435 + $0x304] sm:$0xf]
    %v5630 = vld [vmem:[%s5435 + $0x308] sm:$0xf]
    %v5631 = vld [vmem:[%s5435 + $0x30c] sm:$0xf]
    %v5632 = vld [vmem:[%s5435 + $0x310] sm:$0xf]
    %v5633 = vld [vmem:[%s5435 + $0x314] sm:$0xf]
    %v5634 = vld [vmem:[%s5435 + $0x318] sm:$0xf]
    %v5635 = vld [vmem:[%s5435 + $0x31c] sm:$0xf]
    %v5636 = vld [vmem:[%s5435 + $0x320] sm:$0xf]
    %v5637 = vld [vmem:[%s5435 + $0x324] sm:$0xf]
    %v5638 = vld [vmem:[%s5435 + $0x328] sm:$0xf]
    %v5639 = vld [vmem:[%s5435 + $0x32c] sm:$0xf]
    %v5640 = vld [vmem:[%s5435 + $0x330] sm:$0xf]
    %v5641 = vld [vmem:[%s5435 + $0x334] sm:$0xf]
    %v5642 = vld [vmem:[%s5435 + $0x338] sm:$0xf]
    %v5643 = vld [vmem:[%s5435 + $0x33c] sm:$0xf]
    %v5644 = vld [vmem:[%s5435 + $0x340] sm:$0xf]
    %v5645 = vld [vmem:[%s5435 + $0x344] sm:$0xf]
    %v5646 = vld [vmem:[%s5435 + $0x348] sm:$0xf]
    %v5647 = vld [vmem:[%s5435 + $0x34c] sm:$0xf]
    %v5648 = vld [vmem:[%s5435 + $0x350] sm:$0xf]
    %v5649 = vld [vmem:[%s5435 + $0x354] sm:$0xf]
    %v5650 = vld [vmem:[%s5435 + $0x358] sm:$0xf]
    %v5651 = vld [vmem:[%s5435 + $0x35c] sm:$0xf]
    %v5652 = vld [vmem:[%s5435 + $0x360] sm:$0xf]
    %v5653 = vld [vmem:[%s5435 + $0x364] sm:$0xf]
    %v5654 = vld [vmem:[%s5435 + $0x368] sm:$0xf]
    %v5655 = vld [vmem:[%s5435 + $0x36c] sm:$0xf]
    %v5656 = vld [vmem:[%s5435 + $0x370] sm:$0xf]
    %v5657 = vld [vmem:[%s5435 + $0x374] sm:$0xf]
    %v5658 = vld [vmem:[%s5435 + $0x378] sm:$0xf]
    %v5659 = vld [vmem:[%s5435 + $0x37c] sm:$0xf]
    %v5660 = vld [vmem:[%s5435 + $0x380] sm:$0xf]
    %v5661 = vld [vmem:[%s5435 + $0x384] sm:$0xf]
    %v5662 = vld [vmem:[%s5435 + $0x388] sm:$0xf]
    %v5663 = vld [vmem:[%s5435 + $0x38c] sm:$0xf]
    %v5664 = vld [vmem:[%s5435 + $0x390] sm:$0xf]
    %v5665 = vld [vmem:[%s5435 + $0x394] sm:$0xf]
    %v5666 = vld [vmem:[%s5435 + $0x398] sm:$0xf]
    %v5667 = vld [vmem:[%s5435 + $0x39c] sm:$0xf]
    %v5668 = vld [vmem:[%s5435 + $0x3a0] sm:$0xf]
    %v5669 = vld [vmem:[%s5435 + $0x3a4] sm:$0xf]
    %v5670 = vld [vmem:[%s5435 + $0x3a8] sm:$0xf]
    %v5671 = vld [vmem:[%s5435 + $0x3ac] sm:$0xf]
    %v5672 = vld [vmem:[%s5435 + $0x3b0] sm:$0xf]
    %v5673 = vld [vmem:[%s5435 + $0x3b4] sm:$0xf]
    %v5674 = vld [vmem:[%s5435 + $0x3b8] sm:$0xf]
    %v5675 = vld [vmem:[%s5435 + $0x3bc] sm:$0xf]
    %v5676 = vld [vmem:[%s5435 + $0x3c0] sm:$0xf]
    %v5677 = vld [vmem:[%s5435 + $0x3c4] sm:$0xf]
    %v5678 = vld [vmem:[%s5435 + $0x3c8] sm:$0xf]
    %v5679 = vld [vmem:[%s5435 + $0x3cc] sm:$0xf]
    %v5680 = vld [vmem:[%s5435 + $0x3d0] sm:$0xf]
    %v5681 = vld [vmem:[%s5435 + $0x3d4] sm:$0xf]
    %v5682 = vld [vmem:[%s5435 + $0x3d8] sm:$0xf]
    %v5683 = vld [vmem:[%s5435 + $0x3dc] sm:$0xf]
    %v5684 = vld [vmem:[%s5435 + $0x3e0] sm:$0xf]
    %v5685 = vld [vmem:[%s5435 + $0x3e4] sm:$0xf]
    %v5686 = vld [vmem:[%s5435 + $0x3e8] sm:$0xf]
    %v5687 = vld [vmem:[%s5435 + $0x3ec] sm:$0xf]
    %v5688 = vld [vmem:[%s5435 + $0x3f0] sm:$0xf]
    %v5689 = vld [vmem:[%s5435 + $0x3f4] sm:$0xf]
    %v5690 = vld [vmem:[%s5435 + $0x3f8] sm:$0xf]
    %v5691 = vld [vmem:[%s5435 + $0x3fc] sm:$0xf]
    %s5692 = scalar_lea.vmem %s8, 1
    %v5693 = vld [vmem:[%s5692] sm:$0x1]
    %v5695 = vperm.slane %v5693, 0
    %v5953 = vunpack.c.l.b16 %v5436
    %v5954 = vunpack.c.l.b16 %v5437
    %v5955 = vunpack.c.l.b16 %v5438
    %v5956 = vunpack.c.l.b16 %v5439
    %v5957 = vunpack.c.l.b16 %v5440
    %v5958 = vunpack.c.l.b16 %v5441
    %v5959 = vunpack.c.l.b16 %v5442
    %v5960 = vunpack.c.l.b16 %v5443
    %v5961 = vunpack.c.l.b16 %v5444
    %v5962 = vunpack.c.l.b16 %v5445
    %v5963 = vunpack.c.l.b16 %v5446
    %v5964 = vunpack.c.l.b16 %v5447
    %v5965 = vunpack.c.l.b16 %v5448
    %v5966 = vunpack.c.l.b16 %v5449
    %v5967 = vunpack.c.l.b16 %v5450
    %v5968 = vunpack.c.l.b16 %v5451
    %v5969 = vunpack.c.l.b16 %v5452
    %v5970 = vunpack.c.l.b16 %v5453
    %v5971 = vunpack.c.l.b16 %v5454
    %v5972 = vunpack.c.l.b16 %v5455
    %v5973 = vunpack.c.l.b16 %v5456
    %v5974 = vunpack.c.l.b16 %v5457
    %v5975 = vunpack.c.l.b16 %v5458
    %v5976 = vunpack.c.l.b16 %v5459
    %v5977 = vunpack.c.l.b16 %v5460
    %v5978 = vunpack.c.l.b16 %v5461
    %v5979 = vunpack.c.l.b16 %v5462
    %v5980 = vunpack.c.l.b16 %v5463
    %v5981 = vunpack.c.l.b16 %v5464
    %v5982 = vunpack.c.l.b16 %v5465
    %v5983 = vunpack.c.l.b16 %v5466
    %v5984 = vunpack.c.l.b16 %v5467
    %v5985 = vunpack.c.l.b16 %v5468
    %v5986 = vunpack.c.l.b16 %v5469
    %v5987 = vunpack.c.l.b16 %v5470
    %v5988 = vunpack.c.l.b16 %v5471
    %v5989 = vunpack.c.l.b16 %v5472
    %v5990 = vunpack.c.l.b16 %v5473
    %v5991 = vunpack.c.l.b16 %v5474
    %v5992 = vunpack.c.l.b16 %v5475
    %v5993 = vunpack.c.l.b16 %v5476
    %v5994 = vunpack.c.l.b16 %v5477
    %v5995 = vunpack.c.l.b16 %v5478
    %v5996 = vunpack.c.l.b16 %v5479
    %v5997 = vunpack.c.l.b16 %v5480
    %v5998 = vunpack.c.l.b16 %v5481
    %v5999 = vunpack.c.l.b16 %v5482
    %v6000 = vunpack.c.l.b16 %v5483
    %v6001 = vunpack.c.l.b16 %v5484
    %v6002 = vunpack.c.l.b16 %v5485
    %v6003 = vunpack.c.l.b16 %v5486
    %v6004 = vunpack.c.l.b16 %v5487
    %v6005 = vunpack.c.l.b16 %v5488
    %v6006 = vunpack.c.l.b16 %v5489
    %v6007 = vunpack.c.l.b16 %v5490
    %v6008 = vunpack.c.l.b16 %v5491
    %v6009 = vunpack.c.l.b16 %v5492
    %v6010 = vunpack.c.l.b16 %v5493
    %v6011 = vunpack.c.l.b16 %v5494
    %v6012 = vunpack.c.l.b16 %v5495
    %v6013 = vunpack.c.l.b16 %v5496
    %v6014 = vunpack.c.l.b16 %v5497
    %v6015 = vunpack.c.l.b16 %v5498
    %v6016 = vunpack.c.l.b16 %v5499
    %v6017 = vunpack.c.l.b16 %v5500
    %v6018 = vunpack.c.l.b16 %v5501
    %v6019 = vunpack.c.l.b16 %v5502
    %v6020 = vunpack.c.l.b16 %v5503
    %v6021 = vunpack.c.l.b16 %v5504
    %v6022 = vunpack.c.l.b16 %v5505
    %v6023 = vunpack.c.l.b16 %v5506
    %v6024 = vunpack.c.l.b16 %v5507
    %v6025 = vunpack.c.l.b16 %v5508
    %v6026 = vunpack.c.l.b16 %v5509
    %v6027 = vunpack.c.l.b16 %v5510
    %v6028 = vunpack.c.l.b16 %v5511
    %v6029 = vunpack.c.l.b16 %v5512
    %v6030 = vunpack.c.l.b16 %v5513
    %v6031 = vunpack.c.l.b16 %v5514
    %v6032 = vunpack.c.l.b16 %v5515
    %v6033 = vunpack.c.l.b16 %v5516
    %v6034 = vunpack.c.l.b16 %v5517
    %v6035 = vunpack.c.l.b16 %v5518
    %v6036 = vunpack.c.l.b16 %v5519
    %v6037 = vunpack.c.l.b16 %v5520
    %v6038 = vunpack.c.l.b16 %v5521
    %v6039 = vunpack.c.l.b16 %v5522
    %v6040 = vunpack.c.l.b16 %v5523
    %v6041 = vunpack.c.l.b16 %v5524
    %v6042 = vunpack.c.l.b16 %v5525
    %v6043 = vunpack.c.l.b16 %v5526
    %v6044 = vunpack.c.l.b16 %v5527
    %v6045 = vunpack.c.l.b16 %v5528
    %v6046 = vunpack.c.l.b16 %v5529
    %v6047 = vunpack.c.l.b16 %v5530
    %v6048 = vunpack.c.l.b16 %v5531
    %v6049 = vunpack.c.l.b16 %v5532
    %v6050 = vunpack.c.l.b16 %v5533
    %v6051 = vunpack.c.l.b16 %v5534
    %v6052 = vunpack.c.l.b16 %v5535
    %v6053 = vunpack.c.l.b16 %v5536
    %v6054 = vunpack.c.l.b16 %v5537
    %v6055 = vunpack.c.l.b16 %v5538
    %v6056 = vunpack.c.l.b16 %v5539
    %v6057 = vunpack.c.l.b16 %v5540
    %v6058 = vunpack.c.l.b16 %v5541
    %v6059 = vunpack.c.l.b16 %v5542
    %v6060 = vunpack.c.l.b16 %v5543
    %v6061 = vunpack.c.l.b16 %v5544
    %v6062 = vunpack.c.l.b16 %v5545
    %v6063 = vunpack.c.l.b16 %v5546
    %v6064 = vunpack.c.l.b16 %v5547
    %v6065 = vunpack.c.l.b16 %v5548
    %v6066 = vunpack.c.l.b16 %v5549
    %v6067 = vunpack.c.l.b16 %v5550
    %v6068 = vunpack.c.l.b16 %v5551
    %v6069 = vunpack.c.l.b16 %v5552
    %v6070 = vunpack.c.l.b16 %v5553
    %v6071 = vunpack.c.l.b16 %v5554
    %v6072 = vunpack.c.l.b16 %v5555
    %v6073 = vunpack.c.l.b16 %v5556
    %v6074 = vunpack.c.l.b16 %v5557
    %v6075 = vunpack.c.l.b16 %v5558
    %v6076 = vunpack.c.l.b16 %v5559
    %v6077 = vunpack.c.l.b16 %v5560
    %v6078 = vunpack.c.l.b16 %v5561
    %v6079 = vunpack.c.l.b16 %v5562
    %v6080 = vunpack.c.l.b16 %v5563
    %v6081 = vunpack.c.l.b16 %v5564
    %v6082 = vunpack.c.l.b16 %v5565
    %v6083 = vunpack.c.l.b16 %v5566
    %v6084 = vunpack.c.l.b16 %v5567
    %v6085 = vunpack.c.l.b16 %v5568
    %v6086 = vunpack.c.l.b16 %v5569
    %v6087 = vunpack.c.l.b16 %v5570
    %v6088 = vunpack.c.l.b16 %v5571
    %v6089 = vunpack.c.l.b16 %v5572
    %v6090 = vunpack.c.l.b16 %v5573
    %v6091 = vunpack.c.l.b16 %v5574
    %v6092 = vunpack.c.l.b16 %v5575
    %v6093 = vunpack.c.l.b16 %v5576
    %v6094 = vunpack.c.l.b16 %v5577
    %v6095 = vunpack.c.l.b16 %v5578
    %v6096 = vunpack.c.l.b16 %v5579
    %v6097 = vunpack.c.l.b16 %v5580
    %v6098 = vunpack.c.l.b16 %v5581
    %v6099 = vunpack.c.l.b16 %v5582
    %v6100 = vunpack.c.l.b16 %v5583
    %v6101 = vunpack.c.l.b16 %v5584
    %v6102 = vunpack.c.l.b16 %v5585
    %v6103 = vunpack.c.l.b16 %v5586
    %v6104 = vunpack.c.l.b16 %v5587
    %v6105 = vunpack.c.l.b16 %v5588
    %v6106 = vunpack.c.l.b16 %v5589
    %v6107 = vunpack.c.l.b16 %v5590
    %v6108 = vunpack.c.l.b16 %v5591
    %v6109 = vunpack.c.l.b16 %v5592
    %v6110 = vunpack.c.l.b16 %v5593
    %v6111 = vunpack.c.l.b16 %v5594
    %v6112 = vunpack.c.l.b16 %v5595
    %v6113 = vunpack.c.l.b16 %v5596
    %v6114 = vunpack.c.l.b16 %v5597
    %v6115 = vunpack.c.l.b16 %v5598
    %v6116 = vunpack.c.l.b16 %v5599
    %v6117 = vunpack.c.l.b16 %v5600
    %v6118 = vunpack.c.l.b16 %v5601
    %v6119 = vunpack.c.l.b16 %v5602
    %v6120 = vunpack.c.l.b16 %v5603
    %v6121 = vunpack.c.l.b16 %v5604
    %v6122 = vunpack.c.l.b16 %v5605
    %v6123 = vunpack.c.l.b16 %v5606
    %v6124 = vunpack.c.l.b16 %v5607
    %v6125 = vunpack.c.l.b16 %v5608
    %v6126 = vunpack.c.l.b16 %v5609
    %v6127 = vunpack.c.l.b16 %v5610
    %v6128 = vunpack.c.l.b16 %v5611
    %v6129 = vunpack.c.l.b16 %v5612
    %v6130 = vunpack.c.l.b16 %v5613
    %v6131 = vunpack.c.l.b16 %v5614
    %v6132 = vunpack.c.l.b16 %v5615
    %v6133 = vunpack.c.l.b16 %v5616
    %v6134 = vunpack.c.l.b16 %v5617
    %v6135 = vunpack.c.l.b16 %v5618
    %v6136 = vunpack.c.l.b16 %v5619
    %v6137 = vunpack.c.l.b16 %v5620
    %v6138 = vunpack.c.l.b16 %v5621
    %v6139 = vunpack.c.l.b16 %v5622
    %v6140 = vunpack.c.l.b16 %v5623
    %v6141 = vunpack.c.l.b16 %v5624
    %v6142 = vunpack.c.l.b16 %v5625
    %v6143 = vunpack.c.l.b16 %v5626
    %v6144 = vunpack.c.l.b16 %v5627
    %v6145 = vunpack.c.l.b16 %v5628
    %v6146 = vunpack.c.l.b16 %v5629
    %v6147 = vunpack.c.l.b16 %v5630
    %v6148 = vunpack.c.l.b16 %v5631
    %v6149 = vunpack.c.l.b16 %v5632
    %v6150 = vunpack.c.l.b16 %v5633
    %v6151 = vunpack.c.l.b16 %v5634
    %v6152 = vunpack.c.l.b16 %v5635
    %v6153 = vunpack.c.l.b16 %v5636
    %v6154 = vunpack.c.l.b16 %v5637
    %v6155 = vunpack.c.l.b16 %v5638
    %v6156 = vunpack.c.l.b16 %v5639
    %v6157 = vunpack.c.l.b16 %v5640
    %v6158 = vunpack.c.l.b16 %v5641
    %v6159 = vunpack.c.l.b16 %v5642
    %v6160 = vunpack.c.l.b16 %v5643
    %v6161 = vunpack.c.l.b16 %v5644
    %v6162 = vunpack.c.l.b16 %v5645
    %v6163 = vunpack.c.l.b16 %v5646
    %v6164 = vunpack.c.l.b16 %v5647
    %v6165 = vunpack.c.l.b16 %v5648
    %v6166 = vunpack.c.l.b16 %v5649
    %v6167 = vunpack.c.l.b16 %v5650
    %v6168 = vunpack.c.l.b16 %v5651
    %v6169 = vunpack.c.l.b16 %v5652
    %v6170 = vunpack.c.l.b16 %v5653
    %v6171 = vunpack.c.l.b16 %v5654
    %v6172 = vunpack.c.l.b16 %v5655
    %v6173 = vunpack.c.l.b16 %v5656
    %v6174 = vunpack.c.l.b16 %v5657
    %v6175 = vunpack.c.l.b16 %v5658
    %v6176 = vunpack.c.l.b16 %v5659
    %v6177 = vunpack.c.l.b16 %v5660
    %v6178 = vunpack.c.l.b16 %v5661
    %v6179 = vunpack.c.l.b16 %v5662
    %v6180 = vunpack.c.l.b16 %v5663
    %v6181 = vunpack.c.l.b16 %v5664
    %v6182 = vunpack.c.l.b16 %v5665
    %v6183 = vunpack.c.l.b16 %v5666
    %v6184 = vunpack.c.l.b16 %v5667
    %v6185 = vunpack.c.l.b16 %v5668
    %v6186 = vunpack.c.l.b16 %v5669
    %v6187 = vunpack.c.l.b16 %v5670
    %v6188 = vunpack.c.l.b16 %v5671
    %v6189 = vunpack.c.l.b16 %v5672
    %v6190 = vunpack.c.l.b16 %v5673
    %v6191 = vunpack.c.l.b16 %v5674
    %v6192 = vunpack.c.l.b16 %v5675
    %v6193 = vunpack.c.l.b16 %v5676
    %v6194 = vunpack.c.l.b16 %v5677
    %v6195 = vunpack.c.l.b16 %v5678
    %v6196 = vunpack.c.l.b16 %v5679
    %v6197 = vunpack.c.l.b16 %v5680
    %v6198 = vunpack.c.l.b16 %v5681
    %v6199 = vunpack.c.l.b16 %v5682
    %v6200 = vunpack.c.l.b16 %v5683
    %v6201 = vunpack.c.l.b16 %v5684
    %v6202 = vunpack.c.l.b16 %v5685
    %v6203 = vunpack.c.l.b16 %v5686
    %v6204 = vunpack.c.l.b16 %v5687
    %v6205 = vunpack.c.l.b16 %v5688
    %v6206 = vunpack.c.l.b16 %v5689
    %v6207 = vunpack.c.l.b16 %v5690
    %v6208 = vunpack.c.l.b16 %v5691
    %v6209 = vpack.c.b16 %v5954, %v5953
    %v6210 = vpack.c.b16 %v5956, %v5955
    %v6211 = vpack.c.b16 %v5958, %v5957
    %v6212 = vpack.c.b16 %v5960, %v5959
    %v6213 = vpack.c.b16 %v5962, %v5961
    %v6214 = vpack.c.b16 %v5964, %v5963
    %v6215 = vpack.c.b16 %v5966, %v5965
    %v6216 = vpack.c.b16 %v5968, %v5967
    %v6217 = vpack.c.b16 %v5970, %v5969
    %v6218 = vpack.c.b16 %v5972, %v5971
    %v6219 = vpack.c.b16 %v5974, %v5973
    %v6220 = vpack.c.b16 %v5976, %v5975
    %v6221 = vpack.c.b16 %v5978, %v5977
    %v6222 = vpack.c.b16 %v5980, %v5979
    %v6223 = vpack.c.b16 %v5982, %v5981
    %v6224 = vpack.c.b16 %v5984, %v5983
    %v6225 = vpack.c.b16 %v5986, %v5985
    %v6226 = vpack.c.b16 %v5988, %v5987
    %v6227 = vpack.c.b16 %v5990, %v5989
    %v6228 = vpack.c.b16 %v5992, %v5991
    %v6229 = vpack.c.b16 %v5994, %v5993
    %v6230 = vpack.c.b16 %v5996, %v5995
    %v6231 = vpack.c.b16 %v5998, %v5997
    %v6232 = vpack.c.b16 %v6000, %v5999
    %v6233 = vpack.c.b16 %v6002, %v6001
    %v6234 = vpack.c.b16 %v6004, %v6003
    %v6235 = vpack.c.b16 %v6006, %v6005
    %v6236 = vpack.c.b16 %v6008, %v6007
    %v6237 = vpack.c.b16 %v6010, %v6009
    %v6238 = vpack.c.b16 %v6012, %v6011
    %v6239 = vpack.c.b16 %v6014, %v6013
    %v6240 = vpack.c.b16 %v6016, %v6015
    %v6241 = vpack.c.b16 %v6018, %v6017
    %v6242 = vpack.c.b16 %v6020, %v6019
    %v6243 = vpack.c.b16 %v6022, %v6021
    %v6244 = vpack.c.b16 %v6024, %v6023
    %v6245 = vpack.c.b16 %v6026, %v6025
    %v6246 = vpack.c.b16 %v6028, %v6027
    %v6247 = vpack.c.b16 %v6030, %v6029
    %v6248 = vpack.c.b16 %v6032, %v6031
    %v6249 = vpack.c.b16 %v6034, %v6033
    %v6250 = vpack.c.b16 %v6036, %v6035
    %v6251 = vpack.c.b16 %v6038, %v6037
    %v6252 = vpack.c.b16 %v6040, %v6039
    %v6253 = vpack.c.b16 %v6042, %v6041
    %v6254 = vpack.c.b16 %v6044, %v6043
    %v6255 = vpack.c.b16 %v6046, %v6045
    %v6256 = vpack.c.b16 %v6048, %v6047
    %v6257 = vpack.c.b16 %v6050, %v6049
    %v6258 = vpack.c.b16 %v6052, %v6051
    %v6259 = vpack.c.b16 %v6054, %v6053
    %v6260 = vpack.c.b16 %v6056, %v6055
    %v6261 = vpack.c.b16 %v6058, %v6057
    %v6262 = vpack.c.b16 %v6060, %v6059
    %v6263 = vpack.c.b16 %v6062, %v6061
    %v6264 = vpack.c.b16 %v6064, %v6063
    %v6265 = vpack.c.b16 %v6066, %v6065
    %v6266 = vpack.c.b16 %v6068, %v6067
    %v6267 = vpack.c.b16 %v6070, %v6069
    %v6268 = vpack.c.b16 %v6072, %v6071
    %v6269 = vpack.c.b16 %v6074, %v6073
    %v6270 = vpack.c.b16 %v6076, %v6075
    %v6271 = vpack.c.b16 %v6078, %v6077
    %v6272 = vpack.c.b16 %v6080, %v6079
    %v6273 = vpack.c.b16 %v6082, %v6081
    %v6274 = vpack.c.b16 %v6084, %v6083
    %v6275 = vpack.c.b16 %v6086, %v6085
    %v6276 = vpack.c.b16 %v6088, %v6087
    %v6277 = vpack.c.b16 %v6090, %v6089
    %v6278 = vpack.c.b16 %v6092, %v6091
    %v6279 = vpack.c.b16 %v6094, %v6093
    %v6280 = vpack.c.b16 %v6096, %v6095
    %v6281 = vpack.c.b16 %v6098, %v6097
    %v6282 = vpack.c.b16 %v6100, %v6099
    %v6283 = vpack.c.b16 %v6102, %v6101
    %v6284 = vpack.c.b16 %v6104, %v6103
    %v6285 = vpack.c.b16 %v6106, %v6105
    %v6286 = vpack.c.b16 %v6108, %v6107
    %v6287 = vpack.c.b16 %v6110, %v6109
    %v6288 = vpack.c.b16 %v6112, %v6111
    %v6289 = vpack.c.b16 %v6114, %v6113
    %v6290 = vpack.c.b16 %v6116, %v6115
    %v6291 = vpack.c.b16 %v6118, %v6117
    %v6292 = vpack.c.b16 %v6120, %v6119
    %v6293 = vpack.c.b16 %v6122, %v6121
    %v6294 = vpack.c.b16 %v6124, %v6123
    %v6295 = vpack.c.b16 %v6126, %v6125
    %v6296 = vpack.c.b16 %v6128, %v6127
    %v6297 = vpack.c.b16 %v6130, %v6129
    %v6298 = vpack.c.b16 %v6132, %v6131
    %v6299 = vpack.c.b16 %v6134, %v6133
    %v6300 = vpack.c.b16 %v6136, %v6135
    %v6301 = vpack.c.b16 %v6138, %v6137
    %v6302 = vpack.c.b16 %v6140, %v6139
    %v6303 = vpack.c.b16 %v6142, %v6141
    %v6304 = vpack.c.b16 %v6144, %v6143
    %v6305 = vpack.c.b16 %v6146, %v6145
    %v6306 = vpack.c.b16 %v6148, %v6147
    %v6307 = vpack.c.b16 %v6150, %v6149
    %v6308 = vpack.c.b16 %v6152, %v6151
    %v6309 = vpack.c.b16 %v6154, %v6153
    %v6310 = vpack.c.b16 %v6156, %v6155
    %v6311 = vpack.c.b16 %v6158, %v6157
    %v6312 = vpack.c.b16 %v6160, %v6159
    %v6313 = vpack.c.b16 %v6162, %v6161
    %v6314 = vpack.c.b16 %v6164, %v6163
    %v6315 = vpack.c.b16 %v6166, %v6165
    %v6316 = vpack.c.b16 %v6168, %v6167
    %v6317 = vpack.c.b16 %v6170, %v6169
    %v6318 = vpack.c.b16 %v6172, %v6171
    %v6319 = vpack.c.b16 %v6174, %v6173
    %v6320 = vpack.c.b16 %v6176, %v6175
    %v6321 = vpack.c.b16 %v6178, %v6177
    %v6322 = vpack.c.b16 %v6180, %v6179
    %v6323 = vpack.c.b16 %v6182, %v6181
    %v6324 = vpack.c.b16 %v6184, %v6183
    %v6325 = vpack.c.b16 %v6186, %v6185
    %v6326 = vpack.c.b16 %v6188, %v6187
    %v6327 = vpack.c.b16 %v6190, %v6189
    %v6328 = vpack.c.b16 %v6192, %v6191
    %v6329 = vpack.c.b16 %v6194, %v6193
    %v6330 = vpack.c.b16 %v6196, %v6195
    %v6331 = vpack.c.b16 %v6198, %v6197
    %v6332 = vpack.c.b16 %v6200, %v6199
    %v6333 = vpack.c.b16 %v6202, %v6201
    %v6334 = vpack.c.b16 %v6204, %v6203
    %v6335 = vpack.c.b16 %v6206, %v6205
    %v6336 = vpack.c.b16 %v6208, %v6207
    %6465 = vmatpush.bf16.msra.mxu0 %v6216
    %6466 = vmatpush.bf16.msra.mxu0 %v6215
    %6467 = vmatpush.bf16.msra.mxu0 %v6214
    %6468 = vmatpush.bf16.msra.mxu0 %v6213
    %6469 = vmatpush.bf16.msra.mxu0 %v6212
    %6470 = vmatpush.bf16.msra.mxu0 %v6211
    %6471 = vmatpush.bf16.msra.mxu0 %v6210
    %6472 = vmatpush.bf16.msra.mxu0 %v6209
    %6473 = vmatmul.bf16.gmra.mxu0 %v5419
    %v6474 = vpop.f32.mrf.mxu0
    %v6475 = vadd.f32 %v5695, %v6474
    %v6476 = vpop.f32.mrf.mxu0
    %v6477 = vadd.f32 %v5695, %v6476
    %6478 = vdwg.mxu0
    %6479 = vmatpush.bf16.msra.mxu0 %v6224
    %6480 = vmatpush.bf16.msra.mxu0 %v6223
    %6481 = vmatpush.bf16.msra.mxu0 %v6222
    %6482 = vmatpush.bf16.msra.mxu0 %v6221
    %6483 = vmatpush.bf16.msra.mxu0 %v6220
    %6484 = vmatpush.bf16.msra.mxu0 %v6219
    %6485 = vmatpush.bf16.msra.mxu0 %v6218
    %6486 = vmatpush.bf16.msra.mxu0 %v6217
    %6487 = vmatmul.bf16.gmra.mxu0 %v5420
    %v6488 = vpop.f32.mrf.mxu0
    %v6489 = vadd.f32 %v6475, %v6488
    %v6490 = vpop.f32.mrf.mxu0
    %v6491 = vadd.f32 %v6477, %v6490
    %6492 = vdwg.mxu0
    %6493 = vmatpush.bf16.msra.mxu0 %v6232
    %6494 = vmatpush.bf16.msra.mxu0 %v6231
    %6495 = vmatpush.bf16.msra.mxu0 %v6230
    %6496 = vmatpush.bf16.msra.mxu0 %v6229
    %6497 = vmatpush.bf16.msra.mxu0 %v6228
    %6498 = vmatpush.bf16.msra.mxu0 %v6227
    %6499 = vmatpush.bf16.msra.mxu0 %v6226
    %6500 = vmatpush.bf16.msra.mxu0 %v6225
    %6501 = vmatmul.bf16.gmra.mxu0 %v5421
    %v6502 = vpop.f32.mrf.mxu0
    %v6503 = vadd.f32 %v6489, %v6502
    %v6504 = vpop.f32.mrf.mxu0
    %v6505 = vadd.f32 %v6491, %v6504
    %6506 = vdwg.mxu0
    %6507 = vmatpush.bf16.msra.mxu0 %v6240
    %6508 = vmatpush.bf16.msra.mxu0 %v6239
    %6509 = vmatpush.bf16.msra.mxu0 %v6238
    %6510 = vmatpush.bf16.msra.mxu0 %v6237
    %6511 = vmatpush.bf16.msra.mxu0 %v6236
    %6512 = vmatpush.bf16.msra.mxu0 %v6235
    %6513 = vmatpush.bf16.msra.mxu0 %v6234
    %6514 = vmatpush.bf16.msra.mxu0 %v6233
    %6515 = vmatmul.bf16.gmra.mxu0 %v5422
    %v6516 = vpop.f32.mrf.mxu0
    %v6517 = vadd.f32 %v6503, %v6516
    %v6518 = vpop.f32.mrf.mxu0
    %v6519 = vadd.f32 %v6505, %v6518
    %6520 = vdwg.mxu0
    %6521 = vmatpush.bf16.msra.mxu0 %v6248
    %6522 = vmatpush.bf16.msra.mxu0 %v6247
    %6523 = vmatpush.bf16.msra.mxu0 %v6246
    %6524 = vmatpush.bf16.msra.mxu0 %v6245
    %6525 = vmatpush.bf16.msra.mxu0 %v6244
    %6526 = vmatpush.bf16.msra.mxu0 %v6243
    %6527 = vmatpush.bf16.msra.mxu0 %v6242
    %6528 = vmatpush.bf16.msra.mxu0 %v6241
    %6529 = vmatmul.bf16.gmra.mxu0 %v5423
    %v6530 = vpop.f32.mrf.mxu0
    %v6531 = vadd.f32 %v6517, %v6530
    %v6532 = vpop.f32.mrf.mxu0
    %v6533 = vadd.f32 %v6519, %v6532
    %6534 = vdwg.mxu0
    %6535 = vmatpush.bf16.msra.mxu0 %v6256
    %6536 = vmatpush.bf16.msra.mxu0 %v6255
    %6537 = vmatpush.bf16.msra.mxu0 %v6254
    %6538 = vmatpush.bf16.msra.mxu0 %v6253
    %6539 = vmatpush.bf16.msra.mxu0 %v6252
    %6540 = vmatpush.bf16.msra.mxu0 %v6251
    %6541 = vmatpush.bf16.msra.mxu0 %v6250
    %6542 = vmatpush.bf16.msra.mxu0 %v6249
    %6543 = vmatmul.bf16.gmra.mxu0 %v5424
    %v6544 = vpop.f32.mrf.mxu0
    %v6545 = vadd.f32 %v6531, %v6544
    %v6546 = vpop.f32.mrf.mxu0
    %v6547 = vadd.f32 %v6533, %v6546
    %6548 = vdwg.mxu0
    %6549 = vmatpush.bf16.msra.mxu0 %v6264
    %6550 = vmatpush.bf16.msra.mxu0 %v6263
    %6551 = vmatpush.bf16.msra.mxu0 %v6262
    %6552 = vmatpush.bf16.msra.mxu0 %v6261
    %6553 = vmatpush.bf16.msra.mxu0 %v6260
    %6554 = vmatpush.bf16.msra.mxu0 %v6259
    %6555 = vmatpush.bf16.msra.mxu0 %v6258
    %6556 = vmatpush.bf16.msra.mxu0 %v6257
    %6557 = vmatmul.bf16.gmra.mxu0 %v5425
    %v6558 = vpop.f32.mrf.mxu0
    %v6559 = vadd.f32 %v6545, %v6558
    %v6560 = vpop.f32.mrf.mxu0
    %v6561 = vadd.f32 %v6547, %v6560
    %6562 = vdwg.mxu0
    %6563 = vmatpush.bf16.msra.mxu0 %v6272
    %6564 = vmatpush.bf16.msra.mxu0 %v6271
    %6565 = vmatpush.bf16.msra.mxu0 %v6270
    %6566 = vmatpush.bf16.msra.mxu0 %v6269
    %6567 = vmatpush.bf16.msra.mxu0 %v6268
    %6568 = vmatpush.bf16.msra.mxu0 %v6267
    %6569 = vmatpush.bf16.msra.mxu0 %v6266
    %6570 = vmatpush.bf16.msra.mxu0 %v6265
    %6571 = vmatmul.bf16.gmra.mxu0 %v5426
    %v6572 = vpop.f32.mrf.mxu0
    %v6573 = vadd.f32 %v6559, %v6572
    %v6574 = vpop.f32.mrf.mxu0
    %v6575 = vadd.f32 %v6561, %v6574
    %6576 = vdwg.mxu0
    %6577 = vmatpush.bf16.msra.mxu0 %v6280
    %6578 = vmatpush.bf16.msra.mxu0 %v6279
    %6579 = vmatpush.bf16.msra.mxu0 %v6278
    %6580 = vmatpush.bf16.msra.mxu0 %v6277
    %6581 = vmatpush.bf16.msra.mxu0 %v6276
    %6582 = vmatpush.bf16.msra.mxu0 %v6275
    %6583 = vmatpush.bf16.msra.mxu0 %v6274
    %6584 = vmatpush.bf16.msra.mxu0 %v6273
    %6585 = vmatmul.bf16.gmra.mxu0 %v5427
    %v6586 = vpop.f32.mrf.mxu0
    %v6587 = vadd.f32 %v6573, %v6586
    %v6588 = vpop.f32.mrf.mxu0
    %v6589 = vadd.f32 %v6575, %v6588
    %6590 = vdwg.mxu0
    %6591 = vmatpush.bf16.msra.mxu0 %v6288
    %6592 = vmatpush.bf16.msra.mxu0 %v6287
    %6593 = vmatpush.bf16.msra.mxu0 %v6286
    %6594 = vmatpush.bf16.msra.mxu0 %v6285
    %6595 = vmatpush.bf16.msra.mxu0 %v6284
    %6596 = vmatpush.bf16.msra.mxu0 %v6283
    %6597 = vmatpush.bf16.msra.mxu0 %v6282
    %6598 = vmatpush.bf16.msra.mxu0 %v6281
    %6599 = vmatmul.bf16.gmra.mxu0 %v5428
    %v6600 = vpop.f32.mrf.mxu0
    %v6601 = vadd.f32 %v6587, %v6600
    %v6602 = vpop.f32.mrf.mxu0
    %v6603 = vadd.f32 %v6589, %v6602
    %6604 = vdwg.mxu0
    %6605 = vmatpush.bf16.msra.mxu0 %v6296
    %6606 = vmatpush.bf16.msra.mxu0 %v6295
    %6607 = vmatpush.bf16.msra.mxu0 %v6294
    %6608 = vmatpush.bf16.msra.mxu0 %v6293
    %6609 = vmatpush.bf16.msra.mxu0 %v6292
    %6610 = vmatpush.bf16.msra.mxu0 %v6291
    %6611 = vmatpush.bf16.msra.mxu0 %v6290
    %6612 = vmatpush.bf16.msra.mxu0 %v6289
    %6613 = vmatmul.bf16.gmra.mxu0 %v5429
    %v6614 = vpop.f32.mrf.mxu0
    %v6615 = vadd.f32 %v6601, %v6614
    %v6616 = vpop.f32.mrf.mxu0
    %v6617 = vadd.f32 %v6603, %v6616
    %6618 = vdwg.mxu0
    %6619 = vmatpush.bf16.msra.mxu0 %v6304
    %6620 = vmatpush.bf16.msra.mxu0 %v6303
    %6621 = vmatpush.bf16.msra.mxu0 %v6302
    %6622 = vmatpush.bf16.msra.mxu0 %v6301
    %6623 = vmatpush.bf16.msra.mxu0 %v6300
    %6624 = vmatpush.bf16.msra.mxu0 %v6299
    %6625 = vmatpush.bf16.msra.mxu0 %v6298
    %6626 = vmatpush.bf16.msra.mxu0 %v6297
    %6627 = vmatmul.bf16.gmra.mxu0 %v5430
    %v6628 = vpop.f32.mrf.mxu0
    %v6629 = vadd.f32 %v6615, %v6628
    %v6630 = vpop.f32.mrf.mxu0
    %v6631 = vadd.f32 %v6617, %v6630
    %6632 = vdwg.mxu0
    %6633 = vmatpush.bf16.msra.mxu0 %v6312
    %6634 = vmatpush.bf16.msra.mxu0 %v6311
    %6635 = vmatpush.bf16.msra.mxu0 %v6310
    %6636 = vmatpush.bf16.msra.mxu0 %v6309
    %6637 = vmatpush.bf16.msra.mxu0 %v6308
    %6638 = vmatpush.bf16.msra.mxu0 %v6307
    %6639 = vmatpush.bf16.msra.mxu0 %v6306
    %6640 = vmatpush.bf16.msra.mxu0 %v6305
    %6641 = vmatmul.bf16.gmra.mxu0 %v5431
    %v6642 = vpop.f32.mrf.mxu0
    %v6643 = vadd.f32 %v6629, %v6642
    %v6644 = vpop.f32.mrf.mxu0
    %v6645 = vadd.f32 %v6631, %v6644
    %6646 = vdwg.mxu0
    %6647 = vmatpush.bf16.msra.mxu0 %v6320
    %6648 = vmatpush.bf16.msra.mxu0 %v6319
    %6649 = vmatpush.bf16.msra.mxu0 %v6318
    %6650 = vmatpush.bf16.msra.mxu0 %v6317
    %6651 = vmatpush.bf16.msra.mxu0 %v6316
    %6652 = vmatpush.bf16.msra.mxu0 %v6315
    %6653 = vmatpush.bf16.msra.mxu0 %v6314
    %6654 = vmatpush.bf16.msra.mxu0 %v6313
    %6655 = vmatmul.bf16.gmra.mxu0 %v5432
    %v6656 = vpop.f32.mrf.mxu0
    %v6657 = vadd.f32 %v6643, %v6656
    %v6658 = vpop.f32.mrf.mxu0
    %v6659 = vadd.f32 %v6645, %v6658
    %6660 = vdwg.mxu0
    %6661 = vmatpush.bf16.msra.mxu0 %v6328
    %6662 = vmatpush.bf16.msra.mxu0 %v6327
    %6663 = vmatpush.bf16.msra.mxu0 %v6326
    %6664 = vmatpush.bf16.msra.mxu0 %v6325
    %6665 = vmatpush.bf16.msra.mxu0 %v6324
    %6666 = vmatpush.bf16.msra.mxu0 %v6323
    %6667 = vmatpush.bf16.msra.mxu0 %v6322
    %6668 = vmatpush.bf16.msra.mxu0 %v6321
    %6669 = vmatmul.bf16.gmra.mxu0 %v5433
    %v6670 = vpop.f32.mrf.mxu0
    %v6671 = vadd.f32 %v6657, %v6670
    %v6672 = vpop.f32.mrf.mxu0
    %v6673 = vadd.f32 %v6659, %v6672
    %6674 = vdwg.mxu0
    %6675 = vmatpush.bf16.msra.mxu0 %v6336
    %6676 = vmatpush.bf16.msra.mxu0 %v6335
    %6677 = vmatpush.bf16.msra.mxu0 %v6334
    %6678 = vmatpush.bf16.msra.mxu0 %v6333
    %6679 = vmatpush.bf16.msra.mxu0 %v6332
    %6680 = vmatpush.bf16.msra.mxu0 %v6331
    %6681 = vmatpush.bf16.msra.mxu0 %v6330
    %6682 = vmatpush.bf16.msra.mxu0 %v6329
    %6683 = vmatmul.bf16.gmra.mxu0 %v5434
    %v6684 = vpop.f32.mrf.mxu0
    %v6685 = vadd.f32 %v6671, %v6684
    %v6686 = vpop.f32.mrf.mxu0
    %v6687 = vadd.f32 %v6673, %v6686
    %6688 = vdwg.mxu0
    %v6689 = vadd.f32 %v4354, %v6685
    %v6690 = vadd.f32 %v4355, %v6687
    %s6691 = scalar_lea.vmem [#allocation11], 1
    %v6692 = vld [vmem:[%s6691] sm:$0x1]
    %s6693 = scalar_lea.vmem %s12, 1
    %v6694 = vld [vmem:[%s6693] sm:$0x1]
    %6695 = vadd.xlane.f32.xlu0 %v6689
    %v6696 = vpop.xlane.xlu0 %6695
    %6697 = vadd.xlane.f32.xlu0 %v6690
    %v6698 = vpop.xlane.xlu0 %6697
    %v6699 = vmul.f32 %v6696, %v1022
    %v6700 = vmul.f32 %v6698, %v1022
    %v6701 = vsub.f32 %v6689, %v6699
    %v6702 = vsub.f32 %v6690, %v6700
    %v6703 = vmul.f32 %v6701, %v6701
    %v6704 = vmul.f32 %v6702, %v6702
    %6705 = vadd.xlane.f32.xlu0 %v6703
    %v6706 = vpop.xlane.xlu0 %6705
    %6707 = vadd.xlane.f32.xlu0 %v6704
    %v6708 = vpop.xlane.xlu0 %6707
    %v6709 = vmul.f32 %v6706, %v1022
    %v6710 = vmul.f32 %v6708, %v1022
    %v6711 = vadd.f32 %v6709, 1e-05
    %v6712 = vadd.f32 %v6710, 1e-05
    %v6713 = vrsqrt.pop %v6711
    %v6714 = vmul.f32 %v6713, %v6711
    %v6715 = vmul.f32 %v6714, %v6713
    %v6716 = vmul.f32 0.5, %v6715
    %v6717 = vsub.f32 1.5, %v6716
    %v6718 = vmul.f32 %v6713, %v6717
    %vm6719 = vweird.f32 %v6711
    %vm6720 = vweird.f32 %v6713
    %vm6721 = vmor %vm6719, %vm6720
    %v6722 = vsel %vm6721, %v6713, %v6718
    %v6723 = vrsqrt.pop %v6712
    %v6724 = vmul.f32 %v6723, %v6712
    %v6725 = vmul.f32 %v6724, %v6723
    %v6726 = vmul.f32 0.5, %v6725
    %v6727 = vsub.f32 1.5, %v6726
    %v6728 = vmul.f32 %v6723, %v6727
    %vm6729 = vweird.f32 %v6712
    %vm6730 = vweird.f32 %v6723
    %vm6731 = vmor %vm6729, %vm6730
    %v6732 = vsel %vm6731, %v6723, %v6728
    %v6733 = vmul.f32 %v6701, %v6722
    %v6734 = vmul.f32 %v6702, %v6732
    %v6736 = vperm.slane %v6692, 0
    %v6738 = vmul.f32 %v6733, %v6736
    %v6739 = vmul.f32 %v6734, %v6736
    %v6741 = vperm.slane %v6694, 0
    %v6743 = vadd.f32 %v6738, %v6741
    %v6744 = vadd.f32 %v6739, %v6741
    %v6745 = vrot.slane %v6743, 4
    %v6746 = vmax.f32 %v6743, %v6745
    %v6747 = vrot.slane %v6746, 2
    %v6748 = vmax.f32 %v6746, %v6747
    %v6749 = vrot.slane %v6748, 1
    %v6750 = vmax.f32 %v6748, %v6749
    %v6751 = vrot.slane %v6744, 4
    %v6752 = vmax.f32 %v6744, %v6751
    %v6753 = vrot.slane %v6752, 2
    %v6754 = vmax.f32 %v6752, %v6753
    %v6755 = vrot.slane %v6754, 1
    %v6756 = vmax.f32 %v6754, %v6755
    %vm6757 = vcmask 1040384
    %v6758 = vsel %vm6757, %v6750, %v6756
    %v6759 = vpack.c.bf16 %v6758, %v6758
    %v6760 = vld [vmem:[%s13] sm:$0xf]
    %v6761 = vld [vmem:[%s13 + $0x4] sm:$0xf]
    %v6762 = vld [vmem:[%s13 + $0x8] sm:$0xf]
    %v6763 = vld [vmem:[%s13 + $0xc] sm:$0xf]
    %v6764 = vld [vmem:[%s13 + $0x10] sm:$0xf]
    %v6765 = vld [vmem:[%s13 + $0x14] sm:$0xf]
    %v6766 = vld [vmem:[%s13 + $0x18] sm:$0xf]
    %v6767 = vld [vmem:[%s13 + $0x1c] sm:$0xf]
    %v6768 = vld [vmem:[%s13 + $0x20] sm:$0xf]
    %v6769 = vld [vmem:[%s13 + $0x24] sm:$0xf]
    %v6770 = vld [vmem:[%s13 + $0x28] sm:$0xf]
    %v6771 = vld [vmem:[%s13 + $0x2c] sm:$0xf]
    %v6772 = vld [vmem:[%s13 + $0x30] sm:$0xf]
    %v6773 = vld [vmem:[%s13 + $0x34] sm:$0xf]
    %v6774 = vld [vmem:[%s13 + $0x38] sm:$0xf]
    %v6775 = vld [vmem:[%s13 + $0x3c] sm:$0xf]
    %v6776 = vld [vmem:[#allocation13] sm:$0x1]
    %v6778 = vperm.slane %v6776, 0
    %v6796 = vunpack.c.l.b16 %v6760
    %v6797 = vunpack.c.l.b16 %v6761
    %v6798 = vunpack.c.l.b16 %v6762
    %v6799 = vunpack.c.l.b16 %v6763
    %v6800 = vunpack.c.l.b16 %v6764
    %v6801 = vunpack.c.l.b16 %v6765
    %v6802 = vunpack.c.l.b16 %v6766
    %v6803 = vunpack.c.l.b16 %v6767
    %v6804 = vunpack.c.l.b16 %v6768
    %v6805 = vunpack.c.l.b16 %v6769
    %v6806 = vunpack.c.l.b16 %v6770
    %v6807 = vunpack.c.l.b16 %v6771
    %v6808 = vunpack.c.l.b16 %v6772
    %v6809 = vunpack.c.l.b16 %v6773
    %v6810 = vunpack.c.l.b16 %v6774
    %v6811 = vunpack.c.l.b16 %v6775
    %v6812 = vpack.c.b16 %v6797, %v6796
    %v6813 = vpack.c.b16 %v6799, %v6798
    %v6814 = vpack.c.b16 %v6801, %v6800
    %v6815 = vpack.c.b16 %v6803, %v6802
    %v6816 = vpack.c.b16 %v6805, %v6804
    %v6817 = vpack.c.b16 %v6807, %v6806
    %v6818 = vpack.c.b16 %v6809, %v6808
    %v6819 = vpack.c.b16 %v6811, %v6810
    %6828 = vmatpush.bf16.msra.mxu0 %v6819
    %6829 = vmatpush.bf16.msra.mxu0 %v6818
    %6830 = vmatpush.bf16.msra.mxu0 %v6817
    %6831 = vmatpush.bf16.msra.mxu0 %v6816
    %6832 = vmatpush.bf16.msra.mxu0 %v6815
    %6833 = vmatpush.bf16.msra.mxu0 %v6814
    %6834 = vmatpush.bf16.msra.mxu0 %v6813
    %6835 = vmatpush.bf16.msra.mxu0 %v6812
    %6836 = vmatmul.bf16.gmra.mxu0 %v6759
    %v6837 = vpop.f32.mrf.mxu0
    %v6838 = vadd.f32 %v6778, %v6837
    %v6839 = vpop.f32.mrf.mxu0
    %6840 = vdwg.mxu0
    %v6841 = vlaneseq
    %v6842 = vand.u32 %v6841, 127
    %vm6843 = vcmp.lt.s32.totalorder %v6842, 5
    %v6844 = vsel %vm6843, %v6838, -1e+30
    %vm6845 = vcmask 1041408
    %v6846 = vsel %vm6845, %v6844, -inf
    %6847 = vmax.xlane.f32.xlu0 %v6846
    %v6848 = vpop.xlane.xlu0 %6847
    %v6849 = vsub.f32 %v6844, %v6848
    %v6850 = vmul.f32 %v6849, 1.442695
    %v6851 = vpow.pop %v6850
    %v6852 = vsel %vm6845, %v6851, 0.0
    %6853 = vadd.xlane.f32.xlu0 %v6852
    %v6854 = vpop.xlane.xlu0 %6853
    %v6855 = vrcp.pop %v6854
    %v6856 = vmul.f32 %v6854, %v6855
    %v6857 = vsub.f32 1.0, %v6856
    %v6858 = vmul.f32 %v6855, %v6857
    %v6859 = vadd.f32 %v6855, %v6858
    %vm6860 = vweird.f32 %v6854
    %vm6861 = vweird.f32 %v6855
    %vm6862 = vmor %vm6860, %vm6861
    %v6863 = vsel %vm6862, %v6855, %v6859
    %v6864 = vand.u32 2147483647, %v6854
    %vm6865 = vcmp.eq.f32.partialorder %v6864, 8.507059e+37
    %v6866 = vand.u32 %v6854, 2147483648
    %v6867 = vor.u32 1.1754944e-38, %v6866
    %v6868 = vsel %vm6865, %v6867, %v6863
    %v6869 = vmul.f32 %v6851, %v6868
    %6870 = vst [vmem:[#allocation14] sm:$0x3] %v6869
    // Predicated region
    $region90: #{encoder_forward.1} parent=1 // pred_check
      _
    $region91: #{encoder_forward.1} parent=1 // pred_check_branch
      %6872 = sbr.rel (0) target = $region93
    $region92: #{encoder_forward.1} parent=1 // pred_region
      %6874 = vsyncadd [#allocation4], 0
      %s6876 = sshll.u32 [#allocation14], 4
      %s6877 = int_to_ptr.vmem [resolvable:$true] %s6876
      %s6878 = sshll.u32 %s15, 4
      %s6879 = int_to_ptr.hbm [resolvable:$true] %s6878
      %6881 = dma.vmem_to_hbm [thread:$0]  %s6877, 32, %s6879, [#allocation4]
    $region93: #{encoder_forward.1} parent=1 // pred_fallthru
      _
    // Predicated region
    $region94: #{encoder_forward.1} parent=1 // pred_check
      _
    $region95: #{encoder_forward.1} parent=1 // pred_check_branch
      %6883 = sbr.rel (0) target = $region97
    $region96: #{encoder_forward.1} parent=1 // pred_region
      %6885 = dma.done [#allocation4], 32
    $region97: #{encoder_forward.1} parent=1 // pred_fallthru
      _
    %6886 = vsyncpa [#allocation3], 1
    %6887 = vsyncpa [#allocation6], 1
    %6888 = vsyncpa [#allocation9], 1
    %6889 = vsyncpa [#allocation12], 1
    %6890 = vsyncpa [#allocation4], 1

</llo_original>
